<compile_context>
chip_gen: v7x
topology: tpu7x:2x2x1
jax: 0.10.0
libtpu: 0.0.40
codegen_flags: <defaults>
</compile_context>

<pallas_src>
import jax
import jax.numpy as jnp
from jax.experimental import pallas as pl
from jax.experimental.pallas import tpu as pltpu

DIMS = [512, 2048, 1024, 512, 256, 128, 6]
NUM_CLASSES = DIMS[-1]
PAD_OUT = 128          # lane-dense padded width of the final layer
NEG_BIG = -1e30        # bias for padded (fake) classes -> exp() == 0 (f32 path)
TB_MAX = 512           # max batch tile (fits v7x 64 MiB VMEM comfortably)


def _round_up(n, m):
    return (n + m - 1) // m * m


def _pick_batch_tiling(B):
    """Adaptive batch tile: <=TB_MAX, multiple of 16, >=2 tiles when B > 256."""
    n_tiles = -(-B // TB_MAX)                    # ceil(B / TB_MAX)
    if n_tiles == 1 and B > 256:
        n_tiles = 2                              # use both TensorCores on v7x
    TB = _round_up(-(-B // n_tiles), 16)
    return TB, TB * n_tiles


def _ffnn_kernel(x_ref,
                 w1, b1, w2, b2, w3, b3, w4, b4, w5, b5, w6, b6,
                 out_ref):
    """One batch tile: 6 Linear layers + ReLU + softmax, fully VMEM-resident."""

    def linear(h_bf16, w_ref, b_ref):
        # bf16 x bf16 on the MXU, f32 accumulate, f32 bias add.
        return jnp.dot(h_bf16, w_ref[...],
                       preferred_element_type=jnp.float32) + b_ref[...]

    h = x_ref[...]                                           # bf16 [TB, 512]
    for w_ref, b_ref in ((w1, b1), (w2, b2), (w3, b3), (w4, b4), (w5, b5)):
        # ReLU in f32 (v5e VPU has no bf16), then carry activations as bf16.
        h = jnp.maximum(linear(h, w_ref, b_ref), 0.0).astype(jnp.bfloat16)

    # Final (padded) layer + softmax over the class axis (all in f32).
    logits = linear(h, w6, b6)                               # f32 [TB, 128]
    logits = logits - jnp.max(logits, axis=-1, keepdims=True)
    e = jnp.exp(logits)
    out_ref[...] = (e / jnp.sum(e, axis=-1, keepdims=True)).astype(out_ref.dtype)


@jax.jit
def feedforward_nn(x, kernel_params):
    """x: [B, 512].  kernel_params: output of prepare_params() (bf16 w / f32 b)."""
    B = x.shape[0]
    TB, B_pad = _pick_batch_tiling(B)

    xb = x.astype(jnp.bfloat16)
    if B_pad != B:
        xb = jnp.pad(xb, ((0, B_pad - B), (0, 0)))

    flat = []
    in_specs = [pl.BlockSpec((TB, DIMS[0]), lambda i: (i, 0))]
    for w, b in kernel_params:
        flat += [w, b]
        # Constant index_map + single buffer: weights/biases stay resident
        # across batch tiles without reserving a second VMEM copy.
        in_specs.append(pl.BlockSpec(w.shape, lambda i: (0, 0),
                                     pipeline_mode=pl.Buffered(buffer_count=1)))
        in_specs.append(pl.BlockSpec(b.shape, lambda i: (0, 0),
                                     pipeline_mode=pl.Buffered(buffer_count=1)))

    out = pl.pallas_call(
        _ffnn_kernel,
        out_shape=jax.ShapeDtypeStruct((B_pad, PAD_OUT), jnp.float32),
        grid=(B_pad // TB,),
        in_specs=in_specs,
        out_specs=pl.BlockSpec((TB, PAD_OUT), lambda i: (i, 0)),
        compiler_params=pltpu.CompilerParams(
            dimension_semantics=("parallel",),
            vmem_limit_bytes=48 * 1024 * 1024,   # safe on v7x (64 MiB physical)
        ),
    )(xb, *flat)
    return out[:B, :NUM_CLASSES]


def init_params(key):
    """f32 params with PyTorch nn.Linear-style init; w: (in, out), b: (1, out)."""
    params = []
    for i in range(len(DIMS) - 1):
        fan_in, fan_out = DIMS[i], DIMS[i + 1]
        key, kw, kb = jax.random.split(key, 3)
        bound = 1.0 / (fan_in ** 0.5)
        w = jax.random.uniform(kw, (fan_in, fan_out), jnp.float32, -bound, bound)
        b = jax.random.uniform(kb, (1, fan_out), jnp.float32, -bound, bound)
        params.append((w, b))
    return params


def prepare_params(params_f32):
    """bf16 weights / f32 biases; final layer padded to a 128-lane output."""
    prepared = []
    n = len(params_f32)
    for i, (w, b) in enumerate(params_f32):
        wb = w.astype(jnp.bfloat16)
        bf = b.astype(jnp.float32)
        if i == n - 1:
            pad = PAD_OUT - w.shape[1]
            wb = jnp.pad(wb, ((0, 0), (0, pad)))
            bf = jnp.pad(bf, ((0, 0), (0, pad)), constant_values=NEG_BIG)
        prepared.append((wb, bf))
    return prepared


def reference_forward(x, kernel_params):
    """Pure-JAX reference using the exact same bf16 parameter/activation chain."""
    h = x.astype(jnp.bfloat16)
    for i, (w, b) in enumerate(kernel_params):
        z = jnp.dot(h, w, preferred_element_type=jnp.float32) + b
        if i < len(kernel_params) - 1:
            h = jnp.maximum(z, 0.0).astype(jnp.bfloat16)
        else:
            h = z
    return jax.nn.softmax(h, axis=1)[:, :NUM_CLASSES]


if __name__ == "__main__":
    key = jax.random.PRNGKey(0)
    kx, kp = jax.random.split(key)
    params = prepare_params(init_params(kp))

    # B=8: tiny single-tile path.  B=272: 2 parallel tiles + padded tail path.
    for B in (8, 272):
        x = jax.random.normal(jax.random.fold_in(kx, B), (B, DIMS[0]), jnp.float32)
        out = jax.block_until_ready(feedforward_nn(x, params))
        ref = reference_forward(x, params)
        assert out.shape == (B, NUM_CLASSES)
        assert jnp.allclose(out, ref, atol=2e-3, rtol=2e-3), "mismatch vs reference"
        assert jnp.allclose(jnp.sum(out, axis=1), 1.0, atol=1e-5), "rows must sum to 1"

    print("KERNEL_OK")
</pallas_src>

<mosaic_0001>
module attributes {stable_mosaic.version = 11 : i64} {
  func.func @_ffnn_kernel(%arg0: i32, %arg1: memref<16x512xbf16, #tpu.memory_space<vmem>>, %arg2: memref<512x2048xbf16, #tpu.memory_space<vmem>>, %arg3: memref<1x2048xf32, #tpu.memory_space<vmem>>, %arg4: memref<2048x1024xbf16, #tpu.memory_space<vmem>>, %arg5: memref<1x1024xf32, #tpu.memory_space<vmem>>, %arg6: memref<1024x512xbf16, #tpu.memory_space<vmem>>, %arg7: memref<1x512xf32, #tpu.memory_space<vmem>>, %arg8: memref<512x256xbf16, #tpu.memory_space<vmem>>, %arg9: memref<1x256xf32, #tpu.memory_space<vmem>>, %arg10: memref<256x128xbf16, #tpu.memory_space<vmem>>, %arg11: memref<1x128xf32, #tpu.memory_space<vmem>>, %arg12: memref<128x128xbf16, #tpu.memory_space<vmem>>, %arg13: memref<1x128xf32, #tpu.memory_space<vmem>>, %arg14: memref<16x128xf32, #tpu.memory_space<vmem>>) attributes {dimension_semantics = [#tpu.dimension_semantics<parallel>], iteration_bounds = array<i64: 1>, scalar_prefetch = 0 : i64, scratch_operands = 0 : i64, tpu.core_type = #tpu.core_type<tc>, window_params = [{transform_indices = @transform_0, window_bounds = array<i64: 16, 512>}, {pipeline_mode = #tpu.pipeline_mode<synchronous>, transform_indices = @transform_1, window_bounds = array<i64: 512, 2048>}, {pipeline_mode = #tpu.pipeline_mode<synchronous>, transform_indices = @transform_2, window_bounds = array<i64: 1, 2048>}, {pipeline_mode = #tpu.pipeline_mode<synchronous>, transform_indices = @transform_3, window_bounds = array<i64: 2048, 1024>}, {pipeline_mode = #tpu.pipeline_mode<synchronous>, transform_indices = @transform_4, window_bounds = array<i64: 1, 1024>}, {pipeline_mode = #tpu.pipeline_mode<synchronous>, transform_indices = @transform_5, window_bounds = array<i64: 1024, 512>}, {pipeline_mode = #tpu.pipeline_mode<synchronous>, transform_indices = @transform_6, window_bounds = array<i64: 1, 512>}, {pipeline_mode = #tpu.pipeline_mode<synchronous>, transform_indices = @transform_7, window_bounds = array<i64: 512, 256>}, {pipeline_mode = #tpu.pipeline_mode<synchronous>, transform_indices = @transform_8, window_bounds = array<i64: 1, 256>}, {pipeline_mode = #tpu.pipeline_mode<synchronous>, transform_indices = @transform_9, window_bounds = array<i64: 256, 128>}, {pipeline_mode = #tpu.pipeline_mode<synchronous>, transform_indices = @transform_10, window_bounds = array<i64: 1, 128>}, {pipeline_mode = #tpu.pipeline_mode<synchronous>, transform_indices = @transform_11, window_bounds = array<i64: 128, 128>}, {pipeline_mode = #tpu.pipeline_mode<synchronous>, transform_indices = @transform_12, window_bounds = array<i64: 1, 128>}, {transform_indices = @transform_13, window_bounds = array<i64: 16, 128>}]} {
    %c0 = arith.constant 0 : index
    %c0_0 = arith.constant 0 : index
    %0 = vector.load %arg1[%c0, %c0_0] : memref<16x512xbf16, #tpu.memory_space<vmem>>, vector<16x512xbf16>
    %c0_1 = arith.constant 0 : index
    %c0_2 = arith.constant 0 : index
    %1 = vector.load %arg2[%c0_1, %c0_2] : memref<512x2048xbf16, #tpu.memory_space<vmem>>, vector<512x2048xbf16>
    %cst = arith.constant dense<0.000000e+00> : vector<16x2048xf32>
    %2 = tpu.matmul %0, %1, %cst {dimension_numbers = #tpu.dot_dimension_numbers<[1], [0], [0], [1], [0, 0, 1, 1], [], []>} : vector<16x512xbf16>, vector<512x2048xbf16>, vector<16x2048xf32> -> vector<16x2048xf32>
    %c0_3 = arith.constant 0 : index
    %c0_4 = arith.constant 0 : index
    %3 = vector.load %arg3[%c0_3, %c0_4] : memref<1x2048xf32, #tpu.memory_space<vmem>>, vector<1x2048xf32>
    %4 = vector.broadcast %3 : vector<1x2048xf32> to vector<16x2048xf32>
    %5 = arith.addf %2, %4 : vector<16x2048xf32>
    %cst_5 = arith.constant 0.000000e+00 : f32
    %6 = vector.broadcast %cst_5 : f32 to vector<16x2048xf32>
    %7 = arith.maximumf %5, %6 : vector<16x2048xf32>
    %8 = arith.truncf %7 : vector<16x2048xf32> to vector<16x2048xbf16>
    %c0_6 = arith.constant 0 : index
    %c0_7 = arith.constant 0 : index
    %9 = vector.load %arg4[%c0_6, %c0_7] : memref<2048x1024xbf16, #tpu.memory_space<vmem>>, vector<2048x1024xbf16>
    %cst_8 = arith.constant dense<0.000000e+00> : vector<16x1024xf32>
    %10 = tpu.matmul %8, %9, %cst_8 {dimension_numbers = #tpu.dot_dimension_numbers<[1], [0], [0], [1], [0, 0, 1, 1], [], []>} : vector<16x2048xbf16>, vector<2048x1024xbf16>, vector<16x1024xf32> -> vector<16x1024xf32>
    %c0_9 = arith.constant 0 : index
    %c0_10 = arith.constant 0 : index
    %11 = vector.load %arg5[%c0_9, %c0_10] : memref<1x1024xf32, #tpu.memory_space<vmem>>, vector<1x1024xf32>
    %12 = vector.broadcast %11 : vector<1x1024xf32> to vector<16x1024xf32>
    %13 = arith.addf %10, %12 : vector<16x1024xf32>
    %cst_11 = arith.constant 0.000000e+00 : f32
    %14 = vector.broadcast %cst_11 : f32 to vector<16x1024xf32>
    %15 = arith.maximumf %13, %14 : vector<16x1024xf32>
    %16 = arith.truncf %15 : vector<16x1024xf32> to vector<16x1024xbf16>
    %c0_12 = arith.constant 0 : index
    %c0_13 = arith.constant 0 : index
    %17 = vector.load %arg6[%c0_12, %c0_13] : memref<1024x512xbf16, #tpu.memory_space<vmem>>, vector<1024x512xbf16>
    %cst_14 = arith.constant dense<0.000000e+00> : vector<16x512xf32>
    %18 = tpu.matmul %16, %17, %cst_14 {dimension_numbers = #tpu.dot_dimension_numbers<[1], [0], [0], [1], [0, 0, 1, 1], [], []>} : vector<16x1024xbf16>, vector<1024x512xbf16>, vector<16x512xf32> -> vector<16x512xf32>
    %c0_15 = arith.constant 0 : index
    %c0_16 = arith.constant 0 : index
    %19 = vector.load %arg7[%c0_15, %c0_16] : memref<1x512xf32, #tpu.memory_space<vmem>>, vector<1x512xf32>
    %20 = vector.broadcast %19 : vector<1x512xf32> to vector<16x512xf32>
    %21 = arith.addf %18, %20 : vector<16x512xf32>
    %cst_17 = arith.constant 0.000000e+00 : f32
    %22 = vector.broadcast %cst_17 : f32 to vector<16x512xf32>
    %23 = arith.maximumf %21, %22 : vector<16x512xf32>
    %24 = arith.truncf %23 : vector<16x512xf32> to vector<16x512xbf16>
    %c0_18 = arith.constant 0 : index
    %c0_19 = arith.constant 0 : index
    %25 = vector.load %arg8[%c0_18, %c0_19] : memref<512x256xbf16, #tpu.memory_space<vmem>>, vector<512x256xbf16>
    %cst_20 = arith.constant dense<0.000000e+00> : vector<16x256xf32>
    %26 = tpu.matmul %24, %25, %cst_20 {dimension_numbers = #tpu.dot_dimension_numbers<[1], [0], [0], [1], [0, 0, 1, 1], [], []>} : vector<16x512xbf16>, vector<512x256xbf16>, vector<16x256xf32> -> vector<16x256xf32>
    %c0_21 = arith.constant 0 : index
    %c0_22 = arith.constant 0 : index
    %27 = vector.load %arg9[%c0_21, %c0_22] : memref<1x256xf32, #tpu.memory_space<vmem>>, vector<1x256xf32>
    %28 = vector.broadcast %27 : vector<1x256xf32> to vector<16x256xf32>
    %29 = arith.addf %26, %28 : vector<16x256xf32>
    %cst_23 = arith.constant 0.000000e+00 : f32
    %30 = vector.broadcast %cst_23 : f32 to vector<16x256xf32>
    %31 = arith.maximumf %29, %30 : vector<16x256xf32>
    %32 = arith.truncf %31 : vector<16x256xf32> to vector<16x256xbf16>
    %c0_24 = arith.constant 0 : index
    %c0_25 = arith.constant 0 : index
    %33 = vector.load %arg10[%c0_24, %c0_25] : memref<256x128xbf16, #tpu.memory_space<vmem>>, vector<256x128xbf16>
    %cst_26 = arith.constant dense<0.000000e+00> : vector<16x128xf32>
    %34 = tpu.matmul %32, %33, %cst_26 {dimension_numbers = #tpu.dot_dimension_numbers<[1], [0], [0], [1], [0, 0, 1, 1], [], []>} : vector<16x256xbf16>, vector<256x128xbf16>, vector<16x128xf32> -> vector<16x128xf32>
    %c0_27 = arith.constant 0 : index
    %c0_28 = arith.constant 0 : index
    %35 = vector.load %arg11[%c0_27, %c0_28] : memref<1x128xf32, #tpu.memory_space<vmem>>, vector<1x128xf32>
    %36 = vector.broadcast %35 : vector<1x128xf32> to vector<16x128xf32>
    %37 = arith.addf %34, %36 : vector<16x128xf32>
    %cst_29 = arith.constant 0.000000e+00 : f32
    %38 = vector.broadcast %cst_29 : f32 to vector<16x128xf32>
    %39 = arith.maximumf %37, %38 : vector<16x128xf32>
    %40 = arith.truncf %39 : vector<16x128xf32> to vector<16x128xbf16>
    %c0_30 = arith.constant 0 : index
    %c0_31 = arith.constant 0 : index
    %41 = vector.load %arg12[%c0_30, %c0_31] : memref<128x128xbf16, #tpu.memory_space<vmem>>, vector<128x128xbf16>
    %cst_32 = arith.constant dense<0.000000e+00> : vector<16x128xf32>
    %42 = tpu.matmul %40, %41, %cst_32 {dimension_numbers = #tpu.dot_dimension_numbers<[1], [0], [0], [1], [0, 0, 1, 1], [], []>} : vector<16x128xbf16>, vector<128x128xbf16>, vector<16x128xf32> -> vector<16x128xf32>
    %c0_33 = arith.constant 0 : index
    %c0_34 = arith.constant 0 : index
    %43 = vector.load %arg13[%c0_33, %c0_34] : memref<1x128xf32, #tpu.memory_space<vmem>>, vector<1x128xf32>
    %44 = vector.broadcast %43 : vector<1x128xf32> to vector<16x128xf32>
    %45 = arith.addf %42, %44 : vector<16x128xf32>
    %cst_35 = arith.constant dense<0xFF800000> : vector<16xf32>
    %46 = vector.multi_reduction <maximumf>, %45, %cst_35 [1] : vector<16x128xf32> to vector<16xf32>
    %47 = vector.shape_cast %46 : vector<16xf32> to vector<16x1xf32>
    %48 = vector.broadcast %47 : vector<16x1xf32> to vector<16x128xf32>
    %49 = arith.subf %45, %48 : vector<16x128xf32>
    %50 = math.exp %49 : vector<16x128xf32>
    %cst_36 = arith.constant dense<0.000000e+00> : vector<16xf32>
    %51 = vector.multi_reduction <add>, %50, %cst_36 [1] : vector<16x128xf32> to vector<16xf32>
    %52 = vector.shape_cast %51 : vector<16xf32> to vector<16x1xf32>
    %53 = vector.broadcast %52 : vector<16x1xf32> to vector<16x128xf32>
    %54 = arith.divf %50, %53 : vector<16x128xf32>
    %c0_37 = arith.constant 0 : index
    %c0_38 = arith.constant 0 : index
    %55 = vector.load %arg14[%c0_37, %c0_38] : memref<16x128xf32, #tpu.memory_space<vmem>>, vector<16x128xf32>
    tpu.vector_store %arg14[%c0_37, %c0_38], %54 {strides = array<i32>} : memref<16x128xf32, #tpu.memory_space<vmem>>, vector<16x128xf32>,
    return
  }
  func.func @transform_0(%arg0: i32) -> (i32, i32) {
    %c0_i32 = arith.constant 0 : i32
    %c0_i32_0 = arith.constant 0 : i32
    return %arg0, %c0_i32 : i32, i32
  }
  func.func @transform_1(%arg0: i32) -> (i32, i32) {
    %c0_i32 = arith.constant 0 : i32
    %c0_i32_0 = arith.constant 0 : i32
    %c0_i32_1 = arith.constant 0 : i32
    return %c0_i32, %c0_i32_0 : i32, i32
  }
  func.func @transform_2(%arg0: i32) -> (i32, i32) {
    %c0_i32 = arith.constant 0 : i32
    %c0_i32_0 = arith.constant 0 : i32
    %c0_i32_1 = arith.constant 0 : i32
    return %c0_i32, %c0_i32_0 : i32, i32
  }
  func.func @transform_3(%arg0: i32) -> (i32, i32) {
    %c0_i32 = arith.constant 0 : i32
    %c0_i32_0 = arith.constant 0 : i32
    %c0_i32_1 = arith.constant 0 : i32
    return %c0_i32, %c0_i32_0 : i32, i32
  }
  func.func @transform_4(%arg0: i32) -> (i32, i32) {
    %c0_i32 = arith.constant 0 : i32
    %c0_i32_0 = arith.constant 0 : i32
    %c0_i32_1 = arith.constant 0 : i32
    return %c0_i32, %c0_i32_0 : i32, i32
  }
  func.func @transform_5(%arg0: i32) -> (i32, i32) {
    %c0_i32 = arith.constant 0 : i32
    %c0_i32_0 = arith.constant 0 : i32
    %c0_i32_1 = arith.constant 0 : i32
    return %c0_i32, %c0_i32_0 : i32, i32
  }
  func.func @transform_6(%arg0: i32) -> (i32, i32) {
    %c0_i32 = arith.constant 0 : i32
    %c0_i32_0 = arith.constant 0 : i32
    %c0_i32_1 = arith.constant 0 : i32
    return %c0_i32, %c0_i32_0 : i32, i32
  }
  func.func @transform_7(%arg0: i32) -> (i32, i32) {
    %c0_i32 = arith.constant 0 : i32
    %c0_i32_0 = arith.constant 0 : i32
    %c0_i32_1 = arith.constant 0 : i32
    return %c0_i32, %c0_i32_0 : i32, i32
  }
  func.func @transform_8(%arg0: i32) -> (i32, i32) {
    %c0_i32 = arith.constant 0 : i32
    %c0_i32_0 = arith.constant 0 : i32
    %c0_i32_1 = arith.constant 0 : i32
    return %c0_i32, %c0_i32_0 : i32, i32
  }
  func.func @transform_9(%arg0: i32) -> (i32, i32) {
    %c0_i32 = arith.constant 0 : i32
    %c0_i32_0 = arith.constant 0 : i32
    %c0_i32_1 = arith.constant 0 : i32
    return %c0_i32, %c0_i32_0 : i32, i32
  }
  func.func @transform_10(%arg0: i32) -> (i32, i32) {
    %c0_i32 = arith.constant 0 : i32
    %c0_i32_0 = arith.constant 0 : i32
    %c0_i32_1 = arith.constant 0 : i32
    return %c0_i32, %c0_i32_0 : i32, i32
  }
  func.func @transform_11(%arg0: i32) -> (i32, i32) {
    %c0_i32 = arith.constant 0 : i32
    %c0_i32_0 = arith.constant 0 : i32
    %c0_i32_1 = arith.constant 0 : i32
    return %c0_i32, %c0_i32_0 : i32, i32
  }
  func.func @transform_12(%arg0: i32) -> (i32, i32) {
    %c0_i32 = arith.constant 0 : i32
    %c0_i32_0 = arith.constant 0 : i32
    %c0_i32_1 = arith.constant 0 : i32
    return %c0_i32, %c0_i32_0 : i32, i32
  }
  func.func @transform_13(%arg0: i32) -> (i32, i32) {
    %c0_i32 = arith.constant 0 : i32
    %c0_i32_0 = arith.constant 0 : i32
    return %arg0, %c0_i32 : i32, i32
  }
}

</mosaic_0001>

<llo_original>
// kernel: feedforward_nn.1
$region0: #{feedforward_nn.1}
  #allocation0 [shape = 'u32[]', space=smem, size = 0x4, offset = 0x4, fixed_abs, tag = 'smem constant byte address 0x4 - core index']
  #allocation1 [shape = 'u32[144,128]{1,0:T(1,128)}', space=vmem, size = 0x12000, scoped, tag = 'internal scratch']
  %s0 = inlined_call_operand.vmem [shape: bf16[16,512], index: 0, kind: input, shape index: {}]
  %s1 = inlined_call_operand.hbm [shape: bf16[512,2048], index: 1, kind: input, shape index: {}]
  %s2 = inlined_call_operand.hbm [shape: f32[1,2048], index: 2, kind: input, shape index: {}]
  %s3 = inlined_call_operand.hbm [shape: bf16[2048,1024], index: 3, kind: input, shape index: {}]
  %s4 = inlined_call_operand.hbm [shape: f32[1,1024], index: 4, kind: input, shape index: {}]
  %s5 = inlined_call_operand.hbm [shape: bf16[1024,512], index: 5, kind: input, shape index: {}]
  %s6 = inlined_call_operand.hbm [shape: f32[1,512], index: 6, kind: input, shape index: {}]
  %s7 = inlined_call_operand.hbm [shape: bf16[512,256], index: 7, kind: input, shape index: {}]
  %s8 = inlined_call_operand.hbm [shape: f32[1,256], index: 8, kind: input, shape index: {}]
  %s9 = inlined_call_operand.hbm [shape: bf16[256,128], index: 9, kind: input, shape index: {}]
  %s10 = inlined_call_operand.hbm [shape: f32[1,128], index: 10, kind: input, shape index: {}]
  %s11 = inlined_call_operand.hbm [shape: bf16[128,128], index: 11, kind: input, shape index: {}]
  %s12 = inlined_call_operand.hbm [shape: f32[1,128], index: 12, kind: input, shape index: {}]
  %s13 = inlined_call_operand.vmem [shape: f32[16,128], index: 13, kind: output, shape index: {}]
  %s14 = sld [smem:[#allocation0]]
  $region110: #{feedforward_nn.1} parent=0
    _
  %s16 = ssub.s32 1, %s14
  %s17 = scalar_select 0, %s16, %s14
  $region1: #{feedforward_nn.1} parent=0
    #allocation2 [shape = 'u8[2097152]{0}', space=vmem, size = 0x200000, scoped, tag = 'input window, operand 1, single buffered']
    #allocation3 [shape = 's32[1]{0}', space=sflag, size = 0x4, scoped, tag = 'scoped memory for feedforward_nn.1']
    #allocation4 [shape = 'u8[8192]{0}', space=vmem, size = 0x2000, scoped, tag = 'input window, operand 2, single buffered']
    #allocation5 [shape = 's32[1]{0}', space=sflag, size = 0x4, scoped, tag = 'scoped memory for feedforward_nn.1']
    #allocation6 [shape = 'u8[4194304]{0}', space=vmem, size = 0x400000, scoped, tag = 'input window, operand 3, single buffered']
    #allocation7 [shape = 'u8[4096]{0}', space=vmem, size = 0x1000, scoped, tag = 'input window, operand 4, single buffered']
    #allocation8 [shape = 's32[1]{0}', space=sflag, size = 0x4, scoped, tag = 'scoped memory for feedforward_nn.1']
    #allocation9 [shape = 'u8[1048576]{0}', space=vmem, size = 0x100000, scoped, tag = 'input window, operand 5, single buffered']
    #allocation10 [shape = 'u8[2048]{0}', space=vmem, size = 0x800, scoped, tag = 'input window, operand 6, single buffered']
    #allocation11 [shape = 's32[1]{0}', space=sflag, size = 0x4, scoped, tag = 'scoped memory for feedforward_nn.1']
    #allocation12 [shape = 'u8[262144]{0}', space=vmem, size = 0x40000, scoped, tag = 'input window, operand 7, single buffered']
    #allocation13 [shape = 'u8[1024]{0}', space=vmem, size = 0x400, scoped, tag = 'input window, operand 8, single buffered']
    #allocation14 [shape = 's32[1]{0}', space=sflag, size = 0x4, scoped, tag = 'scoped memory for feedforward_nn.1']
    #allocation15 [shape = 'u8[65536]{0}', space=vmem, size = 0x10000, scoped, tag = 'input window, operand 9, single buffered']
    #allocation16 [shape = 'u8[512]{0}', space=vmem, size = 0x400, scoped, tag = 'input window, operand 10, single buffered']
    #allocation17 [shape = 's32[1]{0}', space=sflag, size = 0x4, scoped, tag = 'scoped memory for feedforward_nn.1']
    #allocation18 [shape = 'u8[32768]{0}', space=vmem, size = 0x8000, scoped, tag = 'input window, operand 11, single buffered']
    #allocation19 [shape = 'u8[512]{0}', space=vmem, size = 0x400, scoped, tag = 'input window, operand 12, single buffered']
    #allocation20 [shape = 's32[1]{0}', space=sflag, size = 0x4, scoped, tag = 'scoped memory for feedforward_nn.1']
    %18 = vsyncpa [#allocation3], 0
    %19 = vsyncpa [#allocation5], 0
    %20 = vsyncpa [#allocation8], 0
    %21 = vsyncpa [#allocation11], 0
    %22 = vsyncpa [#allocation14], 0
    %23 = vsyncpa [#allocation17], 0
    %24 = vsyncpa [#allocation20], 0
    // Predicated region
    $region2: #{feedforward_nn.1} parent=1 // pred_check
      _
    $region3: #{feedforward_nn.1} parent=1 // pred_check_branch
      %26 = sbr.rel (0) target = $region5
    $region4: #{feedforward_nn.1} parent=1 // pred_region
      _
    $region5: #{feedforward_nn.1} parent=1 // pred_fallthru
      _
    // Predicated region
    $region6: #{feedforward_nn.1} parent=1 // pred_check
      _
    $region7: #{feedforward_nn.1} parent=1 // pred_check_branch
      %28 = sbr.rel (0) target = $region9
    $region8: #{feedforward_nn.1} parent=1 // pred_region
      %s30 = ssub.s32 65536, 65536
      %31 = vsyncadd [#allocation3], %s30
      %s32 = sshll.u32 [#allocation2], 4
      %s33 = int_to_ptr.vmem [resolvable:$true] %s32
      %38 = dma.hbm_to_vmem [thread:$0]  %s1, 65536, %s33, [#allocation3], 1024, 1024, 64
    $region9: #{feedforward_nn.1} parent=1 // pred_fallthru
      _
    // Predicated region
    $region10: #{feedforward_nn.1} parent=1 // pred_check
      _
    $region11: #{feedforward_nn.1} parent=1 // pred_check_branch
      %40 = sbr.rel (0) target = $region13
    $region12: #{feedforward_nn.1} parent=1 // pred_region
      %s42 = ssub.s32 256, 256
      %43 = vsyncadd [#allocation5], %s42
      %s45 = sshll.u32 [#allocation4], 4
      %s46 = int_to_ptr.vmem [resolvable:$true] %s45
      %48 = dma.hbm_to_vmem [thread:$0]  %s2, 256, %s46, [#allocation5]
    $region13: #{feedforward_nn.1} parent=1 // pred_fallthru
      _
    // Predicated region
    $region14: #{feedforward_nn.1} parent=1 // pred_check
      _
    $region15: #{feedforward_nn.1} parent=1 // pred_check_branch
      %50 = sbr.rel (0) target = $region17
    $region16: #{feedforward_nn.1} parent=1 // pred_region
      %s52 = ssub.s32 131072, 131072
      %53 = vsyncadd [#allocation5], %s52
      %s54 = sshll.u32 [#allocation6], 4
      %s55 = int_to_ptr.vmem [resolvable:$true] %s54
      %60 = dma.hbm_to_vmem [thread:$0]  %s3, 131072, %s55, [#allocation5], 512, 512, 32
    $region17: #{feedforward_nn.1} parent=1 // pred_fallthru
      _
    // Predicated region
    $region18: #{feedforward_nn.1} parent=1 // pred_check
      _
    $region19: #{feedforward_nn.1} parent=1 // pred_check_branch
      %62 = sbr.rel (0) target = $region21
    $region20: #{feedforward_nn.1} parent=1 // pred_region
      %s64 = ssub.s32 128, 128
      %65 = vsyncadd [#allocation8], %s64
      %s67 = sshll.u32 [#allocation7], 4
      %s68 = int_to_ptr.vmem [resolvable:$true] %s67
      %70 = dma.hbm_to_vmem [thread:$0]  %s4, 128, %s68, [#allocation8]
    $region21: #{feedforward_nn.1} parent=1 // pred_fallthru
      _
    // Predicated region
    $region22: #{feedforward_nn.1} parent=1 // pred_check
      _
    $region23: #{feedforward_nn.1} parent=1 // pred_check_branch
      %72 = sbr.rel (0) target = $region25
    $region24: #{feedforward_nn.1} parent=1 // pred_region
      %s74 = ssub.s32 32768, 32768
      %75 = vsyncadd [#allocation8], %s74
      %s76 = sshll.u32 [#allocation9], 4
      %s77 = int_to_ptr.vmem [resolvable:$true] %s76
      %82 = dma.hbm_to_vmem [thread:$0]  %s5, 32768, %s77, [#allocation8], 256, 256, 16
    $region25: #{feedforward_nn.1} parent=1 // pred_fallthru
      _
    // Predicated region
    $region26: #{feedforward_nn.1} parent=1 // pred_check
      _
    $region27: #{feedforward_nn.1} parent=1 // pred_check_branch
      %84 = sbr.rel (0) target = $region29
    $region28: #{feedforward_nn.1} parent=1 // pred_region
      %s86 = ssub.s32 64, 64
      %87 = vsyncadd [#allocation11], %s86
      %s89 = sshll.u32 [#allocation10], 4
      %s90 = int_to_ptr.vmem [resolvable:$true] %s89
      %92 = dma.hbm_to_vmem [thread:$0]  %s6, 64, %s90, [#allocation11]
    $region29: #{feedforward_nn.1} parent=1 // pred_fallthru
      _
    // Predicated region
    $region30: #{feedforward_nn.1} parent=1 // pred_check
      _
    $region31: #{feedforward_nn.1} parent=1 // pred_check_branch
      %94 = sbr.rel (0) target = $region33
    $region32: #{feedforward_nn.1} parent=1 // pred_region
      %s96 = ssub.s32 8192, 8192
      %97 = vsyncadd [#allocation11], %s96
      %s98 = sshll.u32 [#allocation12], 4
      %s99 = int_to_ptr.vmem [resolvable:$true] %s98
      %104 = dma.hbm_to_vmem [thread:$0]  %s7, 8192, %s99, [#allocation11], 128, 128, 8
    $region33: #{feedforward_nn.1} parent=1 // pred_fallthru
      _
    // Predicated region
    $region34: #{feedforward_nn.1} parent=1 // pred_check
      _
    $region35: #{feedforward_nn.1} parent=1 // pred_check_branch
      %106 = sbr.rel (0) target = $region37
    $region36: #{feedforward_nn.1} parent=1 // pred_region
      %s108 = ssub.s32 32, 32
      %109 = vsyncadd [#allocation14], %s108
      %s111 = sshll.u32 [#allocation13], 4
      %s112 = int_to_ptr.vmem [resolvable:$true] %s111
      %114 = dma.hbm_to_vmem [thread:$0]  %s8, 32, %s112, [#allocation14]
    $region37: #{feedforward_nn.1} parent=1 // pred_fallthru
      _
    // Predicated region
    $region38: #{feedforward_nn.1} parent=1 // pred_check
      _
    $region39: #{feedforward_nn.1} parent=1 // pred_check_branch
      %116 = sbr.rel (0) target = $region41
    $region40: #{feedforward_nn.1} parent=1 // pred_region
      %s118 = ssub.s32 2048, 2048
      %119 = vsyncadd [#allocation14], %s118
      %s120 = sshll.u32 [#allocation15], 4
      %s121 = int_to_ptr.vmem [resolvable:$true] %s120
      %126 = dma.hbm_to_vmem [thread:$0]  %s9, 2048, %s121, [#allocation14], 64, 64, 4
    $region41: #{feedforward_nn.1} parent=1 // pred_fallthru
      _
    // Predicated region
    $region42: #{feedforward_nn.1} parent=1 // pred_check
      _
    $region43: #{feedforward_nn.1} parent=1 // pred_check_branch
      %128 = sbr.rel (0) target = $region45
    $region44: #{feedforward_nn.1} parent=1 // pred_region
      %s130 = ssub.s32 16, 16
      %131 = vsyncadd [#allocation17], %s130
      %s133 = sshll.u32 [#allocation16], 4
      %s134 = int_to_ptr.vmem [resolvable:$true] %s133
      %136 = dma.hbm_to_vmem [thread:$0]  %s10, 16, %s134, [#allocation17]
    $region45: #{feedforward_nn.1} parent=1 // pred_fallthru
      _
    // Predicated region
    $region46: #{feedforward_nn.1} parent=1 // pred_check
      _
    $region47: #{feedforward_nn.1} parent=1 // pred_check_branch
      %138 = sbr.rel (0) target = $region49
    $region48: #{feedforward_nn.1} parent=1 // pred_region
      %s140 = ssub.s32 1024, 1024
      %141 = vsyncadd [#allocation17], %s140
      %s142 = sshll.u32 [#allocation18], 4
      %s143 = int_to_ptr.vmem [resolvable:$true] %s142
      %148 = dma.hbm_to_vmem [thread:$0]  %s11, 1024, %s143, [#allocation17], 64, 64, 4
    $region49: #{feedforward_nn.1} parent=1 // pred_fallthru
      _
    // Predicated region
    $region50: #{feedforward_nn.1} parent=1 // pred_check
      _
    $region51: #{feedforward_nn.1} parent=1 // pred_check_branch
      %150 = sbr.rel (0) target = $region53
    $region52: #{feedforward_nn.1} parent=1 // pred_region
      %s152 = ssub.s32 16, 16
      %153 = vsyncadd [#allocation20], %s152
      %s155 = sshll.u32 [#allocation19], 4
      %s156 = int_to_ptr.vmem [resolvable:$true] %s155
      %158 = dma.hbm_to_vmem [thread:$0]  %s12, 16, %s156, [#allocation20]
    $region53: #{feedforward_nn.1} parent=1 // pred_fallthru
      _
    // Predicated region
    $region54: #{feedforward_nn.1} parent=1 // pred_check
      _
    $region55: #{feedforward_nn.1} parent=1 // pred_check_branch
      %160 = sbr.rel (0) target = $region57
    $region56: #{feedforward_nn.1} parent=1 // pred_region
      %161 = dma.done [#allocation3], 65536
    $region57: #{feedforward_nn.1} parent=1 // pred_fallthru
      _
    // Predicated region
    $region58: #{feedforward_nn.1} parent=1 // pred_check
      _
    $region59: #{feedforward_nn.1} parent=1 // pred_check_branch
      %163 = sbr.rel (0) target = $region61
    $region60: #{feedforward_nn.1} parent=1 // pred_region
      %164 = dma.done [#allocation5], 256
    $region61: #{feedforward_nn.1} parent=1 // pred_fallthru
      _
    // Predicated region
    $region62: #{feedforward_nn.1} parent=1 // pred_check
      _
    $region63: #{feedforward_nn.1} parent=1 // pred_check_branch
      %166 = sbr.rel (0) target = $region65
    $region64: #{feedforward_nn.1} parent=1 // pred_region
      %167 = dma.done [#allocation5], 131072
    $region65: #{feedforward_nn.1} parent=1 // pred_fallthru
      _
    // Predicated region
    $region66: #{feedforward_nn.1} parent=1 // pred_check
      _
    $region67: #{feedforward_nn.1} parent=1 // pred_check_branch
      %169 = sbr.rel (0) target = $region69
    $region68: #{feedforward_nn.1} parent=1 // pred_region
      %170 = dma.done [#allocation8], 128
    $region69: #{feedforward_nn.1} parent=1 // pred_fallthru
      _
    // Predicated region
    $region70: #{feedforward_nn.1} parent=1 // pred_check
      _
    $region71: #{feedforward_nn.1} parent=1 // pred_check_branch
      %172 = sbr.rel (0) target = $region73
    $region72: #{feedforward_nn.1} parent=1 // pred_region
      %173 = dma.done [#allocation8], 32768
    $region73: #{feedforward_nn.1} parent=1 // pred_fallthru
      _
    // Predicated region
    $region74: #{feedforward_nn.1} parent=1 // pred_check
      _
    $region75: #{feedforward_nn.1} parent=1 // pred_check_branch
      %175 = sbr.rel (0) target = $region77
    $region76: #{feedforward_nn.1} parent=1 // pred_region
      %176 = dma.done [#allocation11], 64
    $region77: #{feedforward_nn.1} parent=1 // pred_fallthru
      _
    // Predicated region
    $region78: #{feedforward_nn.1} parent=1 // pred_check
      _
    $region79: #{feedforward_nn.1} parent=1 // pred_check_branch
      %178 = sbr.rel (0) target = $region81
    $region80: #{feedforward_nn.1} parent=1 // pred_region
      %179 = dma.done [#allocation11], 8192
    $region81: #{feedforward_nn.1} parent=1 // pred_fallthru
      _
    // Predicated region
    $region82: #{feedforward_nn.1} parent=1 // pred_check
      _
    $region83: #{feedforward_nn.1} parent=1 // pred_check_branch
      %181 = sbr.rel (0) target = $region85
    $region84: #{feedforward_nn.1} parent=1 // pred_region
      %182 = dma.done [#allocation14], 32
    $region85: #{feedforward_nn.1} parent=1 // pred_fallthru
      _
    // Predicated region
    $region86: #{feedforward_nn.1} parent=1 // pred_check
      _
    $region87: #{feedforward_nn.1} parent=1 // pred_check_branch
      %184 = sbr.rel (0) target = $region89
    $region88: #{feedforward_nn.1} parent=1 // pred_region
      %185 = dma.done [#allocation14], 2048
    $region89: #{feedforward_nn.1} parent=1 // pred_fallthru
      _
    // Predicated region
    $region90: #{feedforward_nn.1} parent=1 // pred_check
      _
    $region91: #{feedforward_nn.1} parent=1 // pred_check_branch
      %187 = sbr.rel (0) target = $region93
    $region92: #{feedforward_nn.1} parent=1 // pred_region
      %188 = dma.done [#allocation17], 16
    $region93: #{feedforward_nn.1} parent=1 // pred_fallthru
      _
    // Predicated region
    $region94: #{feedforward_nn.1} parent=1 // pred_check
      _
    $region95: #{feedforward_nn.1} parent=1 // pred_check_branch
      %190 = sbr.rel (0) target = $region97
    $region96: #{feedforward_nn.1} parent=1 // pred_region
      %191 = dma.done [#allocation17], 1024
    $region97: #{feedforward_nn.1} parent=1 // pred_fallthru
      _
    // Predicated region
    $region98: #{feedforward_nn.1} parent=1 // pred_check
      _
    $region99: #{feedforward_nn.1} parent=1 // pred_check_branch
      %193 = sbr.rel (0) target = $region101
    $region100: #{feedforward_nn.1} parent=1 // pred_region
      %194 = dma.done [#allocation20], 16
    $region101: #{feedforward_nn.1} parent=1 // pred_fallthru
      _
    %v196 = vld [vmem:[%s0] sm:$0xff]
    %v197 = vld [vmem:[%s0 + $0x8] sm:$0xff]
    %v198 = vld [vmem:[%s0 + $0x10] sm:$0xff]
    %v199 = vld [vmem:[%s0 + $0x18] sm:$0xff]
    %v200 = vld [vmem:[#allocation2] sm:$0xff]
    %v201 = vld [vmem:[#allocation2 + $0x8] sm:$0xff]
    %v202 = vld [vmem:[#allocation2 + $0x10] sm:$0xff]
    %v203 = vld [vmem:[#allocation2 + $0x18] sm:$0xff]
    %v204 = vld [vmem:[#allocation2 + $0x20] sm:$0xff]
    %v205 = vld [vmem:[#allocation2 + $0x28] sm:$0xff]
    %v206 = vld [vmem:[#allocation2 + $0x30] sm:$0xff]
    %v207 = vld [vmem:[#allocation2 + $0x38] sm:$0xff]
    %v208 = vld [vmem:[#allocation2 + $0x40] sm:$0xff]
    %v209 = vld [vmem:[#allocation2 + $0x48] sm:$0xff]
    %v210 = vld [vmem:[#allocation2 + $0x50] sm:$0xff]
    %v211 = vld [vmem:[#allocation2 + $0x58] sm:$0xff]
    %v212 = vld [vmem:[#allocation2 + $0x60] sm:$0xff]
    %v213 = vld [vmem:[#allocation2 + $0x68] sm:$0xff]
    %v214 = vld [vmem:[#allocation2 + $0x70] sm:$0xff]
    %v215 = vld [vmem:[#allocation2 + $0x78] sm:$0xff]
    %v216 = vld [vmem:[#allocation2 + $0x80] sm:$0xff]
    %v217 = vld [vmem:[#allocation2 + $0x88] sm:$0xff]
    %v218 = vld [vmem:[#allocation2 + $0x90] sm:$0xff]
    %v219 = vld [vmem:[#allocation2 + $0x98] sm:$0xff]
    %v220 = vld [vmem:[#allocation2 + $0xa0] sm:$0xff]
    %v221 = vld [vmem:[#allocation2 + $0xa8] sm:$0xff]
    %v222 = vld [vmem:[#allocation2 + $0xb0] sm:$0xff]
    %v223 = vld [vmem:[#allocation2 + $0xb8] sm:$0xff]
    %v224 = vld [vmem:[#allocation2 + $0xc0] sm:$0xff]
    %v225 = vld [vmem:[#allocation2 + $0xc8] sm:$0xff]
    %v226 = vld [vmem:[#allocation2 + $0xd0] sm:$0xff]
    %v227 = vld [vmem:[#allocation2 + $0xd8] sm:$0xff]
    %v228 = vld [vmem:[#allocation2 + $0xe0] sm:$0xff]
    %v229 = vld [vmem:[#allocation2 + $0xe8] sm:$0xff]
    %v230 = vld [vmem:[#allocation2 + $0xf0] sm:$0xff]
    %v231 = vld [vmem:[#allocation2 + $0xf8] sm:$0xff]
    %v232 = vld [vmem:[#allocation2 + $0x100] sm:$0xff]
    %v233 = vld [vmem:[#allocation2 + $0x108] sm:$0xff]
    %v234 = vld [vmem:[#allocation2 + $0x110] sm:$0xff]
    %v235 = vld [vmem:[#allocation2 + $0x118] sm:$0xff]
    %v236 = vld [vmem:[#allocation2 + $0x120] sm:$0xff]
    %v237 = vld [vmem:[#allocation2 + $0x128] sm:$0xff]
    %v238 = vld [vmem:[#allocation2 + $0x130] sm:$0xff]
    %v239 = vld [vmem:[#allocation2 + $0x138] sm:$0xff]
    %v240 = vld [vmem:[#allocation2 + $0x140] sm:$0xff]
    %v241 = vld [vmem:[#allocation2 + $0x148] sm:$0xff]
    %v242 = vld [vmem:[#allocation2 + $0x150] sm:$0xff]
    %v243 = vld [vmem:[#allocation2 + $0x158] sm:$0xff]
    %v244 = vld [vmem:[#allocation2 + $0x160] sm:$0xff]
    %v245 = vld [vmem:[#allocation2 + $0x168] sm:$0xff]
    %v246 = vld [vmem:[#allocation2 + $0x170] sm:$0xff]
    %v247 = vld [vmem:[#allocation2 + $0x178] sm:$0xff]
    %v248 = vld [vmem:[#allocation2 + $0x180] sm:$0xff]
    %v249 = vld [vmem:[#allocation2 + $0x188] sm:$0xff]
    %v250 = vld [vmem:[#allocation2 + $0x190] sm:$0xff]
    %v251 = vld [vmem:[#allocation2 + $0x198] sm:$0xff]
    %v252 = vld [vmem:[#allocation2 + $0x1a0] sm:$0xff]
    %v253 = vld [vmem:[#allocation2 + $0x1a8] sm:$0xff]
    %v254 = vld [vmem:[#allocation2 + $0x1b0] sm:$0xff]
    %v255 = vld [vmem:[#allocation2 + $0x1b8] sm:$0xff]
    %v256 = vld [vmem:[#allocation2 + $0x1c0] sm:$0xff]
    %v257 = vld [vmem:[#allocation2 + $0x1c8] sm:$0xff]
    %v258 = vld [vmem:[#allocation2 + $0x1d0] sm:$0xff]
    %v259 = vld [vmem:[#allocation2 + $0x1d8] sm:$0xff]
    %v260 = vld [vmem:[#allocation2 + $0x1e0] sm:$0xff]
    %v261 = vld [vmem:[#allocation2 + $0x1e8] sm:$0xff]
    %v262 = vld [vmem:[#allocation2 + $0x1f0] sm:$0xff]
    %v263 = vld [vmem:[#allocation2 + $0x1f8] sm:$0xff]
    %v264 = vld [vmem:[#allocation2 + $0x200] sm:$0xff]
    %v265 = vld [vmem:[#allocation2 + $0x208] sm:$0xff]
    %v266 = vld [vmem:[#allocation2 + $0x210] sm:$0xff]
    %v267 = vld [vmem:[#allocation2 + $0x218] sm:$0xff]
    %v268 = vld [vmem:[#allocation2 + $0x220] sm:$0xff]
    %v269 = vld [vmem:[#allocation2 + $0x228] sm:$0xff]
    %v270 = vld [vmem:[#allocation2 + $0x230] sm:$0xff]
    %v271 = vld [vmem:[#allocation2 + $0x238] sm:$0xff]
    %v272 = vld [vmem:[#allocation2 + $0x240] sm:$0xff]
    %v273 = vld [vmem:[#allocation2 + $0x248] sm:$0xff]
    %v274 = vld [vmem:[#allocation2 + $0x250] sm:$0xff]
    %v275 = vld [vmem:[#allocation2 + $0x258] sm:$0xff]
    %v276 = vld [vmem:[#allocation2 + $0x260] sm:$0xff]
    %v277 = vld [vmem:[#allocation2 + $0x268] sm:$0xff]
    %v278 = vld [vmem:[#allocation2 + $0x270] sm:$0xff]
    %v279 = vld [vmem:[#allocation2 + $0x278] sm:$0xff]
    %v280 = vld [vmem:[#allocation2 + $0x280] sm:$0xff]
    %v281 = vld [vmem:[#allocation2 + $0x288] sm:$0xff]
    %v282 = vld [vmem:[#allocation2 + $0x290] sm:$0xff]
    %v283 = vld [vmem:[#allocation2 + $0x298] sm:$0xff]
    %v284 = vld [vmem:[#allocation2 + $0x2a0] sm:$0xff]
    %v285 = vld [vmem:[#allocation2 + $0x2a8] sm:$0xff]
    %v286 = vld [vmem:[#allocation2 + $0x2b0] sm:$0xff]
    %v287 = vld [vmem:[#allocation2 + $0x2b8] sm:$0xff]
    %v288 = vld [vmem:[#allocation2 + $0x2c0] sm:$0xff]
    %v289 = vld [vmem:[#allocation2 + $0x2c8] sm:$0xff]
    %v290 = vld [vmem:[#allocation2 + $0x2d0] sm:$0xff]
    %v291 = vld [vmem:[#allocation2 + $0x2d8] sm:$0xff]
    %v292 = vld [vmem:[#allocation2 + $0x2e0] sm:$0xff]
    %v293 = vld [vmem:[#allocation2 + $0x2e8] sm:$0xff]
    %v294 = vld [vmem:[#allocation2 + $0x2f0] sm:$0xff]
    %v295 = vld [vmem:[#allocation2 + $0x2f8] sm:$0xff]
    %v296 = vld [vmem:[#allocation2 + $0x300] sm:$0xff]
    %v297 = vld [vmem:[#allocation2 + $0x308] sm:$0xff]
    %v298 = vld [vmem:[#allocation2 + $0x310] sm:$0xff]
    %v299 = vld [vmem:[#allocation2 + $0x318] sm:$0xff]
    %v300 = vld [vmem:[#allocation2 + $0x320] sm:$0xff]
    %v301 = vld [vmem:[#allocation2 + $0x328] sm:$0xff]
    %v302 = vld [vmem:[#allocation2 + $0x330] sm:$0xff]
    %v303 = vld [vmem:[#allocation2 + $0x338] sm:$0xff]
    %v304 = vld [vmem:[#allocation2 + $0x340] sm:$0xff]
    %v305 = vld [vmem:[#allocation2 + $0x348] sm:$0xff]
    %v306 = vld [vmem:[#allocation2 + $0x350] sm:$0xff]
    %v307 = vld [vmem:[#allocation2 + $0x358] sm:$0xff]
    %v308 = vld [vmem:[#allocation2 + $0x360] sm:$0xff]
    %v309 = vld [vmem:[#allocation2 + $0x368] sm:$0xff]
    %v310 = vld [vmem:[#allocation2 + $0x370] sm:$0xff]
    %v311 = vld [vmem:[#allocation2 + $0x378] sm:$0xff]
    %v312 = vld [vmem:[#allocation2 + $0x380] sm:$0xff]
    %v313 = vld [vmem:[#allocation2 + $0x388] sm:$0xff]
    %v314 = vld [vmem:[#allocation2 + $0x390] sm:$0xff]
    %v315 = vld [vmem:[#allocation2 + $0x398] sm:$0xff]
    %v316 = vld [vmem:[#allocation2 + $0x3a0] sm:$0xff]
    %v317 = vld [vmem:[#allocation2 + $0x3a8] sm:$0xff]
    %v318 = vld [vmem:[#allocation2 + $0x3b0] sm:$0xff]
    %v319 = vld [vmem:[#allocation2 + $0x3b8] sm:$0xff]
    %v320 = vld [vmem:[#allocation2 + $0x3c0] sm:$0xff]
    %v321 = vld [vmem:[#allocation2 + $0x3c8] sm:$0xff]
    %v322 = vld [vmem:[#allocation2 + $0x3d0] sm:$0xff]
    %v323 = vld [vmem:[#allocation2 + $0x3d8] sm:$0xff]
    %v324 = vld [vmem:[#allocation2 + $0x3e0] sm:$0xff]
    %v325 = vld [vmem:[#allocation2 + $0x3e8] sm:$0xff]
    %v326 = vld [vmem:[#allocation2 + $0x3f0] sm:$0xff]
    %v327 = vld [vmem:[#allocation2 + $0x3f8] sm:$0xff]
    %v328 = vld [vmem:[#allocation2 + $0x400] sm:$0xff]
    %v329 = vld [vmem:[#allocation2 + $0x408] sm:$0xff]
    %v330 = vld [vmem:[#allocation2 + $0x410] sm:$0xff]
    %v331 = vld [vmem:[#allocation2 + $0x418] sm:$0xff]
    %v332 = vld [vmem:[#allocation2 + $0x420] sm:$0xff]
    %v333 = vld [vmem:[#allocation2 + $0x428] sm:$0xff]
    %v334 = vld [vmem:[#allocation2 + $0x430] sm:$0xff]
    %v335 = vld [vmem:[#allocation2 + $0x438] sm:$0xff]
    %v336 = vld [vmem:[#allocation2 + $0x440] sm:$0xff]
    %v337 = vld [vmem:[#allocation2 + $0x448] sm:$0xff]
    %v338 = vld [vmem:[#allocation2 + $0x450] sm:$0xff]
    %v339 = vld [vmem:[#allocation2 + $0x458] sm:$0xff]
    %v340 = vld [vmem:[#allocation2 + $0x460] sm:$0xff]
    %v341 = vld [vmem:[#allocation2 + $0x468] sm:$0xff]
    %v342 = vld [vmem:[#allocation2 + $0x470] sm:$0xff]
    %v343 = vld [vmem:[#allocation2 + $0x478] sm:$0xff]
    %v344 = vld [vmem:[#allocation2 + $0x480] sm:$0xff]
    %v345 = vld [vmem:[#allocation2 + $0x488] sm:$0xff]
    %v346 = vld [vmem:[#allocation2 + $0x490] sm:$0xff]
    %v347 = vld [vmem:[#allocation2 + $0x498] sm:$0xff]
    %v348 = vld [vmem:[#allocation2 + $0x4a0] sm:$0xff]
    %v349 = vld [vmem:[#allocation2 + $0x4a8] sm:$0xff]
    %v350 = vld [vmem:[#allocation2 + $0x4b0] sm:$0xff]
    %v351 = vld [vmem:[#allocation2 + $0x4b8] sm:$0xff]
    %v352 = vld [vmem:[#allocation2 + $0x4c0] sm:$0xff]
    %v353 = vld [vmem:[#allocation2 + $0x4c8] sm:$0xff]
    %v354 = vld [vmem:[#allocation2 + $0x4d0] sm:$0xff]
    %v355 = vld [vmem:[#allocation2 + $0x4d8] sm:$0xff]
    %v356 = vld [vmem:[#allocation2 + $0x4e0] sm:$0xff]
    %v357 = vld [vmem:[#allocation2 + $0x4e8] sm:$0xff]
    %v358 = vld [vmem:[#allocation2 + $0x4f0] sm:$0xff]
    %v359 = vld [vmem:[#allocation2 + $0x4f8] sm:$0xff]
    %v360 = vld [vmem:[#allocation2 + $0x500] sm:$0xff]
    %v361 = vld [vmem:[#allocation2 + $0x508] sm:$0xff]
    %v362 = vld [vmem:[#allocation2 + $0x510] sm:$0xff]
    %v363 = vld [vmem:[#allocation2 + $0x518] sm:$0xff]
    %v364 = vld [vmem:[#allocation2 + $0x520] sm:$0xff]
    %v365 = vld [vmem:[#allocation2 + $0x528] sm:$0xff]
    %v366 = vld [vmem:[#allocation2 + $0x530] sm:$0xff]
    %v367 = vld [vmem:[#allocation2 + $0x538] sm:$0xff]
    %v368 = vld [vmem:[#allocation2 + $0x540] sm:$0xff]
    %v369 = vld [vmem:[#allocation2 + $0x548] sm:$0xff]
    %v370 = vld [vmem:[#allocation2 + $0x550] sm:$0xff]
    %v371 = vld [vmem:[#allocation2 + $0x558] sm:$0xff]
    %v372 = vld [vmem:[#allocation2 + $0x560] sm:$0xff]
    %v373 = vld [vmem:[#allocation2 + $0x568] sm:$0xff]
    %v374 = vld [vmem:[#allocation2 + $0x570] sm:$0xff]
    %v375 = vld [vmem:[#allocation2 + $0x578] sm:$0xff]
    %v376 = vld [vmem:[#allocation2 + $0x580] sm:$0xff]
    %v377 = vld [vmem:[#allocation2 + $0x588] sm:$0xff]
    %v378 = vld [vmem:[#allocation2 + $0x590] sm:$0xff]
    %v379 = vld [vmem:[#allocation2 + $0x598] sm:$0xff]
    %v380 = vld [vmem:[#allocation2 + $0x5a0] sm:$0xff]
    %v381 = vld [vmem:[#allocation2 + $0x5a8] sm:$0xff]
    %v382 = vld [vmem:[#allocation2 + $0x5b0] sm:$0xff]
    %v383 = vld [vmem:[#allocation2 + $0x5b8] sm:$0xff]
    %v384 = vld [vmem:[#allocation2 + $0x5c0] sm:$0xff]
    %v385 = vld [vmem:[#allocation2 + $0x5c8] sm:$0xff]
    %v386 = vld [vmem:[#allocation2 + $0x5d0] sm:$0xff]
    %v387 = vld [vmem:[#allocation2 + $0x5d8] sm:$0xff]
    %v388 = vld [vmem:[#allocation2 + $0x5e0] sm:$0xff]
    %v389 = vld [vmem:[#allocation2 + $0x5e8] sm:$0xff]
    %v390 = vld [vmem:[#allocation2 + $0x5f0] sm:$0xff]
    %v391 = vld [vmem:[#allocation2 + $0x5f8] sm:$0xff]
    %v392 = vld [vmem:[#allocation2 + $0x600] sm:$0xff]
    %v393 = vld [vmem:[#allocation2 + $0x608] sm:$0xff]
    %v394 = vld [vmem:[#allocation2 + $0x610] sm:$0xff]
    %v395 = vld [vmem:[#allocation2 + $0x618] sm:$0xff]
    %v396 = vld [vmem:[#allocation2 + $0x620] sm:$0xff]
    %v397 = vld [vmem:[#allocation2 + $0x628] sm:$0xff]
    %v398 = vld [vmem:[#allocation2 + $0x630] sm:$0xff]
    %v399 = vld [vmem:[#allocation2 + $0x638] sm:$0xff]
    %v400 = vld [vmem:[#allocation2 + $0x640] sm:$0xff]
    %v401 = vld [vmem:[#allocation2 + $0x648] sm:$0xff]
    %v402 = vld [vmem:[#allocation2 + $0x650] sm:$0xff]
    %v403 = vld [vmem:[#allocation2 + $0x658] sm:$0xff]
    %v404 = vld [vmem:[#allocation2 + $0x660] sm:$0xff]
    %v405 = vld [vmem:[#allocation2 + $0x668] sm:$0xff]
    %v406 = vld [vmem:[#allocation2 + $0x670] sm:$0xff]
    %v407 = vld [vmem:[#allocation2 + $0x678] sm:$0xff]
    %v408 = vld [vmem:[#allocation2 + $0x680] sm:$0xff]
    %v409 = vld [vmem:[#allocation2 + $0x688] sm:$0xff]
    %v410 = vld [vmem:[#allocation2 + $0x690] sm:$0xff]
    %v411 = vld [vmem:[#allocation2 + $0x698] sm:$0xff]
    %v412 = vld [vmem:[#allocation2 + $0x6a0] sm:$0xff]
    %v413 = vld [vmem:[#allocation2 + $0x6a8] sm:$0xff]
    %v414 = vld [vmem:[#allocation2 + $0x6b0] sm:$0xff]
    %v415 = vld [vmem:[#allocation2 + $0x6b8] sm:$0xff]
    %v416 = vld [vmem:[#allocation2 + $0x6c0] sm:$0xff]
    %v417 = vld [vmem:[#allocation2 + $0x6c8] sm:$0xff]
    %v418 = vld [vmem:[#allocation2 + $0x6d0] sm:$0xff]
    %v419 = vld [vmem:[#allocation2 + $0x6d8] sm:$0xff]
    %v420 = vld [vmem:[#allocation2 + $0x6e0] sm:$0xff]
    %v421 = vld [vmem:[#allocation2 + $0x6e8] sm:$0xff]
    %v422 = vld [vmem:[#allocation2 + $0x6f0] sm:$0xff]
    %v423 = vld [vmem:[#allocation2 + $0x6f8] sm:$0xff]
    %v424 = vld [vmem:[#allocation2 + $0x700] sm:$0xff]
    %v425 = vld [vmem:[#allocation2 + $0x708] sm:$0xff]
    %v426 = vld [vmem:[#allocation2 + $0x710] sm:$0xff]
    %v427 = vld [vmem:[#allocation2 + $0x718] sm:$0xff]
    %v428 = vld [vmem:[#allocation2 + $0x720] sm:$0xff]
    %v429 = vld [vmem:[#allocation2 + $0x728] sm:$0xff]
    %v430 = vld [vmem:[#allocation2 + $0x730] sm:$0xff]
    %v431 = vld [vmem:[#allocation2 + $0x738] sm:$0xff]
    %v432 = vld [vmem:[#allocation2 + $0x740] sm:$0xff]
    %v433 = vld [vmem:[#allocation2 + $0x748] sm:$0xff]
    %v434 = vld [vmem:[#allocation2 + $0x750] sm:$0xff]
    %v435 = vld [vmem:[#allocation2 + $0x758] sm:$0xff]
    %v436 = vld [vmem:[#allocation2 + $0x760] sm:$0xff]
    %v437 = vld [vmem:[#allocation2 + $0x768] sm:$0xff]
    %v438 = vld [vmem:[#allocation2 + $0x770] sm:$0xff]
    %v439 = vld [vmem:[#allocation2 + $0x778] sm:$0xff]
    %v440 = vld [vmem:[#allocation2 + $0x780] sm:$0xff]
    %v441 = vld [vmem:[#allocation2 + $0x788] sm:$0xff]
    %v442 = vld [vmem:[#allocation2 + $0x790] sm:$0xff]
    %v443 = vld [vmem:[#allocation2 + $0x798] sm:$0xff]
    %v444 = vld [vmem:[#allocation2 + $0x7a0] sm:$0xff]
    %v445 = vld [vmem:[#allocation2 + $0x7a8] sm:$0xff]
    %v446 = vld [vmem:[#allocation2 + $0x7b0] sm:$0xff]
    %v447 = vld [vmem:[#allocation2 + $0x7b8] sm:$0xff]
    %v448 = vld [vmem:[#allocation2 + $0x7c0] sm:$0xff]
    %v449 = vld [vmem:[#allocation2 + $0x7c8] sm:$0xff]
    %v450 = vld [vmem:[#allocation2 + $0x7d0] sm:$0xff]
    %v451 = vld [vmem:[#allocation2 + $0x7d8] sm:$0xff]
    %v452 = vld [vmem:[#allocation2 + $0x7e0] sm:$0xff]
    %v453 = vld [vmem:[#allocation2 + $0x7e8] sm:$0xff]
    %v454 = vld [vmem:[#allocation2 + $0x7f0] sm:$0xff]
    %v455 = vld [vmem:[#allocation2 + $0x7f8] sm:$0xff]
    %v456 = vld [vmem:[#allocation2 + $0x800] sm:$0xff]
    %v457 = vld [vmem:[#allocation2 + $0x808] sm:$0xff]
    %v458 = vld [vmem:[#allocation2 + $0x810] sm:$0xff]
    %v459 = vld [vmem:[#allocation2 + $0x818] sm:$0xff]
    %v460 = vld [vmem:[#allocation2 + $0x820] sm:$0xff]
    %v461 = vld [vmem:[#allocation2 + $0x828] sm:$0xff]
    %v462 = vld [vmem:[#allocation2 + $0x830] sm:$0xff]
    %v463 = vld [vmem:[#allocation2 + $0x838] sm:$0xff]
    %v464 = vld [vmem:[#allocation2 + $0x840] sm:$0xff]
    %v465 = vld [vmem:[#allocation2 + $0x848] sm:$0xff]
    %v466 = vld [vmem:[#allocation2 + $0x850] sm:$0xff]
    %v467 = vld [vmem:[#allocation2 + $0x858] sm:$0xff]
    %v468 = vld [vmem:[#allocation2 + $0x860] sm:$0xff]
    %v469 = vld [vmem:[#allocation2 + $0x868] sm:$0xff]
    %v470 = vld [vmem:[#allocation2 + $0x870] sm:$0xff]
    %v471 = vld [vmem:[#allocation2 + $0x878] sm:$0xff]
    %v472 = vld [vmem:[#allocation2 + $0x880] sm:$0xff]
    %v473 = vld [vmem:[#allocation2 + $0x888] sm:$0xff]
    %v474 = vld [vmem:[#allocation2 + $0x890] sm:$0xff]
    %v475 = vld [vmem:[#allocation2 + $0x898] sm:$0xff]
    %v476 = vld [vmem:[#allocation2 + $0x8a0] sm:$0xff]
    %v477 = vld [vmem:[#allocation2 + $0x8a8] sm:$0xff]
    %v478 = vld [vmem:[#allocation2 + $0x8b0] sm:$0xff]
    %v479 = vld [vmem:[#allocation2 + $0x8b8] sm:$0xff]
    %v480 = vld [vmem:[#allocation2 + $0x8c0] sm:$0xff]
    %v481 = vld [vmem:[#allocation2 + $0x8c8] sm:$0xff]
    %v482 = vld [vmem:[#allocation2 + $0x8d0] sm:$0xff]
    %v483 = vld [vmem:[#allocation2 + $0x8d8] sm:$0xff]
    %v484 = vld [vmem:[#allocation2 + $0x8e0] sm:$0xff]
    %v485 = vld [vmem:[#allocation2 + $0x8e8] sm:$0xff]
    %v486 = vld [vmem:[#allocation2 + $0x8f0] sm:$0xff]
    %v487 = vld [vmem:[#allocation2 + $0x8f8] sm:$0xff]
    %v488 = vld [vmem:[#allocation2 + $0x900] sm:$0xff]
    %v489 = vld [vmem:[#allocation2 + $0x908] sm:$0xff]
    %v490 = vld [vmem:[#allocation2 + $0x910] sm:$0xff]
    %v491 = vld [vmem:[#allocation2 + $0x918] sm:$0xff]
    %v492 = vld [vmem:[#allocation2 + $0x920] sm:$0xff]
    %v493 = vld [vmem:[#allocation2 + $0x928] sm:$0xff]
    %v494 = vld [vmem:[#allocation2 + $0x930] sm:$0xff]
    %v495 = vld [vmem:[#allocation2 + $0x938] sm:$0xff]
    %v496 = vld [vmem:[#allocation2 + $0x940] sm:$0xff]
    %v497 = vld [vmem:[#allocation2 + $0x948] sm:$0xff]
    %v498 = vld [vmem:[#allocation2 + $0x950] sm:$0xff]
    %v499 = vld [vmem:[#allocation2 + $0x958] sm:$0xff]
    %v500 = vld [vmem:[#allocation2 + $0x960] sm:$0xff]
    %v501 = vld [vmem:[#allocation2 + $0x968] sm:$0xff]
    %v502 = vld [vmem:[#allocation2 + $0x970] sm:$0xff]
    %v503 = vld [vmem:[#allocation2 + $0x978] sm:$0xff]
    %v504 = vld [vmem:[#allocation2 + $0x980] sm:$0xff]
    %v505 = vld [vmem:[#allocation2 + $0x988] sm:$0xff]
    %v506 = vld [vmem:[#allocation2 + $0x990] sm:$0xff]
    %v507 = vld [vmem:[#allocation2 + $0x998] sm:$0xff]
    %v508 = vld [vmem:[#allocation2 + $0x9a0] sm:$0xff]
    %v509 = vld [vmem:[#allocation2 + $0x9a8] sm:$0xff]
    %v510 = vld [vmem:[#allocation2 + $0x9b0] sm:$0xff]
    %v511 = vld [vmem:[#allocation2 + $0x9b8] sm:$0xff]
    %v512 = vld [vmem:[#allocation2 + $0x9c0] sm:$0xff]
    %v513 = vld [vmem:[#allocation2 + $0x9c8] sm:$0xff]
    %v514 = vld [vmem:[#allocation2 + $0x9d0] sm:$0xff]
    %v515 = vld [vmem:[#allocation2 + $0x9d8] sm:$0xff]
    %v516 = vld [vmem:[#allocation2 + $0x9e0] sm:$0xff]
    %v517 = vld [vmem:[#allocation2 + $0x9e8] sm:$0xff]
    %v518 = vld [vmem:[#allocation2 + $0x9f0] sm:$0xff]
    %v519 = vld [vmem:[#allocation2 + $0x9f8] sm:$0xff]
    %v520 = vld [vmem:[#allocation2 + $0xa00] sm:$0xff]
    %v521 = vld [vmem:[#allocation2 + $0xa08] sm:$0xff]
    %v522 = vld [vmem:[#allocation2 + $0xa10] sm:$0xff]
    %v523 = vld [vmem:[#allocation2 + $0xa18] sm:$0xff]
    %v524 = vld [vmem:[#allocation2 + $0xa20] sm:$0xff]
    %v525 = vld [vmem:[#allocation2 + $0xa28] sm:$0xff]
    %v526 = vld [vmem:[#allocation2 + $0xa30] sm:$0xff]
    %v527 = vld [vmem:[#allocation2 + $0xa38] sm:$0xff]
    %v528 = vld [vmem:[#allocation2 + $0xa40] sm:$0xff]
    %v529 = vld [vmem:[#allocation2 + $0xa48] sm:$0xff]
    %v530 = vld [vmem:[#allocation2 + $0xa50] sm:$0xff]
    %v531 = vld [vmem:[#allocation2 + $0xa58] sm:$0xff]
    %v532 = vld [vmem:[#allocation2 + $0xa60] sm:$0xff]
    %v533 = vld [vmem:[#allocation2 + $0xa68] sm:$0xff]
    %v534 = vld [vmem:[#allocation2 + $0xa70] sm:$0xff]
    %v535 = vld [vmem:[#allocation2 + $0xa78] sm:$0xff]
    %v536 = vld [vmem:[#allocation2 + $0xa80] sm:$0xff]
    %v537 = vld [vmem:[#allocation2 + $0xa88] sm:$0xff]
    %v538 = vld [vmem:[#allocation2 + $0xa90] sm:$0xff]
    %v539 = vld [vmem:[#allocation2 + $0xa98] sm:$0xff]
    %v540 = vld [vmem:[#allocation2 + $0xaa0] sm:$0xff]
    %v541 = vld [vmem:[#allocation2 + $0xaa8] sm:$0xff]
    %v542 = vld [vmem:[#allocation2 + $0xab0] sm:$0xff]
    %v543 = vld [vmem:[#allocation2 + $0xab8] sm:$0xff]
    %v544 = vld [vmem:[#allocation2 + $0xac0] sm:$0xff]
    %v545 = vld [vmem:[#allocation2 + $0xac8] sm:$0xff]
    %v546 = vld [vmem:[#allocation2 + $0xad0] sm:$0xff]
    %v547 = vld [vmem:[#allocation2 + $0xad8] sm:$0xff]
    %v548 = vld [vmem:[#allocation2 + $0xae0] sm:$0xff]
    %v549 = vld [vmem:[#allocation2 + $0xae8] sm:$0xff]
    %v550 = vld [vmem:[#allocation2 + $0xaf0] sm:$0xff]
    %v551 = vld [vmem:[#allocation2 + $0xaf8] sm:$0xff]
    %v552 = vld [vmem:[#allocation2 + $0xb00] sm:$0xff]
    %v553 = vld [vmem:[#allocation2 + $0xb08] sm:$0xff]
    %v554 = vld [vmem:[#allocation2 + $0xb10] sm:$0xff]
    %v555 = vld [vmem:[#allocation2 + $0xb18] sm:$0xff]
    %v556 = vld [vmem:[#allocation2 + $0xb20] sm:$0xff]
    %v557 = vld [vmem:[#allocation2 + $0xb28] sm:$0xff]
    %v558 = vld [vmem:[#allocation2 + $0xb30] sm:$0xff]
    %v559 = vld [vmem:[#allocation2 + $0xb38] sm:$0xff]
    %v560 = vld [vmem:[#allocation2 + $0xb40] sm:$0xff]
    %v561 = vld [vmem:[#allocation2 + $0xb48] sm:$0xff]
    %v562 = vld [vmem:[#allocation2 + $0xb50] sm:$0xff]
    %v563 = vld [vmem:[#allocation2 + $0xb58] sm:$0xff]
    %v564 = vld [vmem:[#allocation2 + $0xb60] sm:$0xff]
    %v565 = vld [vmem:[#allocation2 + $0xb68] sm:$0xff]
    %v566 = vld [vmem:[#allocation2 + $0xb70] sm:$0xff]
    %v567 = vld [vmem:[#allocation2 + $0xb78] sm:$0xff]
    %v568 = vld [vmem:[#allocation2 + $0xb80] sm:$0xff]
    %v569 = vld [vmem:[#allocation2 + $0xb88] sm:$0xff]
    %v570 = vld [vmem:[#allocation2 + $0xb90] sm:$0xff]
    %v571 = vld [vmem:[#allocation2 + $0xb98] sm:$0xff]
    %v572 = vld [vmem:[#allocation2 + $0xba0] sm:$0xff]
    %v573 = vld [vmem:[#allocation2 + $0xba8] sm:$0xff]
    %v574 = vld [vmem:[#allocation2 + $0xbb0] sm:$0xff]
    %v575 = vld [vmem:[#allocation2 + $0xbb8] sm:$0xff]
    %v576 = vld [vmem:[#allocation2 + $0xbc0] sm:$0xff]
    %v577 = vld [vmem:[#allocation2 + $0xbc8] sm:$0xff]
    %v578 = vld [vmem:[#allocation2 + $0xbd0] sm:$0xff]
    %v579 = vld [vmem:[#allocation2 + $0xbd8] sm:$0xff]
    %v580 = vld [vmem:[#allocation2 + $0xbe0] sm:$0xff]
    %v581 = vld [vmem:[#allocation2 + $0xbe8] sm:$0xff]
    %v582 = vld [vmem:[#allocation2 + $0xbf0] sm:$0xff]
    %v583 = vld [vmem:[#allocation2 + $0xbf8] sm:$0xff]
    %v584 = vld [vmem:[#allocation2 + $0xc00] sm:$0xff]
    %v585 = vld [vmem:[#allocation2 + $0xc08] sm:$0xff]
    %v586 = vld [vmem:[#allocation2 + $0xc10] sm:$0xff]
    %v587 = vld [vmem:[#allocation2 + $0xc18] sm:$0xff]
    %v588 = vld [vmem:[#allocation2 + $0xc20] sm:$0xff]
    %v589 = vld [vmem:[#allocation2 + $0xc28] sm:$0xff]
    %v590 = vld [vmem:[#allocation2 + $0xc30] sm:$0xff]
    %v591 = vld [vmem:[#allocation2 + $0xc38] sm:$0xff]
    %v592 = vld [vmem:[#allocation2 + $0xc40] sm:$0xff]
    %v593 = vld [vmem:[#allocation2 + $0xc48] sm:$0xff]
    %v594 = vld [vmem:[#allocation2 + $0xc50] sm:$0xff]
    %v595 = vld [vmem:[#allocation2 + $0xc58] sm:$0xff]
    %v596 = vld [vmem:[#allocation2 + $0xc60] sm:$0xff]
    %v597 = vld [vmem:[#allocation2 + $0xc68] sm:$0xff]
    %v598 = vld [vmem:[#allocation2 + $0xc70] sm:$0xff]
    %v599 = vld [vmem:[#allocation2 + $0xc78] sm:$0xff]
    %v600 = vld [vmem:[#allocation2 + $0xc80] sm:$0xff]
    %v601 = vld [vmem:[#allocation2 + $0xc88] sm:$0xff]
    %v602 = vld [vmem:[#allocation2 + $0xc90] sm:$0xff]
    %v603 = vld [vmem:[#allocation2 + $0xc98] sm:$0xff]
    %v604 = vld [vmem:[#allocation2 + $0xca0] sm:$0xff]
    %v605 = vld [vmem:[#allocation2 + $0xca8] sm:$0xff]
    %v606 = vld [vmem:[#allocation2 + $0xcb0] sm:$0xff]
    %v607 = vld [vmem:[#allocation2 + $0xcb8] sm:$0xff]
    %v608 = vld [vmem:[#allocation2 + $0xcc0] sm:$0xff]
    %v609 = vld [vmem:[#allocation2 + $0xcc8] sm:$0xff]
    %v610 = vld [vmem:[#allocation2 + $0xcd0] sm:$0xff]
    %v611 = vld [vmem:[#allocation2 + $0xcd8] sm:$0xff]
    %v612 = vld [vmem:[#allocation2 + $0xce0] sm:$0xff]
    %v613 = vld [vmem:[#allocation2 + $0xce8] sm:$0xff]
    %v614 = vld [vmem:[#allocation2 + $0xcf0] sm:$0xff]
    %v615 = vld [vmem:[#allocation2 + $0xcf8] sm:$0xff]
    %v616 = vld [vmem:[#allocation2 + $0xd00] sm:$0xff]
    %v617 = vld [vmem:[#allocation2 + $0xd08] sm:$0xff]
    %v618 = vld [vmem:[#allocation2 + $0xd10] sm:$0xff]
    %v619 = vld [vmem:[#allocation2 + $0xd18] sm:$0xff]
    %v620 = vld [vmem:[#allocation2 + $0xd20] sm:$0xff]
    %v621 = vld [vmem:[#allocation2 + $0xd28] sm:$0xff]
    %v622 = vld [vmem:[#allocation2 + $0xd30] sm:$0xff]
    %v623 = vld [vmem:[#allocation2 + $0xd38] sm:$0xff]
    %v624 = vld [vmem:[#allocation2 + $0xd40] sm:$0xff]
    %v625 = vld [vmem:[#allocation2 + $0xd48] sm:$0xff]
    %v626 = vld [vmem:[#allocation2 + $0xd50] sm:$0xff]
    %v627 = vld [vmem:[#allocation2 + $0xd58] sm:$0xff]
    %v628 = vld [vmem:[#allocation2 + $0xd60] sm:$0xff]
    %v629 = vld [vmem:[#allocation2 + $0xd68] sm:$0xff]
    %v630 = vld [vmem:[#allocation2 + $0xd70] sm:$0xff]
    %v631 = vld [vmem:[#allocation2 + $0xd78] sm:$0xff]
    %v632 = vld [vmem:[#allocation2 + $0xd80] sm:$0xff]
    %v633 = vld [vmem:[#allocation2 + $0xd88] sm:$0xff]
    %v634 = vld [vmem:[#allocation2 + $0xd90] sm:$0xff]
    %v635 = vld [vmem:[#allocation2 + $0xd98] sm:$0xff]
    %v636 = vld [vmem:[#allocation2 + $0xda0] sm:$0xff]
    %v637 = vld [vmem:[#allocation2 + $0xda8] sm:$0xff]
    %v638 = vld [vmem:[#allocation2 + $0xdb0] sm:$0xff]
    %v639 = vld [vmem:[#allocation2 + $0xdb8] sm:$0xff]
    %v640 = vld [vmem:[#allocation2 + $0xdc0] sm:$0xff]
    %v641 = vld [vmem:[#allocation2 + $0xdc8] sm:$0xff]
    %v642 = vld [vmem:[#allocation2 + $0xdd0] sm:$0xff]
    %v643 = vld [vmem:[#allocation2 + $0xdd8] sm:$0xff]
    %v644 = vld [vmem:[#allocation2 + $0xde0] sm:$0xff]
    %v645 = vld [vmem:[#allocation2 + $0xde8] sm:$0xff]
    %v646 = vld [vmem:[#allocation2 + $0xdf0] sm:$0xff]
    %v647 = vld [vmem:[#allocation2 + $0xdf8] sm:$0xff]
    %v648 = vld [vmem:[#allocation2 + $0xe00] sm:$0xff]
    %v649 = vld [vmem:[#allocation2 + $0xe08] sm:$0xff]
    %v650 = vld [vmem:[#allocation2 + $0xe10] sm:$0xff]
    %v651 = vld [vmem:[#allocation2 + $0xe18] sm:$0xff]
    %v652 = vld [vmem:[#allocation2 + $0xe20] sm:$0xff]
    %v653 = vld [vmem:[#allocation2 + $0xe28] sm:$0xff]
    %v654 = vld [vmem:[#allocation2 + $0xe30] sm:$0xff]
    %v655 = vld [vmem:[#allocation2 + $0xe38] sm:$0xff]
    %v656 = vld [vmem:[#allocation2 + $0xe40] sm:$0xff]
    %v657 = vld [vmem:[#allocation2 + $0xe48] sm:$0xff]
    %v658 = vld [vmem:[#allocation2 + $0xe50] sm:$0xff]
    %v659 = vld [vmem:[#allocation2 + $0xe58] sm:$0xff]
    %v660 = vld [vmem:[#allocation2 + $0xe60] sm:$0xff]
    %v661 = vld [vmem:[#allocation2 + $0xe68] sm:$0xff]
    %v662 = vld [vmem:[#allocation2 + $0xe70] sm:$0xff]
    %v663 = vld [vmem:[#allocation2 + $0xe78] sm:$0xff]
    %v664 = vld [vmem:[#allocation2 + $0xe80] sm:$0xff]
    %v665 = vld [vmem:[#allocation2 + $0xe88] sm:$0xff]
    %v666 = vld [vmem:[#allocation2 + $0xe90] sm:$0xff]
    %v667 = vld [vmem:[#allocation2 + $0xe98] sm:$0xff]
    %v668 = vld [vmem:[#allocation2 + $0xea0] sm:$0xff]
    %v669 = vld [vmem:[#allocation2 + $0xea8] sm:$0xff]
    %v670 = vld [vmem:[#allocation2 + $0xeb0] sm:$0xff]
    %v671 = vld [vmem:[#allocation2 + $0xeb8] sm:$0xff]
    %v672 = vld [vmem:[#allocation2 + $0xec0] sm:$0xff]
    %v673 = vld [vmem:[#allocation2 + $0xec8] sm:$0xff]
    %v674 = vld [vmem:[#allocation2 + $0xed0] sm:$0xff]
    %v675 = vld [vmem:[#allocation2 + $0xed8] sm:$0xff]
    %v676 = vld [vmem:[#allocation2 + $0xee0] sm:$0xff]
    %v677 = vld [vmem:[#allocation2 + $0xee8] sm:$0xff]
    %v678 = vld [vmem:[#allocation2 + $0xef0] sm:$0xff]
    %v679 = vld [vmem:[#allocation2 + $0xef8] sm:$0xff]
    %v680 = vld [vmem:[#allocation2 + $0xf00] sm:$0xff]
    %v681 = vld [vmem:[#allocation2 + $0xf08] sm:$0xff]
    %v682 = vld [vmem:[#allocation2 + $0xf10] sm:$0xff]
    %v683 = vld [vmem:[#allocation2 + $0xf18] sm:$0xff]
    %v684 = vld [vmem:[#allocation2 + $0xf20] sm:$0xff]
    %v685 = vld [vmem:[#allocation2 + $0xf28] sm:$0xff]
    %v686 = vld [vmem:[#allocation2 + $0xf30] sm:$0xff]
    %v687 = vld [vmem:[#allocation2 + $0xf38] sm:$0xff]
    %v688 = vld [vmem:[#allocation2 + $0xf40] sm:$0xff]
    %v689 = vld [vmem:[#allocation2 + $0xf48] sm:$0xff]
    %v690 = vld [vmem:[#allocation2 + $0xf50] sm:$0xff]
    %v691 = vld [vmem:[#allocation2 + $0xf58] sm:$0xff]
    %v692 = vld [vmem:[#allocation2 + $0xf60] sm:$0xff]
    %v693 = vld [vmem:[#allocation2 + $0xf68] sm:$0xff]
    %v694 = vld [vmem:[#allocation2 + $0xf70] sm:$0xff]
    %v695 = vld [vmem:[#allocation2 + $0xf78] sm:$0xff]
    %v696 = vld [vmem:[#allocation2 + $0xf80] sm:$0xff]
    %v697 = vld [vmem:[#allocation2 + $0xf88] sm:$0xff]
    %v698 = vld [vmem:[#allocation2 + $0xf90] sm:$0xff]
    %v699 = vld [vmem:[#allocation2 + $0xf98] sm:$0xff]
    %v700 = vld [vmem:[#allocation2 + $0xfa0] sm:$0xff]
    %v701 = vld [vmem:[#allocation2 + $0xfa8] sm:$0xff]
    %v702 = vld [vmem:[#allocation2 + $0xfb0] sm:$0xff]
    %v703 = vld [vmem:[#allocation2 + $0xfb8] sm:$0xff]
    %v704 = vld [vmem:[#allocation2 + $0xfc0] sm:$0xff]
    %v705 = vld [vmem:[#allocation2 + $0xfc8] sm:$0xff]
    %v706 = vld [vmem:[#allocation2 + $0xfd0] sm:$0xff]
    %v707 = vld [vmem:[#allocation2 + $0xfd8] sm:$0xff]
    %v708 = vld [vmem:[#allocation2 + $0xfe0] sm:$0xff]
    %v709 = vld [vmem:[#allocation2 + $0xfe8] sm:$0xff]
    %v710 = vld [vmem:[#allocation2 + $0xff0] sm:$0xff]
    %v711 = vld [vmem:[#allocation2 + $0xff8] sm:$0xff]
    %v712 = vld [vmem:[#allocation4] sm:$0xff]
    %v713 = vld [vmem:[#allocation4 + $0x8] sm:$0xff]
    %v716 = vlaneseq
    %v717 = vshrl.u32 %v716, 7
    %v718 = vsub.s32 0, %v717
    %v719 = vrot.slane %v712, %v718
    %v720 = vlaneseq
    %v721 = vshrl.u32 %v720, 7
    %v722 = vsub.s32 1, %v721
    %v723 = vrot.slane %v712, %v722
    %v724 = vlaneseq
    %v725 = vshrl.u32 %v724, 7
    %v726 = vsub.s32 2, %v725
    %v727 = vrot.slane %v712, %v726
    %v728 = vlaneseq
    %v729 = vshrl.u32 %v728, 7
    %v730 = vsub.s32 3, %v729
    %v731 = vrot.slane %v712, %v730
    %v732 = vlaneseq
    %v733 = vshrl.u32 %v732, 7
    %v734 = vsub.s32 4, %v733
    %v735 = vrot.slane %v712, %v734
    %v736 = vlaneseq
    %v737 = vshrl.u32 %v736, 7
    %v738 = vsub.s32 5, %v737
    %v739 = vrot.slane %v712, %v738
    %v740 = vlaneseq
    %v741 = vshrl.u32 %v740, 7
    %v742 = vsub.s32 6, %v741
    %v743 = vrot.slane %v712, %v742
    %v744 = vlaneseq
    %v745 = vshrl.u32 %v744, 7
    %v746 = vsub.s32 7, %v745
    %v747 = vrot.slane %v712, %v746
    %v748 = vlaneseq
    %v749 = vshrl.u32 %v748, 7
    %v750 = vsub.s32 0, %v749
    %v751 = vrot.slane %v713, %v750
    %v752 = vlaneseq
    %v753 = vshrl.u32 %v752, 7
    %v754 = vsub.s32 1, %v753
    %v755 = vrot.slane %v713, %v754
    %v756 = vlaneseq
    %v757 = vshrl.u32 %v756, 7
    %v758 = vsub.s32 2, %v757
    %v759 = vrot.slane %v713, %v758
    %v760 = vlaneseq
    %v761 = vshrl.u32 %v760, 7
    %v762 = vsub.s32 3, %v761
    %v763 = vrot.slane %v713, %v762
    %v764 = vlaneseq
    %v765 = vshrl.u32 %v764, 7
    %v766 = vsub.s32 4, %v765
    %v767 = vrot.slane %v713, %v766
    %v768 = vlaneseq
    %v769 = vshrl.u32 %v768, 7
    %v770 = vsub.s32 5, %v769
    %v771 = vrot.slane %v713, %v770
    %v772 = vlaneseq
    %v773 = vshrl.u32 %v772, 7
    %v774 = vsub.s32 6, %v773
    %v775 = vrot.slane %v713, %v774
    %v776 = vlaneseq
    %v777 = vshrl.u32 %v776, 7
    %v778 = vsub.s32 7, %v777
    %v779 = vrot.slane %v713, %v778
    %v800 = vunpack.c.l.b16 %v196
    %v801 = vunpack.c.h.b16 %v196
    %v802 = vunpack.c.l.b16 %v197
    %v803 = vunpack.c.h.b16 %v197
    %v804 = vunpack.c.l.b16 %v198
    %v805 = vunpack.c.h.b16 %v198
    %v806 = vunpack.c.l.b16 %v199
    %v807 = vunpack.c.h.b16 %v199
    %v808 = vpack.c.b16 %v804, %v800
    %v809 = vpack.c.b16 %v805, %v801
    %v810 = vpack.c.b16 %v806, %v802
    %v811 = vpack.c.b16 %v807, %v803
    %v1328 = vunpack.c.l.b16 %v200
    %v1329 = vunpack.c.h.b16 %v200
    %v1330 = vunpack.c.l.b16 %v201
    %v1331 = vunpack.c.h.b16 %v201
    %v1332 = vunpack.c.l.b16 %v202
    %v1333 = vunpack.c.h.b16 %v202
    %v1334 = vunpack.c.l.b16 %v203
    %v1335 = vunpack.c.h.b16 %v203
    %v1336 = vunpack.c.l.b16 %v204
    %v1337 = vunpack.c.h.b16 %v204
    %v1338 = vunpack.c.l.b16 %v205
    %v1339 = vunpack.c.h.b16 %v205
    %v1340 = vunpack.c.l.b16 %v206
    %v1341 = vunpack.c.h.b16 %v206
    %v1342 = vunpack.c.l.b16 %v207
    %v1343 = vunpack.c.h.b16 %v207
    %v1344 = vunpack.c.l.b16 %v208
    %v1345 = vunpack.c.h.b16 %v208
    %v1346 = vunpack.c.l.b16 %v209
    %v1347 = vunpack.c.h.b16 %v209
    %v1348 = vunpack.c.l.b16 %v210
    %v1349 = vunpack.c.h.b16 %v210
    %v1350 = vunpack.c.l.b16 %v211
    %v1351 = vunpack.c.h.b16 %v211
    %v1352 = vunpack.c.l.b16 %v212
    %v1353 = vunpack.c.h.b16 %v212
    %v1354 = vunpack.c.l.b16 %v213
    %v1355 = vunpack.c.h.b16 %v213
    %v1356 = vunpack.c.l.b16 %v214
    %v1357 = vunpack.c.h.b16 %v214
    %v1358 = vunpack.c.l.b16 %v215
    %v1359 = vunpack.c.h.b16 %v215
    %v1360 = vunpack.c.l.b16 %v216
    %v1361 = vunpack.c.h.b16 %v216
    %v1362 = vunpack.c.l.b16 %v217
    %v1363 = vunpack.c.h.b16 %v217
    %v1364 = vunpack.c.l.b16 %v218
    %v1365 = vunpack.c.h.b16 %v218
    %v1366 = vunpack.c.l.b16 %v219
    %v1367 = vunpack.c.h.b16 %v219
    %v1368 = vunpack.c.l.b16 %v220
    %v1369 = vunpack.c.h.b16 %v220
    %v1370 = vunpack.c.l.b16 %v221
    %v1371 = vunpack.c.h.b16 %v221
    %v1372 = vunpack.c.l.b16 %v222
    %v1373 = vunpack.c.h.b16 %v222
    %v1374 = vunpack.c.l.b16 %v223
    %v1375 = vunpack.c.h.b16 %v223
    %v1376 = vunpack.c.l.b16 %v224
    %v1377 = vunpack.c.h.b16 %v224
    %v1378 = vunpack.c.l.b16 %v225
    %v1379 = vunpack.c.h.b16 %v225
    %v1380 = vunpack.c.l.b16 %v226
    %v1381 = vunpack.c.h.b16 %v226
    %v1382 = vunpack.c.l.b16 %v227
    %v1383 = vunpack.c.h.b16 %v227
    %v1384 = vunpack.c.l.b16 %v228
    %v1385 = vunpack.c.h.b16 %v228
    %v1386 = vunpack.c.l.b16 %v229
    %v1387 = vunpack.c.h.b16 %v229
    %v1388 = vunpack.c.l.b16 %v230
    %v1389 = vunpack.c.h.b16 %v230
    %v1390 = vunpack.c.l.b16 %v231
    %v1391 = vunpack.c.h.b16 %v231
    %v1392 = vunpack.c.l.b16 %v232
    %v1393 = vunpack.c.h.b16 %v232
    %v1394 = vunpack.c.l.b16 %v233
    %v1395 = vunpack.c.h.b16 %v233
    %v1396 = vunpack.c.l.b16 %v234
    %v1397 = vunpack.c.h.b16 %v234
    %v1398 = vunpack.c.l.b16 %v235
    %v1399 = vunpack.c.h.b16 %v235
    %v1400 = vunpack.c.l.b16 %v236
    %v1401 = vunpack.c.h.b16 %v236
    %v1402 = vunpack.c.l.b16 %v237
    %v1403 = vunpack.c.h.b16 %v237
    %v1404 = vunpack.c.l.b16 %v238
    %v1405 = vunpack.c.h.b16 %v238
    %v1406 = vunpack.c.l.b16 %v239
    %v1407 = vunpack.c.h.b16 %v239
    %v1408 = vunpack.c.l.b16 %v240
    %v1409 = vunpack.c.h.b16 %v240
    %v1410 = vunpack.c.l.b16 %v241
    %v1411 = vunpack.c.h.b16 %v241
    %v1412 = vunpack.c.l.b16 %v242
    %v1413 = vunpack.c.h.b16 %v242
    %v1414 = vunpack.c.l.b16 %v243
    %v1415 = vunpack.c.h.b16 %v243
    %v1416 = vunpack.c.l.b16 %v244
    %v1417 = vunpack.c.h.b16 %v244
    %v1418 = vunpack.c.l.b16 %v245
    %v1419 = vunpack.c.h.b16 %v245
    %v1420 = vunpack.c.l.b16 %v246
    %v1421 = vunpack.c.h.b16 %v246
    %v1422 = vunpack.c.l.b16 %v247
    %v1423 = vunpack.c.h.b16 %v247
    %v1424 = vunpack.c.l.b16 %v248
    %v1425 = vunpack.c.h.b16 %v248
    %v1426 = vunpack.c.l.b16 %v249
    %v1427 = vunpack.c.h.b16 %v249
    %v1428 = vunpack.c.l.b16 %v250
    %v1429 = vunpack.c.h.b16 %v250
    %v1430 = vunpack.c.l.b16 %v251
    %v1431 = vunpack.c.h.b16 %v251
    %v1432 = vunpack.c.l.b16 %v252
    %v1433 = vunpack.c.h.b16 %v252
    %v1434 = vunpack.c.l.b16 %v253
    %v1435 = vunpack.c.h.b16 %v253
    %v1436 = vunpack.c.l.b16 %v254
    %v1437 = vunpack.c.h.b16 %v254
    %v1438 = vunpack.c.l.b16 %v255
    %v1439 = vunpack.c.h.b16 %v255
    %v1440 = vunpack.c.l.b16 %v256
    %v1441 = vunpack.c.h.b16 %v256
    %v1442 = vunpack.c.l.b16 %v257
    %v1443 = vunpack.c.h.b16 %v257
    %v1444 = vunpack.c.l.b16 %v258
    %v1445 = vunpack.c.h.b16 %v258
    %v1446 = vunpack.c.l.b16 %v259
    %v1447 = vunpack.c.h.b16 %v259
    %v1448 = vunpack.c.l.b16 %v260
    %v1449 = vunpack.c.h.b16 %v260
    %v1450 = vunpack.c.l.b16 %v261
    %v1451 = vunpack.c.h.b16 %v261
    %v1452 = vunpack.c.l.b16 %v262
    %v1453 = vunpack.c.h.b16 %v262
    %v1454 = vunpack.c.l.b16 %v263
    %v1455 = vunpack.c.h.b16 %v263
    %v1456 = vunpack.c.l.b16 %v264
    %v1457 = vunpack.c.h.b16 %v264
    %v1458 = vunpack.c.l.b16 %v265
    %v1459 = vunpack.c.h.b16 %v265
    %v1460 = vunpack.c.l.b16 %v266
    %v1461 = vunpack.c.h.b16 %v266
    %v1462 = vunpack.c.l.b16 %v267
    %v1463 = vunpack.c.h.b16 %v267
    %v1464 = vunpack.c.l.b16 %v268
    %v1465 = vunpack.c.h.b16 %v268
    %v1466 = vunpack.c.l.b16 %v269
    %v1467 = vunpack.c.h.b16 %v269
    %v1468 = vunpack.c.l.b16 %v270
    %v1469 = vunpack.c.h.b16 %v270
    %v1470 = vunpack.c.l.b16 %v271
    %v1471 = vunpack.c.h.b16 %v271
    %v1472 = vunpack.c.l.b16 %v272
    %v1473 = vunpack.c.h.b16 %v272
    %v1474 = vunpack.c.l.b16 %v273
    %v1475 = vunpack.c.h.b16 %v273
    %v1476 = vunpack.c.l.b16 %v274
    %v1477 = vunpack.c.h.b16 %v274
    %v1478 = vunpack.c.l.b16 %v275
    %v1479 = vunpack.c.h.b16 %v275
    %v1480 = vunpack.c.l.b16 %v276
    %v1481 = vunpack.c.h.b16 %v276
    %v1482 = vunpack.c.l.b16 %v277
    %v1483 = vunpack.c.h.b16 %v277
    %v1484 = vunpack.c.l.b16 %v278
    %v1485 = vunpack.c.h.b16 %v278
    %v1486 = vunpack.c.l.b16 %v279
    %v1487 = vunpack.c.h.b16 %v279
    %v1488 = vunpack.c.l.b16 %v280
    %v1489 = vunpack.c.h.b16 %v280
    %v1490 = vunpack.c.l.b16 %v281
    %v1491 = vunpack.c.h.b16 %v281
    %v1492 = vunpack.c.l.b16 %v282
    %v1493 = vunpack.c.h.b16 %v282
    %v1494 = vunpack.c.l.b16 %v283
    %v1495 = vunpack.c.h.b16 %v283
    %v1496 = vunpack.c.l.b16 %v284
    %v1497 = vunpack.c.h.b16 %v284
    %v1498 = vunpack.c.l.b16 %v285
    %v1499 = vunpack.c.h.b16 %v285
    %v1500 = vunpack.c.l.b16 %v286
    %v1501 = vunpack.c.h.b16 %v286
    %v1502 = vunpack.c.l.b16 %v287
    %v1503 = vunpack.c.h.b16 %v287
    %v1504 = vunpack.c.l.b16 %v288
    %v1505 = vunpack.c.h.b16 %v288
    %v1506 = vunpack.c.l.b16 %v289
    %v1507 = vunpack.c.h.b16 %v289
    %v1508 = vunpack.c.l.b16 %v290
    %v1509 = vunpack.c.h.b16 %v290
    %v1510 = vunpack.c.l.b16 %v291
    %v1511 = vunpack.c.h.b16 %v291
    %v1512 = vunpack.c.l.b16 %v292
    %v1513 = vunpack.c.h.b16 %v292
    %v1514 = vunpack.c.l.b16 %v293
    %v1515 = vunpack.c.h.b16 %v293
    %v1516 = vunpack.c.l.b16 %v294
    %v1517 = vunpack.c.h.b16 %v294
    %v1518 = vunpack.c.l.b16 %v295
    %v1519 = vunpack.c.h.b16 %v295
    %v1520 = vunpack.c.l.b16 %v296
    %v1521 = vunpack.c.h.b16 %v296
    %v1522 = vunpack.c.l.b16 %v297
    %v1523 = vunpack.c.h.b16 %v297
    %v1524 = vunpack.c.l.b16 %v298
    %v1525 = vunpack.c.h.b16 %v298
    %v1526 = vunpack.c.l.b16 %v299
    %v1527 = vunpack.c.h.b16 %v299
    %v1528 = vunpack.c.l.b16 %v300
    %v1529 = vunpack.c.h.b16 %v300
    %v1530 = vunpack.c.l.b16 %v301
    %v1531 = vunpack.c.h.b16 %v301
    %v1532 = vunpack.c.l.b16 %v302
    %v1533 = vunpack.c.h.b16 %v302
    %v1534 = vunpack.c.l.b16 %v303
    %v1535 = vunpack.c.h.b16 %v303
    %v1536 = vunpack.c.l.b16 %v304
    %v1537 = vunpack.c.h.b16 %v304
    %v1538 = vunpack.c.l.b16 %v305
    %v1539 = vunpack.c.h.b16 %v305
    %v1540 = vunpack.c.l.b16 %v306
    %v1541 = vunpack.c.h.b16 %v306
    %v1542 = vunpack.c.l.b16 %v307
    %v1543 = vunpack.c.h.b16 %v307
    %v1544 = vunpack.c.l.b16 %v308
    %v1545 = vunpack.c.h.b16 %v308
    %v1546 = vunpack.c.l.b16 %v309
    %v1547 = vunpack.c.h.b16 %v309
    %v1548 = vunpack.c.l.b16 %v310
    %v1549 = vunpack.c.h.b16 %v310
    %v1550 = vunpack.c.l.b16 %v311
    %v1551 = vunpack.c.h.b16 %v311
    %v1552 = vunpack.c.l.b16 %v312
    %v1553 = vunpack.c.h.b16 %v312
    %v1554 = vunpack.c.l.b16 %v313
    %v1555 = vunpack.c.h.b16 %v313
    %v1556 = vunpack.c.l.b16 %v314
    %v1557 = vunpack.c.h.b16 %v314
    %v1558 = vunpack.c.l.b16 %v315
    %v1559 = vunpack.c.h.b16 %v315
    %v1560 = vunpack.c.l.b16 %v316
    %v1561 = vunpack.c.h.b16 %v316
    %v1562 = vunpack.c.l.b16 %v317
    %v1563 = vunpack.c.h.b16 %v317
    %v1564 = vunpack.c.l.b16 %v318
    %v1565 = vunpack.c.h.b16 %v318
    %v1566 = vunpack.c.l.b16 %v319
    %v1567 = vunpack.c.h.b16 %v319
    %v1568 = vunpack.c.l.b16 %v320
    %v1569 = vunpack.c.h.b16 %v320
    %v1570 = vunpack.c.l.b16 %v321
    %v1571 = vunpack.c.h.b16 %v321
    %v1572 = vunpack.c.l.b16 %v322
    %v1573 = vunpack.c.h.b16 %v322
    %v1574 = vunpack.c.l.b16 %v323
    %v1575 = vunpack.c.h.b16 %v323
    %v1576 = vunpack.c.l.b16 %v324
    %v1577 = vunpack.c.h.b16 %v324
    %v1578 = vunpack.c.l.b16 %v325
    %v1579 = vunpack.c.h.b16 %v325
    %v1580 = vunpack.c.l.b16 %v326
    %v1581 = vunpack.c.h.b16 %v326
    %v1582 = vunpack.c.l.b16 %v327
    %v1583 = vunpack.c.h.b16 %v327
    %v1584 = vunpack.c.l.b16 %v328
    %v1585 = vunpack.c.h.b16 %v328
    %v1586 = vunpack.c.l.b16 %v329
    %v1587 = vunpack.c.h.b16 %v329
    %v1588 = vunpack.c.l.b16 %v330
    %v1589 = vunpack.c.h.b16 %v330
    %v1590 = vunpack.c.l.b16 %v331
    %v1591 = vunpack.c.h.b16 %v331
    %v1592 = vunpack.c.l.b16 %v332
    %v1593 = vunpack.c.h.b16 %v332
    %v1594 = vunpack.c.l.b16 %v333
    %v1595 = vunpack.c.h.b16 %v333
    %v1596 = vunpack.c.l.b16 %v334
    %v1597 = vunpack.c.h.b16 %v334
    %v1598 = vunpack.c.l.b16 %v335
    %v1599 = vunpack.c.h.b16 %v335
    %v1600 = vunpack.c.l.b16 %v336
    %v1601 = vunpack.c.h.b16 %v336
    %v1602 = vunpack.c.l.b16 %v337
    %v1603 = vunpack.c.h.b16 %v337
    %v1604 = vunpack.c.l.b16 %v338
    %v1605 = vunpack.c.h.b16 %v338
    %v1606 = vunpack.c.l.b16 %v339
    %v1607 = vunpack.c.h.b16 %v339
    %v1608 = vunpack.c.l.b16 %v340
    %v1609 = vunpack.c.h.b16 %v340
    %v1610 = vunpack.c.l.b16 %v341
    %v1611 = vunpack.c.h.b16 %v341
    %v1612 = vunpack.c.l.b16 %v342
    %v1613 = vunpack.c.h.b16 %v342
    %v1614 = vunpack.c.l.b16 %v343
    %v1615 = vunpack.c.h.b16 %v343
    %v1616 = vunpack.c.l.b16 %v344
    %v1617 = vunpack.c.h.b16 %v344
    %v1618 = vunpack.c.l.b16 %v345
    %v1619 = vunpack.c.h.b16 %v345
    %v1620 = vunpack.c.l.b16 %v346
    %v1621 = vunpack.c.h.b16 %v346
    %v1622 = vunpack.c.l.b16 %v347
    %v1623 = vunpack.c.h.b16 %v347
    %v1624 = vunpack.c.l.b16 %v348
    %v1625 = vunpack.c.h.b16 %v348
    %v1626 = vunpack.c.l.b16 %v349
    %v1627 = vunpack.c.h.b16 %v349
    %v1628 = vunpack.c.l.b16 %v350
    %v1629 = vunpack.c.h.b16 %v350
    %v1630 = vunpack.c.l.b16 %v351
    %v1631 = vunpack.c.h.b16 %v351
    %v1632 = vunpack.c.l.b16 %v352
    %v1633 = vunpack.c.h.b16 %v352
    %v1634 = vunpack.c.l.b16 %v353
    %v1635 = vunpack.c.h.b16 %v353
    %v1636 = vunpack.c.l.b16 %v354
    %v1637 = vunpack.c.h.b16 %v354
    %v1638 = vunpack.c.l.b16 %v355
    %v1639 = vunpack.c.h.b16 %v355
    %v1640 = vunpack.c.l.b16 %v356
    %v1641 = vunpack.c.h.b16 %v356
    %v1642 = vunpack.c.l.b16 %v357
    %v1643 = vunpack.c.h.b16 %v357
    %v1644 = vunpack.c.l.b16 %v358
    %v1645 = vunpack.c.h.b16 %v358
    %v1646 = vunpack.c.l.b16 %v359
    %v1647 = vunpack.c.h.b16 %v359
    %v1648 = vunpack.c.l.b16 %v360
    %v1649 = vunpack.c.h.b16 %v360
    %v1650 = vunpack.c.l.b16 %v361
    %v1651 = vunpack.c.h.b16 %v361
    %v1652 = vunpack.c.l.b16 %v362
    %v1653 = vunpack.c.h.b16 %v362
    %v1654 = vunpack.c.l.b16 %v363
    %v1655 = vunpack.c.h.b16 %v363
    %v1656 = vunpack.c.l.b16 %v364
    %v1657 = vunpack.c.h.b16 %v364
    %v1658 = vunpack.c.l.b16 %v365
    %v1659 = vunpack.c.h.b16 %v365
    %v1660 = vunpack.c.l.b16 %v366
    %v1661 = vunpack.c.h.b16 %v366
    %v1662 = vunpack.c.l.b16 %v367
    %v1663 = vunpack.c.h.b16 %v367
    %v1664 = vunpack.c.l.b16 %v368
    %v1665 = vunpack.c.h.b16 %v368
    %v1666 = vunpack.c.l.b16 %v369
    %v1667 = vunpack.c.h.b16 %v369
    %v1668 = vunpack.c.l.b16 %v370
    %v1669 = vunpack.c.h.b16 %v370
    %v1670 = vunpack.c.l.b16 %v371
    %v1671 = vunpack.c.h.b16 %v371
    %v1672 = vunpack.c.l.b16 %v372
    %v1673 = vunpack.c.h.b16 %v372
    %v1674 = vunpack.c.l.b16 %v373
    %v1675 = vunpack.c.h.b16 %v373
    %v1676 = vunpack.c.l.b16 %v374
    %v1677 = vunpack.c.h.b16 %v374
    %v1678 = vunpack.c.l.b16 %v375
    %v1679 = vunpack.c.h.b16 %v375
    %v1680 = vunpack.c.l.b16 %v376
    %v1681 = vunpack.c.h.b16 %v376
    %v1682 = vunpack.c.l.b16 %v377
    %v1683 = vunpack.c.h.b16 %v377
    %v1684 = vunpack.c.l.b16 %v378
    %v1685 = vunpack.c.h.b16 %v378
    %v1686 = vunpack.c.l.b16 %v379
    %v1687 = vunpack.c.h.b16 %v379
    %v1688 = vunpack.c.l.b16 %v380
    %v1689 = vunpack.c.h.b16 %v380
    %v1690 = vunpack.c.l.b16 %v381
    %v1691 = vunpack.c.h.b16 %v381
    %v1692 = vunpack.c.l.b16 %v382
    %v1693 = vunpack.c.h.b16 %v382
    %v1694 = vunpack.c.l.b16 %v383
    %v1695 = vunpack.c.h.b16 %v383
    %v1696 = vunpack.c.l.b16 %v384
    %v1697 = vunpack.c.h.b16 %v384
    %v1698 = vunpack.c.l.b16 %v385
    %v1699 = vunpack.c.h.b16 %v385
    %v1700 = vunpack.c.l.b16 %v386
    %v1701 = vunpack.c.h.b16 %v386
    %v1702 = vunpack.c.l.b16 %v387
    %v1703 = vunpack.c.h.b16 %v387
    %v1704 = vunpack.c.l.b16 %v388
    %v1705 = vunpack.c.h.b16 %v388
    %v1706 = vunpack.c.l.b16 %v389
    %v1707 = vunpack.c.h.b16 %v389
    %v1708 = vunpack.c.l.b16 %v390
    %v1709 = vunpack.c.h.b16 %v390
    %v1710 = vunpack.c.l.b16 %v391
    %v1711 = vunpack.c.h.b16 %v391
    %v1712 = vunpack.c.l.b16 %v392
    %v1713 = vunpack.c.h.b16 %v392
    %v1714 = vunpack.c.l.b16 %v393
    %v1715 = vunpack.c.h.b16 %v393
    %v1716 = vunpack.c.l.b16 %v394
    %v1717 = vunpack.c.h.b16 %v394
    %v1718 = vunpack.c.l.b16 %v395
    %v1719 = vunpack.c.h.b16 %v395
    %v1720 = vunpack.c.l.b16 %v396
    %v1721 = vunpack.c.h.b16 %v396
    %v1722 = vunpack.c.l.b16 %v397
    %v1723 = vunpack.c.h.b16 %v397
    %v1724 = vunpack.c.l.b16 %v398
    %v1725 = vunpack.c.h.b16 %v398
    %v1726 = vunpack.c.l.b16 %v399
    %v1727 = vunpack.c.h.b16 %v399
    %v1728 = vunpack.c.l.b16 %v400
    %v1729 = vunpack.c.h.b16 %v400
    %v1730 = vunpack.c.l.b16 %v401
    %v1731 = vunpack.c.h.b16 %v401
    %v1732 = vunpack.c.l.b16 %v402
    %v1733 = vunpack.c.h.b16 %v402
    %v1734 = vunpack.c.l.b16 %v403
    %v1735 = vunpack.c.h.b16 %v403
    %v1736 = vunpack.c.l.b16 %v404
    %v1737 = vunpack.c.h.b16 %v404
    %v1738 = vunpack.c.l.b16 %v405
    %v1739 = vunpack.c.h.b16 %v405
    %v1740 = vunpack.c.l.b16 %v406
    %v1741 = vunpack.c.h.b16 %v406
    %v1742 = vunpack.c.l.b16 %v407
    %v1743 = vunpack.c.h.b16 %v407
    %v1744 = vunpack.c.l.b16 %v408
    %v1745 = vunpack.c.h.b16 %v408
    %v1746 = vunpack.c.l.b16 %v409
    %v1747 = vunpack.c.h.b16 %v409
    %v1748 = vunpack.c.l.b16 %v410
    %v1749 = vunpack.c.h.b16 %v410
    %v1750 = vunpack.c.l.b16 %v411
    %v1751 = vunpack.c.h.b16 %v411
    %v1752 = vunpack.c.l.b16 %v412
    %v1753 = vunpack.c.h.b16 %v412
    %v1754 = vunpack.c.l.b16 %v413
    %v1755 = vunpack.c.h.b16 %v413
    %v1756 = vunpack.c.l.b16 %v414
    %v1757 = vunpack.c.h.b16 %v414
    %v1758 = vunpack.c.l.b16 %v415
    %v1759 = vunpack.c.h.b16 %v415
    %v1760 = vunpack.c.l.b16 %v416
    %v1761 = vunpack.c.h.b16 %v416
    %v1762 = vunpack.c.l.b16 %v417
    %v1763 = vunpack.c.h.b16 %v417
    %v1764 = vunpack.c.l.b16 %v418
    %v1765 = vunpack.c.h.b16 %v418
    %v1766 = vunpack.c.l.b16 %v419
    %v1767 = vunpack.c.h.b16 %v419
    %v1768 = vunpack.c.l.b16 %v420
    %v1769 = vunpack.c.h.b16 %v420
    %v1770 = vunpack.c.l.b16 %v421
    %v1771 = vunpack.c.h.b16 %v421
    %v1772 = vunpack.c.l.b16 %v422
    %v1773 = vunpack.c.h.b16 %v422
    %v1774 = vunpack.c.l.b16 %v423
    %v1775 = vunpack.c.h.b16 %v423
    %v1776 = vunpack.c.l.b16 %v424
    %v1777 = vunpack.c.h.b16 %v424
    %v1778 = vunpack.c.l.b16 %v425
    %v1779 = vunpack.c.h.b16 %v425
    %v1780 = vunpack.c.l.b16 %v426
    %v1781 = vunpack.c.h.b16 %v426
    %v1782 = vunpack.c.l.b16 %v427
    %v1783 = vunpack.c.h.b16 %v427
    %v1784 = vunpack.c.l.b16 %v428
    %v1785 = vunpack.c.h.b16 %v428
    %v1786 = vunpack.c.l.b16 %v429
    %v1787 = vunpack.c.h.b16 %v429
    %v1788 = vunpack.c.l.b16 %v430
    %v1789 = vunpack.c.h.b16 %v430
    %v1790 = vunpack.c.l.b16 %v431
    %v1791 = vunpack.c.h.b16 %v431
    %v1792 = vunpack.c.l.b16 %v432
    %v1793 = vunpack.c.h.b16 %v432
    %v1794 = vunpack.c.l.b16 %v433
    %v1795 = vunpack.c.h.b16 %v433
    %v1796 = vunpack.c.l.b16 %v434
    %v1797 = vunpack.c.h.b16 %v434
    %v1798 = vunpack.c.l.b16 %v435
    %v1799 = vunpack.c.h.b16 %v435
    %v1800 = vunpack.c.l.b16 %v436
    %v1801 = vunpack.c.h.b16 %v436
    %v1802 = vunpack.c.l.b16 %v437
    %v1803 = vunpack.c.h.b16 %v437
    %v1804 = vunpack.c.l.b16 %v438
    %v1805 = vunpack.c.h.b16 %v438
    %v1806 = vunpack.c.l.b16 %v439
    %v1807 = vunpack.c.h.b16 %v439
    %v1808 = vunpack.c.l.b16 %v440
    %v1809 = vunpack.c.h.b16 %v440
    %v1810 = vunpack.c.l.b16 %v441
    %v1811 = vunpack.c.h.b16 %v441
    %v1812 = vunpack.c.l.b16 %v442
    %v1813 = vunpack.c.h.b16 %v442
    %v1814 = vunpack.c.l.b16 %v443
    %v1815 = vunpack.c.h.b16 %v443
    %v1816 = vunpack.c.l.b16 %v444
    %v1817 = vunpack.c.h.b16 %v444
    %v1818 = vunpack.c.l.b16 %v445
    %v1819 = vunpack.c.h.b16 %v445
    %v1820 = vunpack.c.l.b16 %v446
    %v1821 = vunpack.c.h.b16 %v446
    %v1822 = vunpack.c.l.b16 %v447
    %v1823 = vunpack.c.h.b16 %v447
    %v1824 = vunpack.c.l.b16 %v448
    %v1825 = vunpack.c.h.b16 %v448
    %v1826 = vunpack.c.l.b16 %v449
    %v1827 = vunpack.c.h.b16 %v449
    %v1828 = vunpack.c.l.b16 %v450
    %v1829 = vunpack.c.h.b16 %v450
    %v1830 = vunpack.c.l.b16 %v451
    %v1831 = vunpack.c.h.b16 %v451
    %v1832 = vunpack.c.l.b16 %v452
    %v1833 = vunpack.c.h.b16 %v452
    %v1834 = vunpack.c.l.b16 %v453
    %v1835 = vunpack.c.h.b16 %v453
    %v1836 = vunpack.c.l.b16 %v454
    %v1837 = vunpack.c.h.b16 %v454
    %v1838 = vunpack.c.l.b16 %v455
    %v1839 = vunpack.c.h.b16 %v455
    %v1840 = vunpack.c.l.b16 %v456
    %v1841 = vunpack.c.h.b16 %v456
    %v1842 = vunpack.c.l.b16 %v457
    %v1843 = vunpack.c.h.b16 %v457
    %v1844 = vunpack.c.l.b16 %v458
    %v1845 = vunpack.c.h.b16 %v458
    %v1846 = vunpack.c.l.b16 %v459
    %v1847 = vunpack.c.h.b16 %v459
    %v1848 = vunpack.c.l.b16 %v460
    %v1849 = vunpack.c.h.b16 %v460
    %v1850 = vunpack.c.l.b16 %v461
    %v1851 = vunpack.c.h.b16 %v461
    %v1852 = vunpack.c.l.b16 %v462
    %v1853 = vunpack.c.h.b16 %v462
    %v1854 = vunpack.c.l.b16 %v463
    %v1855 = vunpack.c.h.b16 %v463
    %v1856 = vunpack.c.l.b16 %v464
    %v1857 = vunpack.c.h.b16 %v464
    %v1858 = vunpack.c.l.b16 %v465
    %v1859 = vunpack.c.h.b16 %v465
    %v1860 = vunpack.c.l.b16 %v466
    %v1861 = vunpack.c.h.b16 %v466
    %v1862 = vunpack.c.l.b16 %v467
    %v1863 = vunpack.c.h.b16 %v467
    %v1864 = vunpack.c.l.b16 %v468
    %v1865 = vunpack.c.h.b16 %v468
    %v1866 = vunpack.c.l.b16 %v469
    %v1867 = vunpack.c.h.b16 %v469
    %v1868 = vunpack.c.l.b16 %v470
    %v1869 = vunpack.c.h.b16 %v470
    %v1870 = vunpack.c.l.b16 %v471
    %v1871 = vunpack.c.h.b16 %v471
    %v1872 = vunpack.c.l.b16 %v472
    %v1873 = vunpack.c.h.b16 %v472
    %v1874 = vunpack.c.l.b16 %v473
    %v1875 = vunpack.c.h.b16 %v473
    %v1876 = vunpack.c.l.b16 %v474
    %v1877 = vunpack.c.h.b16 %v474
    %v1878 = vunpack.c.l.b16 %v475
    %v1879 = vunpack.c.h.b16 %v475
    %v1880 = vunpack.c.l.b16 %v476
    %v1881 = vunpack.c.h.b16 %v476
    %v1882 = vunpack.c.l.b16 %v477
    %v1883 = vunpack.c.h.b16 %v477
    %v1884 = vunpack.c.l.b16 %v478
    %v1885 = vunpack.c.h.b16 %v478
    %v1886 = vunpack.c.l.b16 %v479
    %v1887 = vunpack.c.h.b16 %v479
    %v1888 = vunpack.c.l.b16 %v480
    %v1889 = vunpack.c.h.b16 %v480
    %v1890 = vunpack.c.l.b16 %v481
    %v1891 = vunpack.c.h.b16 %v481
    %v1892 = vunpack.c.l.b16 %v482
    %v1893 = vunpack.c.h.b16 %v482
    %v1894 = vunpack.c.l.b16 %v483
    %v1895 = vunpack.c.h.b16 %v483
    %v1896 = vunpack.c.l.b16 %v484
    %v1897 = vunpack.c.h.b16 %v484
    %v1898 = vunpack.c.l.b16 %v485
    %v1899 = vunpack.c.h.b16 %v485
    %v1900 = vunpack.c.l.b16 %v486
    %v1901 = vunpack.c.h.b16 %v486
    %v1902 = vunpack.c.l.b16 %v487
    %v1903 = vunpack.c.h.b16 %v487
    %v1904 = vunpack.c.l.b16 %v488
    %v1905 = vunpack.c.h.b16 %v488
    %v1906 = vunpack.c.l.b16 %v489
    %v1907 = vunpack.c.h.b16 %v489
    %v1908 = vunpack.c.l.b16 %v490
    %v1909 = vunpack.c.h.b16 %v490
    %v1910 = vunpack.c.l.b16 %v491
    %v1911 = vunpack.c.h.b16 %v491
    %v1912 = vunpack.c.l.b16 %v492
    %v1913 = vunpack.c.h.b16 %v492
    %v1914 = vunpack.c.l.b16 %v493
    %v1915 = vunpack.c.h.b16 %v493
    %v1916 = vunpack.c.l.b16 %v494
    %v1917 = vunpack.c.h.b16 %v494
    %v1918 = vunpack.c.l.b16 %v495
    %v1919 = vunpack.c.h.b16 %v495
    %v1920 = vunpack.c.l.b16 %v496
    %v1921 = vunpack.c.h.b16 %v496
    %v1922 = vunpack.c.l.b16 %v497
    %v1923 = vunpack.c.h.b16 %v497
    %v1924 = vunpack.c.l.b16 %v498
    %v1925 = vunpack.c.h.b16 %v498
    %v1926 = vunpack.c.l.b16 %v499
    %v1927 = vunpack.c.h.b16 %v499
    %v1928 = vunpack.c.l.b16 %v500
    %v1929 = vunpack.c.h.b16 %v500
    %v1930 = vunpack.c.l.b16 %v501
    %v1931 = vunpack.c.h.b16 %v501
    %v1932 = vunpack.c.l.b16 %v502
    %v1933 = vunpack.c.h.b16 %v502
    %v1934 = vunpack.c.l.b16 %v503
    %v1935 = vunpack.c.h.b16 %v503
    %v1936 = vunpack.c.l.b16 %v504
    %v1937 = vunpack.c.h.b16 %v504
    %v1938 = vunpack.c.l.b16 %v505
    %v1939 = vunpack.c.h.b16 %v505
    %v1940 = vunpack.c.l.b16 %v506
    %v1941 = vunpack.c.h.b16 %v506
    %v1942 = vunpack.c.l.b16 %v507
    %v1943 = vunpack.c.h.b16 %v507
    %v1944 = vunpack.c.l.b16 %v508
    %v1945 = vunpack.c.h.b16 %v508
    %v1946 = vunpack.c.l.b16 %v509
    %v1947 = vunpack.c.h.b16 %v509
    %v1948 = vunpack.c.l.b16 %v510
    %v1949 = vunpack.c.h.b16 %v510
    %v1950 = vunpack.c.l.b16 %v511
    %v1951 = vunpack.c.h.b16 %v511
    %v1952 = vunpack.c.l.b16 %v512
    %v1953 = vunpack.c.h.b16 %v512
    %v1954 = vunpack.c.l.b16 %v513
    %v1955 = vunpack.c.h.b16 %v513
    %v1956 = vunpack.c.l.b16 %v514
    %v1957 = vunpack.c.h.b16 %v514
    %v1958 = vunpack.c.l.b16 %v515
    %v1959 = vunpack.c.h.b16 %v515
    %v1960 = vunpack.c.l.b16 %v516
    %v1961 = vunpack.c.h.b16 %v516
    %v1962 = vunpack.c.l.b16 %v517
    %v1963 = vunpack.c.h.b16 %v517
    %v1964 = vunpack.c.l.b16 %v518
    %v1965 = vunpack.c.h.b16 %v518
    %v1966 = vunpack.c.l.b16 %v519
    %v1967 = vunpack.c.h.b16 %v519
    %v1968 = vunpack.c.l.b16 %v520
    %v1969 = vunpack.c.h.b16 %v520
    %v1970 = vunpack.c.l.b16 %v521
    %v1971 = vunpack.c.h.b16 %v521
    %v1972 = vunpack.c.l.b16 %v522
    %v1973 = vunpack.c.h.b16 %v522
    %v1974 = vunpack.c.l.b16 %v523
    %v1975 = vunpack.c.h.b16 %v523
    %v1976 = vunpack.c.l.b16 %v524
    %v1977 = vunpack.c.h.b16 %v524
    %v1978 = vunpack.c.l.b16 %v525
    %v1979 = vunpack.c.h.b16 %v525
    %v1980 = vunpack.c.l.b16 %v526
    %v1981 = vunpack.c.h.b16 %v526
    %v1982 = vunpack.c.l.b16 %v527
    %v1983 = vunpack.c.h.b16 %v527
    %v1984 = vunpack.c.l.b16 %v528
    %v1985 = vunpack.c.h.b16 %v528
    %v1986 = vunpack.c.l.b16 %v529
    %v1987 = vunpack.c.h.b16 %v529
    %v1988 = vunpack.c.l.b16 %v530
    %v1989 = vunpack.c.h.b16 %v530
    %v1990 = vunpack.c.l.b16 %v531
    %v1991 = vunpack.c.h.b16 %v531
    %v1992 = vunpack.c.l.b16 %v532
    %v1993 = vunpack.c.h.b16 %v532
    %v1994 = vunpack.c.l.b16 %v533
    %v1995 = vunpack.c.h.b16 %v533
    %v1996 = vunpack.c.l.b16 %v534
    %v1997 = vunpack.c.h.b16 %v534
    %v1998 = vunpack.c.l.b16 %v535
    %v1999 = vunpack.c.h.b16 %v535
    %v2000 = vunpack.c.l.b16 %v536
    %v2001 = vunpack.c.h.b16 %v536
    %v2002 = vunpack.c.l.b16 %v537
    %v2003 = vunpack.c.h.b16 %v537
    %v2004 = vunpack.c.l.b16 %v538
    %v2005 = vunpack.c.h.b16 %v538
    %v2006 = vunpack.c.l.b16 %v539
    %v2007 = vunpack.c.h.b16 %v539
    %v2008 = vunpack.c.l.b16 %v540
    %v2009 = vunpack.c.h.b16 %v540
    %v2010 = vunpack.c.l.b16 %v541
    %v2011 = vunpack.c.h.b16 %v541
    %v2012 = vunpack.c.l.b16 %v542
    %v2013 = vunpack.c.h.b16 %v542
    %v2014 = vunpack.c.l.b16 %v543
    %v2015 = vunpack.c.h.b16 %v543
    %v2016 = vunpack.c.l.b16 %v544
    %v2017 = vunpack.c.h.b16 %v544
    %v2018 = vunpack.c.l.b16 %v545
    %v2019 = vunpack.c.h.b16 %v545
    %v2020 = vunpack.c.l.b16 %v546
    %v2021 = vunpack.c.h.b16 %v546
    %v2022 = vunpack.c.l.b16 %v547
    %v2023 = vunpack.c.h.b16 %v547
    %v2024 = vunpack.c.l.b16 %v548
    %v2025 = vunpack.c.h.b16 %v548
    %v2026 = vunpack.c.l.b16 %v549
    %v2027 = vunpack.c.h.b16 %v549
    %v2028 = vunpack.c.l.b16 %v550
    %v2029 = vunpack.c.h.b16 %v550
    %v2030 = vunpack.c.l.b16 %v551
    %v2031 = vunpack.c.h.b16 %v551
    %v2032 = vunpack.c.l.b16 %v552
    %v2033 = vunpack.c.h.b16 %v552
    %v2034 = vunpack.c.l.b16 %v553
    %v2035 = vunpack.c.h.b16 %v553
    %v2036 = vunpack.c.l.b16 %v554
    %v2037 = vunpack.c.h.b16 %v554
    %v2038 = vunpack.c.l.b16 %v555
    %v2039 = vunpack.c.h.b16 %v555
    %v2040 = vunpack.c.l.b16 %v556
    %v2041 = vunpack.c.h.b16 %v556
    %v2042 = vunpack.c.l.b16 %v557
    %v2043 = vunpack.c.h.b16 %v557
    %v2044 = vunpack.c.l.b16 %v558
    %v2045 = vunpack.c.h.b16 %v558
    %v2046 = vunpack.c.l.b16 %v559
    %v2047 = vunpack.c.h.b16 %v559
    %v2048 = vunpack.c.l.b16 %v560
    %v2049 = vunpack.c.h.b16 %v560
    %v2050 = vunpack.c.l.b16 %v561
    %v2051 = vunpack.c.h.b16 %v561
    %v2052 = vunpack.c.l.b16 %v562
    %v2053 = vunpack.c.h.b16 %v562
    %v2054 = vunpack.c.l.b16 %v563
    %v2055 = vunpack.c.h.b16 %v563
    %v2056 = vunpack.c.l.b16 %v564
    %v2057 = vunpack.c.h.b16 %v564
    %v2058 = vunpack.c.l.b16 %v565
    %v2059 = vunpack.c.h.b16 %v565
    %v2060 = vunpack.c.l.b16 %v566
    %v2061 = vunpack.c.h.b16 %v566
    %v2062 = vunpack.c.l.b16 %v567
    %v2063 = vunpack.c.h.b16 %v567
    %v2064 = vunpack.c.l.b16 %v568
    %v2065 = vunpack.c.h.b16 %v568
    %v2066 = vunpack.c.l.b16 %v569
    %v2067 = vunpack.c.h.b16 %v569
    %v2068 = vunpack.c.l.b16 %v570
    %v2069 = vunpack.c.h.b16 %v570
    %v2070 = vunpack.c.l.b16 %v571
    %v2071 = vunpack.c.h.b16 %v571
    %v2072 = vunpack.c.l.b16 %v572
    %v2073 = vunpack.c.h.b16 %v572
    %v2074 = vunpack.c.l.b16 %v573
    %v2075 = vunpack.c.h.b16 %v573
    %v2076 = vunpack.c.l.b16 %v574
    %v2077 = vunpack.c.h.b16 %v574
    %v2078 = vunpack.c.l.b16 %v575
    %v2079 = vunpack.c.h.b16 %v575
    %v2080 = vunpack.c.l.b16 %v576
    %v2081 = vunpack.c.h.b16 %v576
    %v2082 = vunpack.c.l.b16 %v577
    %v2083 = vunpack.c.h.b16 %v577
    %v2084 = vunpack.c.l.b16 %v578
    %v2085 = vunpack.c.h.b16 %v578
    %v2086 = vunpack.c.l.b16 %v579
    %v2087 = vunpack.c.h.b16 %v579
    %v2088 = vunpack.c.l.b16 %v580
    %v2089 = vunpack.c.h.b16 %v580
    %v2090 = vunpack.c.l.b16 %v581
    %v2091 = vunpack.c.h.b16 %v581
    %v2092 = vunpack.c.l.b16 %v582
    %v2093 = vunpack.c.h.b16 %v582
    %v2094 = vunpack.c.l.b16 %v583
    %v2095 = vunpack.c.h.b16 %v583
    %v2096 = vunpack.c.l.b16 %v584
    %v2097 = vunpack.c.h.b16 %v584
    %v2098 = vunpack.c.l.b16 %v585
    %v2099 = vunpack.c.h.b16 %v585
    %v2100 = vunpack.c.l.b16 %v586
    %v2101 = vunpack.c.h.b16 %v586
    %v2102 = vunpack.c.l.b16 %v587
    %v2103 = vunpack.c.h.b16 %v587
    %v2104 = vunpack.c.l.b16 %v588
    %v2105 = vunpack.c.h.b16 %v588
    %v2106 = vunpack.c.l.b16 %v589
    %v2107 = vunpack.c.h.b16 %v589
    %v2108 = vunpack.c.l.b16 %v590
    %v2109 = vunpack.c.h.b16 %v590
    %v2110 = vunpack.c.l.b16 %v591
    %v2111 = vunpack.c.h.b16 %v591
    %v2112 = vunpack.c.l.b16 %v592
    %v2113 = vunpack.c.h.b16 %v592
    %v2114 = vunpack.c.l.b16 %v593
    %v2115 = vunpack.c.h.b16 %v593
    %v2116 = vunpack.c.l.b16 %v594
    %v2117 = vunpack.c.h.b16 %v594
    %v2118 = vunpack.c.l.b16 %v595
    %v2119 = vunpack.c.h.b16 %v595
    %v2120 = vunpack.c.l.b16 %v596
    %v2121 = vunpack.c.h.b16 %v596
    %v2122 = vunpack.c.l.b16 %v597
    %v2123 = vunpack.c.h.b16 %v597
    %v2124 = vunpack.c.l.b16 %v598
    %v2125 = vunpack.c.h.b16 %v598
    %v2126 = vunpack.c.l.b16 %v599
    %v2127 = vunpack.c.h.b16 %v599
    %v2128 = vunpack.c.l.b16 %v600
    %v2129 = vunpack.c.h.b16 %v600
    %v2130 = vunpack.c.l.b16 %v601
    %v2131 = vunpack.c.h.b16 %v601
    %v2132 = vunpack.c.l.b16 %v602
    %v2133 = vunpack.c.h.b16 %v602
    %v2134 = vunpack.c.l.b16 %v603
    %v2135 = vunpack.c.h.b16 %v603
    %v2136 = vunpack.c.l.b16 %v604
    %v2137 = vunpack.c.h.b16 %v604
    %v2138 = vunpack.c.l.b16 %v605
    %v2139 = vunpack.c.h.b16 %v605
    %v2140 = vunpack.c.l.b16 %v606
    %v2141 = vunpack.c.h.b16 %v606
    %v2142 = vunpack.c.l.b16 %v607
    %v2143 = vunpack.c.h.b16 %v607
    %v2144 = vunpack.c.l.b16 %v608
    %v2145 = vunpack.c.h.b16 %v608
    %v2146 = vunpack.c.l.b16 %v609
    %v2147 = vunpack.c.h.b16 %v609
    %v2148 = vunpack.c.l.b16 %v610
    %v2149 = vunpack.c.h.b16 %v610
    %v2150 = vunpack.c.l.b16 %v611
    %v2151 = vunpack.c.h.b16 %v611
    %v2152 = vunpack.c.l.b16 %v612
    %v2153 = vunpack.c.h.b16 %v612
    %v2154 = vunpack.c.l.b16 %v613
    %v2155 = vunpack.c.h.b16 %v613
    %v2156 = vunpack.c.l.b16 %v614
    %v2157 = vunpack.c.h.b16 %v614
    %v2158 = vunpack.c.l.b16 %v615
    %v2159 = vunpack.c.h.b16 %v615
    %v2160 = vunpack.c.l.b16 %v616
    %v2161 = vunpack.c.h.b16 %v616
    %v2162 = vunpack.c.l.b16 %v617
    %v2163 = vunpack.c.h.b16 %v617
    %v2164 = vunpack.c.l.b16 %v618
    %v2165 = vunpack.c.h.b16 %v618
    %v2166 = vunpack.c.l.b16 %v619
    %v2167 = vunpack.c.h.b16 %v619
    %v2168 = vunpack.c.l.b16 %v620
    %v2169 = vunpack.c.h.b16 %v620
    %v2170 = vunpack.c.l.b16 %v621
    %v2171 = vunpack.c.h.b16 %v621
    %v2172 = vunpack.c.l.b16 %v622
    %v2173 = vunpack.c.h.b16 %v622
    %v2174 = vunpack.c.l.b16 %v623
    %v2175 = vunpack.c.h.b16 %v623
    %v2176 = vunpack.c.l.b16 %v624
    %v2177 = vunpack.c.h.b16 %v624
    %v2178 = vunpack.c.l.b16 %v625
    %v2179 = vunpack.c.h.b16 %v625
    %v2180 = vunpack.c.l.b16 %v626
    %v2181 = vunpack.c.h.b16 %v626
    %v2182 = vunpack.c.l.b16 %v627
    %v2183 = vunpack.c.h.b16 %v627
    %v2184 = vunpack.c.l.b16 %v628
    %v2185 = vunpack.c.h.b16 %v628
    %v2186 = vunpack.c.l.b16 %v629
    %v2187 = vunpack.c.h.b16 %v629
    %v2188 = vunpack.c.l.b16 %v630
    %v2189 = vunpack.c.h.b16 %v630
    %v2190 = vunpack.c.l.b16 %v631
    %v2191 = vunpack.c.h.b16 %v631
    %v2192 = vunpack.c.l.b16 %v632
    %v2193 = vunpack.c.h.b16 %v632
    %v2194 = vunpack.c.l.b16 %v633
    %v2195 = vunpack.c.h.b16 %v633
    %v2196 = vunpack.c.l.b16 %v634
    %v2197 = vunpack.c.h.b16 %v634
    %v2198 = vunpack.c.l.b16 %v635
    %v2199 = vunpack.c.h.b16 %v635
    %v2200 = vunpack.c.l.b16 %v636
    %v2201 = vunpack.c.h.b16 %v636
    %v2202 = vunpack.c.l.b16 %v637
    %v2203 = vunpack.c.h.b16 %v637
    %v2204 = vunpack.c.l.b16 %v638
    %v2205 = vunpack.c.h.b16 %v638
    %v2206 = vunpack.c.l.b16 %v639
    %v2207 = vunpack.c.h.b16 %v639
    %v2208 = vunpack.c.l.b16 %v640
    %v2209 = vunpack.c.h.b16 %v640
    %v2210 = vunpack.c.l.b16 %v641
    %v2211 = vunpack.c.h.b16 %v641
    %v2212 = vunpack.c.l.b16 %v642
    %v2213 = vunpack.c.h.b16 %v642
    %v2214 = vunpack.c.l.b16 %v643
    %v2215 = vunpack.c.h.b16 %v643
    %v2216 = vunpack.c.l.b16 %v644
    %v2217 = vunpack.c.h.b16 %v644
    %v2218 = vunpack.c.l.b16 %v645
    %v2219 = vunpack.c.h.b16 %v645
    %v2220 = vunpack.c.l.b16 %v646
    %v2221 = vunpack.c.h.b16 %v646
    %v2222 = vunpack.c.l.b16 %v647
    %v2223 = vunpack.c.h.b16 %v647
    %v2224 = vunpack.c.l.b16 %v648
    %v2225 = vunpack.c.h.b16 %v648
    %v2226 = vunpack.c.l.b16 %v649
    %v2227 = vunpack.c.h.b16 %v649
    %v2228 = vunpack.c.l.b16 %v650
    %v2229 = vunpack.c.h.b16 %v650
    %v2230 = vunpack.c.l.b16 %v651
    %v2231 = vunpack.c.h.b16 %v651
    %v2232 = vunpack.c.l.b16 %v652
    %v2233 = vunpack.c.h.b16 %v652
    %v2234 = vunpack.c.l.b16 %v653
    %v2235 = vunpack.c.h.b16 %v653
    %v2236 = vunpack.c.l.b16 %v654
    %v2237 = vunpack.c.h.b16 %v654
    %v2238 = vunpack.c.l.b16 %v655
    %v2239 = vunpack.c.h.b16 %v655
    %v2240 = vunpack.c.l.b16 %v656
    %v2241 = vunpack.c.h.b16 %v656
    %v2242 = vunpack.c.l.b16 %v657
    %v2243 = vunpack.c.h.b16 %v657
    %v2244 = vunpack.c.l.b16 %v658
    %v2245 = vunpack.c.h.b16 %v658
    %v2246 = vunpack.c.l.b16 %v659
    %v2247 = vunpack.c.h.b16 %v659
    %v2248 = vunpack.c.l.b16 %v660
    %v2249 = vunpack.c.h.b16 %v660
    %v2250 = vunpack.c.l.b16 %v661
    %v2251 = vunpack.c.h.b16 %v661
    %v2252 = vunpack.c.l.b16 %v662
    %v2253 = vunpack.c.h.b16 %v662
    %v2254 = vunpack.c.l.b16 %v663
    %v2255 = vunpack.c.h.b16 %v663
    %v2256 = vunpack.c.l.b16 %v664
    %v2257 = vunpack.c.h.b16 %v664
    %v2258 = vunpack.c.l.b16 %v665
    %v2259 = vunpack.c.h.b16 %v665
    %v2260 = vunpack.c.l.b16 %v666
    %v2261 = vunpack.c.h.b16 %v666
    %v2262 = vunpack.c.l.b16 %v667
    %v2263 = vunpack.c.h.b16 %v667
    %v2264 = vunpack.c.l.b16 %v668
    %v2265 = vunpack.c.h.b16 %v668
    %v2266 = vunpack.c.l.b16 %v669
    %v2267 = vunpack.c.h.b16 %v669
    %v2268 = vunpack.c.l.b16 %v670
    %v2269 = vunpack.c.h.b16 %v670
    %v2270 = vunpack.c.l.b16 %v671
    %v2271 = vunpack.c.h.b16 %v671
    %v2272 = vunpack.c.l.b16 %v672
    %v2273 = vunpack.c.h.b16 %v672
    %v2274 = vunpack.c.l.b16 %v673
    %v2275 = vunpack.c.h.b16 %v673
    %v2276 = vunpack.c.l.b16 %v674
    %v2277 = vunpack.c.h.b16 %v674
    %v2278 = vunpack.c.l.b16 %v675
    %v2279 = vunpack.c.h.b16 %v675
    %v2280 = vunpack.c.l.b16 %v676
    %v2281 = vunpack.c.h.b16 %v676
    %v2282 = vunpack.c.l.b16 %v677
    %v2283 = vunpack.c.h.b16 %v677
    %v2284 = vunpack.c.l.b16 %v678
    %v2285 = vunpack.c.h.b16 %v678
    %v2286 = vunpack.c.l.b16 %v679
    %v2287 = vunpack.c.h.b16 %v679
    %v2288 = vunpack.c.l.b16 %v680
    %v2289 = vunpack.c.h.b16 %v680
    %v2290 = vunpack.c.l.b16 %v681
    %v2291 = vunpack.c.h.b16 %v681
    %v2292 = vunpack.c.l.b16 %v682
    %v2293 = vunpack.c.h.b16 %v682
    %v2294 = vunpack.c.l.b16 %v683
    %v2295 = vunpack.c.h.b16 %v683
    %v2296 = vunpack.c.l.b16 %v684
    %v2297 = vunpack.c.h.b16 %v684
    %v2298 = vunpack.c.l.b16 %v685
    %v2299 = vunpack.c.h.b16 %v685
    %v2300 = vunpack.c.l.b16 %v686
    %v2301 = vunpack.c.h.b16 %v686
    %v2302 = vunpack.c.l.b16 %v687
    %v2303 = vunpack.c.h.b16 %v687
    %v2304 = vunpack.c.l.b16 %v688
    %v2305 = vunpack.c.h.b16 %v688
    %v2306 = vunpack.c.l.b16 %v689
    %v2307 = vunpack.c.h.b16 %v689
    %v2308 = vunpack.c.l.b16 %v690
    %v2309 = vunpack.c.h.b16 %v690
    %v2310 = vunpack.c.l.b16 %v691
    %v2311 = vunpack.c.h.b16 %v691
    %v2312 = vunpack.c.l.b16 %v692
    %v2313 = vunpack.c.h.b16 %v692
    %v2314 = vunpack.c.l.b16 %v693
    %v2315 = vunpack.c.h.b16 %v693
    %v2316 = vunpack.c.l.b16 %v694
    %v2317 = vunpack.c.h.b16 %v694
    %v2318 = vunpack.c.l.b16 %v695
    %v2319 = vunpack.c.h.b16 %v695
    %v2320 = vunpack.c.l.b16 %v696
    %v2321 = vunpack.c.h.b16 %v696
    %v2322 = vunpack.c.l.b16 %v697
    %v2323 = vunpack.c.h.b16 %v697
    %v2324 = vunpack.c.l.b16 %v698
    %v2325 = vunpack.c.h.b16 %v698
    %v2326 = vunpack.c.l.b16 %v699
    %v2327 = vunpack.c.h.b16 %v699
    %v2328 = vunpack.c.l.b16 %v700
    %v2329 = vunpack.c.h.b16 %v700
    %v2330 = vunpack.c.l.b16 %v701
    %v2331 = vunpack.c.h.b16 %v701
    %v2332 = vunpack.c.l.b16 %v702
    %v2333 = vunpack.c.h.b16 %v702
    %v2334 = vunpack.c.l.b16 %v703
    %v2335 = vunpack.c.h.b16 %v703
    %v2336 = vunpack.c.l.b16 %v704
    %v2337 = vunpack.c.h.b16 %v704
    %v2338 = vunpack.c.l.b16 %v705
    %v2339 = vunpack.c.h.b16 %v705
    %v2340 = vunpack.c.l.b16 %v706
    %v2341 = vunpack.c.h.b16 %v706
    %v2342 = vunpack.c.l.b16 %v707
    %v2343 = vunpack.c.h.b16 %v707
    %v2344 = vunpack.c.l.b16 %v708
    %v2345 = vunpack.c.h.b16 %v708
    %v2346 = vunpack.c.l.b16 %v709
    %v2347 = vunpack.c.h.b16 %v709
    %v2348 = vunpack.c.l.b16 %v710
    %v2349 = vunpack.c.h.b16 %v710
    %v2350 = vunpack.c.l.b16 %v711
    %v2351 = vunpack.c.h.b16 %v711
    %v2352 = vpack.c.b16 %v1344, %v1328
    %v2353 = vpack.c.b16 %v1345, %v1329
    %v2354 = vpack.c.b16 %v1346, %v1330
    %v2355 = vpack.c.b16 %v1347, %v1331
    %v2356 = vpack.c.b16 %v1348, %v1332
    %v2357 = vpack.c.b16 %v1349, %v1333
    %v2358 = vpack.c.b16 %v1350, %v1334
    %v2359 = vpack.c.b16 %v1351, %v1335
    %v2360 = vpack.c.b16 %v1352, %v1336
    %v2361 = vpack.c.b16 %v1353, %v1337
    %v2362 = vpack.c.b16 %v1354, %v1338
    %v2363 = vpack.c.b16 %v1355, %v1339
    %v2364 = vpack.c.b16 %v1356, %v1340
    %v2365 = vpack.c.b16 %v1357, %v1341
    %v2366 = vpack.c.b16 %v1358, %v1342
    %v2367 = vpack.c.b16 %v1359, %v1343
    %v2368 = vpack.c.b16 %v1376, %v1360
    %v2369 = vpack.c.b16 %v1377, %v1361
    %v2370 = vpack.c.b16 %v1378, %v1362
    %v2371 = vpack.c.b16 %v1379, %v1363
    %v2372 = vpack.c.b16 %v1380, %v1364
    %v2373 = vpack.c.b16 %v1381, %v1365
    %v2374 = vpack.c.b16 %v1382, %v1366
    %v2375 = vpack.c.b16 %v1383, %v1367
    %v2376 = vpack.c.b16 %v1384, %v1368
    %v2377 = vpack.c.b16 %v1385, %v1369
    %v2378 = vpack.c.b16 %v1386, %v1370
    %v2379 = vpack.c.b16 %v1387, %v1371
    %v2380 = vpack.c.b16 %v1388, %v1372
    %v2381 = vpack.c.b16 %v1389, %v1373
    %v2382 = vpack.c.b16 %v1390, %v1374
    %v2383 = vpack.c.b16 %v1391, %v1375
    %v2384 = vpack.c.b16 %v1408, %v1392
    %v2385 = vpack.c.b16 %v1409, %v1393
    %v2386 = vpack.c.b16 %v1410, %v1394
    %v2387 = vpack.c.b16 %v1411, %v1395
    %v2388 = vpack.c.b16 %v1412, %v1396
    %v2389 = vpack.c.b16 %v1413, %v1397
    %v2390 = vpack.c.b16 %v1414, %v1398
    %v2391 = vpack.c.b16 %v1415, %v1399
    %v2392 = vpack.c.b16 %v1416, %v1400
    %v2393 = vpack.c.b16 %v1417, %v1401
    %v2394 = vpack.c.b16 %v1418, %v1402
    %v2395 = vpack.c.b16 %v1419, %v1403
    %v2396 = vpack.c.b16 %v1420, %v1404
    %v2397 = vpack.c.b16 %v1421, %v1405
    %v2398 = vpack.c.b16 %v1422, %v1406
    %v2399 = vpack.c.b16 %v1423, %v1407
    %v2400 = vpack.c.b16 %v1440, %v1424
    %v2401 = vpack.c.b16 %v1441, %v1425
    %v2402 = vpack.c.b16 %v1442, %v1426
    %v2403 = vpack.c.b16 %v1443, %v1427
    %v2404 = vpack.c.b16 %v1444, %v1428
    %v2405 = vpack.c.b16 %v1445, %v1429
    %v2406 = vpack.c.b16 %v1446, %v1430
    %v2407 = vpack.c.b16 %v1447, %v1431
    %v2408 = vpack.c.b16 %v1448, %v1432
    %v2409 = vpack.c.b16 %v1449, %v1433
    %v2410 = vpack.c.b16 %v1450, %v1434
    %v2411 = vpack.c.b16 %v1451, %v1435
    %v2412 = vpack.c.b16 %v1452, %v1436
    %v2413 = vpack.c.b16 %v1453, %v1437
    %v2414 = vpack.c.b16 %v1454, %v1438
    %v2415 = vpack.c.b16 %v1455, %v1439
    %v2416 = vpack.c.b16 %v1472, %v1456
    %v2417 = vpack.c.b16 %v1473, %v1457
    %v2418 = vpack.c.b16 %v1474, %v1458
    %v2419 = vpack.c.b16 %v1475, %v1459
    %v2420 = vpack.c.b16 %v1476, %v1460
    %v2421 = vpack.c.b16 %v1477, %v1461
    %v2422 = vpack.c.b16 %v1478, %v1462
    %v2423 = vpack.c.b16 %v1479, %v1463
    %v2424 = vpack.c.b16 %v1480, %v1464
    %v2425 = vpack.c.b16 %v1481, %v1465
    %v2426 = vpack.c.b16 %v1482, %v1466
    %v2427 = vpack.c.b16 %v1483, %v1467
    %v2428 = vpack.c.b16 %v1484, %v1468
    %v2429 = vpack.c.b16 %v1485, %v1469
    %v2430 = vpack.c.b16 %v1486, %v1470
    %v2431 = vpack.c.b16 %v1487, %v1471
    %v2432 = vpack.c.b16 %v1504, %v1488
    %v2433 = vpack.c.b16 %v1505, %v1489
    %v2434 = vpack.c.b16 %v1506, %v1490
    %v2435 = vpack.c.b16 %v1507, %v1491
    %v2436 = vpack.c.b16 %v1508, %v1492
    %v2437 = vpack.c.b16 %v1509, %v1493
    %v2438 = vpack.c.b16 %v1510, %v1494
    %v2439 = vpack.c.b16 %v1511, %v1495
    %v2440 = vpack.c.b16 %v1512, %v1496
    %v2441 = vpack.c.b16 %v1513, %v1497
    %v2442 = vpack.c.b16 %v1514, %v1498
    %v2443 = vpack.c.b16 %v1515, %v1499
    %v2444 = vpack.c.b16 %v1516, %v1500
    %v2445 = vpack.c.b16 %v1517, %v1501
    %v2446 = vpack.c.b16 %v1518, %v1502
    %v2447 = vpack.c.b16 %v1519, %v1503
    %v2448 = vpack.c.b16 %v1536, %v1520
    %v2449 = vpack.c.b16 %v1537, %v1521
    %v2450 = vpack.c.b16 %v1538, %v1522
    %v2451 = vpack.c.b16 %v1539, %v1523
    %v2452 = vpack.c.b16 %v1540, %v1524
    %v2453 = vpack.c.b16 %v1541, %v1525
    %v2454 = vpack.c.b16 %v1542, %v1526
    %v2455 = vpack.c.b16 %v1543, %v1527
    %v2456 = vpack.c.b16 %v1544, %v1528
    %v2457 = vpack.c.b16 %v1545, %v1529
    %v2458 = vpack.c.b16 %v1546, %v1530
    %v2459 = vpack.c.b16 %v1547, %v1531
    %v2460 = vpack.c.b16 %v1548, %v1532
    %v2461 = vpack.c.b16 %v1549, %v1533
    %v2462 = vpack.c.b16 %v1550, %v1534
    %v2463 = vpack.c.b16 %v1551, %v1535
    %v2464 = vpack.c.b16 %v1568, %v1552
    %v2465 = vpack.c.b16 %v1569, %v1553
    %v2466 = vpack.c.b16 %v1570, %v1554
    %v2467 = vpack.c.b16 %v1571, %v1555
    %v2468 = vpack.c.b16 %v1572, %v1556
    %v2469 = vpack.c.b16 %v1573, %v1557
    %v2470 = vpack.c.b16 %v1574, %v1558
    %v2471 = vpack.c.b16 %v1575, %v1559
    %v2472 = vpack.c.b16 %v1576, %v1560
    %v2473 = vpack.c.b16 %v1577, %v1561
    %v2474 = vpack.c.b16 %v1578, %v1562
    %v2475 = vpack.c.b16 %v1579, %v1563
    %v2476 = vpack.c.b16 %v1580, %v1564
    %v2477 = vpack.c.b16 %v1581, %v1565
    %v2478 = vpack.c.b16 %v1582, %v1566
    %v2479 = vpack.c.b16 %v1583, %v1567
    %v2480 = vpack.c.b16 %v1600, %v1584
    %v2481 = vpack.c.b16 %v1601, %v1585
    %v2482 = vpack.c.b16 %v1602, %v1586
    %v2483 = vpack.c.b16 %v1603, %v1587
    %v2484 = vpack.c.b16 %v1604, %v1588
    %v2485 = vpack.c.b16 %v1605, %v1589
    %v2486 = vpack.c.b16 %v1606, %v1590
    %v2487 = vpack.c.b16 %v1607, %v1591
    %v2488 = vpack.c.b16 %v1608, %v1592
    %v2489 = vpack.c.b16 %v1609, %v1593
    %v2490 = vpack.c.b16 %v1610, %v1594
    %v2491 = vpack.c.b16 %v1611, %v1595
    %v2492 = vpack.c.b16 %v1612, %v1596
    %v2493 = vpack.c.b16 %v1613, %v1597
    %v2494 = vpack.c.b16 %v1614, %v1598
    %v2495 = vpack.c.b16 %v1615, %v1599
    %v2496 = vpack.c.b16 %v1632, %v1616
    %v2497 = vpack.c.b16 %v1633, %v1617
    %v2498 = vpack.c.b16 %v1634, %v1618
    %v2499 = vpack.c.b16 %v1635, %v1619
    %v2500 = vpack.c.b16 %v1636, %v1620
    %v2501 = vpack.c.b16 %v1637, %v1621
    %v2502 = vpack.c.b16 %v1638, %v1622
    %v2503 = vpack.c.b16 %v1639, %v1623
    %v2504 = vpack.c.b16 %v1640, %v1624
    %v2505 = vpack.c.b16 %v1641, %v1625
    %v2506 = vpack.c.b16 %v1642, %v1626
    %v2507 = vpack.c.b16 %v1643, %v1627
    %v2508 = vpack.c.b16 %v1644, %v1628
    %v2509 = vpack.c.b16 %v1645, %v1629
    %v2510 = vpack.c.b16 %v1646, %v1630
    %v2511 = vpack.c.b16 %v1647, %v1631
    %v2512 = vpack.c.b16 %v1664, %v1648
    %v2513 = vpack.c.b16 %v1665, %v1649
    %v2514 = vpack.c.b16 %v1666, %v1650
    %v2515 = vpack.c.b16 %v1667, %v1651
    %v2516 = vpack.c.b16 %v1668, %v1652
    %v2517 = vpack.c.b16 %v1669, %v1653
    %v2518 = vpack.c.b16 %v1670, %v1654
    %v2519 = vpack.c.b16 %v1671, %v1655
    %v2520 = vpack.c.b16 %v1672, %v1656
    %v2521 = vpack.c.b16 %v1673, %v1657
    %v2522 = vpack.c.b16 %v1674, %v1658
    %v2523 = vpack.c.b16 %v1675, %v1659
    %v2524 = vpack.c.b16 %v1676, %v1660
    %v2525 = vpack.c.b16 %v1677, %v1661
    %v2526 = vpack.c.b16 %v1678, %v1662
    %v2527 = vpack.c.b16 %v1679, %v1663
    %v2528 = vpack.c.b16 %v1696, %v1680
    %v2529 = vpack.c.b16 %v1697, %v1681
    %v2530 = vpack.c.b16 %v1698, %v1682
    %v2531 = vpack.c.b16 %v1699, %v1683
    %v2532 = vpack.c.b16 %v1700, %v1684
    %v2533 = vpack.c.b16 %v1701, %v1685
    %v2534 = vpack.c.b16 %v1702, %v1686
    %v2535 = vpack.c.b16 %v1703, %v1687
    %v2536 = vpack.c.b16 %v1704, %v1688
    %v2537 = vpack.c.b16 %v1705, %v1689
    %v2538 = vpack.c.b16 %v1706, %v1690
    %v2539 = vpack.c.b16 %v1707, %v1691
    %v2540 = vpack.c.b16 %v1708, %v1692
    %v2541 = vpack.c.b16 %v1709, %v1693
    %v2542 = vpack.c.b16 %v1710, %v1694
    %v2543 = vpack.c.b16 %v1711, %v1695
    %v2544 = vpack.c.b16 %v1728, %v1712
    %v2545 = vpack.c.b16 %v1729, %v1713
    %v2546 = vpack.c.b16 %v1730, %v1714
    %v2547 = vpack.c.b16 %v1731, %v1715
    %v2548 = vpack.c.b16 %v1732, %v1716
    %v2549 = vpack.c.b16 %v1733, %v1717
    %v2550 = vpack.c.b16 %v1734, %v1718
    %v2551 = vpack.c.b16 %v1735, %v1719
    %v2552 = vpack.c.b16 %v1736, %v1720
    %v2553 = vpack.c.b16 %v1737, %v1721
    %v2554 = vpack.c.b16 %v1738, %v1722
    %v2555 = vpack.c.b16 %v1739, %v1723
    %v2556 = vpack.c.b16 %v1740, %v1724
    %v2557 = vpack.c.b16 %v1741, %v1725
    %v2558 = vpack.c.b16 %v1742, %v1726
    %v2559 = vpack.c.b16 %v1743, %v1727
    %v2560 = vpack.c.b16 %v1760, %v1744
    %v2561 = vpack.c.b16 %v1761, %v1745
    %v2562 = vpack.c.b16 %v1762, %v1746
    %v2563 = vpack.c.b16 %v1763, %v1747
    %v2564 = vpack.c.b16 %v1764, %v1748
    %v2565 = vpack.c.b16 %v1765, %v1749
    %v2566 = vpack.c.b16 %v1766, %v1750
    %v2567 = vpack.c.b16 %v1767, %v1751
    %v2568 = vpack.c.b16 %v1768, %v1752
    %v2569 = vpack.c.b16 %v1769, %v1753
    %v2570 = vpack.c.b16 %v1770, %v1754
    %v2571 = vpack.c.b16 %v1771, %v1755
    %v2572 = vpack.c.b16 %v1772, %v1756
    %v2573 = vpack.c.b16 %v1773, %v1757
    %v2574 = vpack.c.b16 %v1774, %v1758
    %v2575 = vpack.c.b16 %v1775, %v1759
    %v2576 = vpack.c.b16 %v1792, %v1776
    %v2577 = vpack.c.b16 %v1793, %v1777
    %v2578 = vpack.c.b16 %v1794, %v1778
    %v2579 = vpack.c.b16 %v1795, %v1779
    %v2580 = vpack.c.b16 %v1796, %v1780
    %v2581 = vpack.c.b16 %v1797, %v1781
    %v2582 = vpack.c.b16 %v1798, %v1782
    %v2583 = vpack.c.b16 %v1799, %v1783
    %v2584 = vpack.c.b16 %v1800, %v1784
    %v2585 = vpack.c.b16 %v1801, %v1785
    %v2586 = vpack.c.b16 %v1802, %v1786
    %v2587 = vpack.c.b16 %v1803, %v1787
    %v2588 = vpack.c.b16 %v1804, %v1788
    %v2589 = vpack.c.b16 %v1805, %v1789
    %v2590 = vpack.c.b16 %v1806, %v1790
    %v2591 = vpack.c.b16 %v1807, %v1791
    %v2592 = vpack.c.b16 %v1824, %v1808
    %v2593 = vpack.c.b16 %v1825, %v1809
    %v2594 = vpack.c.b16 %v1826, %v1810
    %v2595 = vpack.c.b16 %v1827, %v1811
    %v2596 = vpack.c.b16 %v1828, %v1812
    %v2597 = vpack.c.b16 %v1829, %v1813
    %v2598 = vpack.c.b16 %v1830, %v1814
    %v2599 = vpack.c.b16 %v1831, %v1815
    %v2600 = vpack.c.b16 %v1832, %v1816
    %v2601 = vpack.c.b16 %v1833, %v1817
    %v2602 = vpack.c.b16 %v1834, %v1818
    %v2603 = vpack.c.b16 %v1835, %v1819
    %v2604 = vpack.c.b16 %v1836, %v1820
    %v2605 = vpack.c.b16 %v1837, %v1821
    %v2606 = vpack.c.b16 %v1838, %v1822
    %v2607 = vpack.c.b16 %v1839, %v1823
    %v2608 = vpack.c.b16 %v1856, %v1840
    %v2609 = vpack.c.b16 %v1857, %v1841
    %v2610 = vpack.c.b16 %v1858, %v1842
    %v2611 = vpack.c.b16 %v1859, %v1843
    %v2612 = vpack.c.b16 %v1860, %v1844
    %v2613 = vpack.c.b16 %v1861, %v1845
    %v2614 = vpack.c.b16 %v1862, %v1846
    %v2615 = vpack.c.b16 %v1863, %v1847
    %v2616 = vpack.c.b16 %v1864, %v1848
    %v2617 = vpack.c.b16 %v1865, %v1849
    %v2618 = vpack.c.b16 %v1866, %v1850
    %v2619 = vpack.c.b16 %v1867, %v1851
    %v2620 = vpack.c.b16 %v1868, %v1852
    %v2621 = vpack.c.b16 %v1869, %v1853
    %v2622 = vpack.c.b16 %v1870, %v1854
    %v2623 = vpack.c.b16 %v1871, %v1855
    %v2624 = vpack.c.b16 %v1888, %v1872
    %v2625 = vpack.c.b16 %v1889, %v1873
    %v2626 = vpack.c.b16 %v1890, %v1874
    %v2627 = vpack.c.b16 %v1891, %v1875
    %v2628 = vpack.c.b16 %v1892, %v1876
    %v2629 = vpack.c.b16 %v1893, %v1877
    %v2630 = vpack.c.b16 %v1894, %v1878
    %v2631 = vpack.c.b16 %v1895, %v1879
    %v2632 = vpack.c.b16 %v1896, %v1880
    %v2633 = vpack.c.b16 %v1897, %v1881
    %v2634 = vpack.c.b16 %v1898, %v1882
    %v2635 = vpack.c.b16 %v1899, %v1883
    %v2636 = vpack.c.b16 %v1900, %v1884
    %v2637 = vpack.c.b16 %v1901, %v1885
    %v2638 = vpack.c.b16 %v1902, %v1886
    %v2639 = vpack.c.b16 %v1903, %v1887
    %v2640 = vpack.c.b16 %v1920, %v1904
    %v2641 = vpack.c.b16 %v1921, %v1905
    %v2642 = vpack.c.b16 %v1922, %v1906
    %v2643 = vpack.c.b16 %v1923, %v1907
    %v2644 = vpack.c.b16 %v1924, %v1908
    %v2645 = vpack.c.b16 %v1925, %v1909
    %v2646 = vpack.c.b16 %v1926, %v1910
    %v2647 = vpack.c.b16 %v1927, %v1911
    %v2648 = vpack.c.b16 %v1928, %v1912
    %v2649 = vpack.c.b16 %v1929, %v1913
    %v2650 = vpack.c.b16 %v1930, %v1914
    %v2651 = vpack.c.b16 %v1931, %v1915
    %v2652 = vpack.c.b16 %v1932, %v1916
    %v2653 = vpack.c.b16 %v1933, %v1917
    %v2654 = vpack.c.b16 %v1934, %v1918
    %v2655 = vpack.c.b16 %v1935, %v1919
    %v2656 = vpack.c.b16 %v1952, %v1936
    %v2657 = vpack.c.b16 %v1953, %v1937
    %v2658 = vpack.c.b16 %v1954, %v1938
    %v2659 = vpack.c.b16 %v1955, %v1939
    %v2660 = vpack.c.b16 %v1956, %v1940
    %v2661 = vpack.c.b16 %v1957, %v1941
    %v2662 = vpack.c.b16 %v1958, %v1942
    %v2663 = vpack.c.b16 %v1959, %v1943
    %v2664 = vpack.c.b16 %v1960, %v1944
    %v2665 = vpack.c.b16 %v1961, %v1945
    %v2666 = vpack.c.b16 %v1962, %v1946
    %v2667 = vpack.c.b16 %v1963, %v1947
    %v2668 = vpack.c.b16 %v1964, %v1948
    %v2669 = vpack.c.b16 %v1965, %v1949
    %v2670 = vpack.c.b16 %v1966, %v1950
    %v2671 = vpack.c.b16 %v1967, %v1951
    %v2672 = vpack.c.b16 %v1984, %v1968
    %v2673 = vpack.c.b16 %v1985, %v1969
    %v2674 = vpack.c.b16 %v1986, %v1970
    %v2675 = vpack.c.b16 %v1987, %v1971
    %v2676 = vpack.c.b16 %v1988, %v1972
    %v2677 = vpack.c.b16 %v1989, %v1973
    %v2678 = vpack.c.b16 %v1990, %v1974
    %v2679 = vpack.c.b16 %v1991, %v1975
    %v2680 = vpack.c.b16 %v1992, %v1976
    %v2681 = vpack.c.b16 %v1993, %v1977
    %v2682 = vpack.c.b16 %v1994, %v1978
    %v2683 = vpack.c.b16 %v1995, %v1979
    %v2684 = vpack.c.b16 %v1996, %v1980
    %v2685 = vpack.c.b16 %v1997, %v1981
    %v2686 = vpack.c.b16 %v1998, %v1982
    %v2687 = vpack.c.b16 %v1999, %v1983
    %v2688 = vpack.c.b16 %v2016, %v2000
    %v2689 = vpack.c.b16 %v2017, %v2001
    %v2690 = vpack.c.b16 %v2018, %v2002
    %v2691 = vpack.c.b16 %v2019, %v2003
    %v2692 = vpack.c.b16 %v2020, %v2004
    %v2693 = vpack.c.b16 %v2021, %v2005
    %v2694 = vpack.c.b16 %v2022, %v2006
    %v2695 = vpack.c.b16 %v2023, %v2007
    %v2696 = vpack.c.b16 %v2024, %v2008
    %v2697 = vpack.c.b16 %v2025, %v2009
    %v2698 = vpack.c.b16 %v2026, %v2010
    %v2699 = vpack.c.b16 %v2027, %v2011
    %v2700 = vpack.c.b16 %v2028, %v2012
    %v2701 = vpack.c.b16 %v2029, %v2013
    %v2702 = vpack.c.b16 %v2030, %v2014
    %v2703 = vpack.c.b16 %v2031, %v2015
    %v2704 = vpack.c.b16 %v2048, %v2032
    %v2705 = vpack.c.b16 %v2049, %v2033
    %v2706 = vpack.c.b16 %v2050, %v2034
    %v2707 = vpack.c.b16 %v2051, %v2035
    %v2708 = vpack.c.b16 %v2052, %v2036
    %v2709 = vpack.c.b16 %v2053, %v2037
    %v2710 = vpack.c.b16 %v2054, %v2038
    %v2711 = vpack.c.b16 %v2055, %v2039
    %v2712 = vpack.c.b16 %v2056, %v2040
    %v2713 = vpack.c.b16 %v2057, %v2041
    %v2714 = vpack.c.b16 %v2058, %v2042
    %v2715 = vpack.c.b16 %v2059, %v2043
    %v2716 = vpack.c.b16 %v2060, %v2044
    %v2717 = vpack.c.b16 %v2061, %v2045
    %v2718 = vpack.c.b16 %v2062, %v2046
    %v2719 = vpack.c.b16 %v2063, %v2047
    %v2720 = vpack.c.b16 %v2080, %v2064
    %v2721 = vpack.c.b16 %v2081, %v2065
    %v2722 = vpack.c.b16 %v2082, %v2066
    %v2723 = vpack.c.b16 %v2083, %v2067
    %v2724 = vpack.c.b16 %v2084, %v2068
    %v2725 = vpack.c.b16 %v2085, %v2069
    %v2726 = vpack.c.b16 %v2086, %v2070
    %v2727 = vpack.c.b16 %v2087, %v2071
    %v2728 = vpack.c.b16 %v2088, %v2072
    %v2729 = vpack.c.b16 %v2089, %v2073
    %v2730 = vpack.c.b16 %v2090, %v2074
    %v2731 = vpack.c.b16 %v2091, %v2075
    %v2732 = vpack.c.b16 %v2092, %v2076
    %v2733 = vpack.c.b16 %v2093, %v2077
    %v2734 = vpack.c.b16 %v2094, %v2078
    %v2735 = vpack.c.b16 %v2095, %v2079
    %v2736 = vpack.c.b16 %v2112, %v2096
    %v2737 = vpack.c.b16 %v2113, %v2097
    %v2738 = vpack.c.b16 %v2114, %v2098
    %v2739 = vpack.c.b16 %v2115, %v2099
    %v2740 = vpack.c.b16 %v2116, %v2100
    %v2741 = vpack.c.b16 %v2117, %v2101
    %v2742 = vpack.c.b16 %v2118, %v2102
    %v2743 = vpack.c.b16 %v2119, %v2103
    %v2744 = vpack.c.b16 %v2120, %v2104
    %v2745 = vpack.c.b16 %v2121, %v2105
    %v2746 = vpack.c.b16 %v2122, %v2106
    %v2747 = vpack.c.b16 %v2123, %v2107
    %v2748 = vpack.c.b16 %v2124, %v2108
    %v2749 = vpack.c.b16 %v2125, %v2109
    %v2750 = vpack.c.b16 %v2126, %v2110
    %v2751 = vpack.c.b16 %v2127, %v2111
    %v2752 = vpack.c.b16 %v2144, %v2128
    %v2753 = vpack.c.b16 %v2145, %v2129
    %v2754 = vpack.c.b16 %v2146, %v2130
    %v2755 = vpack.c.b16 %v2147, %v2131
    %v2756 = vpack.c.b16 %v2148, %v2132
    %v2757 = vpack.c.b16 %v2149, %v2133
    %v2758 = vpack.c.b16 %v2150, %v2134
    %v2759 = vpack.c.b16 %v2151, %v2135
    %v2760 = vpack.c.b16 %v2152, %v2136
    %v2761 = vpack.c.b16 %v2153, %v2137
    %v2762 = vpack.c.b16 %v2154, %v2138
    %v2763 = vpack.c.b16 %v2155, %v2139
    %v2764 = vpack.c.b16 %v2156, %v2140
    %v2765 = vpack.c.b16 %v2157, %v2141
    %v2766 = vpack.c.b16 %v2158, %v2142
    %v2767 = vpack.c.b16 %v2159, %v2143
    %v2768 = vpack.c.b16 %v2176, %v2160
    %v2769 = vpack.c.b16 %v2177, %v2161
    %v2770 = vpack.c.b16 %v2178, %v2162
    %v2771 = vpack.c.b16 %v2179, %v2163
    %v2772 = vpack.c.b16 %v2180, %v2164
    %v2773 = vpack.c.b16 %v2181, %v2165
    %v2774 = vpack.c.b16 %v2182, %v2166
    %v2775 = vpack.c.b16 %v2183, %v2167
    %v2776 = vpack.c.b16 %v2184, %v2168
    %v2777 = vpack.c.b16 %v2185, %v2169
    %v2778 = vpack.c.b16 %v2186, %v2170
    %v2779 = vpack.c.b16 %v2187, %v2171
    %v2780 = vpack.c.b16 %v2188, %v2172
    %v2781 = vpack.c.b16 %v2189, %v2173
    %v2782 = vpack.c.b16 %v2190, %v2174
    %v2783 = vpack.c.b16 %v2191, %v2175
    %v2784 = vpack.c.b16 %v2208, %v2192
    %v2785 = vpack.c.b16 %v2209, %v2193
    %v2786 = vpack.c.b16 %v2210, %v2194
    %v2787 = vpack.c.b16 %v2211, %v2195
    %v2788 = vpack.c.b16 %v2212, %v2196
    %v2789 = vpack.c.b16 %v2213, %v2197
    %v2790 = vpack.c.b16 %v2214, %v2198
    %v2791 = vpack.c.b16 %v2215, %v2199
    %v2792 = vpack.c.b16 %v2216, %v2200
    %v2793 = vpack.c.b16 %v2217, %v2201
    %v2794 = vpack.c.b16 %v2218, %v2202
    %v2795 = vpack.c.b16 %v2219, %v2203
    %v2796 = vpack.c.b16 %v2220, %v2204
    %v2797 = vpack.c.b16 %v2221, %v2205
    %v2798 = vpack.c.b16 %v2222, %v2206
    %v2799 = vpack.c.b16 %v2223, %v2207
    %v2800 = vpack.c.b16 %v2240, %v2224
    %v2801 = vpack.c.b16 %v2241, %v2225
    %v2802 = vpack.c.b16 %v2242, %v2226
    %v2803 = vpack.c.b16 %v2243, %v2227
    %v2804 = vpack.c.b16 %v2244, %v2228
    %v2805 = vpack.c.b16 %v2245, %v2229
    %v2806 = vpack.c.b16 %v2246, %v2230
    %v2807 = vpack.c.b16 %v2247, %v2231
    %v2808 = vpack.c.b16 %v2248, %v2232
    %v2809 = vpack.c.b16 %v2249, %v2233
    %v2810 = vpack.c.b16 %v2250, %v2234
    %v2811 = vpack.c.b16 %v2251, %v2235
    %v2812 = vpack.c.b16 %v2252, %v2236
    %v2813 = vpack.c.b16 %v2253, %v2237
    %v2814 = vpack.c.b16 %v2254, %v2238
    %v2815 = vpack.c.b16 %v2255, %v2239
    %v2816 = vpack.c.b16 %v2272, %v2256
    %v2817 = vpack.c.b16 %v2273, %v2257
    %v2818 = vpack.c.b16 %v2274, %v2258
    %v2819 = vpack.c.b16 %v2275, %v2259
    %v2820 = vpack.c.b16 %v2276, %v2260
    %v2821 = vpack.c.b16 %v2277, %v2261
    %v2822 = vpack.c.b16 %v2278, %v2262
    %v2823 = vpack.c.b16 %v2279, %v2263
    %v2824 = vpack.c.b16 %v2280, %v2264
    %v2825 = vpack.c.b16 %v2281, %v2265
    %v2826 = vpack.c.b16 %v2282, %v2266
    %v2827 = vpack.c.b16 %v2283, %v2267
    %v2828 = vpack.c.b16 %v2284, %v2268
    %v2829 = vpack.c.b16 %v2285, %v2269
    %v2830 = vpack.c.b16 %v2286, %v2270
    %v2831 = vpack.c.b16 %v2287, %v2271
    %v2832 = vpack.c.b16 %v2304, %v2288
    %v2833 = vpack.c.b16 %v2305, %v2289
    %v2834 = vpack.c.b16 %v2306, %v2290
    %v2835 = vpack.c.b16 %v2307, %v2291
    %v2836 = vpack.c.b16 %v2308, %v2292
    %v2837 = vpack.c.b16 %v2309, %v2293
    %v2838 = vpack.c.b16 %v2310, %v2294
    %v2839 = vpack.c.b16 %v2311, %v2295
    %v2840 = vpack.c.b16 %v2312, %v2296
    %v2841 = vpack.c.b16 %v2313, %v2297
    %v2842 = vpack.c.b16 %v2314, %v2298
    %v2843 = vpack.c.b16 %v2315, %v2299
    %v2844 = vpack.c.b16 %v2316, %v2300
    %v2845 = vpack.c.b16 %v2317, %v2301
    %v2846 = vpack.c.b16 %v2318, %v2302
    %v2847 = vpack.c.b16 %v2319, %v2303
    %v2848 = vpack.c.b16 %v2336, %v2320
    %v2849 = vpack.c.b16 %v2337, %v2321
    %v2850 = vpack.c.b16 %v2338, %v2322
    %v2851 = vpack.c.b16 %v2339, %v2323
    %v2852 = vpack.c.b16 %v2340, %v2324
    %v2853 = vpack.c.b16 %v2341, %v2325
    %v2854 = vpack.c.b16 %v2342, %v2326
    %v2855 = vpack.c.b16 %v2343, %v2327
    %v2856 = vpack.c.b16 %v2344, %v2328
    %v2857 = vpack.c.b16 %v2345, %v2329
    %v2858 = vpack.c.b16 %v2346, %v2330
    %v2859 = vpack.c.b16 %v2347, %v2331
    %v2860 = vpack.c.b16 %v2348, %v2332
    %v2861 = vpack.c.b16 %v2349, %v2333
    %v2862 = vpack.c.b16 %v2350, %v2334
    %v2863 = vpack.c.b16 %v2351, %v2335
    %3376 = vmatprep.subr.bf16.mxu0 %v2353
    %3377 = vmatpush1.bf16.msra.mxu0 %v2352
    %3378 = vmatprep.subr.bf16.mxu0 %v2369
    %3379 = vmatpush1.bf16.msra.mxu0 %v2368
    %3380 = vmatprep.subr.bf16.mxu0 %v2385
    %3381 = vmatpush1.bf16.msra.mxu0 %v2384
    %3382 = vmatprep.subr.bf16.mxu0 %v2401
    %3383 = vmatpush1.bf16.msra.mxu0 %v2400
    %3384 = vmatprep.subr.bf16.mxu0 %v2417
    %3385 = vmatpush1.bf16.msra.mxu0 %v2416
    %3386 = vmatprep.subr.bf16.mxu0 %v2433
    %3387 = vmatpush1.bf16.msra.mxu0 %v2432
    %3388 = vmatprep.subr.bf16.mxu0 %v2449
    %3389 = vmatpush1.bf16.msra.mxu0 %v2448
    %3390 = vmatprep.subr.bf16.mxu0 %v2465
    %3391 = vmatpush1.bf16.msra.mxu0 %v2464
    %3392 = vmatprep.subr.bf16.mxu0 %v2481
    %3393 = vmatpush1.bf16.msra.mxu0 %v2480
    %3394 = vmatprep.subr.bf16.mxu0 %v2497
    %3395 = vmatpush1.bf16.msra.mxu0 %v2496
    %3396 = vmatprep.subr.bf16.mxu0 %v2513
    %3397 = vmatpush1.bf16.msra.mxu0 %v2512
    %3398 = vmatprep.subr.bf16.mxu0 %v2529
    %3399 = vmatpush1.bf16.msra.mxu0 %v2528
    %3400 = vmatprep.subr.bf16.mxu0 %v2545
    %3401 = vmatpush1.bf16.msra.mxu0 %v2544
    %3402 = vmatprep.subr.bf16.mxu0 %v2561
    %3403 = vmatpush1.bf16.msra.mxu0 %v2560
    %3404 = vmatprep.subr.bf16.mxu0 %v2577
    %3405 = vmatpush1.bf16.msra.mxu0 %v2576
    %3406 = vmatprep.subr.bf16.mxu0 %v2593
    %3407 = vmatpush1.bf16.msra.mxu0 %v2592
    %3408 = vmatprep.mubr.bf16.mxu0 %v809
    %3409 = vmatmul.mubr.bf16.gmra.mrb[0].mxu0 %v808
    %v3410 = vpop.f32.mrb[0].mxu0
    %v3411 = vadd.f32 %v719, %v3410
    %v3412 = vpop.f32.mrb[0].mxu0
    %v3413 = vadd.f32 %v723, %v3412
    %v3414 = vpop.f32.mrb[0].mxu0
    %v3415 = vadd.f32 %v719, %v3414
    %v3416 = vpop.f32.mrb[0].mxu0
    %v3417 = vadd.f32 %v723, %v3416
    %3418 = vdwg.mxu0
    %3419 = vmatprep.subr.bf16.mxu0 %v2609
    %3420 = vmatpush1.bf16.msra.mxu0 %v2608
    %3421 = vmatprep.subr.bf16.mxu0 %v2625
    %3422 = vmatpush1.bf16.msra.mxu0 %v2624
    %3423 = vmatprep.subr.bf16.mxu0 %v2641
    %3424 = vmatpush1.bf16.msra.mxu0 %v2640
    %3425 = vmatprep.subr.bf16.mxu0 %v2657
    %3426 = vmatpush1.bf16.msra.mxu0 %v2656
    %3427 = vmatprep.subr.bf16.mxu0 %v2673
    %3428 = vmatpush1.bf16.msra.mxu0 %v2672
    %3429 = vmatprep.subr.bf16.mxu0 %v2689
    %3430 = vmatpush1.bf16.msra.mxu0 %v2688
    %3431 = vmatprep.subr.bf16.mxu0 %v2705
    %3432 = vmatpush1.bf16.msra.mxu0 %v2704
    %3433 = vmatprep.subr.bf16.mxu0 %v2721
    %3434 = vmatpush1.bf16.msra.mxu0 %v2720
    %3435 = vmatprep.subr.bf16.mxu0 %v2737
    %3436 = vmatpush1.bf16.msra.mxu0 %v2736
    %3437 = vmatprep.subr.bf16.mxu0 %v2753
    %3438 = vmatpush1.bf16.msra.mxu0 %v2752
    %3439 = vmatprep.subr.bf16.mxu0 %v2769
    %3440 = vmatpush1.bf16.msra.mxu0 %v2768
    %3441 = vmatprep.subr.bf16.mxu0 %v2785
    %3442 = vmatpush1.bf16.msra.mxu0 %v2784
    %3443 = vmatprep.subr.bf16.mxu0 %v2801
    %3444 = vmatpush1.bf16.msra.mxu0 %v2800
    %3445 = vmatprep.subr.bf16.mxu0 %v2817
    %3446 = vmatpush1.bf16.msra.mxu0 %v2816
    %3447 = vmatprep.subr.bf16.mxu0 %v2833
    %3448 = vmatpush1.bf16.msra.mxu0 %v2832
    %3449 = vmatprep.subr.bf16.mxu0 %v2849
    %3450 = vmatpush1.bf16.msra.mxu0 %v2848
    %3451 = vmatprep.mubr.bf16.mxu0 %v811
    %3452 = vmatmul.mubr.bf16.gmra.mrb[0].mxu0 %v810
    %v3453 = vpop.f32.mrb[0].mxu0
    %v3454 = vadd.f32 %v3411, %v3453
    %v3455 = vpop.f32.mrb[0].mxu0
    %v3456 = vadd.f32 %v3413, %v3455
    %v3457 = vpop.f32.mrb[0].mxu0
    %v3458 = vadd.f32 %v3415, %v3457
    %v3459 = vpop.f32.mrb[0].mxu0
    %v3460 = vadd.f32 %v3417, %v3459
    %3461 = vdwg.mxu0
    %3462 = vmatprep.subr.bf16.mxu0 %v2355
    %3463 = vmatpush1.bf16.msra.mxu0 %v2354
    %3464 = vmatprep.subr.bf16.mxu0 %v2371
    %3465 = vmatpush1.bf16.msra.mxu0 %v2370
    %3466 = vmatprep.subr.bf16.mxu0 %v2387
    %3467 = vmatpush1.bf16.msra.mxu0 %v2386
    %3468 = vmatprep.subr.bf16.mxu0 %v2403
    %3469 = vmatpush1.bf16.msra.mxu0 %v2402
    %3470 = vmatprep.subr.bf16.mxu0 %v2419
    %3471 = vmatpush1.bf16.msra.mxu0 %v2418
    %3472 = vmatprep.subr.bf16.mxu0 %v2435
    %3473 = vmatpush1.bf16.msra.mxu0 %v2434
    %3474 = vmatprep.subr.bf16.mxu0 %v2451
    %3475 = vmatpush1.bf16.msra.mxu0 %v2450
    %3476 = vmatprep.subr.bf16.mxu0 %v2467
    %3477 = vmatpush1.bf16.msra.mxu0 %v2466
    %3478 = vmatprep.subr.bf16.mxu0 %v2483
    %3479 = vmatpush1.bf16.msra.mxu0 %v2482
    %3480 = vmatprep.subr.bf16.mxu0 %v2499
    %3481 = vmatpush1.bf16.msra.mxu0 %v2498
    %3482 = vmatprep.subr.bf16.mxu0 %v2515
    %3483 = vmatpush1.bf16.msra.mxu0 %v2514
    %3484 = vmatprep.subr.bf16.mxu0 %v2531
    %3485 = vmatpush1.bf16.msra.mxu0 %v2530
    %3486 = vmatprep.subr.bf16.mxu0 %v2547
    %3487 = vmatpush1.bf16.msra.mxu0 %v2546
    %3488 = vmatprep.subr.bf16.mxu0 %v2563
    %3489 = vmatpush1.bf16.msra.mxu0 %v2562
    %3490 = vmatprep.subr.bf16.mxu0 %v2579
    %3491 = vmatpush1.bf16.msra.mxu0 %v2578
    %3492 = vmatprep.subr.bf16.mxu0 %v2595
    %3493 = vmatpush1.bf16.msra.mxu0 %v2594
    %3494 = vmatprep.mubr.bf16.mxu0 %v809
    %3495 = vmatmul.mubr.bf16.gmra.mrb[0].mxu0 %v808
    %v3496 = vpop.f32.mrb[0].mxu0
    %v3497 = vadd.f32 %v727, %v3496
    %v3498 = vpop.f32.mrb[0].mxu0
    %v3499 = vadd.f32 %v731, %v3498
    %v3500 = vpop.f32.mrb[0].mxu0
    %v3501 = vadd.f32 %v727, %v3500
    %v3502 = vpop.f32.mrb[0].mxu0
    %v3503 = vadd.f32 %v731, %v3502
    %3504 = vdwg.mxu0
    %3505 = vmatprep.subr.bf16.mxu0 %v2611
    %3506 = vmatpush1.bf16.msra.mxu0 %v2610
    %3507 = vmatprep.subr.bf16.mxu0 %v2627
    %3508 = vmatpush1.bf16.msra.mxu0 %v2626
    %3509 = vmatprep.subr.bf16.mxu0 %v2643
    %3510 = vmatpush1.bf16.msra.mxu0 %v2642
    %3511 = vmatprep.subr.bf16.mxu0 %v2659
    %3512 = vmatpush1.bf16.msra.mxu0 %v2658
    %3513 = vmatprep.subr.bf16.mxu0 %v2675
    %3514 = vmatpush1.bf16.msra.mxu0 %v2674
    %3515 = vmatprep.subr.bf16.mxu0 %v2691
    %3516 = vmatpush1.bf16.msra.mxu0 %v2690
    %3517 = vmatprep.subr.bf16.mxu0 %v2707
    %3518 = vmatpush1.bf16.msra.mxu0 %v2706
    %3519 = vmatprep.subr.bf16.mxu0 %v2723
    %3520 = vmatpush1.bf16.msra.mxu0 %v2722
    %3521 = vmatprep.subr.bf16.mxu0 %v2739
    %3522 = vmatpush1.bf16.msra.mxu0 %v2738
    %3523 = vmatprep.subr.bf16.mxu0 %v2755
    %3524 = vmatpush1.bf16.msra.mxu0 %v2754
    %3525 = vmatprep.subr.bf16.mxu0 %v2771
    %3526 = vmatpush1.bf16.msra.mxu0 %v2770
    %3527 = vmatprep.subr.bf16.mxu0 %v2787
    %3528 = vmatpush1.bf16.msra.mxu0 %v2786
    %3529 = vmatprep.subr.bf16.mxu0 %v2803
    %3530 = vmatpush1.bf16.msra.mxu0 %v2802
    %3531 = vmatprep.subr.bf16.mxu0 %v2819
    %3532 = vmatpush1.bf16.msra.mxu0 %v2818
    %3533 = vmatprep.subr.bf16.mxu0 %v2835
    %3534 = vmatpush1.bf16.msra.mxu0 %v2834
    %3535 = vmatprep.subr.bf16.mxu0 %v2851
    %3536 = vmatpush1.bf16.msra.mxu0 %v2850
    %3537 = vmatprep.mubr.bf16.mxu0 %v811
    %3538 = vmatmul.mubr.bf16.gmra.mrb[0].mxu0 %v810
    %v3539 = vpop.f32.mrb[0].mxu0
    %v3540 = vadd.f32 %v3497, %v3539
    %v3541 = vpop.f32.mrb[0].mxu0
    %v3542 = vadd.f32 %v3499, %v3541
    %v3543 = vpop.f32.mrb[0].mxu0
    %v3544 = vadd.f32 %v3501, %v3543
    %v3545 = vpop.f32.mrb[0].mxu0
    %v3546 = vadd.f32 %v3503, %v3545
    %3547 = vdwg.mxu0
    %3548 = vmatprep.subr.bf16.mxu0 %v2357
    %3549 = vmatpush1.bf16.msra.mxu0 %v2356
    %3550 = vmatprep.subr.bf16.mxu0 %v2373
    %3551 = vmatpush1.bf16.msra.mxu0 %v2372
    %3552 = vmatprep.subr.bf16.mxu0 %v2389
    %3553 = vmatpush1.bf16.msra.mxu0 %v2388
    %3554 = vmatprep.subr.bf16.mxu0 %v2405
    %3555 = vmatpush1.bf16.msra.mxu0 %v2404
    %3556 = vmatprep.subr.bf16.mxu0 %v2421
    %3557 = vmatpush1.bf16.msra.mxu0 %v2420
    %3558 = vmatprep.subr.bf16.mxu0 %v2437
    %3559 = vmatpush1.bf16.msra.mxu0 %v2436
    %3560 = vmatprep.subr.bf16.mxu0 %v2453
    %3561 = vmatpush1.bf16.msra.mxu0 %v2452
    %3562 = vmatprep.subr.bf16.mxu0 %v2469
    %3563 = vmatpush1.bf16.msra.mxu0 %v2468
    %3564 = vmatprep.subr.bf16.mxu0 %v2485
    %3565 = vmatpush1.bf16.msra.mxu0 %v2484
    %3566 = vmatprep.subr.bf16.mxu0 %v2501
    %3567 = vmatpush1.bf16.msra.mxu0 %v2500
    %3568 = vmatprep.subr.bf16.mxu0 %v2517
    %3569 = vmatpush1.bf16.msra.mxu0 %v2516
    %3570 = vmatprep.subr.bf16.mxu0 %v2533
    %3571 = vmatpush1.bf16.msra.mxu0 %v2532
    %3572 = vmatprep.subr.bf16.mxu0 %v2549
    %3573 = vmatpush1.bf16.msra.mxu0 %v2548
    %3574 = vmatprep.subr.bf16.mxu0 %v2565
    %3575 = vmatpush1.bf16.msra.mxu0 %v2564
    %3576 = vmatprep.subr.bf16.mxu0 %v2581
    %3577 = vmatpush1.bf16.msra.mxu0 %v2580
    %3578 = vmatprep.subr.bf16.mxu0 %v2597
    %3579 = vmatpush1.bf16.msra.mxu0 %v2596
    %3580 = vmatprep.mubr.bf16.mxu0 %v809
    %3581 = vmatmul.mubr.bf16.gmra.mrb[0].mxu0 %v808
    %v3582 = vpop.f32.mrb[0].mxu0
    %v3583 = vadd.f32 %v735, %v3582
    %v3584 = vpop.f32.mrb[0].mxu0
    %v3585 = vadd.f32 %v739, %v3584
    %v3586 = vpop.f32.mrb[0].mxu0
    %v3587 = vadd.f32 %v735, %v3586
    %v3588 = vpop.f32.mrb[0].mxu0
    %v3589 = vadd.f32 %v739, %v3588
    %3590 = vdwg.mxu0
    %3591 = vmatprep.subr.bf16.mxu0 %v2613
    %3592 = vmatpush1.bf16.msra.mxu0 %v2612
    %3593 = vmatprep.subr.bf16.mxu0 %v2629
    %3594 = vmatpush1.bf16.msra.mxu0 %v2628
    %3595 = vmatprep.subr.bf16.mxu0 %v2645
    %3596 = vmatpush1.bf16.msra.mxu0 %v2644
    %3597 = vmatprep.subr.bf16.mxu0 %v2661
    %3598 = vmatpush1.bf16.msra.mxu0 %v2660
    %3599 = vmatprep.subr.bf16.mxu0 %v2677
    %3600 = vmatpush1.bf16.msra.mxu0 %v2676
    %3601 = vmatprep.subr.bf16.mxu0 %v2693
    %3602 = vmatpush1.bf16.msra.mxu0 %v2692
    %3603 = vmatprep.subr.bf16.mxu0 %v2709
    %3604 = vmatpush1.bf16.msra.mxu0 %v2708
    %3605 = vmatprep.subr.bf16.mxu0 %v2725
    %3606 = vmatpush1.bf16.msra.mxu0 %v2724
    %3607 = vmatprep.subr.bf16.mxu0 %v2741
    %3608 = vmatpush1.bf16.msra.mxu0 %v2740
    %3609 = vmatprep.subr.bf16.mxu0 %v2757
    %3610 = vmatpush1.bf16.msra.mxu0 %v2756
    %3611 = vmatprep.subr.bf16.mxu0 %v2773
    %3612 = vmatpush1.bf16.msra.mxu0 %v2772
    %3613 = vmatprep.subr.bf16.mxu0 %v2789
    %3614 = vmatpush1.bf16.msra.mxu0 %v2788
    %3615 = vmatprep.subr.bf16.mxu0 %v2805
    %3616 = vmatpush1.bf16.msra.mxu0 %v2804
    %3617 = vmatprep.subr.bf16.mxu0 %v2821
    %3618 = vmatpush1.bf16.msra.mxu0 %v2820
    %3619 = vmatprep.subr.bf16.mxu0 %v2837
    %3620 = vmatpush1.bf16.msra.mxu0 %v2836
    %3621 = vmatprep.subr.bf16.mxu0 %v2853
    %3622 = vmatpush1.bf16.msra.mxu0 %v2852
    %3623 = vmatprep.mubr.bf16.mxu0 %v811
    %3624 = vmatmul.mubr.bf16.gmra.mrb[0].mxu0 %v810
    %v3625 = vpop.f32.mrb[0].mxu0
    %v3626 = vadd.f32 %v3583, %v3625
    %v3627 = vpop.f32.mrb[0].mxu0
    %v3628 = vadd.f32 %v3585, %v3627
    %v3629 = vpop.f32.mrb[0].mxu0
    %v3630 = vadd.f32 %v3587, %v3629
    %v3631 = vpop.f32.mrb[0].mxu0
    %v3632 = vadd.f32 %v3589, %v3631
    %3633 = vdwg.mxu0
    %3634 = vmatprep.subr.bf16.mxu0 %v2359
    %3635 = vmatpush1.bf16.msra.mxu0 %v2358
    %3636 = vmatprep.subr.bf16.mxu0 %v2375
    %3637 = vmatpush1.bf16.msra.mxu0 %v2374
    %3638 = vmatprep.subr.bf16.mxu0 %v2391
    %3639 = vmatpush1.bf16.msra.mxu0 %v2390
    %3640 = vmatprep.subr.bf16.mxu0 %v2407
    %3641 = vmatpush1.bf16.msra.mxu0 %v2406
    %3642 = vmatprep.subr.bf16.mxu0 %v2423
    %3643 = vmatpush1.bf16.msra.mxu0 %v2422
    %3644 = vmatprep.subr.bf16.mxu0 %v2439
    %3645 = vmatpush1.bf16.msra.mxu0 %v2438
    %3646 = vmatprep.subr.bf16.mxu0 %v2455
    %3647 = vmatpush1.bf16.msra.mxu0 %v2454
    %3648 = vmatprep.subr.bf16.mxu0 %v2471
    %3649 = vmatpush1.bf16.msra.mxu0 %v2470
    %3650 = vmatprep.subr.bf16.mxu0 %v2487
    %3651 = vmatpush1.bf16.msra.mxu0 %v2486
    %3652 = vmatprep.subr.bf16.mxu0 %v2503
    %3653 = vmatpush1.bf16.msra.mxu0 %v2502
    %3654 = vmatprep.subr.bf16.mxu0 %v2519
    %3655 = vmatpush1.bf16.msra.mxu0 %v2518
    %3656 = vmatprep.subr.bf16.mxu0 %v2535
    %3657 = vmatpush1.bf16.msra.mxu0 %v2534
    %3658 = vmatprep.subr.bf16.mxu0 %v2551
    %3659 = vmatpush1.bf16.msra.mxu0 %v2550
    %3660 = vmatprep.subr.bf16.mxu0 %v2567
    %3661 = vmatpush1.bf16.msra.mxu0 %v2566
    %3662 = vmatprep.subr.bf16.mxu0 %v2583
    %3663 = vmatpush1.bf16.msra.mxu0 %v2582
    %3664 = vmatprep.subr.bf16.mxu0 %v2599
    %3665 = vmatpush1.bf16.msra.mxu0 %v2598
    %3666 = vmatprep.mubr.bf16.mxu0 %v809
    %3667 = vmatmul.mubr.bf16.gmra.mrb[0].mxu0 %v808
    %v3668 = vpop.f32.mrb[0].mxu0
    %v3669 = vadd.f32 %v743, %v3668
    %v3670 = vpop.f32.mrb[0].mxu0
    %v3671 = vadd.f32 %v747, %v3670
    %v3672 = vpop.f32.mrb[0].mxu0
    %v3673 = vadd.f32 %v743, %v3672
    %v3674 = vpop.f32.mrb[0].mxu0
    %v3675 = vadd.f32 %v747, %v3674
    %3676 = vdwg.mxu0
    %3677 = vmatprep.subr.bf16.mxu0 %v2615
    %3678 = vmatpush1.bf16.msra.mxu0 %v2614
    %3679 = vmatprep.subr.bf16.mxu0 %v2631
    %3680 = vmatpush1.bf16.msra.mxu0 %v2630
    %3681 = vmatprep.subr.bf16.mxu0 %v2647
    %3682 = vmatpush1.bf16.msra.mxu0 %v2646
    %3683 = vmatprep.subr.bf16.mxu0 %v2663
    %3684 = vmatpush1.bf16.msra.mxu0 %v2662
    %3685 = vmatprep.subr.bf16.mxu0 %v2679
    %3686 = vmatpush1.bf16.msra.mxu0 %v2678
    %3687 = vmatprep.subr.bf16.mxu0 %v2695
    %3688 = vmatpush1.bf16.msra.mxu0 %v2694
    %3689 = vmatprep.subr.bf16.mxu0 %v2711
    %3690 = vmatpush1.bf16.msra.mxu0 %v2710
    %3691 = vmatprep.subr.bf16.mxu0 %v2727
    %3692 = vmatpush1.bf16.msra.mxu0 %v2726
    %3693 = vmatprep.subr.bf16.mxu0 %v2743
    %3694 = vmatpush1.bf16.msra.mxu0 %v2742
    %3695 = vmatprep.subr.bf16.mxu0 %v2759
    %3696 = vmatpush1.bf16.msra.mxu0 %v2758
    %3697 = vmatprep.subr.bf16.mxu0 %v2775
    %3698 = vmatpush1.bf16.msra.mxu0 %v2774
    %3699 = vmatprep.subr.bf16.mxu0 %v2791
    %3700 = vmatpush1.bf16.msra.mxu0 %v2790
    %3701 = vmatprep.subr.bf16.mxu0 %v2807
    %3702 = vmatpush1.bf16.msra.mxu0 %v2806
    %3703 = vmatprep.subr.bf16.mxu0 %v2823
    %3704 = vmatpush1.bf16.msra.mxu0 %v2822
    %3705 = vmatprep.subr.bf16.mxu0 %v2839
    %3706 = vmatpush1.bf16.msra.mxu0 %v2838
    %3707 = vmatprep.subr.bf16.mxu0 %v2855
    %3708 = vmatpush1.bf16.msra.mxu0 %v2854
    %3709 = vmatprep.mubr.bf16.mxu0 %v811
    %3710 = vmatmul.mubr.bf16.gmra.mrb[0].mxu0 %v810
    %v3711 = vpop.f32.mrb[0].mxu0
    %v3712 = vadd.f32 %v3669, %v3711
    %v3713 = vpop.f32.mrb[0].mxu0
    %v3714 = vadd.f32 %v3671, %v3713
    %v3715 = vpop.f32.mrb[0].mxu0
    %v3716 = vadd.f32 %v3673, %v3715
    %v3717 = vpop.f32.mrb[0].mxu0
    %v3718 = vadd.f32 %v3675, %v3717
    %3719 = vdwg.mxu0
    %3720 = vmatprep.subr.bf16.mxu0 %v2361
    %3721 = vmatpush1.bf16.msra.mxu0 %v2360
    %3722 = vmatprep.subr.bf16.mxu0 %v2377
    %3723 = vmatpush1.bf16.msra.mxu0 %v2376
    %3724 = vmatprep.subr.bf16.mxu0 %v2393
    %3725 = vmatpush1.bf16.msra.mxu0 %v2392
    %3726 = vmatprep.subr.bf16.mxu0 %v2409
    %3727 = vmatpush1.bf16.msra.mxu0 %v2408
    %3728 = vmatprep.subr.bf16.mxu0 %v2425
    %3729 = vmatpush1.bf16.msra.mxu0 %v2424
    %3730 = vmatprep.subr.bf16.mxu0 %v2441
    %3731 = vmatpush1.bf16.msra.mxu0 %v2440
    %3732 = vmatprep.subr.bf16.mxu0 %v2457
    %3733 = vmatpush1.bf16.msra.mxu0 %v2456
    %3734 = vmatprep.subr.bf16.mxu0 %v2473
    %3735 = vmatpush1.bf16.msra.mxu0 %v2472
    %3736 = vmatprep.subr.bf16.mxu0 %v2489
    %3737 = vmatpush1.bf16.msra.mxu0 %v2488
    %3738 = vmatprep.subr.bf16.mxu0 %v2505
    %3739 = vmatpush1.bf16.msra.mxu0 %v2504
    %3740 = vmatprep.subr.bf16.mxu0 %v2521
    %3741 = vmatpush1.bf16.msra.mxu0 %v2520
    %3742 = vmatprep.subr.bf16.mxu0 %v2537
    %3743 = vmatpush1.bf16.msra.mxu0 %v2536
    %3744 = vmatprep.subr.bf16.mxu0 %v2553
    %3745 = vmatpush1.bf16.msra.mxu0 %v2552
    %3746 = vmatprep.subr.bf16.mxu0 %v2569
    %3747 = vmatpush1.bf16.msra.mxu0 %v2568
    %3748 = vmatprep.subr.bf16.mxu0 %v2585
    %3749 = vmatpush1.bf16.msra.mxu0 %v2584
    %3750 = vmatprep.subr.bf16.mxu0 %v2601
    %3751 = vmatpush1.bf16.msra.mxu0 %v2600
    %3752 = vmatprep.mubr.bf16.mxu0 %v809
    %3753 = vmatmul.mubr.bf16.gmra.mrb[0].mxu0 %v808
    %v3754 = vpop.f32.mrb[0].mxu0
    %v3755 = vadd.f32 %v751, %v3754
    %v3756 = vpop.f32.mrb[0].mxu0
    %v3757 = vadd.f32 %v755, %v3756
    %v3758 = vpop.f32.mrb[0].mxu0
    %v3759 = vadd.f32 %v751, %v3758
    %v3760 = vpop.f32.mrb[0].mxu0
    %v3761 = vadd.f32 %v755, %v3760
    %3762 = vdwg.mxu0
    %3763 = vmatprep.subr.bf16.mxu0 %v2617
    %3764 = vmatpush1.bf16.msra.mxu0 %v2616
    %3765 = vmatprep.subr.bf16.mxu0 %v2633
    %3766 = vmatpush1.bf16.msra.mxu0 %v2632
    %3767 = vmatprep.subr.bf16.mxu0 %v2649
    %3768 = vmatpush1.bf16.msra.mxu0 %v2648
    %3769 = vmatprep.subr.bf16.mxu0 %v2665
    %3770 = vmatpush1.bf16.msra.mxu0 %v2664
    %3771 = vmatprep.subr.bf16.mxu0 %v2681
    %3772 = vmatpush1.bf16.msra.mxu0 %v2680
    %3773 = vmatprep.subr.bf16.mxu0 %v2697
    %3774 = vmatpush1.bf16.msra.mxu0 %v2696
    %3775 = vmatprep.subr.bf16.mxu0 %v2713
    %3776 = vmatpush1.bf16.msra.mxu0 %v2712
    %3777 = vmatprep.subr.bf16.mxu0 %v2729
    %3778 = vmatpush1.bf16.msra.mxu0 %v2728
    %3779 = vmatprep.subr.bf16.mxu0 %v2745
    %3780 = vmatpush1.bf16.msra.mxu0 %v2744
    %3781 = vmatprep.subr.bf16.mxu0 %v2761
    %3782 = vmatpush1.bf16.msra.mxu0 %v2760
    %3783 = vmatprep.subr.bf16.mxu0 %v2777
    %3784 = vmatpush1.bf16.msra.mxu0 %v2776
    %3785 = vmatprep.subr.bf16.mxu0 %v2793
    %3786 = vmatpush1.bf16.msra.mxu0 %v2792
    %3787 = vmatprep.subr.bf16.mxu0 %v2809
    %3788 = vmatpush1.bf16.msra.mxu0 %v2808
    %3789 = vmatprep.subr.bf16.mxu0 %v2825
    %3790 = vmatpush1.bf16.msra.mxu0 %v2824
    %3791 = vmatprep.subr.bf16.mxu0 %v2841
    %3792 = vmatpush1.bf16.msra.mxu0 %v2840
    %3793 = vmatprep.subr.bf16.mxu0 %v2857
    %3794 = vmatpush1.bf16.msra.mxu0 %v2856
    %3795 = vmatprep.mubr.bf16.mxu0 %v811
    %3796 = vmatmul.mubr.bf16.gmra.mrb[0].mxu0 %v810
    %v3797 = vpop.f32.mrb[0].mxu0
    %v3798 = vadd.f32 %v3755, %v3797
    %v3799 = vpop.f32.mrb[0].mxu0
    %v3800 = vadd.f32 %v3757, %v3799
    %v3801 = vpop.f32.mrb[0].mxu0
    %v3802 = vadd.f32 %v3759, %v3801
    %v3803 = vpop.f32.mrb[0].mxu0
    %v3804 = vadd.f32 %v3761, %v3803
    %3805 = vdwg.mxu0
    %3806 = vmatprep.subr.bf16.mxu0 %v2363
    %3807 = vmatpush1.bf16.msra.mxu0 %v2362
    %3808 = vmatprep.subr.bf16.mxu0 %v2379
    %3809 = vmatpush1.bf16.msra.mxu0 %v2378
    %3810 = vmatprep.subr.bf16.mxu0 %v2395
    %3811 = vmatpush1.bf16.msra.mxu0 %v2394
    %3812 = vmatprep.subr.bf16.mxu0 %v2411
    %3813 = vmatpush1.bf16.msra.mxu0 %v2410
    %3814 = vmatprep.subr.bf16.mxu0 %v2427
    %3815 = vmatpush1.bf16.msra.mxu0 %v2426
    %3816 = vmatprep.subr.bf16.mxu0 %v2443
    %3817 = vmatpush1.bf16.msra.mxu0 %v2442
    %3818 = vmatprep.subr.bf16.mxu0 %v2459
    %3819 = vmatpush1.bf16.msra.mxu0 %v2458
    %3820 = vmatprep.subr.bf16.mxu0 %v2475
    %3821 = vmatpush1.bf16.msra.mxu0 %v2474
    %3822 = vmatprep.subr.bf16.mxu0 %v2491
    %3823 = vmatpush1.bf16.msra.mxu0 %v2490
    %3824 = vmatprep.subr.bf16.mxu0 %v2507
    %3825 = vmatpush1.bf16.msra.mxu0 %v2506
    %3826 = vmatprep.subr.bf16.mxu0 %v2523
    %3827 = vmatpush1.bf16.msra.mxu0 %v2522
    %3828 = vmatprep.subr.bf16.mxu0 %v2539
    %3829 = vmatpush1.bf16.msra.mxu0 %v2538
    %3830 = vmatprep.subr.bf16.mxu0 %v2555
    %3831 = vmatpush1.bf16.msra.mxu0 %v2554
    %3832 = vmatprep.subr.bf16.mxu0 %v2571
    %3833 = vmatpush1.bf16.msra.mxu0 %v2570
    %3834 = vmatprep.subr.bf16.mxu0 %v2587
    %3835 = vmatpush1.bf16.msra.mxu0 %v2586
    %3836 = vmatprep.subr.bf16.mxu0 %v2603
    %3837 = vmatpush1.bf16.msra.mxu0 %v2602
    %3838 = vmatprep.mubr.bf16.mxu0 %v809
    %3839 = vmatmul.mubr.bf16.gmra.mrb[0].mxu0 %v808
    %v3840 = vpop.f32.mrb[0].mxu0
    %v3841 = vadd.f32 %v759, %v3840
    %v3842 = vpop.f32.mrb[0].mxu0
    %v3843 = vadd.f32 %v763, %v3842
    %v3844 = vpop.f32.mrb[0].mxu0
    %v3845 = vadd.f32 %v759, %v3844
    %v3846 = vpop.f32.mrb[0].mxu0
    %v3847 = vadd.f32 %v763, %v3846
    %3848 = vdwg.mxu0
    %3849 = vmatprep.subr.bf16.mxu0 %v2619
    %3850 = vmatpush1.bf16.msra.mxu0 %v2618
    %3851 = vmatprep.subr.bf16.mxu0 %v2635
    %3852 = vmatpush1.bf16.msra.mxu0 %v2634
    %3853 = vmatprep.subr.bf16.mxu0 %v2651
    %3854 = vmatpush1.bf16.msra.mxu0 %v2650
    %3855 = vmatprep.subr.bf16.mxu0 %v2667
    %3856 = vmatpush1.bf16.msra.mxu0 %v2666
    %3857 = vmatprep.subr.bf16.mxu0 %v2683
    %3858 = vmatpush1.bf16.msra.mxu0 %v2682
    %3859 = vmatprep.subr.bf16.mxu0 %v2699
    %3860 = vmatpush1.bf16.msra.mxu0 %v2698
    %3861 = vmatprep.subr.bf16.mxu0 %v2715
    %3862 = vmatpush1.bf16.msra.mxu0 %v2714
    %3863 = vmatprep.subr.bf16.mxu0 %v2731
    %3864 = vmatpush1.bf16.msra.mxu0 %v2730
    %3865 = vmatprep.subr.bf16.mxu0 %v2747
    %3866 = vmatpush1.bf16.msra.mxu0 %v2746
    %3867 = vmatprep.subr.bf16.mxu0 %v2763
    %3868 = vmatpush1.bf16.msra.mxu0 %v2762
    %3869 = vmatprep.subr.bf16.mxu0 %v2779
    %3870 = vmatpush1.bf16.msra.mxu0 %v2778
    %3871 = vmatprep.subr.bf16.mxu0 %v2795
    %3872 = vmatpush1.bf16.msra.mxu0 %v2794
    %3873 = vmatprep.subr.bf16.mxu0 %v2811
    %3874 = vmatpush1.bf16.msra.mxu0 %v2810
    %3875 = vmatprep.subr.bf16.mxu0 %v2827
    %3876 = vmatpush1.bf16.msra.mxu0 %v2826
    %3877 = vmatprep.subr.bf16.mxu0 %v2843
    %3878 = vmatpush1.bf16.msra.mxu0 %v2842
    %3879 = vmatprep.subr.bf16.mxu0 %v2859
    %3880 = vmatpush1.bf16.msra.mxu0 %v2858
    %3881 = vmatprep.mubr.bf16.mxu0 %v811
    %3882 = vmatmul.mubr.bf16.gmra.mrb[0].mxu0 %v810
    %v3883 = vpop.f32.mrb[0].mxu0
    %v3884 = vadd.f32 %v3841, %v3883
    %v3885 = vpop.f32.mrb[0].mxu0
    %v3886 = vadd.f32 %v3843, %v3885
    %v3887 = vpop.f32.mrb[0].mxu0
    %v3888 = vadd.f32 %v3845, %v3887
    %v3889 = vpop.f32.mrb[0].mxu0
    %v3890 = vadd.f32 %v3847, %v3889
    %3891 = vdwg.mxu0
    %3892 = vmatprep.subr.bf16.mxu0 %v2365
    %3893 = vmatpush1.bf16.msra.mxu0 %v2364
    %3894 = vmatprep.subr.bf16.mxu0 %v2381
    %3895 = vmatpush1.bf16.msra.mxu0 %v2380
    %3896 = vmatprep.subr.bf16.mxu0 %v2397
    %3897 = vmatpush1.bf16.msra.mxu0 %v2396
    %3898 = vmatprep.subr.bf16.mxu0 %v2413
    %3899 = vmatpush1.bf16.msra.mxu0 %v2412
    %3900 = vmatprep.subr.bf16.mxu0 %v2429
    %3901 = vmatpush1.bf16.msra.mxu0 %v2428
    %3902 = vmatprep.subr.bf16.mxu0 %v2445
    %3903 = vmatpush1.bf16.msra.mxu0 %v2444
    %3904 = vmatprep.subr.bf16.mxu0 %v2461
    %3905 = vmatpush1.bf16.msra.mxu0 %v2460
    %3906 = vmatprep.subr.bf16.mxu0 %v2477
    %3907 = vmatpush1.bf16.msra.mxu0 %v2476
    %3908 = vmatprep.subr.bf16.mxu0 %v2493
    %3909 = vmatpush1.bf16.msra.mxu0 %v2492
    %3910 = vmatprep.subr.bf16.mxu0 %v2509
    %3911 = vmatpush1.bf16.msra.mxu0 %v2508
    %3912 = vmatprep.subr.bf16.mxu0 %v2525
    %3913 = vmatpush1.bf16.msra.mxu0 %v2524
    %3914 = vmatprep.subr.bf16.mxu0 %v2541
    %3915 = vmatpush1.bf16.msra.mxu0 %v2540
    %3916 = vmatprep.subr.bf16.mxu0 %v2557
    %3917 = vmatpush1.bf16.msra.mxu0 %v2556
    %3918 = vmatprep.subr.bf16.mxu0 %v2573
    %3919 = vmatpush1.bf16.msra.mxu0 %v2572
    %3920 = vmatprep.subr.bf16.mxu0 %v2589
    %3921 = vmatpush1.bf16.msra.mxu0 %v2588
    %3922 = vmatprep.subr.bf16.mxu0 %v2605
    %3923 = vmatpush1.bf16.msra.mxu0 %v2604
    %3924 = vmatprep.mubr.bf16.mxu0 %v809
    %3925 = vmatmul.mubr.bf16.gmra.mrb[0].mxu0 %v808
    %v3926 = vpop.f32.mrb[0].mxu0
    %v3927 = vadd.f32 %v767, %v3926
    %v3928 = vpop.f32.mrb[0].mxu0
    %v3929 = vadd.f32 %v771, %v3928
    %v3930 = vpop.f32.mrb[0].mxu0
    %v3931 = vadd.f32 %v767, %v3930
    %v3932 = vpop.f32.mrb[0].mxu0
    %v3933 = vadd.f32 %v771, %v3932
    %3934 = vdwg.mxu0
    %3935 = vmatprep.subr.bf16.mxu0 %v2621
    %3936 = vmatpush1.bf16.msra.mxu0 %v2620
    %3937 = vmatprep.subr.bf16.mxu0 %v2637
    %3938 = vmatpush1.bf16.msra.mxu0 %v2636
    %3939 = vmatprep.subr.bf16.mxu0 %v2653
    %3940 = vmatpush1.bf16.msra.mxu0 %v2652
    %3941 = vmatprep.subr.bf16.mxu0 %v2669
    %3942 = vmatpush1.bf16.msra.mxu0 %v2668
    %3943 = vmatprep.subr.bf16.mxu0 %v2685
    %3944 = vmatpush1.bf16.msra.mxu0 %v2684
    %3945 = vmatprep.subr.bf16.mxu0 %v2701
    %3946 = vmatpush1.bf16.msra.mxu0 %v2700
    %3947 = vmatprep.subr.bf16.mxu0 %v2717
    %3948 = vmatpush1.bf16.msra.mxu0 %v2716
    %3949 = vmatprep.subr.bf16.mxu0 %v2733
    %3950 = vmatpush1.bf16.msra.mxu0 %v2732
    %3951 = vmatprep.subr.bf16.mxu0 %v2749
    %3952 = vmatpush1.bf16.msra.mxu0 %v2748
    %3953 = vmatprep.subr.bf16.mxu0 %v2765
    %3954 = vmatpush1.bf16.msra.mxu0 %v2764
    %3955 = vmatprep.subr.bf16.mxu0 %v2781
    %3956 = vmatpush1.bf16.msra.mxu0 %v2780
    %3957 = vmatprep.subr.bf16.mxu0 %v2797
    %3958 = vmatpush1.bf16.msra.mxu0 %v2796
    %3959 = vmatprep.subr.bf16.mxu0 %v2813
    %3960 = vmatpush1.bf16.msra.mxu0 %v2812
    %3961 = vmatprep.subr.bf16.mxu0 %v2829
    %3962 = vmatpush1.bf16.msra.mxu0 %v2828
    %3963 = vmatprep.subr.bf16.mxu0 %v2845
    %3964 = vmatpush1.bf16.msra.mxu0 %v2844
    %3965 = vmatprep.subr.bf16.mxu0 %v2861
    %3966 = vmatpush1.bf16.msra.mxu0 %v2860
    %3967 = vmatprep.mubr.bf16.mxu0 %v811
    %3968 = vmatmul.mubr.bf16.gmra.mrb[0].mxu0 %v810
    %v3969 = vpop.f32.mrb[0].mxu0
    %v3970 = vadd.f32 %v3927, %v3969
    %v3971 = vpop.f32.mrb[0].mxu0
    %v3972 = vadd.f32 %v3929, %v3971
    %v3973 = vpop.f32.mrb[0].mxu0
    %v3974 = vadd.f32 %v3931, %v3973
    %v3975 = vpop.f32.mrb[0].mxu0
    %v3976 = vadd.f32 %v3933, %v3975
    %3977 = vdwg.mxu0
    %3978 = vmatprep.subr.bf16.mxu0 %v2367
    %3979 = vmatpush1.bf16.msra.mxu0 %v2366
    %3980 = vmatprep.subr.bf16.mxu0 %v2383
    %3981 = vmatpush1.bf16.msra.mxu0 %v2382
    %3982 = vmatprep.subr.bf16.mxu0 %v2399
    %3983 = vmatpush1.bf16.msra.mxu0 %v2398
    %3984 = vmatprep.subr.bf16.mxu0 %v2415
    %3985 = vmatpush1.bf16.msra.mxu0 %v2414
    %3986 = vmatprep.subr.bf16.mxu0 %v2431
    %3987 = vmatpush1.bf16.msra.mxu0 %v2430
    %3988 = vmatprep.subr.bf16.mxu0 %v2447
    %3989 = vmatpush1.bf16.msra.mxu0 %v2446
    %3990 = vmatprep.subr.bf16.mxu0 %v2463
    %3991 = vmatpush1.bf16.msra.mxu0 %v2462
    %3992 = vmatprep.subr.bf16.mxu0 %v2479
    %3993 = vmatpush1.bf16.msra.mxu0 %v2478
    %3994 = vmatprep.subr.bf16.mxu0 %v2495
    %3995 = vmatpush1.bf16.msra.mxu0 %v2494
    %3996 = vmatprep.subr.bf16.mxu0 %v2511
    %3997 = vmatpush1.bf16.msra.mxu0 %v2510
    %3998 = vmatprep.subr.bf16.mxu0 %v2527
    %3999 = vmatpush1.bf16.msra.mxu0 %v2526
    %4000 = vmatprep.subr.bf16.mxu0 %v2543
    %4001 = vmatpush1.bf16.msra.mxu0 %v2542
    %4002 = vmatprep.subr.bf16.mxu0 %v2559
    %4003 = vmatpush1.bf16.msra.mxu0 %v2558
    %4004 = vmatprep.subr.bf16.mxu0 %v2575
    %4005 = vmatpush1.bf16.msra.mxu0 %v2574
    %4006 = vmatprep.subr.bf16.mxu0 %v2591
    %4007 = vmatpush1.bf16.msra.mxu0 %v2590
    %4008 = vmatprep.subr.bf16.mxu0 %v2607
    %4009 = vmatpush1.bf16.msra.mxu0 %v2606
    %4010 = vmatprep.mubr.bf16.mxu0 %v809
    %4011 = vmatmul.mubr.bf16.gmra.mrb[0].mxu0 %v808
    %v4012 = vpop.f32.mrb[0].mxu0
    %v4013 = vadd.f32 %v775, %v4012
    %v4014 = vpop.f32.mrb[0].mxu0
    %v4015 = vadd.f32 %v779, %v4014
    %v4016 = vpop.f32.mrb[0].mxu0
    %v4017 = vadd.f32 %v775, %v4016
    %v4018 = vpop.f32.mrb[0].mxu0
    %v4019 = vadd.f32 %v779, %v4018
    %4020 = vdwg.mxu0
    %4021 = vmatprep.subr.bf16.mxu0 %v2623
    %4022 = vmatpush1.bf16.msra.mxu0 %v2622
    %4023 = vmatprep.subr.bf16.mxu0 %v2639
    %4024 = vmatpush1.bf16.msra.mxu0 %v2638
    %4025 = vmatprep.subr.bf16.mxu0 %v2655
    %4026 = vmatpush1.bf16.msra.mxu0 %v2654
    %4027 = vmatprep.subr.bf16.mxu0 %v2671
    %4028 = vmatpush1.bf16.msra.mxu0 %v2670
    %4029 = vmatprep.subr.bf16.mxu0 %v2687
    %4030 = vmatpush1.bf16.msra.mxu0 %v2686
    %4031 = vmatprep.subr.bf16.mxu0 %v2703
    %4032 = vmatpush1.bf16.msra.mxu0 %v2702
    %4033 = vmatprep.subr.bf16.mxu0 %v2719
    %4034 = vmatpush1.bf16.msra.mxu0 %v2718
    %4035 = vmatprep.subr.bf16.mxu0 %v2735
    %4036 = vmatpush1.bf16.msra.mxu0 %v2734
    %4037 = vmatprep.subr.bf16.mxu0 %v2751
    %4038 = vmatpush1.bf16.msra.mxu0 %v2750
    %4039 = vmatprep.subr.bf16.mxu0 %v2767
    %4040 = vmatpush1.bf16.msra.mxu0 %v2766
    %4041 = vmatprep.subr.bf16.mxu0 %v2783
    %4042 = vmatpush1.bf16.msra.mxu0 %v2782
    %4043 = vmatprep.subr.bf16.mxu0 %v2799
    %4044 = vmatpush1.bf16.msra.mxu0 %v2798
    %4045 = vmatprep.subr.bf16.mxu0 %v2815
    %4046 = vmatpush1.bf16.msra.mxu0 %v2814
    %4047 = vmatprep.subr.bf16.mxu0 %v2831
    %4048 = vmatpush1.bf16.msra.mxu0 %v2830
    %4049 = vmatprep.subr.bf16.mxu0 %v2847
    %4050 = vmatpush1.bf16.msra.mxu0 %v2846
    %4051 = vmatprep.subr.bf16.mxu0 %v2863
    %4052 = vmatpush1.bf16.msra.mxu0 %v2862
    %4053 = vmatprep.mubr.bf16.mxu0 %v811
    %4054 = vmatmul.mubr.bf16.gmra.mrb[0].mxu0 %v810
    %v4055 = vpop.f32.mrb[0].mxu0
    %v4056 = vadd.f32 %v4013, %v4055
    %v4057 = vpop.f32.mrb[0].mxu0
    %v4058 = vadd.f32 %v4015, %v4057
    %v4059 = vpop.f32.mrb[0].mxu0
    %v4060 = vadd.f32 %v4017, %v4059
    %v4061 = vpop.f32.mrb[0].mxu0
    %v4062 = vadd.f32 %v4019, %v4061
    %4063 = vdwg.mxu0
    %v4064 = vmax.f32 %v3454, 0.0
    %v4065 = vmax.f32 %v3456, 0.0
    %v4066 = vmax.f32 %v3540, 0.0
    %v4067 = vmax.f32 %v3542, 0.0
    %v4068 = vmax.f32 %v3626, 0.0
    %v4069 = vmax.f32 %v3628, 0.0
    %v4070 = vmax.f32 %v3712, 0.0
    %v4071 = vmax.f32 %v3714, 0.0
    %v4072 = vmax.f32 %v3798, 0.0
    %v4073 = vmax.f32 %v3800, 0.0
    %v4074 = vmax.f32 %v3884, 0.0
    %v4075 = vmax.f32 %v3886, 0.0
    %v4076 = vmax.f32 %v3970, 0.0
    %v4077 = vmax.f32 %v3972, 0.0
    %v4078 = vmax.f32 %v4056, 0.0
    %v4079 = vmax.f32 %v4058, 0.0
    %v4080 = vmax.f32 %v3458, 0.0
    %v4081 = vmax.f32 %v3460, 0.0
    %v4082 = vmax.f32 %v3544, 0.0
    %v4083 = vmax.f32 %v3546, 0.0
    %v4084 = vmax.f32 %v3630, 0.0
    %v4085 = vmax.f32 %v3632, 0.0
    %v4086 = vmax.f32 %v3716, 0.0
    %v4087 = vmax.f32 %v3718, 0.0
    %v4088 = vmax.f32 %v3802, 0.0
    %v4089 = vmax.f32 %v3804, 0.0
    %v4090 = vmax.f32 %v3888, 0.0
    %v4091 = vmax.f32 %v3890, 0.0
    %v4092 = vmax.f32 %v3974, 0.0
    %v4093 = vmax.f32 %v3976, 0.0
    %v4094 = vmax.f32 %v4060, 0.0
    %v4095 = vmax.f32 %v4062, 0.0
    %v4096 = vpack.c.bf16 %v4080, %v4064
    %v4097 = vpack.c.bf16 %v4081, %v4065
    %v4098 = vpack.c.bf16 %v4082, %v4066
    %v4099 = vpack.c.bf16 %v4083, %v4067
    %v4100 = vpack.c.bf16 %v4084, %v4068
    %v4101 = vpack.c.bf16 %v4085, %v4069
    %v4102 = vpack.c.bf16 %v4086, %v4070
    %v4103 = vpack.c.bf16 %v4087, %v4071
    %v4104 = vpack.c.bf16 %v4088, %v4072
    %v4105 = vpack.c.bf16 %v4089, %v4073
    %v4106 = vpack.c.bf16 %v4090, %v4074
    %v4107 = vpack.c.bf16 %v4091, %v4075
    %v4108 = vpack.c.bf16 %v4092, %v4076
    %v4109 = vpack.c.bf16 %v4093, %v4077
    %v4110 = vpack.c.bf16 %v4094, %v4078
    %v4111 = vpack.c.bf16 %v4095, %v4079
    %v4112 = vld [vmem:[#allocation6] sm:$0xff]
    %v4113 = vld [vmem:[#allocation6 + $0x8] sm:$0xff]
    %v4114 = vld [vmem:[#allocation6 + $0x10] sm:$0xff]
    %v4115 = vld [vmem:[#allocation6 + $0x18] sm:$0xff]
    %v4116 = vld [vmem:[#allocation6 + $0x20] sm:$0xff]
    %v4117 = vld [vmem:[#allocation6 + $0x28] sm:$0xff]
    %v4118 = vld [vmem:[#allocation6 + $0x30] sm:$0xff]
    %v4119 = vld [vmem:[#allocation6 + $0x38] sm:$0xff]
    %v4120 = vld [vmem:[#allocation6 + $0x40] sm:$0xff]
    %v4121 = vld [vmem:[#allocation6 + $0x48] sm:$0xff]
    %v4122 = vld [vmem:[#allocation6 + $0x50] sm:$0xff]
    %v4123 = vld [vmem:[#allocation6 + $0x58] sm:$0xff]
    %v4124 = vld [vmem:[#allocation6 + $0x60] sm:$0xff]
    %v4125 = vld [vmem:[#allocation6 + $0x68] sm:$0xff]
    %v4126 = vld [vmem:[#allocation6 + $0x70] sm:$0xff]
    %v4127 = vld [vmem:[#allocation6 + $0x78] sm:$0xff]
    %v4128 = vld [vmem:[#allocation6 + $0x80] sm:$0xff]
    %v4129 = vld [vmem:[#allocation6 + $0x88] sm:$0xff]
    %v4130 = vld [vmem:[#allocation6 + $0x90] sm:$0xff]
    %v4131 = vld [vmem:[#allocation6 + $0x98] sm:$0xff]
    %v4132 = vld [vmem:[#allocation6 + $0xa0] sm:$0xff]
    %v4133 = vld [vmem:[#allocation6 + $0xa8] sm:$0xff]
    %v4134 = vld [vmem:[#allocation6 + $0xb0] sm:$0xff]
    %v4135 = vld [vmem:[#allocation6 + $0xb8] sm:$0xff]
    %v4136 = vld [vmem:[#allocation6 + $0xc0] sm:$0xff]
    %v4137 = vld [vmem:[#allocation6 + $0xc8] sm:$0xff]
    %v4138 = vld [vmem:[#allocation6 + $0xd0] sm:$0xff]
    %v4139 = vld [vmem:[#allocation6 + $0xd8] sm:$0xff]
    %v4140 = vld [vmem:[#allocation6 + $0xe0] sm:$0xff]
    %v4141 = vld [vmem:[#allocation6 + $0xe8] sm:$0xff]
    %v4142 = vld [vmem:[#allocation6 + $0xf0] sm:$0xff]
    %v4143 = vld [vmem:[#allocation6 + $0xf8] sm:$0xff]
    %v4144 = vld [vmem:[#allocation6 + $0x100] sm:$0xff]
    %v4145 = vld [vmem:[#allocation6 + $0x108] sm:$0xff]
    %v4146 = vld [vmem:[#allocation6 + $0x110] sm:$0xff]
    %v4147 = vld [vmem:[#allocation6 + $0x118] sm:$0xff]
    %v4148 = vld [vmem:[#allocation6 + $0x120] sm:$0xff]
    %v4149 = vld [vmem:[#allocation6 + $0x128] sm:$0xff]
    %v4150 = vld [vmem:[#allocation6 + $0x130] sm:$0xff]
    %v4151 = vld [vmem:[#allocation6 + $0x138] sm:$0xff]
    %v4152 = vld [vmem:[#allocation6 + $0x140] sm:$0xff]
    %v4153 = vld [vmem:[#allocation6 + $0x148] sm:$0xff]
    %v4154 = vld [vmem:[#allocation6 + $0x150] sm:$0xff]
    %v4155 = vld [vmem:[#allocation6 + $0x158] sm:$0xff]
    %v4156 = vld [vmem:[#allocation6 + $0x160] sm:$0xff]
    %v4157 = vld [vmem:[#allocation6 + $0x168] sm:$0xff]
    %v4158 = vld [vmem:[#allocation6 + $0x170] sm:$0xff]
    %v4159 = vld [vmem:[#allocation6 + $0x178] sm:$0xff]
    %v4160 = vld [vmem:[#allocation6 + $0x180] sm:$0xff]
    %v4161 = vld [vmem:[#allocation6 + $0x188] sm:$0xff]
    %v4162 = vld [vmem:[#allocation6 + $0x190] sm:$0xff]
    %v4163 = vld [vmem:[#allocation6 + $0x198] sm:$0xff]
    %v4164 = vld [vmem:[#allocation6 + $0x1a0] sm:$0xff]
    %v4165 = vld [vmem:[#allocation6 + $0x1a8] sm:$0xff]
    %v4166 = vld [vmem:[#allocation6 + $0x1b0] sm:$0xff]
    %v4167 = vld [vmem:[#allocation6 + $0x1b8] sm:$0xff]
    %v4168 = vld [vmem:[#allocation6 + $0x1c0] sm:$0xff]
    %v4169 = vld [vmem:[#allocation6 + $0x1c8] sm:$0xff]
    %v4170 = vld [vmem:[#allocation6 + $0x1d0] sm:$0xff]
    %v4171 = vld [vmem:[#allocation6 + $0x1d8] sm:$0xff]
    %v4172 = vld [vmem:[#allocation6 + $0x1e0] sm:$0xff]
    %v4173 = vld [vmem:[#allocation6 + $0x1e8] sm:$0xff]
    %v4174 = vld [vmem:[#allocation6 + $0x1f0] sm:$0xff]
    %v4175 = vld [vmem:[#allocation6 + $0x1f8] sm:$0xff]
    %v4176 = vld [vmem:[#allocation6 + $0x200] sm:$0xff]
    %v4177 = vld [vmem:[#allocation6 + $0x208] sm:$0xff]
    %v4178 = vld [vmem:[#allocation6 + $0x210] sm:$0xff]
    %v4179 = vld [vmem:[#allocation6 + $0x218] sm:$0xff]
    %v4180 = vld [vmem:[#allocation6 + $0x220] sm:$0xff]
    %v4181 = vld [vmem:[#allocation6 + $0x228] sm:$0xff]
    %v4182 = vld [vmem:[#allocation6 + $0x230] sm:$0xff]
    %v4183 = vld [vmem:[#allocation6 + $0x238] sm:$0xff]
    %v4184 = vld [vmem:[#allocation6 + $0x240] sm:$0xff]
    %v4185 = vld [vmem:[#allocation6 + $0x248] sm:$0xff]
    %v4186 = vld [vmem:[#allocation6 + $0x250] sm:$0xff]
    %v4187 = vld [vmem:[#allocation6 + $0x258] sm:$0xff]
    %v4188 = vld [vmem:[#allocation6 + $0x260] sm:$0xff]
    %v4189 = vld [vmem:[#allocation6 + $0x268] sm:$0xff]
    %v4190 = vld [vmem:[#allocation6 + $0x270] sm:$0xff]
    %v4191 = vld [vmem:[#allocation6 + $0x278] sm:$0xff]
    %v4192 = vld [vmem:[#allocation6 + $0x280] sm:$0xff]
    %v4193 = vld [vmem:[#allocation6 + $0x288] sm:$0xff]
    %v4194 = vld [vmem:[#allocation6 + $0x290] sm:$0xff]
    %v4195 = vld [vmem:[#allocation6 + $0x298] sm:$0xff]
    %v4196 = vld [vmem:[#allocation6 + $0x2a0] sm:$0xff]
    %v4197 = vld [vmem:[#allocation6 + $0x2a8] sm:$0xff]
    %v4198 = vld [vmem:[#allocation6 + $0x2b0] sm:$0xff]
    %v4199 = vld [vmem:[#allocation6 + $0x2b8] sm:$0xff]
    %v4200 = vld [vmem:[#allocation6 + $0x2c0] sm:$0xff]
    %v4201 = vld [vmem:[#allocation6 + $0x2c8] sm:$0xff]
    %v4202 = vld [vmem:[#allocation6 + $0x2d0] sm:$0xff]
    %v4203 = vld [vmem:[#allocation6 + $0x2d8] sm:$0xff]
    %v4204 = vld [vmem:[#allocation6 + $0x2e0] sm:$0xff]
    %v4205 = vld [vmem:[#allocation6 + $0x2e8] sm:$0xff]
    %v4206 = vld [vmem:[#allocation6 + $0x2f0] sm:$0xff]
    %v4207 = vld [vmem:[#allocation6 + $0x2f8] sm:$0xff]
    %v4208 = vld [vmem:[#allocation6 + $0x300] sm:$0xff]
    %v4209 = vld [vmem:[#allocation6 + $0x308] sm:$0xff]
    %v4210 = vld [vmem:[#allocation6 + $0x310] sm:$0xff]
    %v4211 = vld [vmem:[#allocation6 + $0x318] sm:$0xff]
    %v4212 = vld [vmem:[#allocation6 + $0x320] sm:$0xff]
    %v4213 = vld [vmem:[#allocation6 + $0x328] sm:$0xff]
    %v4214 = vld [vmem:[#allocation6 + $0x330] sm:$0xff]
    %v4215 = vld [vmem:[#allocation6 + $0x338] sm:$0xff]
    %v4216 = vld [vmem:[#allocation6 + $0x340] sm:$0xff]
    %v4217 = vld [vmem:[#allocation6 + $0x348] sm:$0xff]
    %v4218 = vld [vmem:[#allocation6 + $0x350] sm:$0xff]
    %v4219 = vld [vmem:[#allocation6 + $0x358] sm:$0xff]
    %v4220 = vld [vmem:[#allocation6 + $0x360] sm:$0xff]
    %v4221 = vld [vmem:[#allocation6 + $0x368] sm:$0xff]
    %v4222 = vld [vmem:[#allocation6 + $0x370] sm:$0xff]
    %v4223 = vld [vmem:[#allocation6 + $0x378] sm:$0xff]
    %v4224 = vld [vmem:[#allocation6 + $0x380] sm:$0xff]
    %v4225 = vld [vmem:[#allocation6 + $0x388] sm:$0xff]
    %v4226 = vld [vmem:[#allocation6 + $0x390] sm:$0xff]
    %v4227 = vld [vmem:[#allocation6 + $0x398] sm:$0xff]
    %v4228 = vld [vmem:[#allocation6 + $0x3a0] sm:$0xff]
    %v4229 = vld [vmem:[#allocation6 + $0x3a8] sm:$0xff]
    %v4230 = vld [vmem:[#allocation6 + $0x3b0] sm:$0xff]
    %v4231 = vld [vmem:[#allocation6 + $0x3b8] sm:$0xff]
    %v4232 = vld [vmem:[#allocation6 + $0x3c0] sm:$0xff]
    %v4233 = vld [vmem:[#allocation6 + $0x3c8] sm:$0xff]
    %v4234 = vld [vmem:[#allocation6 + $0x3d0] sm:$0xff]
    %v4235 = vld [vmem:[#allocation6 + $0x3d8] sm:$0xff]
    %v4236 = vld [vmem:[#allocation6 + $0x3e0] sm:$0xff]
    %v4237 = vld [vmem:[#allocation6 + $0x3e8] sm:$0xff]
    %v4238 = vld [vmem:[#allocation6 + $0x3f0] sm:$0xff]
    %v4239 = vld [vmem:[#allocation6 + $0x3f8] sm:$0xff]
    %v4240 = vld [vmem:[#allocation6 + $0x400] sm:$0xff]
    %v4241 = vld [vmem:[#allocation6 + $0x408] sm:$0xff]
    %v4242 = vld [vmem:[#allocation6 + $0x410] sm:$0xff]
    %v4243 = vld [vmem:[#allocation6 + $0x418] sm:$0xff]
    %v4244 = vld [vmem:[#allocation6 + $0x420] sm:$0xff]
    %v4245 = vld [vmem:[#allocation6 + $0x428] sm:$0xff]
    %v4246 = vld [vmem:[#allocation6 + $0x430] sm:$0xff]
    %v4247 = vld [vmem:[#allocation6 + $0x438] sm:$0xff]
    %v4248 = vld [vmem:[#allocation6 + $0x440] sm:$0xff]
    %v4249 = vld [vmem:[#allocation6 + $0x448] sm:$0xff]
    %v4250 = vld [vmem:[#allocation6 + $0x450] sm:$0xff]
    %v4251 = vld [vmem:[#allocation6 + $0x458] sm:$0xff]
    %v4252 = vld [vmem:[#allocation6 + $0x460] sm:$0xff]
    %v4253 = vld [vmem:[#allocation6 + $0x468] sm:$0xff]
    %v4254 = vld [vmem:[#allocation6 + $0x470] sm:$0xff]
    %v4255 = vld [vmem:[#allocation6 + $0x478] sm:$0xff]
    %v4256 = vld [vmem:[#allocation6 + $0x480] sm:$0xff]
    %v4257 = vld [vmem:[#allocation6 + $0x488] sm:$0xff]
    %v4258 = vld [vmem:[#allocation6 + $0x490] sm:$0xff]
    %v4259 = vld [vmem:[#allocation6 + $0x498] sm:$0xff]
    %v4260 = vld [vmem:[#allocation6 + $0x4a0] sm:$0xff]
    %v4261 = vld [vmem:[#allocation6 + $0x4a8] sm:$0xff]
    %v4262 = vld [vmem:[#allocation6 + $0x4b0] sm:$0xff]
    %v4263 = vld [vmem:[#allocation6 + $0x4b8] sm:$0xff]
    %v4264 = vld [vmem:[#allocation6 + $0x4c0] sm:$0xff]
    %v4265 = vld [vmem:[#allocation6 + $0x4c8] sm:$0xff]
    %v4266 = vld [vmem:[#allocation6 + $0x4d0] sm:$0xff]
    %v4267 = vld [vmem:[#allocation6 + $0x4d8] sm:$0xff]
    %v4268 = vld [vmem:[#allocation6 + $0x4e0] sm:$0xff]
    %v4269 = vld [vmem:[#allocation6 + $0x4e8] sm:$0xff]
    %v4270 = vld [vmem:[#allocation6 + $0x4f0] sm:$0xff]
    %v4271 = vld [vmem:[#allocation6 + $0x4f8] sm:$0xff]
    %v4272 = vld [vmem:[#allocation6 + $0x500] sm:$0xff]
    %v4273 = vld [vmem:[#allocation6 + $0x508] sm:$0xff]
    %v4274 = vld [vmem:[#allocation6 + $0x510] sm:$0xff]
    %v4275 = vld [vmem:[#allocation6 + $0x518] sm:$0xff]
    %v4276 = vld [vmem:[#allocation6 + $0x520] sm:$0xff]
    %v4277 = vld [vmem:[#allocation6 + $0x528] sm:$0xff]
    %v4278 = vld [vmem:[#allocation6 + $0x530] sm:$0xff]
    %v4279 = vld [vmem:[#allocation6 + $0x538] sm:$0xff]
    %v4280 = vld [vmem:[#allocation6 + $0x540] sm:$0xff]
    %v4281 = vld [vmem:[#allocation6 + $0x548] sm:$0xff]
    %v4282 = vld [vmem:[#allocation6 + $0x550] sm:$0xff]
    %v4283 = vld [vmem:[#allocation6 + $0x558] sm:$0xff]
    %v4284 = vld [vmem:[#allocation6 + $0x560] sm:$0xff]
    %v4285 = vld [vmem:[#allocation6 + $0x568] sm:$0xff]
    %v4286 = vld [vmem:[#allocation6 + $0x570] sm:$0xff]
    %v4287 = vld [vmem:[#allocation6 + $0x578] sm:$0xff]
    %v4288 = vld [vmem:[#allocation6 + $0x580] sm:$0xff]
    %v4289 = vld [vmem:[#allocation6 + $0x588] sm:$0xff]
    %v4290 = vld [vmem:[#allocation6 + $0x590] sm:$0xff]
    %v4291 = vld [vmem:[#allocation6 + $0x598] sm:$0xff]
    %v4292 = vld [vmem:[#allocation6 + $0x5a0] sm:$0xff]
    %v4293 = vld [vmem:[#allocation6 + $0x5a8] sm:$0xff]
    %v4294 = vld [vmem:[#allocation6 + $0x5b0] sm:$0xff]
    %v4295 = vld [vmem:[#allocation6 + $0x5b8] sm:$0xff]
    %v4296 = vld [vmem:[#allocation6 + $0x5c0] sm:$0xff]
    %v4297 = vld [vmem:[#allocation6 + $0x5c8] sm:$0xff]
    %v4298 = vld [vmem:[#allocation6 + $0x5d0] sm:$0xff]
    %v4299 = vld [vmem:[#allocation6 + $0x5d8] sm:$0xff]
    %v4300 = vld [vmem:[#allocation6 + $0x5e0] sm:$0xff]
    %v4301 = vld [vmem:[#allocation6 + $0x5e8] sm:$0xff]
    %v4302 = vld [vmem:[#allocation6 + $0x5f0] sm:$0xff]
    %v4303 = vld [vmem:[#allocation6 + $0x5f8] sm:$0xff]
    %v4304 = vld [vmem:[#allocation6 + $0x600] sm:$0xff]
    %v4305 = vld [vmem:[#allocation6 + $0x608] sm:$0xff]
    %v4306 = vld [vmem:[#allocation6 + $0x610] sm:$0xff]
    %v4307 = vld [vmem:[#allocation6 + $0x618] sm:$0xff]
    %v4308 = vld [vmem:[#allocation6 + $0x620] sm:$0xff]
    %v4309 = vld [vmem:[#allocation6 + $0x628] sm:$0xff]
    %v4310 = vld [vmem:[#allocation6 + $0x630] sm:$0xff]
    %v4311 = vld [vmem:[#allocation6 + $0x638] sm:$0xff]
    %v4312 = vld [vmem:[#allocation6 + $0x640] sm:$0xff]
    %v4313 = vld [vmem:[#allocation6 + $0x648] sm:$0xff]
    %v4314 = vld [vmem:[#allocation6 + $0x650] sm:$0xff]
    %v4315 = vld [vmem:[#allocation6 + $0x658] sm:$0xff]
    %v4316 = vld [vmem:[#allocation6 + $0x660] sm:$0xff]
    %v4317 = vld [vmem:[#allocation6 + $0x668] sm:$0xff]
    %v4318 = vld [vmem:[#allocation6 + $0x670] sm:$0xff]
    %v4319 = vld [vmem:[#allocation6 + $0x678] sm:$0xff]
    %v4320 = vld [vmem:[#allocation6 + $0x680] sm:$0xff]
    %v4321 = vld [vmem:[#allocation6 + $0x688] sm:$0xff]
    %v4322 = vld [vmem:[#allocation6 + $0x690] sm:$0xff]
    %v4323 = vld [vmem:[#allocation6 + $0x698] sm:$0xff]
    %v4324 = vld [vmem:[#allocation6 + $0x6a0] sm:$0xff]
    %v4325 = vld [vmem:[#allocation6 + $0x6a8] sm:$0xff]
    %v4326 = vld [vmem:[#allocation6 + $0x6b0] sm:$0xff]
    %v4327 = vld [vmem:[#allocation6 + $0x6b8] sm:$0xff]
    %v4328 = vld [vmem:[#allocation6 + $0x6c0] sm:$0xff]
    %v4329 = vld [vmem:[#allocation6 + $0x6c8] sm:$0xff]
    %v4330 = vld [vmem:[#allocation6 + $0x6d0] sm:$0xff]
    %v4331 = vld [vmem:[#allocation6 + $0x6d8] sm:$0xff]
    %v4332 = vld [vmem:[#allocation6 + $0x6e0] sm:$0xff]
    %v4333 = vld [vmem:[#allocation6 + $0x6e8] sm:$0xff]
    %v4334 = vld [vmem:[#allocation6 + $0x6f0] sm:$0xff]
    %v4335 = vld [vmem:[#allocation6 + $0x6f8] sm:$0xff]
    %v4336 = vld [vmem:[#allocation6 + $0x700] sm:$0xff]
    %v4337 = vld [vmem:[#allocation6 + $0x708] sm:$0xff]
    %v4338 = vld [vmem:[#allocation6 + $0x710] sm:$0xff]
    %v4339 = vld [vmem:[#allocation6 + $0x718] sm:$0xff]
    %v4340 = vld [vmem:[#allocation6 + $0x720] sm:$0xff]
    %v4341 = vld [vmem:[#allocation6 + $0x728] sm:$0xff]
    %v4342 = vld [vmem:[#allocation6 + $0x730] sm:$0xff]
    %v4343 = vld [vmem:[#allocation6 + $0x738] sm:$0xff]
    %v4344 = vld [vmem:[#allocation6 + $0x740] sm:$0xff]
    %v4345 = vld [vmem:[#allocation6 + $0x748] sm:$0xff]
    %v4346 = vld [vmem:[#allocation6 + $0x750] sm:$0xff]
    %v4347 = vld [vmem:[#allocation6 + $0x758] sm:$0xff]
    %v4348 = vld [vmem:[#allocation6 + $0x760] sm:$0xff]
    %v4349 = vld [vmem:[#allocation6 + $0x768] sm:$0xff]
    %v4350 = vld [vmem:[#allocation6 + $0x770] sm:$0xff]
    %v4351 = vld [vmem:[#allocation6 + $0x778] sm:$0xff]
    %v4352 = vld [vmem:[#allocation6 + $0x780] sm:$0xff]
    %v4353 = vld [vmem:[#allocation6 + $0x788] sm:$0xff]
    %v4354 = vld [vmem:[#allocation6 + $0x790] sm:$0xff]
    %v4355 = vld [vmem:[#allocation6 + $0x798] sm:$0xff]
    %v4356 = vld [vmem:[#allocation6 + $0x7a0] sm:$0xff]
    %v4357 = vld [vmem:[#allocation6 + $0x7a8] sm:$0xff]
    %v4358 = vld [vmem:[#allocation6 + $0x7b0] sm:$0xff]
    %v4359 = vld [vmem:[#allocation6 + $0x7b8] sm:$0xff]
    %v4360 = vld [vmem:[#allocation6 + $0x7c0] sm:$0xff]
    %v4361 = vld [vmem:[#allocation6 + $0x7c8] sm:$0xff]
    %v4362 = vld [vmem:[#allocation6 + $0x7d0] sm:$0xff]
    %v4363 = vld [vmem:[#allocation6 + $0x7d8] sm:$0xff]
    %v4364 = vld [vmem:[#allocation6 + $0x7e0] sm:$0xff]
    %v4365 = vld [vmem:[#allocation6 + $0x7e8] sm:$0xff]
    %v4366 = vld [vmem:[#allocation6 + $0x7f0] sm:$0xff]
    %v4367 = vld [vmem:[#allocation6 + $0x7f8] sm:$0xff]
    %v4368 = vld [vmem:[#allocation6 + $0x800] sm:$0xff]
    %v4369 = vld [vmem:[#allocation6 + $0x808] sm:$0xff]
    %v4370 = vld [vmem:[#allocation6 + $0x810] sm:$0xff]
    %v4371 = vld [vmem:[#allocation6 + $0x818] sm:$0xff]
    %v4372 = vld [vmem:[#allocation6 + $0x820] sm:$0xff]
    %v4373 = vld [vmem:[#allocation6 + $0x828] sm:$0xff]
    %v4374 = vld [vmem:[#allocation6 + $0x830] sm:$0xff]
    %v4375 = vld [vmem:[#allocation6 + $0x838] sm:$0xff]
    %v4376 = vld [vmem:[#allocation6 + $0x840] sm:$0xff]
    %v4377 = vld [vmem:[#allocation6 + $0x848] sm:$0xff]
    %v4378 = vld [vmem:[#allocation6 + $0x850] sm:$0xff]
    %v4379 = vld [vmem:[#allocation6 + $0x858] sm:$0xff]
    %v4380 = vld [vmem:[#allocation6 + $0x860] sm:$0xff]
    %v4381 = vld [vmem:[#allocation6 + $0x868] sm:$0xff]
    %v4382 = vld [vmem:[#allocation6 + $0x870] sm:$0xff]
    %v4383 = vld [vmem:[#allocation6 + $0x878] sm:$0xff]
    %v4384 = vld [vmem:[#allocation6 + $0x880] sm:$0xff]
    %v4385 = vld [vmem:[#allocation6 + $0x888] sm:$0xff]
    %v4386 = vld [vmem:[#allocation6 + $0x890] sm:$0xff]
    %v4387 = vld [vmem:[#allocation6 + $0x898] sm:$0xff]
    %v4388 = vld [vmem:[#allocation6 + $0x8a0] sm:$0xff]
    %v4389 = vld [vmem:[#allocation6 + $0x8a8] sm:$0xff]
    %v4390 = vld [vmem:[#allocation6 + $0x8b0] sm:$0xff]
    %v4391 = vld [vmem:[#allocation6 + $0x8b8] sm:$0xff]
    %v4392 = vld [vmem:[#allocation6 + $0x8c0] sm:$0xff]
    %v4393 = vld [vmem:[#allocation6 + $0x8c8] sm:$0xff]
    %v4394 = vld [vmem:[#allocation6 + $0x8d0] sm:$0xff]
    %v4395 = vld [vmem:[#allocation6 + $0x8d8] sm:$0xff]
    %v4396 = vld [vmem:[#allocation6 + $0x8e0] sm:$0xff]
    %v4397 = vld [vmem:[#allocation6 + $0x8e8] sm:$0xff]
    %v4398 = vld [vmem:[#allocation6 + $0x8f0] sm:$0xff]
    %v4399 = vld [vmem:[#allocation6 + $0x8f8] sm:$0xff]
    %v4400 = vld [vmem:[#allocation6 + $0x900] sm:$0xff]
    %v4401 = vld [vmem:[#allocation6 + $0x908] sm:$0xff]
    %v4402 = vld [vmem:[#allocation6 + $0x910] sm:$0xff]
    %v4403 = vld [vmem:[#allocation6 + $0x918] sm:$0xff]
    %v4404 = vld [vmem:[#allocation6 + $0x920] sm:$0xff]
    %v4405 = vld [vmem:[#allocation6 + $0x928] sm:$0xff]
    %v4406 = vld [vmem:[#allocation6 + $0x930] sm:$0xff]
    %v4407 = vld [vmem:[#allocation6 + $0x938] sm:$0xff]
    %v4408 = vld [vmem:[#allocation6 + $0x940] sm:$0xff]
    %v4409 = vld [vmem:[#allocation6 + $0x948] sm:$0xff]
    %v4410 = vld [vmem:[#allocation6 + $0x950] sm:$0xff]
    %v4411 = vld [vmem:[#allocation6 + $0x958] sm:$0xff]
    %v4412 = vld [vmem:[#allocation6 + $0x960] sm:$0xff]
    %v4413 = vld [vmem:[#allocation6 + $0x968] sm:$0xff]
    %v4414 = vld [vmem:[#allocation6 + $0x970] sm:$0xff]
    %v4415 = vld [vmem:[#allocation6 + $0x978] sm:$0xff]
    %v4416 = vld [vmem:[#allocation6 + $0x980] sm:$0xff]
    %v4417 = vld [vmem:[#allocation6 + $0x988] sm:$0xff]
    %v4418 = vld [vmem:[#allocation6 + $0x990] sm:$0xff]
    %v4419 = vld [vmem:[#allocation6 + $0x998] sm:$0xff]
    %v4420 = vld [vmem:[#allocation6 + $0x9a0] sm:$0xff]
    %v4421 = vld [vmem:[#allocation6 + $0x9a8] sm:$0xff]
    %v4422 = vld [vmem:[#allocation6 + $0x9b0] sm:$0xff]
    %v4423 = vld [vmem:[#allocation6 + $0x9b8] sm:$0xff]
    %v4424 = vld [vmem:[#allocation6 + $0x9c0] sm:$0xff]
    %v4425 = vld [vmem:[#allocation6 + $0x9c8] sm:$0xff]
    %v4426 = vld [vmem:[#allocation6 + $0x9d0] sm:$0xff]
    %v4427 = vld [vmem:[#allocation6 + $0x9d8] sm:$0xff]
    %v4428 = vld [vmem:[#allocation6 + $0x9e0] sm:$0xff]
    %v4429 = vld [vmem:[#allocation6 + $0x9e8] sm:$0xff]
    %v4430 = vld [vmem:[#allocation6 + $0x9f0] sm:$0xff]
    %v4431 = vld [vmem:[#allocation6 + $0x9f8] sm:$0xff]
    %v4432 = vld [vmem:[#allocation6 + $0xa00] sm:$0xff]
    %v4433 = vld [vmem:[#allocation6 + $0xa08] sm:$0xff]
    %v4434 = vld [vmem:[#allocation6 + $0xa10] sm:$0xff]
    %v4435 = vld [vmem:[#allocation6 + $0xa18] sm:$0xff]
    %v4436 = vld [vmem:[#allocation6 + $0xa20] sm:$0xff]
    %v4437 = vld [vmem:[#allocation6 + $0xa28] sm:$0xff]
    %v4438 = vld [vmem:[#allocation6 + $0xa30] sm:$0xff]
    %v4439 = vld [vmem:[#allocation6 + $0xa38] sm:$0xff]
    %v4440 = vld [vmem:[#allocation6 + $0xa40] sm:$0xff]
    %v4441 = vld [vmem:[#allocation6 + $0xa48] sm:$0xff]
    %v4442 = vld [vmem:[#allocation6 + $0xa50] sm:$0xff]
    %v4443 = vld [vmem:[#allocation6 + $0xa58] sm:$0xff]
    %v4444 = vld [vmem:[#allocation6 + $0xa60] sm:$0xff]
    %v4445 = vld [vmem:[#allocation6 + $0xa68] sm:$0xff]
    %v4446 = vld [vmem:[#allocation6 + $0xa70] sm:$0xff]
    %v4447 = vld [vmem:[#allocation6 + $0xa78] sm:$0xff]
    %v4448 = vld [vmem:[#allocation6 + $0xa80] sm:$0xff]
    %v4449 = vld [vmem:[#allocation6 + $0xa88] sm:$0xff]
    %v4450 = vld [vmem:[#allocation6 + $0xa90] sm:$0xff]
    %v4451 = vld [vmem:[#allocation6 + $0xa98] sm:$0xff]
    %v4452 = vld [vmem:[#allocation6 + $0xaa0] sm:$0xff]
    %v4453 = vld [vmem:[#allocation6 + $0xaa8] sm:$0xff]
    %v4454 = vld [vmem:[#allocation6 + $0xab0] sm:$0xff]
    %v4455 = vld [vmem:[#allocation6 + $0xab8] sm:$0xff]
    %v4456 = vld [vmem:[#allocation6 + $0xac0] sm:$0xff]
    %v4457 = vld [vmem:[#allocation6 + $0xac8] sm:$0xff]
    %v4458 = vld [vmem:[#allocation6 + $0xad0] sm:$0xff]
    %v4459 = vld [vmem:[#allocation6 + $0xad8] sm:$0xff]
    %v4460 = vld [vmem:[#allocation6 + $0xae0] sm:$0xff]
    %v4461 = vld [vmem:[#allocation6 + $0xae8] sm:$0xff]
    %v4462 = vld [vmem:[#allocation6 + $0xaf0] sm:$0xff]
    %v4463 = vld [vmem:[#allocation6 + $0xaf8] sm:$0xff]
    %v4464 = vld [vmem:[#allocation6 + $0xb00] sm:$0xff]
    %v4465 = vld [vmem:[#allocation6 + $0xb08] sm:$0xff]
    %v4466 = vld [vmem:[#allocation6 + $0xb10] sm:$0xff]
    %v4467 = vld [vmem:[#allocation6 + $0xb18] sm:$0xff]
    %v4468 = vld [vmem:[#allocation6 + $0xb20] sm:$0xff]
    %v4469 = vld [vmem:[#allocation6 + $0xb28] sm:$0xff]
    %v4470 = vld [vmem:[#allocation6 + $0xb30] sm:$0xff]
    %v4471 = vld [vmem:[#allocation6 + $0xb38] sm:$0xff]
    %v4472 = vld [vmem:[#allocation6 + $0xb40] sm:$0xff]
    %v4473 = vld [vmem:[#allocation6 + $0xb48] sm:$0xff]
    %v4474 = vld [vmem:[#allocation6 + $0xb50] sm:$0xff]
    %v4475 = vld [vmem:[#allocation6 + $0xb58] sm:$0xff]
    %v4476 = vld [vmem:[#allocation6 + $0xb60] sm:$0xff]
    %v4477 = vld [vmem:[#allocation6 + $0xb68] sm:$0xff]
    %v4478 = vld [vmem:[#allocation6 + $0xb70] sm:$0xff]
    %v4479 = vld [vmem:[#allocation6 + $0xb78] sm:$0xff]
    %v4480 = vld [vmem:[#allocation6 + $0xb80] sm:$0xff]
    %v4481 = vld [vmem:[#allocation6 + $0xb88] sm:$0xff]
    %v4482 = vld [vmem:[#allocation6 + $0xb90] sm:$0xff]
    %v4483 = vld [vmem:[#allocation6 + $0xb98] sm:$0xff]
    %v4484 = vld [vmem:[#allocation6 + $0xba0] sm:$0xff]
    %v4485 = vld [vmem:[#allocation6 + $0xba8] sm:$0xff]
    %v4486 = vld [vmem:[#allocation6 + $0xbb0] sm:$0xff]
    %v4487 = vld [vmem:[#allocation6 + $0xbb8] sm:$0xff]
    %v4488 = vld [vmem:[#allocation6 + $0xbc0] sm:$0xff]
    %v4489 = vld [vmem:[#allocation6 + $0xbc8] sm:$0xff]
    %v4490 = vld [vmem:[#allocation6 + $0xbd0] sm:$0xff]
    %v4491 = vld [vmem:[#allocation6 + $0xbd8] sm:$0xff]
    %v4492 = vld [vmem:[#allocation6 + $0xbe0] sm:$0xff]
    %v4493 = vld [vmem:[#allocation6 + $0xbe8] sm:$0xff]
    %v4494 = vld [vmem:[#allocation6 + $0xbf0] sm:$0xff]
    %v4495 = vld [vmem:[#allocation6 + $0xbf8] sm:$0xff]
    %v4496 = vld [vmem:[#allocation6 + $0xc00] sm:$0xff]
    %v4497 = vld [vmem:[#allocation6 + $0xc08] sm:$0xff]
    %v4498 = vld [vmem:[#allocation6 + $0xc10] sm:$0xff]
    %v4499 = vld [vmem:[#allocation6 + $0xc18] sm:$0xff]
    %v4500 = vld [vmem:[#allocation6 + $0xc20] sm:$0xff]
    %v4501 = vld [vmem:[#allocation6 + $0xc28] sm:$0xff]
    %v4502 = vld [vmem:[#allocation6 + $0xc30] sm:$0xff]
    %v4503 = vld [vmem:[#allocation6 + $0xc38] sm:$0xff]
    %v4504 = vld [vmem:[#allocation6 + $0xc40] sm:$0xff]
    %v4505 = vld [vmem:[#allocation6 + $0xc48] sm:$0xff]
    %v4506 = vld [vmem:[#allocation6 + $0xc50] sm:$0xff]
    %v4507 = vld [vmem:[#allocation6 + $0xc58] sm:$0xff]
    %v4508 = vld [vmem:[#allocation6 + $0xc60] sm:$0xff]
    %v4509 = vld [vmem:[#allocation6 + $0xc68] sm:$0xff]
    %v4510 = vld [vmem:[#allocation6 + $0xc70] sm:$0xff]
    %v4511 = vld [vmem:[#allocation6 + $0xc78] sm:$0xff]
    %v4512 = vld [vmem:[#allocation6 + $0xc80] sm:$0xff]
    %v4513 = vld [vmem:[#allocation6 + $0xc88] sm:$0xff]
    %v4514 = vld [vmem:[#allocation6 + $0xc90] sm:$0xff]
    %v4515 = vld [vmem:[#allocation6 + $0xc98] sm:$0xff]
    %v4516 = vld [vmem:[#allocation6 + $0xca0] sm:$0xff]
    %v4517 = vld [vmem:[#allocation6 + $0xca8] sm:$0xff]
    %v4518 = vld [vmem:[#allocation6 + $0xcb0] sm:$0xff]
    %v4519 = vld [vmem:[#allocation6 + $0xcb8] sm:$0xff]
    %v4520 = vld [vmem:[#allocation6 + $0xcc0] sm:$0xff]
    %v4521 = vld [vmem:[#allocation6 + $0xcc8] sm:$0xff]
    %v4522 = vld [vmem:[#allocation6 + $0xcd0] sm:$0xff]
    %v4523 = vld [vmem:[#allocation6 + $0xcd8] sm:$0xff]
    %v4524 = vld [vmem:[#allocation6 + $0xce0] sm:$0xff]
    %v4525 = vld [vmem:[#allocation6 + $0xce8] sm:$0xff]
    %v4526 = vld [vmem:[#allocation6 + $0xcf0] sm:$0xff]
    %v4527 = vld [vmem:[#allocation6 + $0xcf8] sm:$0xff]
    %v4528 = vld [vmem:[#allocation6 + $0xd00] sm:$0xff]
    %v4529 = vld [vmem:[#allocation6 + $0xd08] sm:$0xff]
    %v4530 = vld [vmem:[#allocation6 + $0xd10] sm:$0xff]
    %v4531 = vld [vmem:[#allocation6 + $0xd18] sm:$0xff]
    %v4532 = vld [vmem:[#allocation6 + $0xd20] sm:$0xff]
    %v4533 = vld [vmem:[#allocation6 + $0xd28] sm:$0xff]
    %v4534 = vld [vmem:[#allocation6 + $0xd30] sm:$0xff]
    %v4535 = vld [vmem:[#allocation6 + $0xd38] sm:$0xff]
    %v4536 = vld [vmem:[#allocation6 + $0xd40] sm:$0xff]
    %v4537 = vld [vmem:[#allocation6 + $0xd48] sm:$0xff]
    %v4538 = vld [vmem:[#allocation6 + $0xd50] sm:$0xff]
    %v4539 = vld [vmem:[#allocation6 + $0xd58] sm:$0xff]
    %v4540 = vld [vmem:[#allocation6 + $0xd60] sm:$0xff]
    %v4541 = vld [vmem:[#allocation6 + $0xd68] sm:$0xff]
    %v4542 = vld [vmem:[#allocation6 + $0xd70] sm:$0xff]
    %v4543 = vld [vmem:[#allocation6 + $0xd78] sm:$0xff]
    %v4544 = vld [vmem:[#allocation6 + $0xd80] sm:$0xff]
    %v4545 = vld [vmem:[#allocation6 + $0xd88] sm:$0xff]
    %v4546 = vld [vmem:[#allocation6 + $0xd90] sm:$0xff]
    %v4547 = vld [vmem:[#allocation6 + $0xd98] sm:$0xff]
    %v4548 = vld [vmem:[#allocation6 + $0xda0] sm:$0xff]
    %v4549 = vld [vmem:[#allocation6 + $0xda8] sm:$0xff]
    %v4550 = vld [vmem:[#allocation6 + $0xdb0] sm:$0xff]
    %v4551 = vld [vmem:[#allocation6 + $0xdb8] sm:$0xff]
    %v4552 = vld [vmem:[#allocation6 + $0xdc0] sm:$0xff]
    %v4553 = vld [vmem:[#allocation6 + $0xdc8] sm:$0xff]
    %v4554 = vld [vmem:[#allocation6 + $0xdd0] sm:$0xff]
    %v4555 = vld [vmem:[#allocation6 + $0xdd8] sm:$0xff]
    %v4556 = vld [vmem:[#allocation6 + $0xde0] sm:$0xff]
    %v4557 = vld [vmem:[#allocation6 + $0xde8] sm:$0xff]
    %v4558 = vld [vmem:[#allocation6 + $0xdf0] sm:$0xff]
    %v4559 = vld [vmem:[#allocation6 + $0xdf8] sm:$0xff]
    %v4560 = vld [vmem:[#allocation6 + $0xe00] sm:$0xff]
    %v4561 = vld [vmem:[#allocation6 + $0xe08] sm:$0xff]
    %v4562 = vld [vmem:[#allocation6 + $0xe10] sm:$0xff]
    %v4563 = vld [vmem:[#allocation6 + $0xe18] sm:$0xff]
    %v4564 = vld [vmem:[#allocation6 + $0xe20] sm:$0xff]
    %v4565 = vld [vmem:[#allocation6 + $0xe28] sm:$0xff]
    %v4566 = vld [vmem:[#allocation6 + $0xe30] sm:$0xff]
    %v4567 = vld [vmem:[#allocation6 + $0xe38] sm:$0xff]
    %v4568 = vld [vmem:[#allocation6 + $0xe40] sm:$0xff]
    %v4569 = vld [vmem:[#allocation6 + $0xe48] sm:$0xff]
    %v4570 = vld [vmem:[#allocation6 + $0xe50] sm:$0xff]
    %v4571 = vld [vmem:[#allocation6 + $0xe58] sm:$0xff]
    %v4572 = vld [vmem:[#allocation6 + $0xe60] sm:$0xff]
    %v4573 = vld [vmem:[#allocation6 + $0xe68] sm:$0xff]
    %v4574 = vld [vmem:[#allocation6 + $0xe70] sm:$0xff]
    %v4575 = vld [vmem:[#allocation6 + $0xe78] sm:$0xff]
    %v4576 = vld [vmem:[#allocation6 + $0xe80] sm:$0xff]
    %v4577 = vld [vmem:[#allocation6 + $0xe88] sm:$0xff]
    %v4578 = vld [vmem:[#allocation6 + $0xe90] sm:$0xff]
    %v4579 = vld [vmem:[#allocation6 + $0xe98] sm:$0xff]
    %v4580 = vld [vmem:[#allocation6 + $0xea0] sm:$0xff]
    %v4581 = vld [vmem:[#allocation6 + $0xea8] sm:$0xff]
    %v4582 = vld [vmem:[#allocation6 + $0xeb0] sm:$0xff]
    %v4583 = vld [vmem:[#allocation6 + $0xeb8] sm:$0xff]
    %v4584 = vld [vmem:[#allocation6 + $0xec0] sm:$0xff]
    %v4585 = vld [vmem:[#allocation6 + $0xec8] sm:$0xff]
    %v4586 = vld [vmem:[#allocation6 + $0xed0] sm:$0xff]
    %v4587 = vld [vmem:[#allocation6 + $0xed8] sm:$0xff]
    %v4588 = vld [vmem:[#allocation6 + $0xee0] sm:$0xff]
    %v4589 = vld [vmem:[#allocation6 + $0xee8] sm:$0xff]
    %v4590 = vld [vmem:[#allocation6 + $0xef0] sm:$0xff]
    %v4591 = vld [vmem:[#allocation6 + $0xef8] sm:$0xff]
    %v4592 = vld [vmem:[#allocation6 + $0xf00] sm:$0xff]
    %v4593 = vld [vmem:[#allocation6 + $0xf08] sm:$0xff]
    %v4594 = vld [vmem:[#allocation6 + $0xf10] sm:$0xff]
    %v4595 = vld [vmem:[#allocation6 + $0xf18] sm:$0xff]
    %v4596 = vld [vmem:[#allocation6 + $0xf20] sm:$0xff]
    %v4597 = vld [vmem:[#allocation6 + $0xf28] sm:$0xff]
    %v4598 = vld [vmem:[#allocation6 + $0xf30] sm:$0xff]
    %v4599 = vld [vmem:[#allocation6 + $0xf38] sm:$0xff]
    %v4600 = vld [vmem:[#allocation6 + $0xf40] sm:$0xff]
    %v4601 = vld [vmem:[#allocation6 + $0xf48] sm:$0xff]
    %v4602 = vld [vmem:[#allocation6 + $0xf50] sm:$0xff]
    %v4603 = vld [vmem:[#allocation6 + $0xf58] sm:$0xff]
    %v4604 = vld [vmem:[#allocation6 + $0xf60] sm:$0xff]
    %v4605 = vld [vmem:[#allocation6 + $0xf68] sm:$0xff]
    %v4606 = vld [vmem:[#allocation6 + $0xf70] sm:$0xff]
    %v4607 = vld [vmem:[#allocation6 + $0xf78] sm:$0xff]
    %v4608 = vld [vmem:[#allocation6 + $0xf80] sm:$0xff]
    %v4609 = vld [vmem:[#allocation6 + $0xf88] sm:$0xff]
    %v4610 = vld [vmem:[#allocation6 + $0xf90] sm:$0xff]
    %v4611 = vld [vmem:[#allocation6 + $0xf98] sm:$0xff]
    %v4612 = vld [vmem:[#allocation6 + $0xfa0] sm:$0xff]
    %v4613 = vld [vmem:[#allocation6 + $0xfa8] sm:$0xff]
    %v4614 = vld [vmem:[#allocation6 + $0xfb0] sm:$0xff]
    %v4615 = vld [vmem:[#allocation6 + $0xfb8] sm:$0xff]
    %v4616 = vld [vmem:[#allocation6 + $0xfc0] sm:$0xff]
    %v4617 = vld [vmem:[#allocation6 + $0xfc8] sm:$0xff]
    %v4618 = vld [vmem:[#allocation6 + $0xfd0] sm:$0xff]
    %v4619 = vld [vmem:[#allocation6 + $0xfd8] sm:$0xff]
    %v4620 = vld [vmem:[#allocation6 + $0xfe0] sm:$0xff]
    %v4621 = vld [vmem:[#allocation6 + $0xfe8] sm:$0xff]
    %v4622 = vld [vmem:[#allocation6 + $0xff0] sm:$0xff]
    %v4623 = vld [vmem:[#allocation6 + $0xff8] sm:$0xff]
    %v4624 = vld [vmem:[#allocation6 + $0x1000] sm:$0xff]
    %v4625 = vld [vmem:[#allocation6 + $0x1008] sm:$0xff]
    %v4626 = vld [vmem:[#allocation6 + $0x1010] sm:$0xff]
    %v4627 = vld [vmem:[#allocation6 + $0x1018] sm:$0xff]
    %v4628 = vld [vmem:[#allocation6 + $0x1020] sm:$0xff]
    %v4629 = vld [vmem:[#allocation6 + $0x1028] sm:$0xff]
    %v4630 = vld [vmem:[#allocation6 + $0x1030] sm:$0xff]
    %v4631 = vld [vmem:[#allocation6 + $0x1038] sm:$0xff]
    %v4632 = vld [vmem:[#allocation6 + $0x1040] sm:$0xff]
    %v4633 = vld [vmem:[#allocation6 + $0x1048] sm:$0xff]
    %v4634 = vld [vmem:[#allocation6 + $0x1050] sm:$0xff]
    %v4635 = vld [vmem:[#allocation6 + $0x1058] sm:$0xff]
    %v4636 = vld [vmem:[#allocation6 + $0x1060] sm:$0xff]
    %v4637 = vld [vmem:[#allocation6 + $0x1068] sm:$0xff]
    %v4638 = vld [vmem:[#allocation6 + $0x1070] sm:$0xff]
    %v4639 = vld [vmem:[#allocation6 + $0x1078] sm:$0xff]
    %v4640 = vld [vmem:[#allocation6 + $0x1080] sm:$0xff]
    %v4641 = vld [vmem:[#allocation6 + $0x1088] sm:$0xff]
    %v4642 = vld [vmem:[#allocation6 + $0x1090] sm:$0xff]
    %v4643 = vld [vmem:[#allocation6 + $0x1098] sm:$0xff]
    %v4644 = vld [vmem:[#allocation6 + $0x10a0] sm:$0xff]
    %v4645 = vld [vmem:[#allocation6 + $0x10a8] sm:$0xff]
    %v4646 = vld [vmem:[#allocation6 + $0x10b0] sm:$0xff]
    %v4647 = vld [vmem:[#allocation6 + $0x10b8] sm:$0xff]
    %v4648 = vld [vmem:[#allocation6 + $0x10c0] sm:$0xff]
    %v4649 = vld [vmem:[#allocation6 + $0x10c8] sm:$0xff]
    %v4650 = vld [vmem:[#allocation6 + $0x10d0] sm:$0xff]
    %v4651 = vld [vmem:[#allocation6 + $0x10d8] sm:$0xff]
    %v4652 = vld [vmem:[#allocation6 + $0x10e0] sm:$0xff]
    %v4653 = vld [vmem:[#allocation6 + $0x10e8] sm:$0xff]
    %v4654 = vld [vmem:[#allocation6 + $0x10f0] sm:$0xff]
    %v4655 = vld [vmem:[#allocation6 + $0x10f8] sm:$0xff]
    %v4656 = vld [vmem:[#allocation6 + $0x1100] sm:$0xff]
    %v4657 = vld [vmem:[#allocation6 + $0x1108] sm:$0xff]
    %v4658 = vld [vmem:[#allocation6 + $0x1110] sm:$0xff]
    %v4659 = vld [vmem:[#allocation6 + $0x1118] sm:$0xff]
    %v4660 = vld [vmem:[#allocation6 + $0x1120] sm:$0xff]
    %v4661 = vld [vmem:[#allocation6 + $0x1128] sm:$0xff]
    %v4662 = vld [vmem:[#allocation6 + $0x1130] sm:$0xff]
    %v4663 = vld [vmem:[#allocation6 + $0x1138] sm:$0xff]
    %v4664 = vld [vmem:[#allocation6 + $0x1140] sm:$0xff]
    %v4665 = vld [vmem:[#allocation6 + $0x1148] sm:$0xff]
    %v4666 = vld [vmem:[#allocation6 + $0x1150] sm:$0xff]
    %v4667 = vld [vmem:[#allocation6 + $0x1158] sm:$0xff]
    %v4668 = vld [vmem:[#allocation6 + $0x1160] sm:$0xff]
    %v4669 = vld [vmem:[#allocation6 + $0x1168] sm:$0xff]
    %v4670 = vld [vmem:[#allocation6 + $0x1170] sm:$0xff]
    %v4671 = vld [vmem:[#allocation6 + $0x1178] sm:$0xff]
    %v4672 = vld [vmem:[#allocation6 + $0x1180] sm:$0xff]
    %v4673 = vld [vmem:[#allocation6 + $0x1188] sm:$0xff]
    %v4674 = vld [vmem:[#allocation6 + $0x1190] sm:$0xff]
    %v4675 = vld [vmem:[#allocation6 + $0x1198] sm:$0xff]
    %v4676 = vld [vmem:[#allocation6 + $0x11a0] sm:$0xff]
    %v4677 = vld [vmem:[#allocation6 + $0x11a8] sm:$0xff]
    %v4678 = vld [vmem:[#allocation6 + $0x11b0] sm:$0xff]
    %v4679 = vld [vmem:[#allocation6 + $0x11b8] sm:$0xff]
    %v4680 = vld [vmem:[#allocation6 + $0x11c0] sm:$0xff]
    %v4681 = vld [vmem:[#allocation6 + $0x11c8] sm:$0xff]
    %v4682 = vld [vmem:[#allocation6 + $0x11d0] sm:$0xff]
    %v4683 = vld [vmem:[#allocation6 + $0x11d8] sm:$0xff]
    %v4684 = vld [vmem:[#allocation6 + $0x11e0] sm:$0xff]
    %v4685 = vld [vmem:[#allocation6 + $0x11e8] sm:$0xff]
    %v4686 = vld [vmem:[#allocation6 + $0x11f0] sm:$0xff]
    %v4687 = vld [vmem:[#allocation6 + $0x11f8] sm:$0xff]
    %v4688 = vld [vmem:[#allocation6 + $0x1200] sm:$0xff]
    %v4689 = vld [vmem:[#allocation6 + $0x1208] sm:$0xff]
    %v4690 = vld [vmem:[#allocation6 + $0x1210] sm:$0xff]
    %v4691 = vld [vmem:[#allocation6 + $0x1218] sm:$0xff]
    %v4692 = vld [vmem:[#allocation6 + $0x1220] sm:$0xff]
    %v4693 = vld [vmem:[#allocation6 + $0x1228] sm:$0xff]
    %v4694 = vld [vmem:[#allocation6 + $0x1230] sm:$0xff]
    %v4695 = vld [vmem:[#allocation6 + $0x1238] sm:$0xff]
    %v4696 = vld [vmem:[#allocation6 + $0x1240] sm:$0xff]
    %v4697 = vld [vmem:[#allocation6 + $0x1248] sm:$0xff]
    %v4698 = vld [vmem:[#allocation6 + $0x1250] sm:$0xff]
    %v4699 = vld [vmem:[#allocation6 + $0x1258] sm:$0xff]
    %v4700 = vld [vmem:[#allocation6 + $0x1260] sm:$0xff]
    %v4701 = vld [vmem:[#allocation6 + $0x1268] sm:$0xff]
    %v4702 = vld [vmem:[#allocation6 + $0x1270] sm:$0xff]
    %v4703 = vld [vmem:[#allocation6 + $0x1278] sm:$0xff]
    %v4704 = vld [vmem:[#allocation6 + $0x1280] sm:$0xff]
    %v4705 = vld [vmem:[#allocation6 + $0x1288] sm:$0xff]
    %v4706 = vld [vmem:[#allocation6 + $0x1290] sm:$0xff]
    %v4707 = vld [vmem:[#allocation6 + $0x1298] sm:$0xff]
    %v4708 = vld [vmem:[#allocation6 + $0x12a0] sm:$0xff]
    %v4709 = vld [vmem:[#allocation6 + $0x12a8] sm:$0xff]
    %v4710 = vld [vmem:[#allocation6 + $0x12b0] sm:$0xff]
    %v4711 = vld [vmem:[#allocation6 + $0x12b8] sm:$0xff]
    %v4712 = vld [vmem:[#allocation6 + $0x12c0] sm:$0xff]
    %v4713 = vld [vmem:[#allocation6 + $0x12c8] sm:$0xff]
    %v4714 = vld [vmem:[#allocation6 + $0x12d0] sm:$0xff]
    %v4715 = vld [vmem:[#allocation6 + $0x12d8] sm:$0xff]
    %v4716 = vld [vmem:[#allocation6 + $0x12e0] sm:$0xff]
    %v4717 = vld [vmem:[#allocation6 + $0x12e8] sm:$0xff]
    %v4718 = vld [vmem:[#allocation6 + $0x12f0] sm:$0xff]
    %v4719 = vld [vmem:[#allocation6 + $0x12f8] sm:$0xff]
    %v4720 = vld [vmem:[#allocation6 + $0x1300] sm:$0xff]
    %v4721 = vld [vmem:[#allocation6 + $0x1308] sm:$0xff]
    %v4722 = vld [vmem:[#allocation6 + $0x1310] sm:$0xff]
    %v4723 = vld [vmem:[#allocation6 + $0x1318] sm:$0xff]
    %v4724 = vld [vmem:[#allocation6 + $0x1320] sm:$0xff]
    %v4725 = vld [vmem:[#allocation6 + $0x1328] sm:$0xff]
    %v4726 = vld [vmem:[#allocation6 + $0x1330] sm:$0xff]
    %v4727 = vld [vmem:[#allocation6 + $0x1338] sm:$0xff]
    %v4728 = vld [vmem:[#allocation6 + $0x1340] sm:$0xff]
    %v4729 = vld [vmem:[#allocation6 + $0x1348] sm:$0xff]
    %v4730 = vld [vmem:[#allocation6 + $0x1350] sm:$0xff]
    %v4731 = vld [vmem:[#allocation6 + $0x1358] sm:$0xff]
    %v4732 = vld [vmem:[#allocation6 + $0x1360] sm:$0xff]
    %v4733 = vld [vmem:[#allocation6 + $0x1368] sm:$0xff]
    %v4734 = vld [vmem:[#allocation6 + $0x1370] sm:$0xff]
    %v4735 = vld [vmem:[#allocation6 + $0x1378] sm:$0xff]
    %v4736 = vld [vmem:[#allocation6 + $0x1380] sm:$0xff]
    %v4737 = vld [vmem:[#allocation6 + $0x1388] sm:$0xff]
    %v4738 = vld [vmem:[#allocation6 + $0x1390] sm:$0xff]
    %v4739 = vld [vmem:[#allocation6 + $0x1398] sm:$0xff]
    %v4740 = vld [vmem:[#allocation6 + $0x13a0] sm:$0xff]
    %v4741 = vld [vmem:[#allocation6 + $0x13a8] sm:$0xff]
    %v4742 = vld [vmem:[#allocation6 + $0x13b0] sm:$0xff]
    %v4743 = vld [vmem:[#allocation6 + $0x13b8] sm:$0xff]
    %v4744 = vld [vmem:[#allocation6 + $0x13c0] sm:$0xff]
    %v4745 = vld [vmem:[#allocation6 + $0x13c8] sm:$0xff]
    %v4746 = vld [vmem:[#allocation6 + $0x13d0] sm:$0xff]
    %v4747 = vld [vmem:[#allocation6 + $0x13d8] sm:$0xff]
    %v4748 = vld [vmem:[#allocation6 + $0x13e0] sm:$0xff]
    %v4749 = vld [vmem:[#allocation6 + $0x13e8] sm:$0xff]
    %v4750 = vld [vmem:[#allocation6 + $0x13f0] sm:$0xff]
    %v4751 = vld [vmem:[#allocation6 + $0x13f8] sm:$0xff]
    %v4752 = vld [vmem:[#allocation6 + $0x1400] sm:$0xff]
    %v4753 = vld [vmem:[#allocation6 + $0x1408] sm:$0xff]
    %v4754 = vld [vmem:[#allocation6 + $0x1410] sm:$0xff]
    %v4755 = vld [vmem:[#allocation6 + $0x1418] sm:$0xff]
    %v4756 = vld [vmem:[#allocation6 + $0x1420] sm:$0xff]
    %v4757 = vld [vmem:[#allocation6 + $0x1428] sm:$0xff]
    %v4758 = vld [vmem:[#allocation6 + $0x1430] sm:$0xff]
    %v4759 = vld [vmem:[#allocation6 + $0x1438] sm:$0xff]
    %v4760 = vld [vmem:[#allocation6 + $0x1440] sm:$0xff]
    %v4761 = vld [vmem:[#allocation6 + $0x1448] sm:$0xff]
    %v4762 = vld [vmem:[#allocation6 + $0x1450] sm:$0xff]
    %v4763 = vld [vmem:[#allocation6 + $0x1458] sm:$0xff]
    %v4764 = vld [vmem:[#allocation6 + $0x1460] sm:$0xff]
    %v4765 = vld [vmem:[#allocation6 + $0x1468] sm:$0xff]
    %v4766 = vld [vmem:[#allocation6 + $0x1470] sm:$0xff]
    %v4767 = vld [vmem:[#allocation6 + $0x1478] sm:$0xff]
    %v4768 = vld [vmem:[#allocation6 + $0x1480] sm:$0xff]
    %v4769 = vld [vmem:[#allocation6 + $0x1488] sm:$0xff]
    %v4770 = vld [vmem:[#allocation6 + $0x1490] sm:$0xff]
    %v4771 = vld [vmem:[#allocation6 + $0x1498] sm:$0xff]
    %v4772 = vld [vmem:[#allocation6 + $0x14a0] sm:$0xff]
    %v4773 = vld [vmem:[#allocation6 + $0x14a8] sm:$0xff]
    %v4774 = vld [vmem:[#allocation6 + $0x14b0] sm:$0xff]
    %v4775 = vld [vmem:[#allocation6 + $0x14b8] sm:$0xff]
    %v4776 = vld [vmem:[#allocation6 + $0x14c0] sm:$0xff]
    %v4777 = vld [vmem:[#allocation6 + $0x14c8] sm:$0xff]
    %v4778 = vld [vmem:[#allocation6 + $0x14d0] sm:$0xff]
    %v4779 = vld [vmem:[#allocation6 + $0x14d8] sm:$0xff]
    %v4780 = vld [vmem:[#allocation6 + $0x14e0] sm:$0xff]
    %v4781 = vld [vmem:[#allocation6 + $0x14e8] sm:$0xff]
    %v4782 = vld [vmem:[#allocation6 + $0x14f0] sm:$0xff]
    %v4783 = vld [vmem:[#allocation6 + $0x14f8] sm:$0xff]
    %v4784 = vld [vmem:[#allocation6 + $0x1500] sm:$0xff]
    %v4785 = vld [vmem:[#allocation6 + $0x1508] sm:$0xff]
    %v4786 = vld [vmem:[#allocation6 + $0x1510] sm:$0xff]
    %v4787 = vld [vmem:[#allocation6 + $0x1518] sm:$0xff]
    %v4788 = vld [vmem:[#allocation6 + $0x1520] sm:$0xff]
    %v4789 = vld [vmem:[#allocation6 + $0x1528] sm:$0xff]
    %v4790 = vld [vmem:[#allocation6 + $0x1530] sm:$0xff]
    %v4791 = vld [vmem:[#allocation6 + $0x1538] sm:$0xff]
    %v4792 = vld [vmem:[#allocation6 + $0x1540] sm:$0xff]
    %v4793 = vld [vmem:[#allocation6 + $0x1548] sm:$0xff]
    %v4794 = vld [vmem:[#allocation6 + $0x1550] sm:$0xff]
    %v4795 = vld [vmem:[#allocation6 + $0x1558] sm:$0xff]
    %v4796 = vld [vmem:[#allocation6 + $0x1560] sm:$0xff]
    %v4797 = vld [vmem:[#allocation6 + $0x1568] sm:$0xff]
    %v4798 = vld [vmem:[#allocation6 + $0x1570] sm:$0xff]
    %v4799 = vld [vmem:[#allocation6 + $0x1578] sm:$0xff]
    %v4800 = vld [vmem:[#allocation6 + $0x1580] sm:$0xff]
    %v4801 = vld [vmem:[#allocation6 + $0x1588] sm:$0xff]
    %v4802 = vld [vmem:[#allocation6 + $0x1590] sm:$0xff]
    %v4803 = vld [vmem:[#allocation6 + $0x1598] sm:$0xff]
    %v4804 = vld [vmem:[#allocation6 + $0x15a0] sm:$0xff]
    %v4805 = vld [vmem:[#allocation6 + $0x15a8] sm:$0xff]
    %v4806 = vld [vmem:[#allocation6 + $0x15b0] sm:$0xff]
    %v4807 = vld [vmem:[#allocation6 + $0x15b8] sm:$0xff]
    %v4808 = vld [vmem:[#allocation6 + $0x15c0] sm:$0xff]
    %v4809 = vld [vmem:[#allocation6 + $0x15c8] sm:$0xff]
    %v4810 = vld [vmem:[#allocation6 + $0x15d0] sm:$0xff]
    %v4811 = vld [vmem:[#allocation6 + $0x15d8] sm:$0xff]
    %v4812 = vld [vmem:[#allocation6 + $0x15e0] sm:$0xff]
    %v4813 = vld [vmem:[#allocation6 + $0x15e8] sm:$0xff]
    %v4814 = vld [vmem:[#allocation6 + $0x15f0] sm:$0xff]
    %v4815 = vld [vmem:[#allocation6 + $0x15f8] sm:$0xff]
    %v4816 = vld [vmem:[#allocation6 + $0x1600] sm:$0xff]
    %v4817 = vld [vmem:[#allocation6 + $0x1608] sm:$0xff]
    %v4818 = vld [vmem:[#allocation6 + $0x1610] sm:$0xff]
    %v4819 = vld [vmem:[#allocation6 + $0x1618] sm:$0xff]
    %v4820 = vld [vmem:[#allocation6 + $0x1620] sm:$0xff]
    %v4821 = vld [vmem:[#allocation6 + $0x1628] sm:$0xff]
    %v4822 = vld [vmem:[#allocation6 + $0x1630] sm:$0xff]
    %v4823 = vld [vmem:[#allocation6 + $0x1638] sm:$0xff]
    %v4824 = vld [vmem:[#allocation6 + $0x1640] sm:$0xff]
    %v4825 = vld [vmem:[#allocation6 + $0x1648] sm:$0xff]
    %v4826 = vld [vmem:[#allocation6 + $0x1650] sm:$0xff]
    %v4827 = vld [vmem:[#allocation6 + $0x1658] sm:$0xff]
    %v4828 = vld [vmem:[#allocation6 + $0x1660] sm:$0xff]
    %v4829 = vld [vmem:[#allocation6 + $0x1668] sm:$0xff]
    %v4830 = vld [vmem:[#allocation6 + $0x1670] sm:$0xff]
    %v4831 = vld [vmem:[#allocation6 + $0x1678] sm:$0xff]
    %v4832 = vld [vmem:[#allocation6 + $0x1680] sm:$0xff]
    %v4833 = vld [vmem:[#allocation6 + $0x1688] sm:$0xff]
    %v4834 = vld [vmem:[#allocation6 + $0x1690] sm:$0xff]
    %v4835 = vld [vmem:[#allocation6 + $0x1698] sm:$0xff]
    %v4836 = vld [vmem:[#allocation6 + $0x16a0] sm:$0xff]
    %v4837 = vld [vmem:[#allocation6 + $0x16a8] sm:$0xff]
    %v4838 = vld [vmem:[#allocation6 + $0x16b0] sm:$0xff]
    %v4839 = vld [vmem:[#allocation6 + $0x16b8] sm:$0xff]
    %v4840 = vld [vmem:[#allocation6 + $0x16c0] sm:$0xff]
    %v4841 = vld [vmem:[#allocation6 + $0x16c8] sm:$0xff]
    %v4842 = vld [vmem:[#allocation6 + $0x16d0] sm:$0xff]
    %v4843 = vld [vmem:[#allocation6 + $0x16d8] sm:$0xff]
    %v4844 = vld [vmem:[#allocation6 + $0x16e0] sm:$0xff]
    %v4845 = vld [vmem:[#allocation6 + $0x16e8] sm:$0xff]
    %v4846 = vld [vmem:[#allocation6 + $0x16f0] sm:$0xff]
    %v4847 = vld [vmem:[#allocation6 + $0x16f8] sm:$0xff]
    %v4848 = vld [vmem:[#allocation6 + $0x1700] sm:$0xff]
    %v4849 = vld [vmem:[#allocation6 + $0x1708] sm:$0xff]
    %v4850 = vld [vmem:[#allocation6 + $0x1710] sm:$0xff]
    %v4851 = vld [vmem:[#allocation6 + $0x1718] sm:$0xff]
    %v4852 = vld [vmem:[#allocation6 + $0x1720] sm:$0xff]
    %v4853 = vld [vmem:[#allocation6 + $0x1728] sm:$0xff]
    %v4854 = vld [vmem:[#allocation6 + $0x1730] sm:$0xff]
    %v4855 = vld [vmem:[#allocation6 + $0x1738] sm:$0xff]
    %v4856 = vld [vmem:[#allocation6 + $0x1740] sm:$0xff]
    %v4857 = vld [vmem:[#allocation6 + $0x1748] sm:$0xff]
    %v4858 = vld [vmem:[#allocation6 + $0x1750] sm:$0xff]
    %v4859 = vld [vmem:[#allocation6 + $0x1758] sm:$0xff]
    %v4860 = vld [vmem:[#allocation6 + $0x1760] sm:$0xff]
    %v4861 = vld [vmem:[#allocation6 + $0x1768] sm:$0xff]
    %v4862 = vld [vmem:[#allocation6 + $0x1770] sm:$0xff]
    %v4863 = vld [vmem:[#allocation6 + $0x1778] sm:$0xff]
    %v4864 = vld [vmem:[#allocation6 + $0x1780] sm:$0xff]
    %v4865 = vld [vmem:[#allocation6 + $0x1788] sm:$0xff]
    %v4866 = vld [vmem:[#allocation6 + $0x1790] sm:$0xff]
    %v4867 = vld [vmem:[#allocation6 + $0x1798] sm:$0xff]
    %v4868 = vld [vmem:[#allocation6 + $0x17a0] sm:$0xff]
    %v4869 = vld [vmem:[#allocation6 + $0x17a8] sm:$0xff]
    %v4870 = vld [vmem:[#allocation6 + $0x17b0] sm:$0xff]
    %v4871 = vld [vmem:[#allocation6 + $0x17b8] sm:$0xff]
    %v4872 = vld [vmem:[#allocation6 + $0x17c0] sm:$0xff]
    %v4873 = vld [vmem:[#allocation6 + $0x17c8] sm:$0xff]
    %v4874 = vld [vmem:[#allocation6 + $0x17d0] sm:$0xff]
    %v4875 = vld [vmem:[#allocation6 + $0x17d8] sm:$0xff]
    %v4876 = vld [vmem:[#allocation6 + $0x17e0] sm:$0xff]
    %v4877 = vld [vmem:[#allocation6 + $0x17e8] sm:$0xff]
    %v4878 = vld [vmem:[#allocation6 + $0x17f0] sm:$0xff]
    %v4879 = vld [vmem:[#allocation6 + $0x17f8] sm:$0xff]
    %v4880 = vld [vmem:[#allocation6 + $0x1800] sm:$0xff]
    %v4881 = vld [vmem:[#allocation6 + $0x1808] sm:$0xff]
    %v4882 = vld [vmem:[#allocation6 + $0x1810] sm:$0xff]
    %v4883 = vld [vmem:[#allocation6 + $0x1818] sm:$0xff]
    %v4884 = vld [vmem:[#allocation6 + $0x1820] sm:$0xff]
    %v4885 = vld [vmem:[#allocation6 + $0x1828] sm:$0xff]
    %v4886 = vld [vmem:[#allocation6 + $0x1830] sm:$0xff]
    %v4887 = vld [vmem:[#allocation6 + $0x1838] sm:$0xff]
    %v4888 = vld [vmem:[#allocation6 + $0x1840] sm:$0xff]
    %v4889 = vld [vmem:[#allocation6 + $0x1848] sm:$0xff]
    %v4890 = vld [vmem:[#allocation6 + $0x1850] sm:$0xff]
    %v4891 = vld [vmem:[#allocation6 + $0x1858] sm:$0xff]
    %v4892 = vld [vmem:[#allocation6 + $0x1860] sm:$0xff]
    %v4893 = vld [vmem:[#allocation6 + $0x1868] sm:$0xff]
    %v4894 = vld [vmem:[#allocation6 + $0x1870] sm:$0xff]
    %v4895 = vld [vmem:[#allocation6 + $0x1878] sm:$0xff]
    %v4896 = vld [vmem:[#allocation6 + $0x1880] sm:$0xff]
    %v4897 = vld [vmem:[#allocation6 + $0x1888] sm:$0xff]
    %v4898 = vld [vmem:[#allocation6 + $0x1890] sm:$0xff]
    %v4899 = vld [vmem:[#allocation6 + $0x1898] sm:$0xff]
    %v4900 = vld [vmem:[#allocation6 + $0x18a0] sm:$0xff]
    %v4901 = vld [vmem:[#allocation6 + $0x18a8] sm:$0xff]
    %v4902 = vld [vmem:[#allocation6 + $0x18b0] sm:$0xff]
    %v4903 = vld [vmem:[#allocation6 + $0x18b8] sm:$0xff]
    %v4904 = vld [vmem:[#allocation6 + $0x18c0] sm:$0xff]
    %v4905 = vld [vmem:[#allocation6 + $0x18c8] sm:$0xff]
    %v4906 = vld [vmem:[#allocation6 + $0x18d0] sm:$0xff]
    %v4907 = vld [vmem:[#allocation6 + $0x18d8] sm:$0xff]
    %v4908 = vld [vmem:[#allocation6 + $0x18e0] sm:$0xff]
    %v4909 = vld [vmem:[#allocation6 + $0x18e8] sm:$0xff]
    %v4910 = vld [vmem:[#allocation6 + $0x18f0] sm:$0xff]
    %v4911 = vld [vmem:[#allocation6 + $0x18f8] sm:$0xff]
    %v4912 = vld [vmem:[#allocation6 + $0x1900] sm:$0xff]
    %v4913 = vld [vmem:[#allocation6 + $0x1908] sm:$0xff]
    %v4914 = vld [vmem:[#allocation6 + $0x1910] sm:$0xff]
    %v4915 = vld [vmem:[#allocation6 + $0x1918] sm:$0xff]
    %v4916 = vld [vmem:[#allocation6 + $0x1920] sm:$0xff]
    %v4917 = vld [vmem:[#allocation6 + $0x1928] sm:$0xff]
    %v4918 = vld [vmem:[#allocation6 + $0x1930] sm:$0xff]
    %v4919 = vld [vmem:[#allocation6 + $0x1938] sm:$0xff]
    %v4920 = vld [vmem:[#allocation6 + $0x1940] sm:$0xff]
    %v4921 = vld [vmem:[#allocation6 + $0x1948] sm:$0xff]
    %v4922 = vld [vmem:[#allocation6 + $0x1950] sm:$0xff]
    %v4923 = vld [vmem:[#allocation6 + $0x1958] sm:$0xff]
    %v4924 = vld [vmem:[#allocation6 + $0x1960] sm:$0xff]
    %v4925 = vld [vmem:[#allocation6 + $0x1968] sm:$0xff]
    %v4926 = vld [vmem:[#allocation6 + $0x1970] sm:$0xff]
    %v4927 = vld [vmem:[#allocation6 + $0x1978] sm:$0xff]
    %v4928 = vld [vmem:[#allocation6 + $0x1980] sm:$0xff]
    %v4929 = vld [vmem:[#allocation6 + $0x1988] sm:$0xff]
    %v4930 = vld [vmem:[#allocation6 + $0x1990] sm:$0xff]
    %v4931 = vld [vmem:[#allocation6 + $0x1998] sm:$0xff]
    %v4932 = vld [vmem:[#allocation6 + $0x19a0] sm:$0xff]
    %v4933 = vld [vmem:[#allocation6 + $0x19a8] sm:$0xff]
    %v4934 = vld [vmem:[#allocation6 + $0x19b0] sm:$0xff]
    %v4935 = vld [vmem:[#allocation6 + $0x19b8] sm:$0xff]
    %v4936 = vld [vmem:[#allocation6 + $0x19c0] sm:$0xff]
    %v4937 = vld [vmem:[#allocation6 + $0x19c8] sm:$0xff]
    %v4938 = vld [vmem:[#allocation6 + $0x19d0] sm:$0xff]
    %v4939 = vld [vmem:[#allocation6 + $0x19d8] sm:$0xff]
    %v4940 = vld [vmem:[#allocation6 + $0x19e0] sm:$0xff]
    %v4941 = vld [vmem:[#allocation6 + $0x19e8] sm:$0xff]
    %v4942 = vld [vmem:[#allocation6 + $0x19f0] sm:$0xff]
    %v4943 = vld [vmem:[#allocation6 + $0x19f8] sm:$0xff]
    %v4944 = vld [vmem:[#allocation6 + $0x1a00] sm:$0xff]
    %v4945 = vld [vmem:[#allocation6 + $0x1a08] sm:$0xff]
    %v4946 = vld [vmem:[#allocation6 + $0x1a10] sm:$0xff]
    %v4947 = vld [vmem:[#allocation6 + $0x1a18] sm:$0xff]
    %v4948 = vld [vmem:[#allocation6 + $0x1a20] sm:$0xff]
    %v4949 = vld [vmem:[#allocation6 + $0x1a28] sm:$0xff]
    %v4950 = vld [vmem:[#allocation6 + $0x1a30] sm:$0xff]
    %v4951 = vld [vmem:[#allocation6 + $0x1a38] sm:$0xff]
    %v4952 = vld [vmem:[#allocation6 + $0x1a40] sm:$0xff]
    %v4953 = vld [vmem:[#allocation6 + $0x1a48] sm:$0xff]
    %v4954 = vld [vmem:[#allocation6 + $0x1a50] sm:$0xff]
    %v4955 = vld [vmem:[#allocation6 + $0x1a58] sm:$0xff]
    %v4956 = vld [vmem:[#allocation6 + $0x1a60] sm:$0xff]
    %v4957 = vld [vmem:[#allocation6 + $0x1a68] sm:$0xff]
    %v4958 = vld [vmem:[#allocation6 + $0x1a70] sm:$0xff]
    %v4959 = vld [vmem:[#allocation6 + $0x1a78] sm:$0xff]
    %v4960 = vld [vmem:[#allocation6 + $0x1a80] sm:$0xff]
    %v4961 = vld [vmem:[#allocation6 + $0x1a88] sm:$0xff]
    %v4962 = vld [vmem:[#allocation6 + $0x1a90] sm:$0xff]
    %v4963 = vld [vmem:[#allocation6 + $0x1a98] sm:$0xff]
    %v4964 = vld [vmem:[#allocation6 + $0x1aa0] sm:$0xff]
    %v4965 = vld [vmem:[#allocation6 + $0x1aa8] sm:$0xff]
    %v4966 = vld [vmem:[#allocation6 + $0x1ab0] sm:$0xff]
    %v4967 = vld [vmem:[#allocation6 + $0x1ab8] sm:$0xff]
    %v4968 = vld [vmem:[#allocation6 + $0x1ac0] sm:$0xff]
    %v4969 = vld [vmem:[#allocation6 + $0x1ac8] sm:$0xff]
    %v4970 = vld [vmem:[#allocation6 + $0x1ad0] sm:$0xff]
    %v4971 = vld [vmem:[#allocation6 + $0x1ad8] sm:$0xff]
    %v4972 = vld [vmem:[#allocation6 + $0x1ae0] sm:$0xff]
    %v4973 = vld [vmem:[#allocation6 + $0x1ae8] sm:$0xff]
    %v4974 = vld [vmem:[#allocation6 + $0x1af0] sm:$0xff]
    %v4975 = vld [vmem:[#allocation6 + $0x1af8] sm:$0xff]
    %v4976 = vld [vmem:[#allocation6 + $0x1b00] sm:$0xff]
    %v4977 = vld [vmem:[#allocation6 + $0x1b08] sm:$0xff]
    %v4978 = vld [vmem:[#allocation6 + $0x1b10] sm:$0xff]
    %v4979 = vld [vmem:[#allocation6 + $0x1b18] sm:$0xff]
    %v4980 = vld [vmem:[#allocation6 + $0x1b20] sm:$0xff]
    %v4981 = vld [vmem:[#allocation6 + $0x1b28] sm:$0xff]
    %v4982 = vld [vmem:[#allocation6 + $0x1b30] sm:$0xff]
    %v4983 = vld [vmem:[#allocation6 + $0x1b38] sm:$0xff]
    %v4984 = vld [vmem:[#allocation6 + $0x1b40] sm:$0xff]
    %v4985 = vld [vmem:[#allocation6 + $0x1b48] sm:$0xff]
    %v4986 = vld [vmem:[#allocation6 + $0x1b50] sm:$0xff]
    %v4987 = vld [vmem:[#allocation6 + $0x1b58] sm:$0xff]
    %v4988 = vld [vmem:[#allocation6 + $0x1b60] sm:$0xff]
    %v4989 = vld [vmem:[#allocation6 + $0x1b68] sm:$0xff]
    %v4990 = vld [vmem:[#allocation6 + $0x1b70] sm:$0xff]
    %v4991 = vld [vmem:[#allocation6 + $0x1b78] sm:$0xff]
    %v4992 = vld [vmem:[#allocation6 + $0x1b80] sm:$0xff]
    %v4993 = vld [vmem:[#allocation6 + $0x1b88] sm:$0xff]
    %v4994 = vld [vmem:[#allocation6 + $0x1b90] sm:$0xff]
    %v4995 = vld [vmem:[#allocation6 + $0x1b98] sm:$0xff]
    %v4996 = vld [vmem:[#allocation6 + $0x1ba0] sm:$0xff]
    %v4997 = vld [vmem:[#allocation6 + $0x1ba8] sm:$0xff]
    %v4998 = vld [vmem:[#allocation6 + $0x1bb0] sm:$0xff]
    %v4999 = vld [vmem:[#allocation6 + $0x1bb8] sm:$0xff]
    %v5000 = vld [vmem:[#allocation6 + $0x1bc0] sm:$0xff]
    %v5001 = vld [vmem:[#allocation6 + $0x1bc8] sm:$0xff]
    %v5002 = vld [vmem:[#allocation6 + $0x1bd0] sm:$0xff]
    %v5003 = vld [vmem:[#allocation6 + $0x1bd8] sm:$0xff]
    %v5004 = vld [vmem:[#allocation6 + $0x1be0] sm:$0xff]
    %v5005 = vld [vmem:[#allocation6 + $0x1be8] sm:$0xff]
    %v5006 = vld [vmem:[#allocation6 + $0x1bf0] sm:$0xff]
    %v5007 = vld [vmem:[#allocation6 + $0x1bf8] sm:$0xff]
    %v5008 = vld [vmem:[#allocation6 + $0x1c00] sm:$0xff]
    %v5009 = vld [vmem:[#allocation6 + $0x1c08] sm:$0xff]
    %v5010 = vld [vmem:[#allocation6 + $0x1c10] sm:$0xff]
    %v5011 = vld [vmem:[#allocation6 + $0x1c18] sm:$0xff]
    %v5012 = vld [vmem:[#allocation6 + $0x1c20] sm:$0xff]
    %v5013 = vld [vmem:[#allocation6 + $0x1c28] sm:$0xff]
    %v5014 = vld [vmem:[#allocation6 + $0x1c30] sm:$0xff]
    %v5015 = vld [vmem:[#allocation6 + $0x1c38] sm:$0xff]
    %v5016 = vld [vmem:[#allocation6 + $0x1c40] sm:$0xff]
    %v5017 = vld [vmem:[#allocation6 + $0x1c48] sm:$0xff]
    %v5018 = vld [vmem:[#allocation6 + $0x1c50] sm:$0xff]
    %v5019 = vld [vmem:[#allocation6 + $0x1c58] sm:$0xff]
    %v5020 = vld [vmem:[#allocation6 + $0x1c60] sm:$0xff]
    %v5021 = vld [vmem:[#allocation6 + $0x1c68] sm:$0xff]
    %v5022 = vld [vmem:[#allocation6 + $0x1c70] sm:$0xff]
    %v5023 = vld [vmem:[#allocation6 + $0x1c78] sm:$0xff]
    %v5024 = vld [vmem:[#allocation6 + $0x1c80] sm:$0xff]
    %v5025 = vld [vmem:[#allocation6 + $0x1c88] sm:$0xff]
    %v5026 = vld [vmem:[#allocation6 + $0x1c90] sm:$0xff]
    %v5027 = vld [vmem:[#allocation6 + $0x1c98] sm:$0xff]
    %v5028 = vld [vmem:[#allocation6 + $0x1ca0] sm:$0xff]
    %v5029 = vld [vmem:[#allocation6 + $0x1ca8] sm:$0xff]
    %v5030 = vld [vmem:[#allocation6 + $0x1cb0] sm:$0xff]
    %v5031 = vld [vmem:[#allocation6 + $0x1cb8] sm:$0xff]
    %v5032 = vld [vmem:[#allocation6 + $0x1cc0] sm:$0xff]
    %v5033 = vld [vmem:[#allocation6 + $0x1cc8] sm:$0xff]
    %v5034 = vld [vmem:[#allocation6 + $0x1cd0] sm:$0xff]
    %v5035 = vld [vmem:[#allocation6 + $0x1cd8] sm:$0xff]
    %v5036 = vld [vmem:[#allocation6 + $0x1ce0] sm:$0xff]
    %v5037 = vld [vmem:[#allocation6 + $0x1ce8] sm:$0xff]
    %v5038 = vld [vmem:[#allocation6 + $0x1cf0] sm:$0xff]
    %v5039 = vld [vmem:[#allocation6 + $0x1cf8] sm:$0xff]
    %v5040 = vld [vmem:[#allocation6 + $0x1d00] sm:$0xff]
    %v5041 = vld [vmem:[#allocation6 + $0x1d08] sm:$0xff]
    %v5042 = vld [vmem:[#allocation6 + $0x1d10] sm:$0xff]
    %v5043 = vld [vmem:[#allocation6 + $0x1d18] sm:$0xff]
    %v5044 = vld [vmem:[#allocation6 + $0x1d20] sm:$0xff]
    %v5045 = vld [vmem:[#allocation6 + $0x1d28] sm:$0xff]
    %v5046 = vld [vmem:[#allocation6 + $0x1d30] sm:$0xff]
    %v5047 = vld [vmem:[#allocation6 + $0x1d38] sm:$0xff]
    %v5048 = vld [vmem:[#allocation6 + $0x1d40] sm:$0xff]
    %v5049 = vld [vmem:[#allocation6 + $0x1d48] sm:$0xff]
    %v5050 = vld [vmem:[#allocation6 + $0x1d50] sm:$0xff]
    %v5051 = vld [vmem:[#allocation6 + $0x1d58] sm:$0xff]
    %v5052 = vld [vmem:[#allocation6 + $0x1d60] sm:$0xff]
    %v5053 = vld [vmem:[#allocation6 + $0x1d68] sm:$0xff]
    %v5054 = vld [vmem:[#allocation6 + $0x1d70] sm:$0xff]
    %v5055 = vld [vmem:[#allocation6 + $0x1d78] sm:$0xff]
    %v5056 = vld [vmem:[#allocation6 + $0x1d80] sm:$0xff]
    %v5057 = vld [vmem:[#allocation6 + $0x1d88] sm:$0xff]
    %v5058 = vld [vmem:[#allocation6 + $0x1d90] sm:$0xff]
    %v5059 = vld [vmem:[#allocation6 + $0x1d98] sm:$0xff]
    %v5060 = vld [vmem:[#allocation6 + $0x1da0] sm:$0xff]
    %v5061 = vld [vmem:[#allocation6 + $0x1da8] sm:$0xff]
    %v5062 = vld [vmem:[#allocation6 + $0x1db0] sm:$0xff]
    %v5063 = vld [vmem:[#allocation6 + $0x1db8] sm:$0xff]
    %v5064 = vld [vmem:[#allocation6 + $0x1dc0] sm:$0xff]
    %v5065 = vld [vmem:[#allocation6 + $0x1dc8] sm:$0xff]
    %v5066 = vld [vmem:[#allocation6 + $0x1dd0] sm:$0xff]
    %v5067 = vld [vmem:[#allocation6 + $0x1dd8] sm:$0xff]
    %v5068 = vld [vmem:[#allocation6 + $0x1de0] sm:$0xff]
    %v5069 = vld [vmem:[#allocation6 + $0x1de8] sm:$0xff]
    %v5070 = vld [vmem:[#allocation6 + $0x1df0] sm:$0xff]
    %v5071 = vld [vmem:[#allocation6 + $0x1df8] sm:$0xff]
    %v5072 = vld [vmem:[#allocation6 + $0x1e00] sm:$0xff]
    %v5073 = vld [vmem:[#allocation6 + $0x1e08] sm:$0xff]
    %v5074 = vld [vmem:[#allocation6 + $0x1e10] sm:$0xff]
    %v5075 = vld [vmem:[#allocation6 + $0x1e18] sm:$0xff]
    %v5076 = vld [vmem:[#allocation6 + $0x1e20] sm:$0xff]
    %v5077 = vld [vmem:[#allocation6 + $0x1e28] sm:$0xff]
    %v5078 = vld [vmem:[#allocation6 + $0x1e30] sm:$0xff]
    %v5079 = vld [vmem:[#allocation6 + $0x1e38] sm:$0xff]
    %v5080 = vld [vmem:[#allocation6 + $0x1e40] sm:$0xff]
    %v5081 = vld [vmem:[#allocation6 + $0x1e48] sm:$0xff]
    %v5082 = vld [vmem:[#allocation6 + $0x1e50] sm:$0xff]
    %v5083 = vld [vmem:[#allocation6 + $0x1e58] sm:$0xff]
    %v5084 = vld [vmem:[#allocation6 + $0x1e60] sm:$0xff]
    %v5085 = vld [vmem:[#allocation6 + $0x1e68] sm:$0xff]
    %v5086 = vld [vmem:[#allocation6 + $0x1e70] sm:$0xff]
    %v5087 = vld [vmem:[#allocation6 + $0x1e78] sm:$0xff]
    %v5088 = vld [vmem:[#allocation6 + $0x1e80] sm:$0xff]
    %v5089 = vld [vmem:[#allocation6 + $0x1e88] sm:$0xff]
    %v5090 = vld [vmem:[#allocation6 + $0x1e90] sm:$0xff]
    %v5091 = vld [vmem:[#allocation6 + $0x1e98] sm:$0xff]
    %v5092 = vld [vmem:[#allocation6 + $0x1ea0] sm:$0xff]
    %v5093 = vld [vmem:[#allocation6 + $0x1ea8] sm:$0xff]
    %v5094 = vld [vmem:[#allocation6 + $0x1eb0] sm:$0xff]
    %v5095 = vld [vmem:[#allocation6 + $0x1eb8] sm:$0xff]
    %v5096 = vld [vmem:[#allocation6 + $0x1ec0] sm:$0xff]
    %v5097 = vld [vmem:[#allocation6 + $0x1ec8] sm:$0xff]
    %v5098 = vld [vmem:[#allocation6 + $0x1ed0] sm:$0xff]
    %v5099 = vld [vmem:[#allocation6 + $0x1ed8] sm:$0xff]
    %v5100 = vld [vmem:[#allocation6 + $0x1ee0] sm:$0xff]
    %v5101 = vld [vmem:[#allocation6 + $0x1ee8] sm:$0xff]
    %v5102 = vld [vmem:[#allocation6 + $0x1ef0] sm:$0xff]
    %v5103 = vld [vmem:[#allocation6 + $0x1ef8] sm:$0xff]
    %v5104 = vld [vmem:[#allocation6 + $0x1f00] sm:$0xff]
    %v5105 = vld [vmem:[#allocation6 + $0x1f08] sm:$0xff]
    %v5106 = vld [vmem:[#allocation6 + $0x1f10] sm:$0xff]
    %v5107 = vld [vmem:[#allocation6 + $0x1f18] sm:$0xff]
    %v5108 = vld [vmem:[#allocation6 + $0x1f20] sm:$0xff]
    %v5109 = vld [vmem:[#allocation6 + $0x1f28] sm:$0xff]
    %v5110 = vld [vmem:[#allocation6 + $0x1f30] sm:$0xff]
    %v5111 = vld [vmem:[#allocation6 + $0x1f38] sm:$0xff]
    %v5112 = vld [vmem:[#allocation6 + $0x1f40] sm:$0xff]
    %v5113 = vld [vmem:[#allocation6 + $0x1f48] sm:$0xff]
    %v5114 = vld [vmem:[#allocation6 + $0x1f50] sm:$0xff]
    %v5115 = vld [vmem:[#allocation6 + $0x1f58] sm:$0xff]
    %v5116 = vld [vmem:[#allocation6 + $0x1f60] sm:$0xff]
    %v5117 = vld [vmem:[#allocation6 + $0x1f68] sm:$0xff]
    %v5118 = vld [vmem:[#allocation6 + $0x1f70] sm:$0xff]
    %v5119 = vld [vmem:[#allocation6 + $0x1f78] sm:$0xff]
    %v5120 = vld [vmem:[#allocation6 + $0x1f80] sm:$0xff]
    %v5121 = vld [vmem:[#allocation6 + $0x1f88] sm:$0xff]
    %v5122 = vld [vmem:[#allocation6 + $0x1f90] sm:$0xff]
    %v5123 = vld [vmem:[#allocation6 + $0x1f98] sm:$0xff]
    %v5124 = vld [vmem:[#allocation6 + $0x1fa0] sm:$0xff]
    %v5125 = vld [vmem:[#allocation6 + $0x1fa8] sm:$0xff]
    %v5126 = vld [vmem:[#allocation6 + $0x1fb0] sm:$0xff]
    %v5127 = vld [vmem:[#allocation6 + $0x1fb8] sm:$0xff]
    %v5128 = vld [vmem:[#allocation6 + $0x1fc0] sm:$0xff]
    %v5129 = vld [vmem:[#allocation6 + $0x1fc8] sm:$0xff]
    %v5130 = vld [vmem:[#allocation6 + $0x1fd0] sm:$0xff]
    %v5131 = vld [vmem:[#allocation6 + $0x1fd8] sm:$0xff]
    %v5132 = vld [vmem:[#allocation6 + $0x1fe0] sm:$0xff]
    %v5133 = vld [vmem:[#allocation6 + $0x1fe8] sm:$0xff]
    %v5134 = vld [vmem:[#allocation6 + $0x1ff0] sm:$0xff]
    %v5135 = vld [vmem:[#allocation6 + $0x1ff8] sm:$0xff]
    %v5136 = vld [vmem:[#allocation7] sm:$0xff]
    %v5138 = vlaneseq
    %v5139 = vshrl.u32 %v5138, 7
    %v5140 = vsub.s32 0, %v5139
    %v5141 = vrot.slane %v5136, %v5140
    %v5142 = vlaneseq
    %v5143 = vshrl.u32 %v5142, 7
    %v5144 = vsub.s32 1, %v5143
    %v5145 = vrot.slane %v5136, %v5144
    %v5146 = vlaneseq
    %v5147 = vshrl.u32 %v5146, 7
    %v5148 = vsub.s32 2, %v5147
    %v5149 = vrot.slane %v5136, %v5148
    %v5150 = vlaneseq
    %v5151 = vshrl.u32 %v5150, 7
    %v5152 = vsub.s32 3, %v5151
    %v5153 = vrot.slane %v5136, %v5152
    %v5154 = vlaneseq
    %v5155 = vshrl.u32 %v5154, 7
    %v5156 = vsub.s32 4, %v5155
    %v5157 = vrot.slane %v5136, %v5156
    %v5158 = vlaneseq
    %v5159 = vshrl.u32 %v5158, 7
    %v5160 = vsub.s32 5, %v5159
    %v5161 = vrot.slane %v5136, %v5160
    %v5162 = vlaneseq
    %v5163 = vshrl.u32 %v5162, 7
    %v5164 = vsub.s32 6, %v5163
    %v5165 = vrot.slane %v5136, %v5164
    %v5166 = vlaneseq
    %v5167 = vshrl.u32 %v5166, 7
    %v5168 = vsub.s32 7, %v5167
    %v5169 = vrot.slane %v5136, %v5168
    %v6202 = vunpack.c.l.b16 %v4112
    %v6203 = vunpack.c.h.b16 %v4112
    %v6204 = vunpack.c.l.b16 %v4113
    %v6205 = vunpack.c.h.b16 %v4113
    %v6206 = vunpack.c.l.b16 %v4114
    %v6207 = vunpack.c.h.b16 %v4114
    %v6208 = vunpack.c.l.b16 %v4115
    %v6209 = vunpack.c.h.b16 %v4115
    %v6210 = vunpack.c.l.b16 %v4116
    %v6211 = vunpack.c.h.b16 %v4116
    %v6212 = vunpack.c.l.b16 %v4117
    %v6213 = vunpack.c.h.b16 %v4117
    %v6214 = vunpack.c.l.b16 %v4118
    %v6215 = vunpack.c.h.b16 %v4118
    %v6216 = vunpack.c.l.b16 %v4119
    %v6217 = vunpack.c.h.b16 %v4119
    %v6218 = vunpack.c.l.b16 %v4120
    %v6219 = vunpack.c.h.b16 %v4120
    %v6220 = vunpack.c.l.b16 %v4121
    %v6221 = vunpack.c.h.b16 %v4121
    %v6222 = vunpack.c.l.b16 %v4122
    %v6223 = vunpack.c.h.b16 %v4122
    %v6224 = vunpack.c.l.b16 %v4123
    %v6225 = vunpack.c.h.b16 %v4123
    %v6226 = vunpack.c.l.b16 %v4124
    %v6227 = vunpack.c.h.b16 %v4124
    %v6228 = vunpack.c.l.b16 %v4125
    %v6229 = vunpack.c.h.b16 %v4125
    %v6230 = vunpack.c.l.b16 %v4126
    %v6231 = vunpack.c.h.b16 %v4126
    %v6232 = vunpack.c.l.b16 %v4127
    %v6233 = vunpack.c.h.b16 %v4127
    %v6234 = vunpack.c.l.b16 %v4128
    %v6235 = vunpack.c.h.b16 %v4128
    %v6236 = vunpack.c.l.b16 %v4129
    %v6237 = vunpack.c.h.b16 %v4129
    %v6238 = vunpack.c.l.b16 %v4130
    %v6239 = vunpack.c.h.b16 %v4130
    %v6240 = vunpack.c.l.b16 %v4131
    %v6241 = vunpack.c.h.b16 %v4131
    %v6242 = vunpack.c.l.b16 %v4132
    %v6243 = vunpack.c.h.b16 %v4132
    %v6244 = vunpack.c.l.b16 %v4133
    %v6245 = vunpack.c.h.b16 %v4133
    %v6246 = vunpack.c.l.b16 %v4134
    %v6247 = vunpack.c.h.b16 %v4134
    %v6248 = vunpack.c.l.b16 %v4135
    %v6249 = vunpack.c.h.b16 %v4135
    %v6250 = vunpack.c.l.b16 %v4136
    %v6251 = vunpack.c.h.b16 %v4136
    %v6252 = vunpack.c.l.b16 %v4137
    %v6253 = vunpack.c.h.b16 %v4137
    %v6254 = vunpack.c.l.b16 %v4138
    %v6255 = vunpack.c.h.b16 %v4138
    %v6256 = vunpack.c.l.b16 %v4139
    %v6257 = vunpack.c.h.b16 %v4139
    %v6258 = vunpack.c.l.b16 %v4140
    %v6259 = vunpack.c.h.b16 %v4140
    %v6260 = vunpack.c.l.b16 %v4141
    %v6261 = vunpack.c.h.b16 %v4141
    %v6262 = vunpack.c.l.b16 %v4142
    %v6263 = vunpack.c.h.b16 %v4142
    %v6264 = vunpack.c.l.b16 %v4143
    %v6265 = vunpack.c.h.b16 %v4143
    %v6266 = vunpack.c.l.b16 %v4144
    %v6267 = vunpack.c.h.b16 %v4144
    %v6268 = vunpack.c.l.b16 %v4145
    %v6269 = vunpack.c.h.b16 %v4145
    %v6270 = vunpack.c.l.b16 %v4146
    %v6271 = vunpack.c.h.b16 %v4146
    %v6272 = vunpack.c.l.b16 %v4147
    %v6273 = vunpack.c.h.b16 %v4147
    %v6274 = vunpack.c.l.b16 %v4148
    %v6275 = vunpack.c.h.b16 %v4148
    %v6276 = vunpack.c.l.b16 %v4149
    %v6277 = vunpack.c.h.b16 %v4149
    %v6278 = vunpack.c.l.b16 %v4150
    %v6279 = vunpack.c.h.b16 %v4150
    %v6280 = vunpack.c.l.b16 %v4151
    %v6281 = vunpack.c.h.b16 %v4151
    %v6282 = vunpack.c.l.b16 %v4152
    %v6283 = vunpack.c.h.b16 %v4152
    %v6284 = vunpack.c.l.b16 %v4153
    %v6285 = vunpack.c.h.b16 %v4153
    %v6286 = vunpack.c.l.b16 %v4154
    %v6287 = vunpack.c.h.b16 %v4154
    %v6288 = vunpack.c.l.b16 %v4155
    %v6289 = vunpack.c.h.b16 %v4155
    %v6290 = vunpack.c.l.b16 %v4156
    %v6291 = vunpack.c.h.b16 %v4156
    %v6292 = vunpack.c.l.b16 %v4157
    %v6293 = vunpack.c.h.b16 %v4157
    %v6294 = vunpack.c.l.b16 %v4158
    %v6295 = vunpack.c.h.b16 %v4158
    %v6296 = vunpack.c.l.b16 %v4159
    %v6297 = vunpack.c.h.b16 %v4159
    %v6298 = vunpack.c.l.b16 %v4160
    %v6299 = vunpack.c.h.b16 %v4160
    %v6300 = vunpack.c.l.b16 %v4161
    %v6301 = vunpack.c.h.b16 %v4161
    %v6302 = vunpack.c.l.b16 %v4162
    %v6303 = vunpack.c.h.b16 %v4162
    %v6304 = vunpack.c.l.b16 %v4163
    %v6305 = vunpack.c.h.b16 %v4163
    %v6306 = vunpack.c.l.b16 %v4164
    %v6307 = vunpack.c.h.b16 %v4164
    %v6308 = vunpack.c.l.b16 %v4165
    %v6309 = vunpack.c.h.b16 %v4165
    %v6310 = vunpack.c.l.b16 %v4166
    %v6311 = vunpack.c.h.b16 %v4166
    %v6312 = vunpack.c.l.b16 %v4167
    %v6313 = vunpack.c.h.b16 %v4167
    %v6314 = vunpack.c.l.b16 %v4168
    %v6315 = vunpack.c.h.b16 %v4168
    %v6316 = vunpack.c.l.b16 %v4169
    %v6317 = vunpack.c.h.b16 %v4169
    %v6318 = vunpack.c.l.b16 %v4170
    %v6319 = vunpack.c.h.b16 %v4170
    %v6320 = vunpack.c.l.b16 %v4171
    %v6321 = vunpack.c.h.b16 %v4171
    %v6322 = vunpack.c.l.b16 %v4172
    %v6323 = vunpack.c.h.b16 %v4172
    %v6324 = vunpack.c.l.b16 %v4173
    %v6325 = vunpack.c.h.b16 %v4173
    %v6326 = vunpack.c.l.b16 %v4174
    %v6327 = vunpack.c.h.b16 %v4174
    %v6328 = vunpack.c.l.b16 %v4175
    %v6329 = vunpack.c.h.b16 %v4175
    %v6330 = vunpack.c.l.b16 %v4176
    %v6331 = vunpack.c.h.b16 %v4176
    %v6332 = vunpack.c.l.b16 %v4177
    %v6333 = vunpack.c.h.b16 %v4177
    %v6334 = vunpack.c.l.b16 %v4178
    %v6335 = vunpack.c.h.b16 %v4178
    %v6336 = vunpack.c.l.b16 %v4179
    %v6337 = vunpack.c.h.b16 %v4179
    %v6338 = vunpack.c.l.b16 %v4180
    %v6339 = vunpack.c.h.b16 %v4180
    %v6340 = vunpack.c.l.b16 %v4181
    %v6341 = vunpack.c.h.b16 %v4181
    %v6342 = vunpack.c.l.b16 %v4182
    %v6343 = vunpack.c.h.b16 %v4182
    %v6344 = vunpack.c.l.b16 %v4183
    %v6345 = vunpack.c.h.b16 %v4183
    %v6346 = vunpack.c.l.b16 %v4184
    %v6347 = vunpack.c.h.b16 %v4184
    %v6348 = vunpack.c.l.b16 %v4185
    %v6349 = vunpack.c.h.b16 %v4185
    %v6350 = vunpack.c.l.b16 %v4186
    %v6351 = vunpack.c.h.b16 %v4186
    %v6352 = vunpack.c.l.b16 %v4187
    %v6353 = vunpack.c.h.b16 %v4187
    %v6354 = vunpack.c.l.b16 %v4188
    %v6355 = vunpack.c.h.b16 %v4188
    %v6356 = vunpack.c.l.b16 %v4189
    %v6357 = vunpack.c.h.b16 %v4189
    %v6358 = vunpack.c.l.b16 %v4190
    %v6359 = vunpack.c.h.b16 %v4190
    %v6360 = vunpack.c.l.b16 %v4191
    %v6361 = vunpack.c.h.b16 %v4191
    %v6362 = vunpack.c.l.b16 %v4192
    %v6363 = vunpack.c.h.b16 %v4192
    %v6364 = vunpack.c.l.b16 %v4193
    %v6365 = vunpack.c.h.b16 %v4193
    %v6366 = vunpack.c.l.b16 %v4194
    %v6367 = vunpack.c.h.b16 %v4194
    %v6368 = vunpack.c.l.b16 %v4195
    %v6369 = vunpack.c.h.b16 %v4195
    %v6370 = vunpack.c.l.b16 %v4196
    %v6371 = vunpack.c.h.b16 %v4196
    %v6372 = vunpack.c.l.b16 %v4197
    %v6373 = vunpack.c.h.b16 %v4197
    %v6374 = vunpack.c.l.b16 %v4198
    %v6375 = vunpack.c.h.b16 %v4198
    %v6376 = vunpack.c.l.b16 %v4199
    %v6377 = vunpack.c.h.b16 %v4199
    %v6378 = vunpack.c.l.b16 %v4200
    %v6379 = vunpack.c.h.b16 %v4200
    %v6380 = vunpack.c.l.b16 %v4201
    %v6381 = vunpack.c.h.b16 %v4201
    %v6382 = vunpack.c.l.b16 %v4202
    %v6383 = vunpack.c.h.b16 %v4202
    %v6384 = vunpack.c.l.b16 %v4203
    %v6385 = vunpack.c.h.b16 %v4203
    %v6386 = vunpack.c.l.b16 %v4204
    %v6387 = vunpack.c.h.b16 %v4204
    %v6388 = vunpack.c.l.b16 %v4205
    %v6389 = vunpack.c.h.b16 %v4205
    %v6390 = vunpack.c.l.b16 %v4206
    %v6391 = vunpack.c.h.b16 %v4206
    %v6392 = vunpack.c.l.b16 %v4207
    %v6393 = vunpack.c.h.b16 %v4207
    %v6394 = vunpack.c.l.b16 %v4208
    %v6395 = vunpack.c.h.b16 %v4208
    %v6396 = vunpack.c.l.b16 %v4209
    %v6397 = vunpack.c.h.b16 %v4209
    %v6398 = vunpack.c.l.b16 %v4210
    %v6399 = vunpack.c.h.b16 %v4210
    %v6400 = vunpack.c.l.b16 %v4211
    %v6401 = vunpack.c.h.b16 %v4211
    %v6402 = vunpack.c.l.b16 %v4212
    %v6403 = vunpack.c.h.b16 %v4212
    %v6404 = vunpack.c.l.b16 %v4213
    %v6405 = vunpack.c.h.b16 %v4213
    %v6406 = vunpack.c.l.b16 %v4214
    %v6407 = vunpack.c.h.b16 %v4214
    %v6408 = vunpack.c.l.b16 %v4215
    %v6409 = vunpack.c.h.b16 %v4215
    %v6410 = vunpack.c.l.b16 %v4216
    %v6411 = vunpack.c.h.b16 %v4216
    %v6412 = vunpack.c.l.b16 %v4217
    %v6413 = vunpack.c.h.b16 %v4217
    %v6414 = vunpack.c.l.b16 %v4218
    %v6415 = vunpack.c.h.b16 %v4218
    %v6416 = vunpack.c.l.b16 %v4219
    %v6417 = vunpack.c.h.b16 %v4219
    %v6418 = vunpack.c.l.b16 %v4220
    %v6419 = vunpack.c.h.b16 %v4220
    %v6420 = vunpack.c.l.b16 %v4221
    %v6421 = vunpack.c.h.b16 %v4221
    %v6422 = vunpack.c.l.b16 %v4222
    %v6423 = vunpack.c.h.b16 %v4222
    %v6424 = vunpack.c.l.b16 %v4223
    %v6425 = vunpack.c.h.b16 %v4223
    %v6426 = vunpack.c.l.b16 %v4224
    %v6427 = vunpack.c.h.b16 %v4224
    %v6428 = vunpack.c.l.b16 %v4225
    %v6429 = vunpack.c.h.b16 %v4225
    %v6430 = vunpack.c.l.b16 %v4226
    %v6431 = vunpack.c.h.b16 %v4226
    %v6432 = vunpack.c.l.b16 %v4227
    %v6433 = vunpack.c.h.b16 %v4227
    %v6434 = vunpack.c.l.b16 %v4228
    %v6435 = vunpack.c.h.b16 %v4228
    %v6436 = vunpack.c.l.b16 %v4229
    %v6437 = vunpack.c.h.b16 %v4229
    %v6438 = vunpack.c.l.b16 %v4230
    %v6439 = vunpack.c.h.b16 %v4230
    %v6440 = vunpack.c.l.b16 %v4231
    %v6441 = vunpack.c.h.b16 %v4231
    %v6442 = vunpack.c.l.b16 %v4232
    %v6443 = vunpack.c.h.b16 %v4232
    %v6444 = vunpack.c.l.b16 %v4233
    %v6445 = vunpack.c.h.b16 %v4233
    %v6446 = vunpack.c.l.b16 %v4234
    %v6447 = vunpack.c.h.b16 %v4234
    %v6448 = vunpack.c.l.b16 %v4235
    %v6449 = vunpack.c.h.b16 %v4235
    %v6450 = vunpack.c.l.b16 %v4236
    %v6451 = vunpack.c.h.b16 %v4236
    %v6452 = vunpack.c.l.b16 %v4237
    %v6453 = vunpack.c.h.b16 %v4237
    %v6454 = vunpack.c.l.b16 %v4238
    %v6455 = vunpack.c.h.b16 %v4238
    %v6456 = vunpack.c.l.b16 %v4239
    %v6457 = vunpack.c.h.b16 %v4239
    %v6458 = vunpack.c.l.b16 %v4240
    %v6459 = vunpack.c.h.b16 %v4240
    %v6460 = vunpack.c.l.b16 %v4241
    %v6461 = vunpack.c.h.b16 %v4241
    %v6462 = vunpack.c.l.b16 %v4242
    %v6463 = vunpack.c.h.b16 %v4242
    %v6464 = vunpack.c.l.b16 %v4243
    %v6465 = vunpack.c.h.b16 %v4243
    %v6466 = vunpack.c.l.b16 %v4244
    %v6467 = vunpack.c.h.b16 %v4244
    %v6468 = vunpack.c.l.b16 %v4245
    %v6469 = vunpack.c.h.b16 %v4245
    %v6470 = vunpack.c.l.b16 %v4246
    %v6471 = vunpack.c.h.b16 %v4246
    %v6472 = vunpack.c.l.b16 %v4247
    %v6473 = vunpack.c.h.b16 %v4247
    %v6474 = vunpack.c.l.b16 %v4248
    %v6475 = vunpack.c.h.b16 %v4248
    %v6476 = vunpack.c.l.b16 %v4249
    %v6477 = vunpack.c.h.b16 %v4249
    %v6478 = vunpack.c.l.b16 %v4250
    %v6479 = vunpack.c.h.b16 %v4250
    %v6480 = vunpack.c.l.b16 %v4251
    %v6481 = vunpack.c.h.b16 %v4251
    %v6482 = vunpack.c.l.b16 %v4252
    %v6483 = vunpack.c.h.b16 %v4252
    %v6484 = vunpack.c.l.b16 %v4253
    %v6485 = vunpack.c.h.b16 %v4253
    %v6486 = vunpack.c.l.b16 %v4254
    %v6487 = vunpack.c.h.b16 %v4254
    %v6488 = vunpack.c.l.b16 %v4255
    %v6489 = vunpack.c.h.b16 %v4255
    %v6490 = vunpack.c.l.b16 %v4256
    %v6491 = vunpack.c.h.b16 %v4256
    %v6492 = vunpack.c.l.b16 %v4257
    %v6493 = vunpack.c.h.b16 %v4257
    %v6494 = vunpack.c.l.b16 %v4258
    %v6495 = vunpack.c.h.b16 %v4258
    %v6496 = vunpack.c.l.b16 %v4259
    %v6497 = vunpack.c.h.b16 %v4259
    %v6498 = vunpack.c.l.b16 %v4260
    %v6499 = vunpack.c.h.b16 %v4260
    %v6500 = vunpack.c.l.b16 %v4261
    %v6501 = vunpack.c.h.b16 %v4261
    %v6502 = vunpack.c.l.b16 %v4262
    %v6503 = vunpack.c.h.b16 %v4262
    %v6504 = vunpack.c.l.b16 %v4263
    %v6505 = vunpack.c.h.b16 %v4263
    %v6506 = vunpack.c.l.b16 %v4264
    %v6507 = vunpack.c.h.b16 %v4264
    %v6508 = vunpack.c.l.b16 %v4265
    %v6509 = vunpack.c.h.b16 %v4265
    %v6510 = vunpack.c.l.b16 %v4266
    %v6511 = vunpack.c.h.b16 %v4266
    %v6512 = vunpack.c.l.b16 %v4267
    %v6513 = vunpack.c.h.b16 %v4267
    %v6514 = vunpack.c.l.b16 %v4268
    %v6515 = vunpack.c.h.b16 %v4268
    %v6516 = vunpack.c.l.b16 %v4269
    %v6517 = vunpack.c.h.b16 %v4269
    %v6518 = vunpack.c.l.b16 %v4270
    %v6519 = vunpack.c.h.b16 %v4270
    %v6520 = vunpack.c.l.b16 %v4271
    %v6521 = vunpack.c.h.b16 %v4271
    %v6522 = vunpack.c.l.b16 %v4272
    %v6523 = vunpack.c.h.b16 %v4272
    %v6524 = vunpack.c.l.b16 %v4273
    %v6525 = vunpack.c.h.b16 %v4273
    %v6526 = vunpack.c.l.b16 %v4274
    %v6527 = vunpack.c.h.b16 %v4274
    %v6528 = vunpack.c.l.b16 %v4275
    %v6529 = vunpack.c.h.b16 %v4275
    %v6530 = vunpack.c.l.b16 %v4276
    %v6531 = vunpack.c.h.b16 %v4276
    %v6532 = vunpack.c.l.b16 %v4277
    %v6533 = vunpack.c.h.b16 %v4277
    %v6534 = vunpack.c.l.b16 %v4278
    %v6535 = vunpack.c.h.b16 %v4278
    %v6536 = vunpack.c.l.b16 %v4279
    %v6537 = vunpack.c.h.b16 %v4279
    %v6538 = vunpack.c.l.b16 %v4280
    %v6539 = vunpack.c.h.b16 %v4280
    %v6540 = vunpack.c.l.b16 %v4281
    %v6541 = vunpack.c.h.b16 %v4281
    %v6542 = vunpack.c.l.b16 %v4282
    %v6543 = vunpack.c.h.b16 %v4282
    %v6544 = vunpack.c.l.b16 %v4283
    %v6545 = vunpack.c.h.b16 %v4283
    %v6546 = vunpack.c.l.b16 %v4284
    %v6547 = vunpack.c.h.b16 %v4284
    %v6548 = vunpack.c.l.b16 %v4285
    %v6549 = vunpack.c.h.b16 %v4285
    %v6550 = vunpack.c.l.b16 %v4286
    %v6551 = vunpack.c.h.b16 %v4286
    %v6552 = vunpack.c.l.b16 %v4287
    %v6553 = vunpack.c.h.b16 %v4287
    %v6554 = vunpack.c.l.b16 %v4288
    %v6555 = vunpack.c.h.b16 %v4288
    %v6556 = vunpack.c.l.b16 %v4289
    %v6557 = vunpack.c.h.b16 %v4289
    %v6558 = vunpack.c.l.b16 %v4290
    %v6559 = vunpack.c.h.b16 %v4290
    %v6560 = vunpack.c.l.b16 %v4291
    %v6561 = vunpack.c.h.b16 %v4291
    %v6562 = vunpack.c.l.b16 %v4292
    %v6563 = vunpack.c.h.b16 %v4292
    %v6564 = vunpack.c.l.b16 %v4293
    %v6565 = vunpack.c.h.b16 %v4293
    %v6566 = vunpack.c.l.b16 %v4294
    %v6567 = vunpack.c.h.b16 %v4294
    %v6568 = vunpack.c.l.b16 %v4295
    %v6569 = vunpack.c.h.b16 %v4295
    %v6570 = vunpack.c.l.b16 %v4296
    %v6571 = vunpack.c.h.b16 %v4296
    %v6572 = vunpack.c.l.b16 %v4297
    %v6573 = vunpack.c.h.b16 %v4297
    %v6574 = vunpack.c.l.b16 %v4298
    %v6575 = vunpack.c.h.b16 %v4298
    %v6576 = vunpack.c.l.b16 %v4299
    %v6577 = vunpack.c.h.b16 %v4299
    %v6578 = vunpack.c.l.b16 %v4300
    %v6579 = vunpack.c.h.b16 %v4300
    %v6580 = vunpack.c.l.b16 %v4301
    %v6581 = vunpack.c.h.b16 %v4301
    %v6582 = vunpack.c.l.b16 %v4302
    %v6583 = vunpack.c.h.b16 %v4302
    %v6584 = vunpack.c.l.b16 %v4303
    %v6585 = vunpack.c.h.b16 %v4303
    %v6586 = vunpack.c.l.b16 %v4304
    %v6587 = vunpack.c.h.b16 %v4304
    %v6588 = vunpack.c.l.b16 %v4305
    %v6589 = vunpack.c.h.b16 %v4305
    %v6590 = vunpack.c.l.b16 %v4306
    %v6591 = vunpack.c.h.b16 %v4306
    %v6592 = vunpack.c.l.b16 %v4307
    %v6593 = vunpack.c.h.b16 %v4307
    %v6594 = vunpack.c.l.b16 %v4308
    %v6595 = vunpack.c.h.b16 %v4308
    %v6596 = vunpack.c.l.b16 %v4309
    %v6597 = vunpack.c.h.b16 %v4309
    %v6598 = vunpack.c.l.b16 %v4310
    %v6599 = vunpack.c.h.b16 %v4310
    %v6600 = vunpack.c.l.b16 %v4311
    %v6601 = vunpack.c.h.b16 %v4311
    %v6602 = vunpack.c.l.b16 %v4312
    %v6603 = vunpack.c.h.b16 %v4312
    %v6604 = vunpack.c.l.b16 %v4313
    %v6605 = vunpack.c.h.b16 %v4313
    %v6606 = vunpack.c.l.b16 %v4314
    %v6607 = vunpack.c.h.b16 %v4314
    %v6608 = vunpack.c.l.b16 %v4315
    %v6609 = vunpack.c.h.b16 %v4315
    %v6610 = vunpack.c.l.b16 %v4316
    %v6611 = vunpack.c.h.b16 %v4316
    %v6612 = vunpack.c.l.b16 %v4317
    %v6613 = vunpack.c.h.b16 %v4317
    %v6614 = vunpack.c.l.b16 %v4318
    %v6615 = vunpack.c.h.b16 %v4318
    %v6616 = vunpack.c.l.b16 %v4319
    %v6617 = vunpack.c.h.b16 %v4319
    %v6618 = vunpack.c.l.b16 %v4320
    %v6619 = vunpack.c.h.b16 %v4320
    %v6620 = vunpack.c.l.b16 %v4321
    %v6621 = vunpack.c.h.b16 %v4321
    %v6622 = vunpack.c.l.b16 %v4322
    %v6623 = vunpack.c.h.b16 %v4322
    %v6624 = vunpack.c.l.b16 %v4323
    %v6625 = vunpack.c.h.b16 %v4323
    %v6626 = vunpack.c.l.b16 %v4324
    %v6627 = vunpack.c.h.b16 %v4324
    %v6628 = vunpack.c.l.b16 %v4325
    %v6629 = vunpack.c.h.b16 %v4325
    %v6630 = vunpack.c.l.b16 %v4326
    %v6631 = vunpack.c.h.b16 %v4326
    %v6632 = vunpack.c.l.b16 %v4327
    %v6633 = vunpack.c.h.b16 %v4327
    %v6634 = vunpack.c.l.b16 %v4328
    %v6635 = vunpack.c.h.b16 %v4328
    %v6636 = vunpack.c.l.b16 %v4329
    %v6637 = vunpack.c.h.b16 %v4329
    %v6638 = vunpack.c.l.b16 %v4330
    %v6639 = vunpack.c.h.b16 %v4330
    %v6640 = vunpack.c.l.b16 %v4331
    %v6641 = vunpack.c.h.b16 %v4331
    %v6642 = vunpack.c.l.b16 %v4332
    %v6643 = vunpack.c.h.b16 %v4332
    %v6644 = vunpack.c.l.b16 %v4333
    %v6645 = vunpack.c.h.b16 %v4333
    %v6646 = vunpack.c.l.b16 %v4334
    %v6647 = vunpack.c.h.b16 %v4334
    %v6648 = vunpack.c.l.b16 %v4335
    %v6649 = vunpack.c.h.b16 %v4335
    %v6650 = vunpack.c.l.b16 %v4336
    %v6651 = vunpack.c.h.b16 %v4336
    %v6652 = vunpack.c.l.b16 %v4337
    %v6653 = vunpack.c.h.b16 %v4337
    %v6654 = vunpack.c.l.b16 %v4338
    %v6655 = vunpack.c.h.b16 %v4338
    %v6656 = vunpack.c.l.b16 %v4339
    %v6657 = vunpack.c.h.b16 %v4339
    %v6658 = vunpack.c.l.b16 %v4340
    %v6659 = vunpack.c.h.b16 %v4340
    %v6660 = vunpack.c.l.b16 %v4341
    %v6661 = vunpack.c.h.b16 %v4341
    %v6662 = vunpack.c.l.b16 %v4342
    %v6663 = vunpack.c.h.b16 %v4342
    %v6664 = vunpack.c.l.b16 %v4343
    %v6665 = vunpack.c.h.b16 %v4343
    %v6666 = vunpack.c.l.b16 %v4344
    %v6667 = vunpack.c.h.b16 %v4344
    %v6668 = vunpack.c.l.b16 %v4345
    %v6669 = vunpack.c.h.b16 %v4345
    %v6670 = vunpack.c.l.b16 %v4346
    %v6671 = vunpack.c.h.b16 %v4346
    %v6672 = vunpack.c.l.b16 %v4347
    %v6673 = vunpack.c.h.b16 %v4347
    %v6674 = vunpack.c.l.b16 %v4348
    %v6675 = vunpack.c.h.b16 %v4348
    %v6676 = vunpack.c.l.b16 %v4349
    %v6677 = vunpack.c.h.b16 %v4349
    %v6678 = vunpack.c.l.b16 %v4350
    %v6679 = vunpack.c.h.b16 %v4350
    %v6680 = vunpack.c.l.b16 %v4351
    %v6681 = vunpack.c.h.b16 %v4351
    %v6682 = vunpack.c.l.b16 %v4352
    %v6683 = vunpack.c.h.b16 %v4352
    %v6684 = vunpack.c.l.b16 %v4353
    %v6685 = vunpack.c.h.b16 %v4353
    %v6686 = vunpack.c.l.b16 %v4354
    %v6687 = vunpack.c.h.b16 %v4354
    %v6688 = vunpack.c.l.b16 %v4355
    %v6689 = vunpack.c.h.b16 %v4355
    %v6690 = vunpack.c.l.b16 %v4356
    %v6691 = vunpack.c.h.b16 %v4356
    %v6692 = vunpack.c.l.b16 %v4357
    %v6693 = vunpack.c.h.b16 %v4357
    %v6694 = vunpack.c.l.b16 %v4358
    %v6695 = vunpack.c.h.b16 %v4358
    %v6696 = vunpack.c.l.b16 %v4359
    %v6697 = vunpack.c.h.b16 %v4359
    %v6698 = vunpack.c.l.b16 %v4360
    %v6699 = vunpack.c.h.b16 %v4360
    %v6700 = vunpack.c.l.b16 %v4361
    %v6701 = vunpack.c.h.b16 %v4361
    %v6702 = vunpack.c.l.b16 %v4362
    %v6703 = vunpack.c.h.b16 %v4362
    %v6704 = vunpack.c.l.b16 %v4363
    %v6705 = vunpack.c.h.b16 %v4363
    %v6706 = vunpack.c.l.b16 %v4364
    %v6707 = vunpack.c.h.b16 %v4364
    %v6708 = vunpack.c.l.b16 %v4365
    %v6709 = vunpack.c.h.b16 %v4365
    %v6710 = vunpack.c.l.b16 %v4366
    %v6711 = vunpack.c.h.b16 %v4366
    %v6712 = vunpack.c.l.b16 %v4367
    %v6713 = vunpack.c.h.b16 %v4367
    %v6714 = vunpack.c.l.b16 %v4368
    %v6715 = vunpack.c.h.b16 %v4368
    %v6716 = vunpack.c.l.b16 %v4369
    %v6717 = vunpack.c.h.b16 %v4369
    %v6718 = vunpack.c.l.b16 %v4370
    %v6719 = vunpack.c.h.b16 %v4370
    %v6720 = vunpack.c.l.b16 %v4371
    %v6721 = vunpack.c.h.b16 %v4371
    %v6722 = vunpack.c.l.b16 %v4372
    %v6723 = vunpack.c.h.b16 %v4372
    %v6724 = vunpack.c.l.b16 %v4373
    %v6725 = vunpack.c.h.b16 %v4373
    %v6726 = vunpack.c.l.b16 %v4374
    %v6727 = vunpack.c.h.b16 %v4374
    %v6728 = vunpack.c.l.b16 %v4375
    %v6729 = vunpack.c.h.b16 %v4375
    %v6730 = vunpack.c.l.b16 %v4376
    %v6731 = vunpack.c.h.b16 %v4376
    %v6732 = vunpack.c.l.b16 %v4377
    %v6733 = vunpack.c.h.b16 %v4377
    %v6734 = vunpack.c.l.b16 %v4378
    %v6735 = vunpack.c.h.b16 %v4378
    %v6736 = vunpack.c.l.b16 %v4379
    %v6737 = vunpack.c.h.b16 %v4379
    %v6738 = vunpack.c.l.b16 %v4380
    %v6739 = vunpack.c.h.b16 %v4380
    %v6740 = vunpack.c.l.b16 %v4381
    %v6741 = vunpack.c.h.b16 %v4381
    %v6742 = vunpack.c.l.b16 %v4382
    %v6743 = vunpack.c.h.b16 %v4382
    %v6744 = vunpack.c.l.b16 %v4383
    %v6745 = vunpack.c.h.b16 %v4383
    %v6746 = vunpack.c.l.b16 %v4384
    %v6747 = vunpack.c.h.b16 %v4384
    %v6748 = vunpack.c.l.b16 %v4385
    %v6749 = vunpack.c.h.b16 %v4385
    %v6750 = vunpack.c.l.b16 %v4386
    %v6751 = vunpack.c.h.b16 %v4386
    %v6752 = vunpack.c.l.b16 %v4387
    %v6753 = vunpack.c.h.b16 %v4387
    %v6754 = vunpack.c.l.b16 %v4388
    %v6755 = vunpack.c.h.b16 %v4388
    %v6756 = vunpack.c.l.b16 %v4389
    %v6757 = vunpack.c.h.b16 %v4389
    %v6758 = vunpack.c.l.b16 %v4390
    %v6759 = vunpack.c.h.b16 %v4390
    %v6760 = vunpack.c.l.b16 %v4391
    %v6761 = vunpack.c.h.b16 %v4391
    %v6762 = vunpack.c.l.b16 %v4392
    %v6763 = vunpack.c.h.b16 %v4392
    %v6764 = vunpack.c.l.b16 %v4393
    %v6765 = vunpack.c.h.b16 %v4393
    %v6766 = vunpack.c.l.b16 %v4394
    %v6767 = vunpack.c.h.b16 %v4394
    %v6768 = vunpack.c.l.b16 %v4395
    %v6769 = vunpack.c.h.b16 %v4395
    %v6770 = vunpack.c.l.b16 %v4396
    %v6771 = vunpack.c.h.b16 %v4396
    %v6772 = vunpack.c.l.b16 %v4397
    %v6773 = vunpack.c.h.b16 %v4397
    %v6774 = vunpack.c.l.b16 %v4398
    %v6775 = vunpack.c.h.b16 %v4398
    %v6776 = vunpack.c.l.b16 %v4399
    %v6777 = vunpack.c.h.b16 %v4399
    %v6778 = vunpack.c.l.b16 %v4400
    %v6779 = vunpack.c.h.b16 %v4400
    %v6780 = vunpack.c.l.b16 %v4401
    %v6781 = vunpack.c.h.b16 %v4401
    %v6782 = vunpack.c.l.b16 %v4402
    %v6783 = vunpack.c.h.b16 %v4402
    %v6784 = vunpack.c.l.b16 %v4403
    %v6785 = vunpack.c.h.b16 %v4403
    %v6786 = vunpack.c.l.b16 %v4404
    %v6787 = vunpack.c.h.b16 %v4404
    %v6788 = vunpack.c.l.b16 %v4405
    %v6789 = vunpack.c.h.b16 %v4405
    %v6790 = vunpack.c.l.b16 %v4406
    %v6791 = vunpack.c.h.b16 %v4406
    %v6792 = vunpack.c.l.b16 %v4407
    %v6793 = vunpack.c.h.b16 %v4407
    %v6794 = vunpack.c.l.b16 %v4408
    %v6795 = vunpack.c.h.b16 %v4408
    %v6796 = vunpack.c.l.b16 %v4409
    %v6797 = vunpack.c.h.b16 %v4409
    %v6798 = vunpack.c.l.b16 %v4410
    %v6799 = vunpack.c.h.b16 %v4410
    %v6800 = vunpack.c.l.b16 %v4411
    %v6801 = vunpack.c.h.b16 %v4411
    %v6802 = vunpack.c.l.b16 %v4412
    %v6803 = vunpack.c.h.b16 %v4412
    %v6804 = vunpack.c.l.b16 %v4413
    %v6805 = vunpack.c.h.b16 %v4413
    %v6806 = vunpack.c.l.b16 %v4414
    %v6807 = vunpack.c.h.b16 %v4414
    %v6808 = vunpack.c.l.b16 %v4415
    %v6809 = vunpack.c.h.b16 %v4415
    %v6810 = vunpack.c.l.b16 %v4416
    %v6811 = vunpack.c.h.b16 %v4416
    %v6812 = vunpack.c.l.b16 %v4417
    %v6813 = vunpack.c.h.b16 %v4417
    %v6814 = vunpack.c.l.b16 %v4418
    %v6815 = vunpack.c.h.b16 %v4418
    %v6816 = vunpack.c.l.b16 %v4419
    %v6817 = vunpack.c.h.b16 %v4419
    %v6818 = vunpack.c.l.b16 %v4420
    %v6819 = vunpack.c.h.b16 %v4420
    %v6820 = vunpack.c.l.b16 %v4421
    %v6821 = vunpack.c.h.b16 %v4421
    %v6822 = vunpack.c.l.b16 %v4422
    %v6823 = vunpack.c.h.b16 %v4422
    %v6824 = vunpack.c.l.b16 %v4423
    %v6825 = vunpack.c.h.b16 %v4423
    %v6826 = vunpack.c.l.b16 %v4424
    %v6827 = vunpack.c.h.b16 %v4424
    %v6828 = vunpack.c.l.b16 %v4425
    %v6829 = vunpack.c.h.b16 %v4425
    %v6830 = vunpack.c.l.b16 %v4426
    %v6831 = vunpack.c.h.b16 %v4426
    %v6832 = vunpack.c.l.b16 %v4427
    %v6833 = vunpack.c.h.b16 %v4427
    %v6834 = vunpack.c.l.b16 %v4428
    %v6835 = vunpack.c.h.b16 %v4428
    %v6836 = vunpack.c.l.b16 %v4429
    %v6837 = vunpack.c.h.b16 %v4429
    %v6838 = vunpack.c.l.b16 %v4430
    %v6839 = vunpack.c.h.b16 %v4430
    %v6840 = vunpack.c.l.b16 %v4431
    %v6841 = vunpack.c.h.b16 %v4431
    %v6842 = vunpack.c.l.b16 %v4432
    %v6843 = vunpack.c.h.b16 %v4432
    %v6844 = vunpack.c.l.b16 %v4433
    %v6845 = vunpack.c.h.b16 %v4433
    %v6846 = vunpack.c.l.b16 %v4434
    %v6847 = vunpack.c.h.b16 %v4434
    %v6848 = vunpack.c.l.b16 %v4435
    %v6849 = vunpack.c.h.b16 %v4435
    %v6850 = vunpack.c.l.b16 %v4436
    %v6851 = vunpack.c.h.b16 %v4436
    %v6852 = vunpack.c.l.b16 %v4437
    %v6853 = vunpack.c.h.b16 %v4437
    %v6854 = vunpack.c.l.b16 %v4438
    %v6855 = vunpack.c.h.b16 %v4438
    %v6856 = vunpack.c.l.b16 %v4439
    %v6857 = vunpack.c.h.b16 %v4439
    %v6858 = vunpack.c.l.b16 %v4440
    %v6859 = vunpack.c.h.b16 %v4440
    %v6860 = vunpack.c.l.b16 %v4441
    %v6861 = vunpack.c.h.b16 %v4441
    %v6862 = vunpack.c.l.b16 %v4442
    %v6863 = vunpack.c.h.b16 %v4442
    %v6864 = vunpack.c.l.b16 %v4443
    %v6865 = vunpack.c.h.b16 %v4443
    %v6866 = vunpack.c.l.b16 %v4444
    %v6867 = vunpack.c.h.b16 %v4444
    %v6868 = vunpack.c.l.b16 %v4445
    %v6869 = vunpack.c.h.b16 %v4445
    %v6870 = vunpack.c.l.b16 %v4446
    %v6871 = vunpack.c.h.b16 %v4446
    %v6872 = vunpack.c.l.b16 %v4447
    %v6873 = vunpack.c.h.b16 %v4447
    %v6874 = vunpack.c.l.b16 %v4448
    %v6875 = vunpack.c.h.b16 %v4448
    %v6876 = vunpack.c.l.b16 %v4449
    %v6877 = vunpack.c.h.b16 %v4449
    %v6878 = vunpack.c.l.b16 %v4450
    %v6879 = vunpack.c.h.b16 %v4450
    %v6880 = vunpack.c.l.b16 %v4451
    %v6881 = vunpack.c.h.b16 %v4451
    %v6882 = vunpack.c.l.b16 %v4452
    %v6883 = vunpack.c.h.b16 %v4452
    %v6884 = vunpack.c.l.b16 %v4453
    %v6885 = vunpack.c.h.b16 %v4453
    %v6886 = vunpack.c.l.b16 %v4454
    %v6887 = vunpack.c.h.b16 %v4454
    %v6888 = vunpack.c.l.b16 %v4455
    %v6889 = vunpack.c.h.b16 %v4455
    %v6890 = vunpack.c.l.b16 %v4456
    %v6891 = vunpack.c.h.b16 %v4456
    %v6892 = vunpack.c.l.b16 %v4457
    %v6893 = vunpack.c.h.b16 %v4457
    %v6894 = vunpack.c.l.b16 %v4458
    %v6895 = vunpack.c.h.b16 %v4458
    %v6896 = vunpack.c.l.b16 %v4459
    %v6897 = vunpack.c.h.b16 %v4459
    %v6898 = vunpack.c.l.b16 %v4460
    %v6899 = vunpack.c.h.b16 %v4460
    %v6900 = vunpack.c.l.b16 %v4461
    %v6901 = vunpack.c.h.b16 %v4461
    %v6902 = vunpack.c.l.b16 %v4462
    %v6903 = vunpack.c.h.b16 %v4462
    %v6904 = vunpack.c.l.b16 %v4463
    %v6905 = vunpack.c.h.b16 %v4463
    %v6906 = vunpack.c.l.b16 %v4464
    %v6907 = vunpack.c.h.b16 %v4464
    %v6908 = vunpack.c.l.b16 %v4465
    %v6909 = vunpack.c.h.b16 %v4465
    %v6910 = vunpack.c.l.b16 %v4466
    %v6911 = vunpack.c.h.b16 %v4466
    %v6912 = vunpack.c.l.b16 %v4467
    %v6913 = vunpack.c.h.b16 %v4467
    %v6914 = vunpack.c.l.b16 %v4468
    %v6915 = vunpack.c.h.b16 %v4468
    %v6916 = vunpack.c.l.b16 %v4469
    %v6917 = vunpack.c.h.b16 %v4469
    %v6918 = vunpack.c.l.b16 %v4470
    %v6919 = vunpack.c.h.b16 %v4470
    %v6920 = vunpack.c.l.b16 %v4471
    %v6921 = vunpack.c.h.b16 %v4471
    %v6922 = vunpack.c.l.b16 %v4472
    %v6923 = vunpack.c.h.b16 %v4472
    %v6924 = vunpack.c.l.b16 %v4473
    %v6925 = vunpack.c.h.b16 %v4473
    %v6926 = vunpack.c.l.b16 %v4474
    %v6927 = vunpack.c.h.b16 %v4474
    %v6928 = vunpack.c.l.b16 %v4475
    %v6929 = vunpack.c.h.b16 %v4475
    %v6930 = vunpack.c.l.b16 %v4476
    %v6931 = vunpack.c.h.b16 %v4476
    %v6932 = vunpack.c.l.b16 %v4477
    %v6933 = vunpack.c.h.b16 %v4477
    %v6934 = vunpack.c.l.b16 %v4478
    %v6935 = vunpack.c.h.b16 %v4478
    %v6936 = vunpack.c.l.b16 %v4479
    %v6937 = vunpack.c.h.b16 %v4479
    %v6938 = vunpack.c.l.b16 %v4480
    %v6939 = vunpack.c.h.b16 %v4480
    %v6940 = vunpack.c.l.b16 %v4481
    %v6941 = vunpack.c.h.b16 %v4481
    %v6942 = vunpack.c.l.b16 %v4482
    %v6943 = vunpack.c.h.b16 %v4482
    %v6944 = vunpack.c.l.b16 %v4483
    %v6945 = vunpack.c.h.b16 %v4483
    %v6946 = vunpack.c.l.b16 %v4484
    %v6947 = vunpack.c.h.b16 %v4484
    %v6948 = vunpack.c.l.b16 %v4485
    %v6949 = vunpack.c.h.b16 %v4485
    %v6950 = vunpack.c.l.b16 %v4486
    %v6951 = vunpack.c.h.b16 %v4486
    %v6952 = vunpack.c.l.b16 %v4487
    %v6953 = vunpack.c.h.b16 %v4487
    %v6954 = vunpack.c.l.b16 %v4488
    %v6955 = vunpack.c.h.b16 %v4488
    %v6956 = vunpack.c.l.b16 %v4489
    %v6957 = vunpack.c.h.b16 %v4489
    %v6958 = vunpack.c.l.b16 %v4490
    %v6959 = vunpack.c.h.b16 %v4490
    %v6960 = vunpack.c.l.b16 %v4491
    %v6961 = vunpack.c.h.b16 %v4491
    %v6962 = vunpack.c.l.b16 %v4492
    %v6963 = vunpack.c.h.b16 %v4492
    %v6964 = vunpack.c.l.b16 %v4493
    %v6965 = vunpack.c.h.b16 %v4493
    %v6966 = vunpack.c.l.b16 %v4494
    %v6967 = vunpack.c.h.b16 %v4494
    %v6968 = vunpack.c.l.b16 %v4495
    %v6969 = vunpack.c.h.b16 %v4495
    %v6970 = vunpack.c.l.b16 %v4496
    %v6971 = vunpack.c.h.b16 %v4496
    %v6972 = vunpack.c.l.b16 %v4497
    %v6973 = vunpack.c.h.b16 %v4497
    %v6974 = vunpack.c.l.b16 %v4498
    %v6975 = vunpack.c.h.b16 %v4498
    %v6976 = vunpack.c.l.b16 %v4499
    %v6977 = vunpack.c.h.b16 %v4499
    %v6978 = vunpack.c.l.b16 %v4500
    %v6979 = vunpack.c.h.b16 %v4500
    %v6980 = vunpack.c.l.b16 %v4501
    %v6981 = vunpack.c.h.b16 %v4501
    %v6982 = vunpack.c.l.b16 %v4502
    %v6983 = vunpack.c.h.b16 %v4502
    %v6984 = vunpack.c.l.b16 %v4503
    %v6985 = vunpack.c.h.b16 %v4503
    %v6986 = vunpack.c.l.b16 %v4504
    %v6987 = vunpack.c.h.b16 %v4504
    %v6988 = vunpack.c.l.b16 %v4505
    %v6989 = vunpack.c.h.b16 %v4505
    %v6990 = vunpack.c.l.b16 %v4506
    %v6991 = vunpack.c.h.b16 %v4506
    %v6992 = vunpack.c.l.b16 %v4507
    %v6993 = vunpack.c.h.b16 %v4507
    %v6994 = vunpack.c.l.b16 %v4508
    %v6995 = vunpack.c.h.b16 %v4508
    %v6996 = vunpack.c.l.b16 %v4509
    %v6997 = vunpack.c.h.b16 %v4509
    %v6998 = vunpack.c.l.b16 %v4510
    %v6999 = vunpack.c.h.b16 %v4510
    %v7000 = vunpack.c.l.b16 %v4511
    %v7001 = vunpack.c.h.b16 %v4511
    %v7002 = vunpack.c.l.b16 %v4512
    %v7003 = vunpack.c.h.b16 %v4512
    %v7004 = vunpack.c.l.b16 %v4513
    %v7005 = vunpack.c.h.b16 %v4513
    %v7006 = vunpack.c.l.b16 %v4514
    %v7007 = vunpack.c.h.b16 %v4514
    %v7008 = vunpack.c.l.b16 %v4515
    %v7009 = vunpack.c.h.b16 %v4515
    %v7010 = vunpack.c.l.b16 %v4516
    %v7011 = vunpack.c.h.b16 %v4516
    %v7012 = vunpack.c.l.b16 %v4517
    %v7013 = vunpack.c.h.b16 %v4517
    %v7014 = vunpack.c.l.b16 %v4518
    %v7015 = vunpack.c.h.b16 %v4518
    %v7016 = vunpack.c.l.b16 %v4519
    %v7017 = vunpack.c.h.b16 %v4519
    %v7018 = vunpack.c.l.b16 %v4520
    %v7019 = vunpack.c.h.b16 %v4520
    %v7020 = vunpack.c.l.b16 %v4521
    %v7021 = vunpack.c.h.b16 %v4521
    %v7022 = vunpack.c.l.b16 %v4522
    %v7023 = vunpack.c.h.b16 %v4522
    %v7024 = vunpack.c.l.b16 %v4523
    %v7025 = vunpack.c.h.b16 %v4523
    %v7026 = vunpack.c.l.b16 %v4524
    %v7027 = vunpack.c.h.b16 %v4524
    %v7028 = vunpack.c.l.b16 %v4525
    %v7029 = vunpack.c.h.b16 %v4525
    %v7030 = vunpack.c.l.b16 %v4526
    %v7031 = vunpack.c.h.b16 %v4526
    %v7032 = vunpack.c.l.b16 %v4527
    %v7033 = vunpack.c.h.b16 %v4527
    %v7034 = vunpack.c.l.b16 %v4528
    %v7035 = vunpack.c.h.b16 %v4528
    %v7036 = vunpack.c.l.b16 %v4529
    %v7037 = vunpack.c.h.b16 %v4529
    %v7038 = vunpack.c.l.b16 %v4530
    %v7039 = vunpack.c.h.b16 %v4530
    %v7040 = vunpack.c.l.b16 %v4531
    %v7041 = vunpack.c.h.b16 %v4531
    %v7042 = vunpack.c.l.b16 %v4532
    %v7043 = vunpack.c.h.b16 %v4532
    %v7044 = vunpack.c.l.b16 %v4533
    %v7045 = vunpack.c.h.b16 %v4533
    %v7046 = vunpack.c.l.b16 %v4534
    %v7047 = vunpack.c.h.b16 %v4534
    %v7048 = vunpack.c.l.b16 %v4535
    %v7049 = vunpack.c.h.b16 %v4535
    %v7050 = vunpack.c.l.b16 %v4536
    %v7051 = vunpack.c.h.b16 %v4536
    %v7052 = vunpack.c.l.b16 %v4537
    %v7053 = vunpack.c.h.b16 %v4537
    %v7054 = vunpack.c.l.b16 %v4538
    %v7055 = vunpack.c.h.b16 %v4538
    %v7056 = vunpack.c.l.b16 %v4539
    %v7057 = vunpack.c.h.b16 %v4539
    %v7058 = vunpack.c.l.b16 %v4540
    %v7059 = vunpack.c.h.b16 %v4540
    %v7060 = vunpack.c.l.b16 %v4541
    %v7061 = vunpack.c.h.b16 %v4541
    %v7062 = vunpack.c.l.b16 %v4542
    %v7063 = vunpack.c.h.b16 %v4542
    %v7064 = vunpack.c.l.b16 %v4543
    %v7065 = vunpack.c.h.b16 %v4543
    %v7066 = vunpack.c.l.b16 %v4544
    %v7067 = vunpack.c.h.b16 %v4544
    %v7068 = vunpack.c.l.b16 %v4545
    %v7069 = vunpack.c.h.b16 %v4545
    %v7070 = vunpack.c.l.b16 %v4546
    %v7071 = vunpack.c.h.b16 %v4546
    %v7072 = vunpack.c.l.b16 %v4547
    %v7073 = vunpack.c.h.b16 %v4547
    %v7074 = vunpack.c.l.b16 %v4548
    %v7075 = vunpack.c.h.b16 %v4548
    %v7076 = vunpack.c.l.b16 %v4549
    %v7077 = vunpack.c.h.b16 %v4549
    %v7078 = vunpack.c.l.b16 %v4550
    %v7079 = vunpack.c.h.b16 %v4550
    %v7080 = vunpack.c.l.b16 %v4551
    %v7081 = vunpack.c.h.b16 %v4551
    %v7082 = vunpack.c.l.b16 %v4552
    %v7083 = vunpack.c.h.b16 %v4552
    %v7084 = vunpack.c.l.b16 %v4553
    %v7085 = vunpack.c.h.b16 %v4553
    %v7086 = vunpack.c.l.b16 %v4554
    %v7087 = vunpack.c.h.b16 %v4554
    %v7088 = vunpack.c.l.b16 %v4555
    %v7089 = vunpack.c.h.b16 %v4555
    %v7090 = vunpack.c.l.b16 %v4556
    %v7091 = vunpack.c.h.b16 %v4556
    %v7092 = vunpack.c.l.b16 %v4557
    %v7093 = vunpack.c.h.b16 %v4557
    %v7094 = vunpack.c.l.b16 %v4558
    %v7095 = vunpack.c.h.b16 %v4558
    %v7096 = vunpack.c.l.b16 %v4559
    %v7097 = vunpack.c.h.b16 %v4559
    %v7098 = vunpack.c.l.b16 %v4560
    %v7099 = vunpack.c.h.b16 %v4560
    %v7100 = vunpack.c.l.b16 %v4561
    %v7101 = vunpack.c.h.b16 %v4561
    %v7102 = vunpack.c.l.b16 %v4562
    %v7103 = vunpack.c.h.b16 %v4562
    %v7104 = vunpack.c.l.b16 %v4563
    %v7105 = vunpack.c.h.b16 %v4563
    %v7106 = vunpack.c.l.b16 %v4564
    %v7107 = vunpack.c.h.b16 %v4564
    %v7108 = vunpack.c.l.b16 %v4565
    %v7109 = vunpack.c.h.b16 %v4565
    %v7110 = vunpack.c.l.b16 %v4566
    %v7111 = vunpack.c.h.b16 %v4566
    %v7112 = vunpack.c.l.b16 %v4567
    %v7113 = vunpack.c.h.b16 %v4567
    %v7114 = vunpack.c.l.b16 %v4568
    %v7115 = vunpack.c.h.b16 %v4568
    %v7116 = vunpack.c.l.b16 %v4569
    %v7117 = vunpack.c.h.b16 %v4569
    %v7118 = vunpack.c.l.b16 %v4570
    %v7119 = vunpack.c.h.b16 %v4570
    %v7120 = vunpack.c.l.b16 %v4571
    %v7121 = vunpack.c.h.b16 %v4571
    %v7122 = vunpack.c.l.b16 %v4572
    %v7123 = vunpack.c.h.b16 %v4572
    %v7124 = vunpack.c.l.b16 %v4573
    %v7125 = vunpack.c.h.b16 %v4573
    %v7126 = vunpack.c.l.b16 %v4574
    %v7127 = vunpack.c.h.b16 %v4574
    %v7128 = vunpack.c.l.b16 %v4575
    %v7129 = vunpack.c.h.b16 %v4575
    %v7130 = vunpack.c.l.b16 %v4576
    %v7131 = vunpack.c.h.b16 %v4576
    %v7132 = vunpack.c.l.b16 %v4577
    %v7133 = vunpack.c.h.b16 %v4577
    %v7134 = vunpack.c.l.b16 %v4578
    %v7135 = vunpack.c.h.b16 %v4578
    %v7136 = vunpack.c.l.b16 %v4579
    %v7137 = vunpack.c.h.b16 %v4579
    %v7138 = vunpack.c.l.b16 %v4580
    %v7139 = vunpack.c.h.b16 %v4580
    %v7140 = vunpack.c.l.b16 %v4581
    %v7141 = vunpack.c.h.b16 %v4581
    %v7142 = vunpack.c.l.b16 %v4582
    %v7143 = vunpack.c.h.b16 %v4582
    %v7144 = vunpack.c.l.b16 %v4583
    %v7145 = vunpack.c.h.b16 %v4583
    %v7146 = vunpack.c.l.b16 %v4584
    %v7147 = vunpack.c.h.b16 %v4584
    %v7148 = vunpack.c.l.b16 %v4585
    %v7149 = vunpack.c.h.b16 %v4585
    %v7150 = vunpack.c.l.b16 %v4586
    %v7151 = vunpack.c.h.b16 %v4586
    %v7152 = vunpack.c.l.b16 %v4587
    %v7153 = vunpack.c.h.b16 %v4587
    %v7154 = vunpack.c.l.b16 %v4588
    %v7155 = vunpack.c.h.b16 %v4588
    %v7156 = vunpack.c.l.b16 %v4589
    %v7157 = vunpack.c.h.b16 %v4589
    %v7158 = vunpack.c.l.b16 %v4590
    %v7159 = vunpack.c.h.b16 %v4590
    %v7160 = vunpack.c.l.b16 %v4591
    %v7161 = vunpack.c.h.b16 %v4591
    %v7162 = vunpack.c.l.b16 %v4592
    %v7163 = vunpack.c.h.b16 %v4592
    %v7164 = vunpack.c.l.b16 %v4593
    %v7165 = vunpack.c.h.b16 %v4593
    %v7166 = vunpack.c.l.b16 %v4594
    %v7167 = vunpack.c.h.b16 %v4594
    %v7168 = vunpack.c.l.b16 %v4595
    %v7169 = vunpack.c.h.b16 %v4595
    %v7170 = vunpack.c.l.b16 %v4596
    %v7171 = vunpack.c.h.b16 %v4596
    %v7172 = vunpack.c.l.b16 %v4597
    %v7173 = vunpack.c.h.b16 %v4597
    %v7174 = vunpack.c.l.b16 %v4598
    %v7175 = vunpack.c.h.b16 %v4598
    %v7176 = vunpack.c.l.b16 %v4599
    %v7177 = vunpack.c.h.b16 %v4599
    %v7178 = vunpack.c.l.b16 %v4600
    %v7179 = vunpack.c.h.b16 %v4600
    %v7180 = vunpack.c.l.b16 %v4601
    %v7181 = vunpack.c.h.b16 %v4601
    %v7182 = vunpack.c.l.b16 %v4602
    %v7183 = vunpack.c.h.b16 %v4602
    %v7184 = vunpack.c.l.b16 %v4603
    %v7185 = vunpack.c.h.b16 %v4603
    %v7186 = vunpack.c.l.b16 %v4604
    %v7187 = vunpack.c.h.b16 %v4604
    %v7188 = vunpack.c.l.b16 %v4605
    %v7189 = vunpack.c.h.b16 %v4605
    %v7190 = vunpack.c.l.b16 %v4606
    %v7191 = vunpack.c.h.b16 %v4606
    %v7192 = vunpack.c.l.b16 %v4607
    %v7193 = vunpack.c.h.b16 %v4607
    %v7194 = vunpack.c.l.b16 %v4608
    %v7195 = vunpack.c.h.b16 %v4608
    %v7196 = vunpack.c.l.b16 %v4609
    %v7197 = vunpack.c.h.b16 %v4609
    %v7198 = vunpack.c.l.b16 %v4610
    %v7199 = vunpack.c.h.b16 %v4610
    %v7200 = vunpack.c.l.b16 %v4611
    %v7201 = vunpack.c.h.b16 %v4611
    %v7202 = vunpack.c.l.b16 %v4612
    %v7203 = vunpack.c.h.b16 %v4612
    %v7204 = vunpack.c.l.b16 %v4613
    %v7205 = vunpack.c.h.b16 %v4613
    %v7206 = vunpack.c.l.b16 %v4614
    %v7207 = vunpack.c.h.b16 %v4614
    %v7208 = vunpack.c.l.b16 %v4615
    %v7209 = vunpack.c.h.b16 %v4615
    %v7210 = vunpack.c.l.b16 %v4616
    %v7211 = vunpack.c.h.b16 %v4616
    %v7212 = vunpack.c.l.b16 %v4617
    %v7213 = vunpack.c.h.b16 %v4617
    %v7214 = vunpack.c.l.b16 %v4618
    %v7215 = vunpack.c.h.b16 %v4618
    %v7216 = vunpack.c.l.b16 %v4619
    %v7217 = vunpack.c.h.b16 %v4619
    %v7218 = vunpack.c.l.b16 %v4620
    %v7219 = vunpack.c.h.b16 %v4620
    %v7220 = vunpack.c.l.b16 %v4621
    %v7221 = vunpack.c.h.b16 %v4621
    %v7222 = vunpack.c.l.b16 %v4622
    %v7223 = vunpack.c.h.b16 %v4622
    %v7224 = vunpack.c.l.b16 %v4623
    %v7225 = vunpack.c.h.b16 %v4623
    %v7226 = vunpack.c.l.b16 %v4624
    %v7227 = vunpack.c.h.b16 %v4624
    %v7228 = vunpack.c.l.b16 %v4625
    %v7229 = vunpack.c.h.b16 %v4625
    %v7230 = vunpack.c.l.b16 %v4626
    %v7231 = vunpack.c.h.b16 %v4626
    %v7232 = vunpack.c.l.b16 %v4627
    %v7233 = vunpack.c.h.b16 %v4627
    %v7234 = vunpack.c.l.b16 %v4628
    %v7235 = vunpack.c.h.b16 %v4628
    %v7236 = vunpack.c.l.b16 %v4629
    %v7237 = vunpack.c.h.b16 %v4629
    %v7238 = vunpack.c.l.b16 %v4630
    %v7239 = vunpack.c.h.b16 %v4630
    %v7240 = vunpack.c.l.b16 %v4631
    %v7241 = vunpack.c.h.b16 %v4631
    %v7242 = vunpack.c.l.b16 %v4632
    %v7243 = vunpack.c.h.b16 %v4632
    %v7244 = vunpack.c.l.b16 %v4633
    %v7245 = vunpack.c.h.b16 %v4633
    %v7246 = vunpack.c.l.b16 %v4634
    %v7247 = vunpack.c.h.b16 %v4634
    %v7248 = vunpack.c.l.b16 %v4635
    %v7249 = vunpack.c.h.b16 %v4635
    %v7250 = vunpack.c.l.b16 %v4636
    %v7251 = vunpack.c.h.b16 %v4636
    %v7252 = vunpack.c.l.b16 %v4637
    %v7253 = vunpack.c.h.b16 %v4637
    %v7254 = vunpack.c.l.b16 %v4638
    %v7255 = vunpack.c.h.b16 %v4638
    %v7256 = vunpack.c.l.b16 %v4639
    %v7257 = vunpack.c.h.b16 %v4639
    %v7258 = vunpack.c.l.b16 %v4640
    %v7259 = vunpack.c.h.b16 %v4640
    %v7260 = vunpack.c.l.b16 %v4641
    %v7261 = vunpack.c.h.b16 %v4641
    %v7262 = vunpack.c.l.b16 %v4642
    %v7263 = vunpack.c.h.b16 %v4642
    %v7264 = vunpack.c.l.b16 %v4643
    %v7265 = vunpack.c.h.b16 %v4643
    %v7266 = vunpack.c.l.b16 %v4644
    %v7267 = vunpack.c.h.b16 %v4644
    %v7268 = vunpack.c.l.b16 %v4645
    %v7269 = vunpack.c.h.b16 %v4645
    %v7270 = vunpack.c.l.b16 %v4646
    %v7271 = vunpack.c.h.b16 %v4646
    %v7272 = vunpack.c.l.b16 %v4647
    %v7273 = vunpack.c.h.b16 %v4647
    %v7274 = vunpack.c.l.b16 %v4648
    %v7275 = vunpack.c.h.b16 %v4648
    %v7276 = vunpack.c.l.b16 %v4649
    %v7277 = vunpack.c.h.b16 %v4649
    %v7278 = vunpack.c.l.b16 %v4650
    %v7279 = vunpack.c.h.b16 %v4650
    %v7280 = vunpack.c.l.b16 %v4651
    %v7281 = vunpack.c.h.b16 %v4651
    %v7282 = vunpack.c.l.b16 %v4652
    %v7283 = vunpack.c.h.b16 %v4652
    %v7284 = vunpack.c.l.b16 %v4653
    %v7285 = vunpack.c.h.b16 %v4653
    %v7286 = vunpack.c.l.b16 %v4654
    %v7287 = vunpack.c.h.b16 %v4654
    %v7288 = vunpack.c.l.b16 %v4655
    %v7289 = vunpack.c.h.b16 %v4655
    %v7290 = vunpack.c.l.b16 %v4656
    %v7291 = vunpack.c.h.b16 %v4656
    %v7292 = vunpack.c.l.b16 %v4657
    %v7293 = vunpack.c.h.b16 %v4657
    %v7294 = vunpack.c.l.b16 %v4658
    %v7295 = vunpack.c.h.b16 %v4658
    %v7296 = vunpack.c.l.b16 %v4659
    %v7297 = vunpack.c.h.b16 %v4659
    %v7298 = vunpack.c.l.b16 %v4660
    %v7299 = vunpack.c.h.b16 %v4660
    %v7300 = vunpack.c.l.b16 %v4661
    %v7301 = vunpack.c.h.b16 %v4661
    %v7302 = vunpack.c.l.b16 %v4662
    %v7303 = vunpack.c.h.b16 %v4662
    %v7304 = vunpack.c.l.b16 %v4663
    %v7305 = vunpack.c.h.b16 %v4663
    %v7306 = vunpack.c.l.b16 %v4664
    %v7307 = vunpack.c.h.b16 %v4664
    %v7308 = vunpack.c.l.b16 %v4665
    %v7309 = vunpack.c.h.b16 %v4665
    %v7310 = vunpack.c.l.b16 %v4666
    %v7311 = vunpack.c.h.b16 %v4666
    %v7312 = vunpack.c.l.b16 %v4667
    %v7313 = vunpack.c.h.b16 %v4667
    %v7314 = vunpack.c.l.b16 %v4668
    %v7315 = vunpack.c.h.b16 %v4668
    %v7316 = vunpack.c.l.b16 %v4669
    %v7317 = vunpack.c.h.b16 %v4669
    %v7318 = vunpack.c.l.b16 %v4670
    %v7319 = vunpack.c.h.b16 %v4670
    %v7320 = vunpack.c.l.b16 %v4671
    %v7321 = vunpack.c.h.b16 %v4671
    %v7322 = vunpack.c.l.b16 %v4672
    %v7323 = vunpack.c.h.b16 %v4672
    %v7324 = vunpack.c.l.b16 %v4673
    %v7325 = vunpack.c.h.b16 %v4673
    %v7326 = vunpack.c.l.b16 %v4674
    %v7327 = vunpack.c.h.b16 %v4674
    %v7328 = vunpack.c.l.b16 %v4675
    %v7329 = vunpack.c.h.b16 %v4675
    %v7330 = vunpack.c.l.b16 %v4676
    %v7331 = vunpack.c.h.b16 %v4676
    %v7332 = vunpack.c.l.b16 %v4677
    %v7333 = vunpack.c.h.b16 %v4677
    %v7334 = vunpack.c.l.b16 %v4678
    %v7335 = vunpack.c.h.b16 %v4678
    %v7336 = vunpack.c.l.b16 %v4679
    %v7337 = vunpack.c.h.b16 %v4679
    %v7338 = vunpack.c.l.b16 %v4680
    %v7339 = vunpack.c.h.b16 %v4680
    %v7340 = vunpack.c.l.b16 %v4681
    %v7341 = vunpack.c.h.b16 %v4681
    %v7342 = vunpack.c.l.b16 %v4682
    %v7343 = vunpack.c.h.b16 %v4682
    %v7344 = vunpack.c.l.b16 %v4683
    %v7345 = vunpack.c.h.b16 %v4683
    %v7346 = vunpack.c.l.b16 %v4684
    %v7347 = vunpack.c.h.b16 %v4684
    %v7348 = vunpack.c.l.b16 %v4685
    %v7349 = vunpack.c.h.b16 %v4685
    %v7350 = vunpack.c.l.b16 %v4686
    %v7351 = vunpack.c.h.b16 %v4686
    %v7352 = vunpack.c.l.b16 %v4687
    %v7353 = vunpack.c.h.b16 %v4687
    %v7354 = vunpack.c.l.b16 %v4688
    %v7355 = vunpack.c.h.b16 %v4688
    %v7356 = vunpack.c.l.b16 %v4689
    %v7357 = vunpack.c.h.b16 %v4689
    %v7358 = vunpack.c.l.b16 %v4690
    %v7359 = vunpack.c.h.b16 %v4690
    %v7360 = vunpack.c.l.b16 %v4691
    %v7361 = vunpack.c.h.b16 %v4691
    %v7362 = vunpack.c.l.b16 %v4692
    %v7363 = vunpack.c.h.b16 %v4692
    %v7364 = vunpack.c.l.b16 %v4693
    %v7365 = vunpack.c.h.b16 %v4693
    %v7366 = vunpack.c.l.b16 %v4694
    %v7367 = vunpack.c.h.b16 %v4694
    %v7368 = vunpack.c.l.b16 %v4695
    %v7369 = vunpack.c.h.b16 %v4695
    %v7370 = vunpack.c.l.b16 %v4696
    %v7371 = vunpack.c.h.b16 %v4696
    %v7372 = vunpack.c.l.b16 %v4697
    %v7373 = vunpack.c.h.b16 %v4697
    %v7374 = vunpack.c.l.b16 %v4698
    %v7375 = vunpack.c.h.b16 %v4698
    %v7376 = vunpack.c.l.b16 %v4699
    %v7377 = vunpack.c.h.b16 %v4699
    %v7378 = vunpack.c.l.b16 %v4700
    %v7379 = vunpack.c.h.b16 %v4700
    %v7380 = vunpack.c.l.b16 %v4701
    %v7381 = vunpack.c.h.b16 %v4701
    %v7382 = vunpack.c.l.b16 %v4702
    %v7383 = vunpack.c.h.b16 %v4702
    %v7384 = vunpack.c.l.b16 %v4703
    %v7385 = vunpack.c.h.b16 %v4703
    %v7386 = vunpack.c.l.b16 %v4704
    %v7387 = vunpack.c.h.b16 %v4704
    %v7388 = vunpack.c.l.b16 %v4705
    %v7389 = vunpack.c.h.b16 %v4705
    %v7390 = vunpack.c.l.b16 %v4706
    %v7391 = vunpack.c.h.b16 %v4706
    %v7392 = vunpack.c.l.b16 %v4707
    %v7393 = vunpack.c.h.b16 %v4707
    %v7394 = vunpack.c.l.b16 %v4708
    %v7395 = vunpack.c.h.b16 %v4708
    %v7396 = vunpack.c.l.b16 %v4709
    %v7397 = vunpack.c.h.b16 %v4709
    %v7398 = vunpack.c.l.b16 %v4710
    %v7399 = vunpack.c.h.b16 %v4710
    %v7400 = vunpack.c.l.b16 %v4711
    %v7401 = vunpack.c.h.b16 %v4711
    %v7402 = vunpack.c.l.b16 %v4712
    %v7403 = vunpack.c.h.b16 %v4712
    %v7404 = vunpack.c.l.b16 %v4713
    %v7405 = vunpack.c.h.b16 %v4713
    %v7406 = vunpack.c.l.b16 %v4714
    %v7407 = vunpack.c.h.b16 %v4714
    %v7408 = vunpack.c.l.b16 %v4715
    %v7409 = vunpack.c.h.b16 %v4715
    %v7410 = vunpack.c.l.b16 %v4716
    %v7411 = vunpack.c.h.b16 %v4716
    %v7412 = vunpack.c.l.b16 %v4717
    %v7413 = vunpack.c.h.b16 %v4717
    %v7414 = vunpack.c.l.b16 %v4718
    %v7415 = vunpack.c.h.b16 %v4718
    %v7416 = vunpack.c.l.b16 %v4719
    %v7417 = vunpack.c.h.b16 %v4719
    %v7418 = vunpack.c.l.b16 %v4720
    %v7419 = vunpack.c.h.b16 %v4720
    %v7420 = vunpack.c.l.b16 %v4721
    %v7421 = vunpack.c.h.b16 %v4721
    %v7422 = vunpack.c.l.b16 %v4722
    %v7423 = vunpack.c.h.b16 %v4722
    %v7424 = vunpack.c.l.b16 %v4723
    %v7425 = vunpack.c.h.b16 %v4723
    %v7426 = vunpack.c.l.b16 %v4724
    %v7427 = vunpack.c.h.b16 %v4724
    %v7428 = vunpack.c.l.b16 %v4725
    %v7429 = vunpack.c.h.b16 %v4725
    %v7430 = vunpack.c.l.b16 %v4726
    %v7431 = vunpack.c.h.b16 %v4726
    %v7432 = vunpack.c.l.b16 %v4727
    %v7433 = vunpack.c.h.b16 %v4727
    %v7434 = vunpack.c.l.b16 %v4728
    %v7435 = vunpack.c.h.b16 %v4728
    %v7436 = vunpack.c.l.b16 %v4729
    %v7437 = vunpack.c.h.b16 %v4729
    %v7438 = vunpack.c.l.b16 %v4730
    %v7439 = vunpack.c.h.b16 %v4730
    %v7440 = vunpack.c.l.b16 %v4731
    %v7441 = vunpack.c.h.b16 %v4731
    %v7442 = vunpack.c.l.b16 %v4732
    %v7443 = vunpack.c.h.b16 %v4732
    %v7444 = vunpack.c.l.b16 %v4733
    %v7445 = vunpack.c.h.b16 %v4733
    %v7446 = vunpack.c.l.b16 %v4734
    %v7447 = vunpack.c.h.b16 %v4734
    %v7448 = vunpack.c.l.b16 %v4735
    %v7449 = vunpack.c.h.b16 %v4735
    %v7450 = vunpack.c.l.b16 %v4736
    %v7451 = vunpack.c.h.b16 %v4736
    %v7452 = vunpack.c.l.b16 %v4737
    %v7453 = vunpack.c.h.b16 %v4737
    %v7454 = vunpack.c.l.b16 %v4738
    %v7455 = vunpack.c.h.b16 %v4738
    %v7456 = vunpack.c.l.b16 %v4739
    %v7457 = vunpack.c.h.b16 %v4739
    %v7458 = vunpack.c.l.b16 %v4740
    %v7459 = vunpack.c.h.b16 %v4740
    %v7460 = vunpack.c.l.b16 %v4741
    %v7461 = vunpack.c.h.b16 %v4741
    %v7462 = vunpack.c.l.b16 %v4742
    %v7463 = vunpack.c.h.b16 %v4742
    %v7464 = vunpack.c.l.b16 %v4743
    %v7465 = vunpack.c.h.b16 %v4743
    %v7466 = vunpack.c.l.b16 %v4744
    %v7467 = vunpack.c.h.b16 %v4744
    %v7468 = vunpack.c.l.b16 %v4745
    %v7469 = vunpack.c.h.b16 %v4745
    %v7470 = vunpack.c.l.b16 %v4746
    %v7471 = vunpack.c.h.b16 %v4746
    %v7472 = vunpack.c.l.b16 %v4747
    %v7473 = vunpack.c.h.b16 %v4747
    %v7474 = vunpack.c.l.b16 %v4748
    %v7475 = vunpack.c.h.b16 %v4748
    %v7476 = vunpack.c.l.b16 %v4749
    %v7477 = vunpack.c.h.b16 %v4749
    %v7478 = vunpack.c.l.b16 %v4750
    %v7479 = vunpack.c.h.b16 %v4750
    %v7480 = vunpack.c.l.b16 %v4751
    %v7481 = vunpack.c.h.b16 %v4751
    %v7482 = vunpack.c.l.b16 %v4752
    %v7483 = vunpack.c.h.b16 %v4752
    %v7484 = vunpack.c.l.b16 %v4753
    %v7485 = vunpack.c.h.b16 %v4753
    %v7486 = vunpack.c.l.b16 %v4754
    %v7487 = vunpack.c.h.b16 %v4754
    %v7488 = vunpack.c.l.b16 %v4755
    %v7489 = vunpack.c.h.b16 %v4755
    %v7490 = vunpack.c.l.b16 %v4756
    %v7491 = vunpack.c.h.b16 %v4756
    %v7492 = vunpack.c.l.b16 %v4757
    %v7493 = vunpack.c.h.b16 %v4757
    %v7494 = vunpack.c.l.b16 %v4758
    %v7495 = vunpack.c.h.b16 %v4758
    %v7496 = vunpack.c.l.b16 %v4759
    %v7497 = vunpack.c.h.b16 %v4759
    %v7498 = vunpack.c.l.b16 %v4760
    %v7499 = vunpack.c.h.b16 %v4760
    %v7500 = vunpack.c.l.b16 %v4761
    %v7501 = vunpack.c.h.b16 %v4761
    %v7502 = vunpack.c.l.b16 %v4762
    %v7503 = vunpack.c.h.b16 %v4762
    %v7504 = vunpack.c.l.b16 %v4763
    %v7505 = vunpack.c.h.b16 %v4763
    %v7506 = vunpack.c.l.b16 %v4764
    %v7507 = vunpack.c.h.b16 %v4764
    %v7508 = vunpack.c.l.b16 %v4765
    %v7509 = vunpack.c.h.b16 %v4765
    %v7510 = vunpack.c.l.b16 %v4766
    %v7511 = vunpack.c.h.b16 %v4766
    %v7512 = vunpack.c.l.b16 %v4767
    %v7513 = vunpack.c.h.b16 %v4767
    %v7514 = vunpack.c.l.b16 %v4768
    %v7515 = vunpack.c.h.b16 %v4768
    %v7516 = vunpack.c.l.b16 %v4769
    %v7517 = vunpack.c.h.b16 %v4769
    %v7518 = vunpack.c.l.b16 %v4770
    %v7519 = vunpack.c.h.b16 %v4770
    %v7520 = vunpack.c.l.b16 %v4771
    %v7521 = vunpack.c.h.b16 %v4771
    %v7522 = vunpack.c.l.b16 %v4772
    %v7523 = vunpack.c.h.b16 %v4772
    %v7524 = vunpack.c.l.b16 %v4773
    %v7525 = vunpack.c.h.b16 %v4773
    %v7526 = vunpack.c.l.b16 %v4774
    %v7527 = vunpack.c.h.b16 %v4774
    %v7528 = vunpack.c.l.b16 %v4775
    %v7529 = vunpack.c.h.b16 %v4775
    %v7530 = vunpack.c.l.b16 %v4776
    %v7531 = vunpack.c.h.b16 %v4776
    %v7532 = vunpack.c.l.b16 %v4777
    %v7533 = vunpack.c.h.b16 %v4777
    %v7534 = vunpack.c.l.b16 %v4778
    %v7535 = vunpack.c.h.b16 %v4778
    %v7536 = vunpack.c.l.b16 %v4779
    %v7537 = vunpack.c.h.b16 %v4779
    %v7538 = vunpack.c.l.b16 %v4780
    %v7539 = vunpack.c.h.b16 %v4780
    %v7540 = vunpack.c.l.b16 %v4781
    %v7541 = vunpack.c.h.b16 %v4781
    %v7542 = vunpack.c.l.b16 %v4782
    %v7543 = vunpack.c.h.b16 %v4782
    %v7544 = vunpack.c.l.b16 %v4783
    %v7545 = vunpack.c.h.b16 %v4783
    %v7546 = vunpack.c.l.b16 %v4784
    %v7547 = vunpack.c.h.b16 %v4784
    %v7548 = vunpack.c.l.b16 %v4785
    %v7549 = vunpack.c.h.b16 %v4785
    %v7550 = vunpack.c.l.b16 %v4786
    %v7551 = vunpack.c.h.b16 %v4786
    %v7552 = vunpack.c.l.b16 %v4787
    %v7553 = vunpack.c.h.b16 %v4787
    %v7554 = vunpack.c.l.b16 %v4788
    %v7555 = vunpack.c.h.b16 %v4788
    %v7556 = vunpack.c.l.b16 %v4789
    %v7557 = vunpack.c.h.b16 %v4789
    %v7558 = vunpack.c.l.b16 %v4790
    %v7559 = vunpack.c.h.b16 %v4790
    %v7560 = vunpack.c.l.b16 %v4791
    %v7561 = vunpack.c.h.b16 %v4791
    %v7562 = vunpack.c.l.b16 %v4792
    %v7563 = vunpack.c.h.b16 %v4792
    %v7564 = vunpack.c.l.b16 %v4793
    %v7565 = vunpack.c.h.b16 %v4793
    %v7566 = vunpack.c.l.b16 %v4794
    %v7567 = vunpack.c.h.b16 %v4794
    %v7568 = vunpack.c.l.b16 %v4795
    %v7569 = vunpack.c.h.b16 %v4795
    %v7570 = vunpack.c.l.b16 %v4796
    %v7571 = vunpack.c.h.b16 %v4796
    %v7572 = vunpack.c.l.b16 %v4797
    %v7573 = vunpack.c.h.b16 %v4797
    %v7574 = vunpack.c.l.b16 %v4798
    %v7575 = vunpack.c.h.b16 %v4798
    %v7576 = vunpack.c.l.b16 %v4799
    %v7577 = vunpack.c.h.b16 %v4799
    %v7578 = vunpack.c.l.b16 %v4800
    %v7579 = vunpack.c.h.b16 %v4800
    %v7580 = vunpack.c.l.b16 %v4801
    %v7581 = vunpack.c.h.b16 %v4801
    %v7582 = vunpack.c.l.b16 %v4802
    %v7583 = vunpack.c.h.b16 %v4802
    %v7584 = vunpack.c.l.b16 %v4803
    %v7585 = vunpack.c.h.b16 %v4803
    %v7586 = vunpack.c.l.b16 %v4804
    %v7587 = vunpack.c.h.b16 %v4804
    %v7588 = vunpack.c.l.b16 %v4805
    %v7589 = vunpack.c.h.b16 %v4805
    %v7590 = vunpack.c.l.b16 %v4806
    %v7591 = vunpack.c.h.b16 %v4806
    %v7592 = vunpack.c.l.b16 %v4807
    %v7593 = vunpack.c.h.b16 %v4807
    %v7594 = vunpack.c.l.b16 %v4808
    %v7595 = vunpack.c.h.b16 %v4808
    %v7596 = vunpack.c.l.b16 %v4809
    %v7597 = vunpack.c.h.b16 %v4809
    %v7598 = vunpack.c.l.b16 %v4810
    %v7599 = vunpack.c.h.b16 %v4810
    %v7600 = vunpack.c.l.b16 %v4811
    %v7601 = vunpack.c.h.b16 %v4811
    %v7602 = vunpack.c.l.b16 %v4812
    %v7603 = vunpack.c.h.b16 %v4812
    %v7604 = vunpack.c.l.b16 %v4813
    %v7605 = vunpack.c.h.b16 %v4813
    %v7606 = vunpack.c.l.b16 %v4814
    %v7607 = vunpack.c.h.b16 %v4814
    %v7608 = vunpack.c.l.b16 %v4815
    %v7609 = vunpack.c.h.b16 %v4815
    %v7610 = vunpack.c.l.b16 %v4816
    %v7611 = vunpack.c.h.b16 %v4816
    %v7612 = vunpack.c.l.b16 %v4817
    %v7613 = vunpack.c.h.b16 %v4817
    %v7614 = vunpack.c.l.b16 %v4818
    %v7615 = vunpack.c.h.b16 %v4818
    %v7616 = vunpack.c.l.b16 %v4819
    %v7617 = vunpack.c.h.b16 %v4819
    %v7618 = vunpack.c.l.b16 %v4820
    %v7619 = vunpack.c.h.b16 %v4820
    %v7620 = vunpack.c.l.b16 %v4821
    %v7621 = vunpack.c.h.b16 %v4821
    %v7622 = vunpack.c.l.b16 %v4822
    %v7623 = vunpack.c.h.b16 %v4822
    %v7624 = vunpack.c.l.b16 %v4823
    %v7625 = vunpack.c.h.b16 %v4823
    %v7626 = vunpack.c.l.b16 %v4824
    %v7627 = vunpack.c.h.b16 %v4824
    %v7628 = vunpack.c.l.b16 %v4825
    %v7629 = vunpack.c.h.b16 %v4825
    %v7630 = vunpack.c.l.b16 %v4826
    %v7631 = vunpack.c.h.b16 %v4826
    %v7632 = vunpack.c.l.b16 %v4827
    %v7633 = vunpack.c.h.b16 %v4827
    %v7634 = vunpack.c.l.b16 %v4828
    %v7635 = vunpack.c.h.b16 %v4828
    %v7636 = vunpack.c.l.b16 %v4829
    %v7637 = vunpack.c.h.b16 %v4829
    %v7638 = vunpack.c.l.b16 %v4830
    %v7639 = vunpack.c.h.b16 %v4830
    %v7640 = vunpack.c.l.b16 %v4831
    %v7641 = vunpack.c.h.b16 %v4831
    %v7642 = vunpack.c.l.b16 %v4832
    %v7643 = vunpack.c.h.b16 %v4832
    %v7644 = vunpack.c.l.b16 %v4833
    %v7645 = vunpack.c.h.b16 %v4833
    %v7646 = vunpack.c.l.b16 %v4834
    %v7647 = vunpack.c.h.b16 %v4834
    %v7648 = vunpack.c.l.b16 %v4835
    %v7649 = vunpack.c.h.b16 %v4835
    %v7650 = vunpack.c.l.b16 %v4836
    %v7651 = vunpack.c.h.b16 %v4836
    %v7652 = vunpack.c.l.b16 %v4837
    %v7653 = vunpack.c.h.b16 %v4837
    %v7654 = vunpack.c.l.b16 %v4838
    %v7655 = vunpack.c.h.b16 %v4838
    %v7656 = vunpack.c.l.b16 %v4839
    %v7657 = vunpack.c.h.b16 %v4839
    %v7658 = vunpack.c.l.b16 %v4840
    %v7659 = vunpack.c.h.b16 %v4840
    %v7660 = vunpack.c.l.b16 %v4841
    %v7661 = vunpack.c.h.b16 %v4841
    %v7662 = vunpack.c.l.b16 %v4842
    %v7663 = vunpack.c.h.b16 %v4842
    %v7664 = vunpack.c.l.b16 %v4843
    %v7665 = vunpack.c.h.b16 %v4843
    %v7666 = vunpack.c.l.b16 %v4844
    %v7667 = vunpack.c.h.b16 %v4844
    %v7668 = vunpack.c.l.b16 %v4845
    %v7669 = vunpack.c.h.b16 %v4845
    %v7670 = vunpack.c.l.b16 %v4846
    %v7671 = vunpack.c.h.b16 %v4846
    %v7672 = vunpack.c.l.b16 %v4847
    %v7673 = vunpack.c.h.b16 %v4847
    %v7674 = vunpack.c.l.b16 %v4848
    %v7675 = vunpack.c.h.b16 %v4848
    %v7676 = vunpack.c.l.b16 %v4849
    %v7677 = vunpack.c.h.b16 %v4849
    %v7678 = vunpack.c.l.b16 %v4850
    %v7679 = vunpack.c.h.b16 %v4850
    %v7680 = vunpack.c.l.b16 %v4851
    %v7681 = vunpack.c.h.b16 %v4851
    %v7682 = vunpack.c.l.b16 %v4852
    %v7683 = vunpack.c.h.b16 %v4852
    %v7684 = vunpack.c.l.b16 %v4853
    %v7685 = vunpack.c.h.b16 %v4853
    %v7686 = vunpack.c.l.b16 %v4854
    %v7687 = vunpack.c.h.b16 %v4854
    %v7688 = vunpack.c.l.b16 %v4855
    %v7689 = vunpack.c.h.b16 %v4855
    %v7690 = vunpack.c.l.b16 %v4856
    %v7691 = vunpack.c.h.b16 %v4856
    %v7692 = vunpack.c.l.b16 %v4857
    %v7693 = vunpack.c.h.b16 %v4857
    %v7694 = vunpack.c.l.b16 %v4858
    %v7695 = vunpack.c.h.b16 %v4858
    %v7696 = vunpack.c.l.b16 %v4859
    %v7697 = vunpack.c.h.b16 %v4859
    %v7698 = vunpack.c.l.b16 %v4860
    %v7699 = vunpack.c.h.b16 %v4860
    %v7700 = vunpack.c.l.b16 %v4861
    %v7701 = vunpack.c.h.b16 %v4861
    %v7702 = vunpack.c.l.b16 %v4862
    %v7703 = vunpack.c.h.b16 %v4862
    %v7704 = vunpack.c.l.b16 %v4863
    %v7705 = vunpack.c.h.b16 %v4863
    %v7706 = vunpack.c.l.b16 %v4864
    %v7707 = vunpack.c.h.b16 %v4864
    %v7708 = vunpack.c.l.b16 %v4865
    %v7709 = vunpack.c.h.b16 %v4865
    %v7710 = vunpack.c.l.b16 %v4866
    %v7711 = vunpack.c.h.b16 %v4866
    %v7712 = vunpack.c.l.b16 %v4867
    %v7713 = vunpack.c.h.b16 %v4867
    %v7714 = vunpack.c.l.b16 %v4868
    %v7715 = vunpack.c.h.b16 %v4868
    %v7716 = vunpack.c.l.b16 %v4869
    %v7717 = vunpack.c.h.b16 %v4869
    %v7718 = vunpack.c.l.b16 %v4870
    %v7719 = vunpack.c.h.b16 %v4870
    %v7720 = vunpack.c.l.b16 %v4871
    %v7721 = vunpack.c.h.b16 %v4871
    %v7722 = vunpack.c.l.b16 %v4872
    %v7723 = vunpack.c.h.b16 %v4872
    %v7724 = vunpack.c.l.b16 %v4873
    %v7725 = vunpack.c.h.b16 %v4873
    %v7726 = vunpack.c.l.b16 %v4874
    %v7727 = vunpack.c.h.b16 %v4874
    %v7728 = vunpack.c.l.b16 %v4875
    %v7729 = vunpack.c.h.b16 %v4875
    %v7730 = vunpack.c.l.b16 %v4876
    %v7731 = vunpack.c.h.b16 %v4876
    %v7732 = vunpack.c.l.b16 %v4877
    %v7733 = vunpack.c.h.b16 %v4877
    %v7734 = vunpack.c.l.b16 %v4878
    %v7735 = vunpack.c.h.b16 %v4878
    %v7736 = vunpack.c.l.b16 %v4879
    %v7737 = vunpack.c.h.b16 %v4879
    %v7738 = vunpack.c.l.b16 %v4880
    %v7739 = vunpack.c.h.b16 %v4880
    %v7740 = vunpack.c.l.b16 %v4881
    %v7741 = vunpack.c.h.b16 %v4881
    %v7742 = vunpack.c.l.b16 %v4882
    %v7743 = vunpack.c.h.b16 %v4882
    %v7744 = vunpack.c.l.b16 %v4883
    %v7745 = vunpack.c.h.b16 %v4883
    %v7746 = vunpack.c.l.b16 %v4884
    %v7747 = vunpack.c.h.b16 %v4884
    %v7748 = vunpack.c.l.b16 %v4885
    %v7749 = vunpack.c.h.b16 %v4885
    %v7750 = vunpack.c.l.b16 %v4886
    %v7751 = vunpack.c.h.b16 %v4886
    %v7752 = vunpack.c.l.b16 %v4887
    %v7753 = vunpack.c.h.b16 %v4887
    %v7754 = vunpack.c.l.b16 %v4888
    %v7755 = vunpack.c.h.b16 %v4888
    %v7756 = vunpack.c.l.b16 %v4889
    %v7757 = vunpack.c.h.b16 %v4889
    %v7758 = vunpack.c.l.b16 %v4890
    %v7759 = vunpack.c.h.b16 %v4890
    %v7760 = vunpack.c.l.b16 %v4891
    %v7761 = vunpack.c.h.b16 %v4891
    %v7762 = vunpack.c.l.b16 %v4892
    %v7763 = vunpack.c.h.b16 %v4892
    %v7764 = vunpack.c.l.b16 %v4893
    %v7765 = vunpack.c.h.b16 %v4893
    %v7766 = vunpack.c.l.b16 %v4894
    %v7767 = vunpack.c.h.b16 %v4894
    %v7768 = vunpack.c.l.b16 %v4895
    %v7769 = vunpack.c.h.b16 %v4895
    %v7770 = vunpack.c.l.b16 %v4896
    %v7771 = vunpack.c.h.b16 %v4896
    %v7772 = vunpack.c.l.b16 %v4897
    %v7773 = vunpack.c.h.b16 %v4897
    %v7774 = vunpack.c.l.b16 %v4898
    %v7775 = vunpack.c.h.b16 %v4898
    %v7776 = vunpack.c.l.b16 %v4899
    %v7777 = vunpack.c.h.b16 %v4899
    %v7778 = vunpack.c.l.b16 %v4900
    %v7779 = vunpack.c.h.b16 %v4900
    %v7780 = vunpack.c.l.b16 %v4901
    %v7781 = vunpack.c.h.b16 %v4901
    %v7782 = vunpack.c.l.b16 %v4902
    %v7783 = vunpack.c.h.b16 %v4902
    %v7784 = vunpack.c.l.b16 %v4903
    %v7785 = vunpack.c.h.b16 %v4903
    %v7786 = vunpack.c.l.b16 %v4904
    %v7787 = vunpack.c.h.b16 %v4904
    %v7788 = vunpack.c.l.b16 %v4905
    %v7789 = vunpack.c.h.b16 %v4905
    %v7790 = vunpack.c.l.b16 %v4906
    %v7791 = vunpack.c.h.b16 %v4906
    %v7792 = vunpack.c.l.b16 %v4907
    %v7793 = vunpack.c.h.b16 %v4907
    %v7794 = vunpack.c.l.b16 %v4908
    %v7795 = vunpack.c.h.b16 %v4908
    %v7796 = vunpack.c.l.b16 %v4909
    %v7797 = vunpack.c.h.b16 %v4909
    %v7798 = vunpack.c.l.b16 %v4910
    %v7799 = vunpack.c.h.b16 %v4910
    %v7800 = vunpack.c.l.b16 %v4911
    %v7801 = vunpack.c.h.b16 %v4911
    %v7802 = vunpack.c.l.b16 %v4912
    %v7803 = vunpack.c.h.b16 %v4912
    %v7804 = vunpack.c.l.b16 %v4913
    %v7805 = vunpack.c.h.b16 %v4913
    %v7806 = vunpack.c.l.b16 %v4914
    %v7807 = vunpack.c.h.b16 %v4914
    %v7808 = vunpack.c.l.b16 %v4915
    %v7809 = vunpack.c.h.b16 %v4915
    %v7810 = vunpack.c.l.b16 %v4916
    %v7811 = vunpack.c.h.b16 %v4916
    %v7812 = vunpack.c.l.b16 %v4917
    %v7813 = vunpack.c.h.b16 %v4917
    %v7814 = vunpack.c.l.b16 %v4918
    %v7815 = vunpack.c.h.b16 %v4918
    %v7816 = vunpack.c.l.b16 %v4919
    %v7817 = vunpack.c.h.b16 %v4919
    %v7818 = vunpack.c.l.b16 %v4920
    %v7819 = vunpack.c.h.b16 %v4920
    %v7820 = vunpack.c.l.b16 %v4921
    %v7821 = vunpack.c.h.b16 %v4921
    %v7822 = vunpack.c.l.b16 %v4922
    %v7823 = vunpack.c.h.b16 %v4922
    %v7824 = vunpack.c.l.b16 %v4923
    %v7825 = vunpack.c.h.b16 %v4923
    %v7826 = vunpack.c.l.b16 %v4924
    %v7827 = vunpack.c.h.b16 %v4924
    %v7828 = vunpack.c.l.b16 %v4925
    %v7829 = vunpack.c.h.b16 %v4925
    %v7830 = vunpack.c.l.b16 %v4926
    %v7831 = vunpack.c.h.b16 %v4926
    %v7832 = vunpack.c.l.b16 %v4927
    %v7833 = vunpack.c.h.b16 %v4927
    %v7834 = vunpack.c.l.b16 %v4928
    %v7835 = vunpack.c.h.b16 %v4928
    %v7836 = vunpack.c.l.b16 %v4929
    %v7837 = vunpack.c.h.b16 %v4929
    %v7838 = vunpack.c.l.b16 %v4930
    %v7839 = vunpack.c.h.b16 %v4930
    %v7840 = vunpack.c.l.b16 %v4931
    %v7841 = vunpack.c.h.b16 %v4931
    %v7842 = vunpack.c.l.b16 %v4932
    %v7843 = vunpack.c.h.b16 %v4932
    %v7844 = vunpack.c.l.b16 %v4933
    %v7845 = vunpack.c.h.b16 %v4933
    %v7846 = vunpack.c.l.b16 %v4934
    %v7847 = vunpack.c.h.b16 %v4934
    %v7848 = vunpack.c.l.b16 %v4935
    %v7849 = vunpack.c.h.b16 %v4935
    %v7850 = vunpack.c.l.b16 %v4936
    %v7851 = vunpack.c.h.b16 %v4936
    %v7852 = vunpack.c.l.b16 %v4937
    %v7853 = vunpack.c.h.b16 %v4937
    %v7854 = vunpack.c.l.b16 %v4938
    %v7855 = vunpack.c.h.b16 %v4938
    %v7856 = vunpack.c.l.b16 %v4939
    %v7857 = vunpack.c.h.b16 %v4939
    %v7858 = vunpack.c.l.b16 %v4940
    %v7859 = vunpack.c.h.b16 %v4940
    %v7860 = vunpack.c.l.b16 %v4941
    %v7861 = vunpack.c.h.b16 %v4941
    %v7862 = vunpack.c.l.b16 %v4942
    %v7863 = vunpack.c.h.b16 %v4942
    %v7864 = vunpack.c.l.b16 %v4943
    %v7865 = vunpack.c.h.b16 %v4943
    %v7866 = vunpack.c.l.b16 %v4944
    %v7867 = vunpack.c.h.b16 %v4944
    %v7868 = vunpack.c.l.b16 %v4945
    %v7869 = vunpack.c.h.b16 %v4945
    %v7870 = vunpack.c.l.b16 %v4946
    %v7871 = vunpack.c.h.b16 %v4946
    %v7872 = vunpack.c.l.b16 %v4947
    %v7873 = vunpack.c.h.b16 %v4947
    %v7874 = vunpack.c.l.b16 %v4948
    %v7875 = vunpack.c.h.b16 %v4948
    %v7876 = vunpack.c.l.b16 %v4949
    %v7877 = vunpack.c.h.b16 %v4949
    %v7878 = vunpack.c.l.b16 %v4950
    %v7879 = vunpack.c.h.b16 %v4950
    %v7880 = vunpack.c.l.b16 %v4951
    %v7881 = vunpack.c.h.b16 %v4951
    %v7882 = vunpack.c.l.b16 %v4952
    %v7883 = vunpack.c.h.b16 %v4952
    %v7884 = vunpack.c.l.b16 %v4953
    %v7885 = vunpack.c.h.b16 %v4953
    %v7886 = vunpack.c.l.b16 %v4954
    %v7887 = vunpack.c.h.b16 %v4954
    %v7888 = vunpack.c.l.b16 %v4955
    %v7889 = vunpack.c.h.b16 %v4955
    %v7890 = vunpack.c.l.b16 %v4956
    %v7891 = vunpack.c.h.b16 %v4956
    %v7892 = vunpack.c.l.b16 %v4957
    %v7893 = vunpack.c.h.b16 %v4957
    %v7894 = vunpack.c.l.b16 %v4958
    %v7895 = vunpack.c.h.b16 %v4958
    %v7896 = vunpack.c.l.b16 %v4959
    %v7897 = vunpack.c.h.b16 %v4959
    %v7898 = vunpack.c.l.b16 %v4960
    %v7899 = vunpack.c.h.b16 %v4960
    %v7900 = vunpack.c.l.b16 %v4961
    %v7901 = vunpack.c.h.b16 %v4961
    %v7902 = vunpack.c.l.b16 %v4962
    %v7903 = vunpack.c.h.b16 %v4962
    %v7904 = vunpack.c.l.b16 %v4963
    %v7905 = vunpack.c.h.b16 %v4963
    %v7906 = vunpack.c.l.b16 %v4964
    %v7907 = vunpack.c.h.b16 %v4964
    %v7908 = vunpack.c.l.b16 %v4965
    %v7909 = vunpack.c.h.b16 %v4965
    %v7910 = vunpack.c.l.b16 %v4966
    %v7911 = vunpack.c.h.b16 %v4966
    %v7912 = vunpack.c.l.b16 %v4967
    %v7913 = vunpack.c.h.b16 %v4967
    %v7914 = vunpack.c.l.b16 %v4968
    %v7915 = vunpack.c.h.b16 %v4968
    %v7916 = vunpack.c.l.b16 %v4969
    %v7917 = vunpack.c.h.b16 %v4969
    %v7918 = vunpack.c.l.b16 %v4970
    %v7919 = vunpack.c.h.b16 %v4970
    %v7920 = vunpack.c.l.b16 %v4971
    %v7921 = vunpack.c.h.b16 %v4971
    %v7922 = vunpack.c.l.b16 %v4972
    %v7923 = vunpack.c.h.b16 %v4972
    %v7924 = vunpack.c.l.b16 %v4973
    %v7925 = vunpack.c.h.b16 %v4973
    %v7926 = vunpack.c.l.b16 %v4974
    %v7927 = vunpack.c.h.b16 %v4974
    %v7928 = vunpack.c.l.b16 %v4975
    %v7929 = vunpack.c.h.b16 %v4975
    %v7930 = vunpack.c.l.b16 %v4976
    %v7931 = vunpack.c.h.b16 %v4976
    %v7932 = vunpack.c.l.b16 %v4977
    %v7933 = vunpack.c.h.b16 %v4977
    %v7934 = vunpack.c.l.b16 %v4978
    %v7935 = vunpack.c.h.b16 %v4978
    %v7936 = vunpack.c.l.b16 %v4979
    %v7937 = vunpack.c.h.b16 %v4979
    %v7938 = vunpack.c.l.b16 %v4980
    %v7939 = vunpack.c.h.b16 %v4980
    %v7940 = vunpack.c.l.b16 %v4981
    %v7941 = vunpack.c.h.b16 %v4981
    %v7942 = vunpack.c.l.b16 %v4982
    %v7943 = vunpack.c.h.b16 %v4982
    %v7944 = vunpack.c.l.b16 %v4983
    %v7945 = vunpack.c.h.b16 %v4983
    %v7946 = vunpack.c.l.b16 %v4984
    %v7947 = vunpack.c.h.b16 %v4984
    %v7948 = vunpack.c.l.b16 %v4985
    %v7949 = vunpack.c.h.b16 %v4985
    %v7950 = vunpack.c.l.b16 %v4986
    %v7951 = vunpack.c.h.b16 %v4986
    %v7952 = vunpack.c.l.b16 %v4987
    %v7953 = vunpack.c.h.b16 %v4987
    %v7954 = vunpack.c.l.b16 %v4988
    %v7955 = vunpack.c.h.b16 %v4988
    %v7956 = vunpack.c.l.b16 %v4989
    %v7957 = vunpack.c.h.b16 %v4989
    %v7958 = vunpack.c.l.b16 %v4990
    %v7959 = vunpack.c.h.b16 %v4990
    %v7960 = vunpack.c.l.b16 %v4991
    %v7961 = vunpack.c.h.b16 %v4991
    %v7962 = vunpack.c.l.b16 %v4992
    %v7963 = vunpack.c.h.b16 %v4992
    %v7964 = vunpack.c.l.b16 %v4993
    %v7965 = vunpack.c.h.b16 %v4993
    %v7966 = vunpack.c.l.b16 %v4994
    %v7967 = vunpack.c.h.b16 %v4994
    %v7968 = vunpack.c.l.b16 %v4995
    %v7969 = vunpack.c.h.b16 %v4995
    %v7970 = vunpack.c.l.b16 %v4996
    %v7971 = vunpack.c.h.b16 %v4996
    %v7972 = vunpack.c.l.b16 %v4997
    %v7973 = vunpack.c.h.b16 %v4997
    %v7974 = vunpack.c.l.b16 %v4998
    %v7975 = vunpack.c.h.b16 %v4998
    %v7976 = vunpack.c.l.b16 %v4999
    %v7977 = vunpack.c.h.b16 %v4999
    %v7978 = vunpack.c.l.b16 %v5000
    %v7979 = vunpack.c.h.b16 %v5000
    %v7980 = vunpack.c.l.b16 %v5001
    %v7981 = vunpack.c.h.b16 %v5001
    %v7982 = vunpack.c.l.b16 %v5002
    %v7983 = vunpack.c.h.b16 %v5002
    %v7984 = vunpack.c.l.b16 %v5003
    %v7985 = vunpack.c.h.b16 %v5003
    %v7986 = vunpack.c.l.b16 %v5004
    %v7987 = vunpack.c.h.b16 %v5004
    %v7988 = vunpack.c.l.b16 %v5005
    %v7989 = vunpack.c.h.b16 %v5005
    %v7990 = vunpack.c.l.b16 %v5006
    %v7991 = vunpack.c.h.b16 %v5006
    %v7992 = vunpack.c.l.b16 %v5007
    %v7993 = vunpack.c.h.b16 %v5007
    %v7994 = vunpack.c.l.b16 %v5008
    %v7995 = vunpack.c.h.b16 %v5008
    %v7996 = vunpack.c.l.b16 %v5009
    %v7997 = vunpack.c.h.b16 %v5009
    %v7998 = vunpack.c.l.b16 %v5010
    %v7999 = vunpack.c.h.b16 %v5010
    %v8000 = vunpack.c.l.b16 %v5011
    %v8001 = vunpack.c.h.b16 %v5011
    %v8002 = vunpack.c.l.b16 %v5012
    %v8003 = vunpack.c.h.b16 %v5012
    %v8004 = vunpack.c.l.b16 %v5013
    %v8005 = vunpack.c.h.b16 %v5013
    %v8006 = vunpack.c.l.b16 %v5014
    %v8007 = vunpack.c.h.b16 %v5014
    %v8008 = vunpack.c.l.b16 %v5015
    %v8009 = vunpack.c.h.b16 %v5015
    %v8010 = vunpack.c.l.b16 %v5016
    %v8011 = vunpack.c.h.b16 %v5016
    %v8012 = vunpack.c.l.b16 %v5017
    %v8013 = vunpack.c.h.b16 %v5017
    %v8014 = vunpack.c.l.b16 %v5018
    %v8015 = vunpack.c.h.b16 %v5018
    %v8016 = vunpack.c.l.b16 %v5019
    %v8017 = vunpack.c.h.b16 %v5019
    %v8018 = vunpack.c.l.b16 %v5020
    %v8019 = vunpack.c.h.b16 %v5020
    %v8020 = vunpack.c.l.b16 %v5021
    %v8021 = vunpack.c.h.b16 %v5021
    %v8022 = vunpack.c.l.b16 %v5022
    %v8023 = vunpack.c.h.b16 %v5022
    %v8024 = vunpack.c.l.b16 %v5023
    %v8025 = vunpack.c.h.b16 %v5023
    %v8026 = vunpack.c.l.b16 %v5024
    %v8027 = vunpack.c.h.b16 %v5024
    %v8028 = vunpack.c.l.b16 %v5025
    %v8029 = vunpack.c.h.b16 %v5025
    %v8030 = vunpack.c.l.b16 %v5026
    %v8031 = vunpack.c.h.b16 %v5026
    %v8032 = vunpack.c.l.b16 %v5027
    %v8033 = vunpack.c.h.b16 %v5027
    %v8034 = vunpack.c.l.b16 %v5028
    %v8035 = vunpack.c.h.b16 %v5028
    %v8036 = vunpack.c.l.b16 %v5029
    %v8037 = vunpack.c.h.b16 %v5029
    %v8038 = vunpack.c.l.b16 %v5030
    %v8039 = vunpack.c.h.b16 %v5030
    %v8040 = vunpack.c.l.b16 %v5031
    %v8041 = vunpack.c.h.b16 %v5031
    %v8042 = vunpack.c.l.b16 %v5032
    %v8043 = vunpack.c.h.b16 %v5032
    %v8044 = vunpack.c.l.b16 %v5033
    %v8045 = vunpack.c.h.b16 %v5033
    %v8046 = vunpack.c.l.b16 %v5034
    %v8047 = vunpack.c.h.b16 %v5034
    %v8048 = vunpack.c.l.b16 %v5035
    %v8049 = vunpack.c.h.b16 %v5035
    %v8050 = vunpack.c.l.b16 %v5036
    %v8051 = vunpack.c.h.b16 %v5036
    %v8052 = vunpack.c.l.b16 %v5037
    %v8053 = vunpack.c.h.b16 %v5037
    %v8054 = vunpack.c.l.b16 %v5038
    %v8055 = vunpack.c.h.b16 %v5038
    %v8056 = vunpack.c.l.b16 %v5039
    %v8057 = vunpack.c.h.b16 %v5039
    %v8058 = vunpack.c.l.b16 %v5040
    %v8059 = vunpack.c.h.b16 %v5040
    %v8060 = vunpack.c.l.b16 %v5041
    %v8061 = vunpack.c.h.b16 %v5041
    %v8062 = vunpack.c.l.b16 %v5042
    %v8063 = vunpack.c.h.b16 %v5042
    %v8064 = vunpack.c.l.b16 %v5043
    %v8065 = vunpack.c.h.b16 %v5043
    %v8066 = vunpack.c.l.b16 %v5044
    %v8067 = vunpack.c.h.b16 %v5044
    %v8068 = vunpack.c.l.b16 %v5045
    %v8069 = vunpack.c.h.b16 %v5045
    %v8070 = vunpack.c.l.b16 %v5046
    %v8071 = vunpack.c.h.b16 %v5046
    %v8072 = vunpack.c.l.b16 %v5047
    %v8073 = vunpack.c.h.b16 %v5047
    %v8074 = vunpack.c.l.b16 %v5048
    %v8075 = vunpack.c.h.b16 %v5048
    %v8076 = vunpack.c.l.b16 %v5049
    %v8077 = vunpack.c.h.b16 %v5049
    %v8078 = vunpack.c.l.b16 %v5050
    %v8079 = vunpack.c.h.b16 %v5050
    %v8080 = vunpack.c.l.b16 %v5051
    %v8081 = vunpack.c.h.b16 %v5051
    %v8082 = vunpack.c.l.b16 %v5052
    %v8083 = vunpack.c.h.b16 %v5052
    %v8084 = vunpack.c.l.b16 %v5053
    %v8085 = vunpack.c.h.b16 %v5053
    %v8086 = vunpack.c.l.b16 %v5054
    %v8087 = vunpack.c.h.b16 %v5054
    %v8088 = vunpack.c.l.b16 %v5055
    %v8089 = vunpack.c.h.b16 %v5055
    %v8090 = vunpack.c.l.b16 %v5056
    %v8091 = vunpack.c.h.b16 %v5056
    %v8092 = vunpack.c.l.b16 %v5057
    %v8093 = vunpack.c.h.b16 %v5057
    %v8094 = vunpack.c.l.b16 %v5058
    %v8095 = vunpack.c.h.b16 %v5058
    %v8096 = vunpack.c.l.b16 %v5059
    %v8097 = vunpack.c.h.b16 %v5059
    %v8098 = vunpack.c.l.b16 %v5060
    %v8099 = vunpack.c.h.b16 %v5060
    %v8100 = vunpack.c.l.b16 %v5061
    %v8101 = vunpack.c.h.b16 %v5061
    %v8102 = vunpack.c.l.b16 %v5062
    %v8103 = vunpack.c.h.b16 %v5062
    %v8104 = vunpack.c.l.b16 %v5063
    %v8105 = vunpack.c.h.b16 %v5063
    %v8106 = vunpack.c.l.b16 %v5064
    %v8107 = vunpack.c.h.b16 %v5064
    %v8108 = vunpack.c.l.b16 %v5065
    %v8109 = vunpack.c.h.b16 %v5065
    %v8110 = vunpack.c.l.b16 %v5066
    %v8111 = vunpack.c.h.b16 %v5066
    %v8112 = vunpack.c.l.b16 %v5067
    %v8113 = vunpack.c.h.b16 %v5067
    %v8114 = vunpack.c.l.b16 %v5068
    %v8115 = vunpack.c.h.b16 %v5068
    %v8116 = vunpack.c.l.b16 %v5069
    %v8117 = vunpack.c.h.b16 %v5069
    %v8118 = vunpack.c.l.b16 %v5070
    %v8119 = vunpack.c.h.b16 %v5070
    %v8120 = vunpack.c.l.b16 %v5071
    %v8121 = vunpack.c.h.b16 %v5071
    %v8122 = vunpack.c.l.b16 %v5072
    %v8123 = vunpack.c.h.b16 %v5072
    %v8124 = vunpack.c.l.b16 %v5073
    %v8125 = vunpack.c.h.b16 %v5073
    %v8126 = vunpack.c.l.b16 %v5074
    %v8127 = vunpack.c.h.b16 %v5074
    %v8128 = vunpack.c.l.b16 %v5075
    %v8129 = vunpack.c.h.b16 %v5075
    %v8130 = vunpack.c.l.b16 %v5076
    %v8131 = vunpack.c.h.b16 %v5076
    %v8132 = vunpack.c.l.b16 %v5077
    %v8133 = vunpack.c.h.b16 %v5077
    %v8134 = vunpack.c.l.b16 %v5078
    %v8135 = vunpack.c.h.b16 %v5078
    %v8136 = vunpack.c.l.b16 %v5079
    %v8137 = vunpack.c.h.b16 %v5079
    %v8138 = vunpack.c.l.b16 %v5080
    %v8139 = vunpack.c.h.b16 %v5080
    %v8140 = vunpack.c.l.b16 %v5081
    %v8141 = vunpack.c.h.b16 %v5081
    %v8142 = vunpack.c.l.b16 %v5082
    %v8143 = vunpack.c.h.b16 %v5082
    %v8144 = vunpack.c.l.b16 %v5083
    %v8145 = vunpack.c.h.b16 %v5083
    %v8146 = vunpack.c.l.b16 %v5084
    %v8147 = vunpack.c.h.b16 %v5084
    %v8148 = vunpack.c.l.b16 %v5085
    %v8149 = vunpack.c.h.b16 %v5085
    %v8150 = vunpack.c.l.b16 %v5086
    %v8151 = vunpack.c.h.b16 %v5086
    %v8152 = vunpack.c.l.b16 %v5087
    %v8153 = vunpack.c.h.b16 %v5087
    %v8154 = vunpack.c.l.b16 %v5088
    %v8155 = vunpack.c.h.b16 %v5088
    %v8156 = vunpack.c.l.b16 %v5089
    %v8157 = vunpack.c.h.b16 %v5089
    %v8158 = vunpack.c.l.b16 %v5090
    %v8159 = vunpack.c.h.b16 %v5090
    %v8160 = vunpack.c.l.b16 %v5091
    %v8161 = vunpack.c.h.b16 %v5091
    %v8162 = vunpack.c.l.b16 %v5092
    %v8163 = vunpack.c.h.b16 %v5092
    %v8164 = vunpack.c.l.b16 %v5093
    %v8165 = vunpack.c.h.b16 %v5093
    %v8166 = vunpack.c.l.b16 %v5094
    %v8167 = vunpack.c.h.b16 %v5094
    %v8168 = vunpack.c.l.b16 %v5095
    %v8169 = vunpack.c.h.b16 %v5095
    %v8170 = vunpack.c.l.b16 %v5096
    %v8171 = vunpack.c.h.b16 %v5096
    %v8172 = vunpack.c.l.b16 %v5097
    %v8173 = vunpack.c.h.b16 %v5097
    %v8174 = vunpack.c.l.b16 %v5098
    %v8175 = vunpack.c.h.b16 %v5098
    %v8176 = vunpack.c.l.b16 %v5099
    %v8177 = vunpack.c.h.b16 %v5099
    %v8178 = vunpack.c.l.b16 %v5100
    %v8179 = vunpack.c.h.b16 %v5100
    %v8180 = vunpack.c.l.b16 %v5101
    %v8181 = vunpack.c.h.b16 %v5101
    %v8182 = vunpack.c.l.b16 %v5102
    %v8183 = vunpack.c.h.b16 %v5102
    %v8184 = vunpack.c.l.b16 %v5103
    %v8185 = vunpack.c.h.b16 %v5103
    %v8186 = vunpack.c.l.b16 %v5104
    %v8187 = vunpack.c.h.b16 %v5104
    %v8188 = vunpack.c.l.b16 %v5105
    %v8189 = vunpack.c.h.b16 %v5105
    %v8190 = vunpack.c.l.b16 %v5106
    %v8191 = vunpack.c.h.b16 %v5106
    %v8192 = vunpack.c.l.b16 %v5107
    %v8193 = vunpack.c.h.b16 %v5107
    %v8194 = vunpack.c.l.b16 %v5108
    %v8195 = vunpack.c.h.b16 %v5108
    %v8196 = vunpack.c.l.b16 %v5109
    %v8197 = vunpack.c.h.b16 %v5109
    %v8198 = vunpack.c.l.b16 %v5110
    %v8199 = vunpack.c.h.b16 %v5110
    %v8200 = vunpack.c.l.b16 %v5111
    %v8201 = vunpack.c.h.b16 %v5111
    %v8202 = vunpack.c.l.b16 %v5112
    %v8203 = vunpack.c.h.b16 %v5112
    %v8204 = vunpack.c.l.b16 %v5113
    %v8205 = vunpack.c.h.b16 %v5113
    %v8206 = vunpack.c.l.b16 %v5114
    %v8207 = vunpack.c.h.b16 %v5114
    %v8208 = vunpack.c.l.b16 %v5115
    %v8209 = vunpack.c.h.b16 %v5115
    %v8210 = vunpack.c.l.b16 %v5116
    %v8211 = vunpack.c.h.b16 %v5116
    %v8212 = vunpack.c.l.b16 %v5117
    %v8213 = vunpack.c.h.b16 %v5117
    %v8214 = vunpack.c.l.b16 %v5118
    %v8215 = vunpack.c.h.b16 %v5118
    %v8216 = vunpack.c.l.b16 %v5119
    %v8217 = vunpack.c.h.b16 %v5119
    %v8218 = vunpack.c.l.b16 %v5120
    %v8219 = vunpack.c.h.b16 %v5120
    %v8220 = vunpack.c.l.b16 %v5121
    %v8221 = vunpack.c.h.b16 %v5121
    %v8222 = vunpack.c.l.b16 %v5122
    %v8223 = vunpack.c.h.b16 %v5122
    %v8224 = vunpack.c.l.b16 %v5123
    %v8225 = vunpack.c.h.b16 %v5123
    %v8226 = vunpack.c.l.b16 %v5124
    %v8227 = vunpack.c.h.b16 %v5124
    %v8228 = vunpack.c.l.b16 %v5125
    %v8229 = vunpack.c.h.b16 %v5125
    %v8230 = vunpack.c.l.b16 %v5126
    %v8231 = vunpack.c.h.b16 %v5126
    %v8232 = vunpack.c.l.b16 %v5127
    %v8233 = vunpack.c.h.b16 %v5127
    %v8234 = vunpack.c.l.b16 %v5128
    %v8235 = vunpack.c.h.b16 %v5128
    %v8236 = vunpack.c.l.b16 %v5129
    %v8237 = vunpack.c.h.b16 %v5129
    %v8238 = vunpack.c.l.b16 %v5130
    %v8239 = vunpack.c.h.b16 %v5130
    %v8240 = vunpack.c.l.b16 %v5131
    %v8241 = vunpack.c.h.b16 %v5131
    %v8242 = vunpack.c.l.b16 %v5132
    %v8243 = vunpack.c.h.b16 %v5132
    %v8244 = vunpack.c.l.b16 %v5133
    %v8245 = vunpack.c.h.b16 %v5133
    %v8246 = vunpack.c.l.b16 %v5134
    %v8247 = vunpack.c.h.b16 %v5134
    %v8248 = vunpack.c.l.b16 %v5135
    %v8249 = vunpack.c.h.b16 %v5135
    %v8250 = vpack.c.b16 %v6210, %v6202
    %v8251 = vpack.c.b16 %v6211, %v6203
    %v8252 = vpack.c.b16 %v6212, %v6204
    %v8253 = vpack.c.b16 %v6213, %v6205
    %v8254 = vpack.c.b16 %v6214, %v6206
    %v8255 = vpack.c.b16 %v6215, %v6207
    %v8256 = vpack.c.b16 %v6216, %v6208
    %v8257 = vpack.c.b16 %v6217, %v6209
    %v8258 = vpack.c.b16 %v6226, %v6218
    %v8259 = vpack.c.b16 %v6227, %v6219
    %v8260 = vpack.c.b16 %v6228, %v6220
    %v8261 = vpack.c.b16 %v6229, %v6221
    %v8262 = vpack.c.b16 %v6230, %v6222
    %v8263 = vpack.c.b16 %v6231, %v6223
    %v8264 = vpack.c.b16 %v6232, %v6224
    %v8265 = vpack.c.b16 %v6233, %v6225
    %v8266 = vpack.c.b16 %v6242, %v6234
    %v8267 = vpack.c.b16 %v6243, %v6235
    %v8268 = vpack.c.b16 %v6244, %v6236
    %v8269 = vpack.c.b16 %v6245, %v6237
    %v8270 = vpack.c.b16 %v6246, %v6238
    %v8271 = vpack.c.b16 %v6247, %v6239
    %v8272 = vpack.c.b16 %v6248, %v6240
    %v8273 = vpack.c.b16 %v6249, %v6241
    %v8274 = vpack.c.b16 %v6258, %v6250
    %v8275 = vpack.c.b16 %v6259, %v6251
    %v8276 = vpack.c.b16 %v6260, %v6252
    %v8277 = vpack.c.b16 %v6261, %v6253
    %v8278 = vpack.c.b16 %v6262, %v6254
    %v8279 = vpack.c.b16 %v6263, %v6255
    %v8280 = vpack.c.b16 %v6264, %v6256
    %v8281 = vpack.c.b16 %v6265, %v6257
    %v8282 = vpack.c.b16 %v6274, %v6266
    %v8283 = vpack.c.b16 %v6275, %v6267
    %v8284 = vpack.c.b16 %v6276, %v6268
    %v8285 = vpack.c.b16 %v6277, %v6269
    %v8286 = vpack.c.b16 %v6278, %v6270
    %v8287 = vpack.c.b16 %v6279, %v6271
    %v8288 = vpack.c.b16 %v6280, %v6272
    %v8289 = vpack.c.b16 %v6281, %v6273
    %v8290 = vpack.c.b16 %v6290, %v6282
    %v8291 = vpack.c.b16 %v6291, %v6283
    %v8292 = vpack.c.b16 %v6292, %v6284
    %v8293 = vpack.c.b16 %v6293, %v6285
    %v8294 = vpack.c.b16 %v6294, %v6286
    %v8295 = vpack.c.b16 %v6295, %v6287
    %v8296 = vpack.c.b16 %v6296, %v6288
    %v8297 = vpack.c.b16 %v6297, %v6289
    %v8298 = vpack.c.b16 %v6306, %v6298
    %v8299 = vpack.c.b16 %v6307, %v6299
    %v8300 = vpack.c.b16 %v6308, %v6300
    %v8301 = vpack.c.b16 %v6309, %v6301
    %v8302 = vpack.c.b16 %v6310, %v6302
    %v8303 = vpack.c.b16 %v6311, %v6303
    %v8304 = vpack.c.b16 %v6312, %v6304
    %v8305 = vpack.c.b16 %v6313, %v6305
    %v8306 = vpack.c.b16 %v6322, %v6314
    %v8307 = vpack.c.b16 %v6323, %v6315
    %v8308 = vpack.c.b16 %v6324, %v6316
    %v8309 = vpack.c.b16 %v6325, %v6317
    %v8310 = vpack.c.b16 %v6326, %v6318
    %v8311 = vpack.c.b16 %v6327, %v6319
    %v8312 = vpack.c.b16 %v6328, %v6320
    %v8313 = vpack.c.b16 %v6329, %v6321
    %v8314 = vpack.c.b16 %v6338, %v6330
    %v8315 = vpack.c.b16 %v6339, %v6331
    %v8316 = vpack.c.b16 %v6340, %v6332
    %v8317 = vpack.c.b16 %v6341, %v6333
    %v8318 = vpack.c.b16 %v6342, %v6334
    %v8319 = vpack.c.b16 %v6343, %v6335
    %v8320 = vpack.c.b16 %v6344, %v6336
    %v8321 = vpack.c.b16 %v6345, %v6337
    %v8322 = vpack.c.b16 %v6354, %v6346
    %v8323 = vpack.c.b16 %v6355, %v6347
    %v8324 = vpack.c.b16 %v6356, %v6348
    %v8325 = vpack.c.b16 %v6357, %v6349
    %v8326 = vpack.c.b16 %v6358, %v6350
    %v8327 = vpack.c.b16 %v6359, %v6351
    %v8328 = vpack.c.b16 %v6360, %v6352
    %v8329 = vpack.c.b16 %v6361, %v6353
    %v8330 = vpack.c.b16 %v6370, %v6362
    %v8331 = vpack.c.b16 %v6371, %v6363
    %v8332 = vpack.c.b16 %v6372, %v6364
    %v8333 = vpack.c.b16 %v6373, %v6365
    %v8334 = vpack.c.b16 %v6374, %v6366
    %v8335 = vpack.c.b16 %v6375, %v6367
    %v8336 = vpack.c.b16 %v6376, %v6368
    %v8337 = vpack.c.b16 %v6377, %v6369
    %v8338 = vpack.c.b16 %v6386, %v6378
    %v8339 = vpack.c.b16 %v6387, %v6379
    %v8340 = vpack.c.b16 %v6388, %v6380
    %v8341 = vpack.c.b16 %v6389, %v6381
    %v8342 = vpack.c.b16 %v6390, %v6382
    %v8343 = vpack.c.b16 %v6391, %v6383
    %v8344 = vpack.c.b16 %v6392, %v6384
    %v8345 = vpack.c.b16 %v6393, %v6385
    %v8346 = vpack.c.b16 %v6402, %v6394
    %v8347 = vpack.c.b16 %v6403, %v6395
    %v8348 = vpack.c.b16 %v6404, %v6396
    %v8349 = vpack.c.b16 %v6405, %v6397
    %v8350 = vpack.c.b16 %v6406, %v6398
    %v8351 = vpack.c.b16 %v6407, %v6399
    %v8352 = vpack.c.b16 %v6408, %v6400
    %v8353 = vpack.c.b16 %v6409, %v6401
    %v8354 = vpack.c.b16 %v6418, %v6410
    %v8355 = vpack.c.b16 %v6419, %v6411
    %v8356 = vpack.c.b16 %v6420, %v6412
    %v8357 = vpack.c.b16 %v6421, %v6413
    %v8358 = vpack.c.b16 %v6422, %v6414
    %v8359 = vpack.c.b16 %v6423, %v6415
    %v8360 = vpack.c.b16 %v6424, %v6416
    %v8361 = vpack.c.b16 %v6425, %v6417
    %v8362 = vpack.c.b16 %v6434, %v6426
    %v8363 = vpack.c.b16 %v6435, %v6427
    %v8364 = vpack.c.b16 %v6436, %v6428
    %v8365 = vpack.c.b16 %v6437, %v6429
    %v8366 = vpack.c.b16 %v6438, %v6430
    %v8367 = vpack.c.b16 %v6439, %v6431
    %v8368 = vpack.c.b16 %v6440, %v6432
    %v8369 = vpack.c.b16 %v6441, %v6433
    %v8370 = vpack.c.b16 %v6450, %v6442
    %v8371 = vpack.c.b16 %v6451, %v6443
    %v8372 = vpack.c.b16 %v6452, %v6444
    %v8373 = vpack.c.b16 %v6453, %v6445
    %v8374 = vpack.c.b16 %v6454, %v6446
    %v8375 = vpack.c.b16 %v6455, %v6447
    %v8376 = vpack.c.b16 %v6456, %v6448
    %v8377 = vpack.c.b16 %v6457, %v6449
    %v8378 = vpack.c.b16 %v6466, %v6458
    %v8379 = vpack.c.b16 %v6467, %v6459
    %v8380 = vpack.c.b16 %v6468, %v6460
    %v8381 = vpack.c.b16 %v6469, %v6461
    %v8382 = vpack.c.b16 %v6470, %v6462
    %v8383 = vpack.c.b16 %v6471, %v6463
    %v8384 = vpack.c.b16 %v6472, %v6464
    %v8385 = vpack.c.b16 %v6473, %v6465
    %v8386 = vpack.c.b16 %v6482, %v6474
    %v8387 = vpack.c.b16 %v6483, %v6475
    %v8388 = vpack.c.b16 %v6484, %v6476
    %v8389 = vpack.c.b16 %v6485, %v6477
    %v8390 = vpack.c.b16 %v6486, %v6478
    %v8391 = vpack.c.b16 %v6487, %v6479
    %v8392 = vpack.c.b16 %v6488, %v6480
    %v8393 = vpack.c.b16 %v6489, %v6481
    %v8394 = vpack.c.b16 %v6498, %v6490
    %v8395 = vpack.c.b16 %v6499, %v6491
    %v8396 = vpack.c.b16 %v6500, %v6492
    %v8397 = vpack.c.b16 %v6501, %v6493
    %v8398 = vpack.c.b16 %v6502, %v6494
    %v8399 = vpack.c.b16 %v6503, %v6495
    %v8400 = vpack.c.b16 %v6504, %v6496
    %v8401 = vpack.c.b16 %v6505, %v6497
    %v8402 = vpack.c.b16 %v6514, %v6506
    %v8403 = vpack.c.b16 %v6515, %v6507
    %v8404 = vpack.c.b16 %v6516, %v6508
    %v8405 = vpack.c.b16 %v6517, %v6509
    %v8406 = vpack.c.b16 %v6518, %v6510
    %v8407 = vpack.c.b16 %v6519, %v6511
    %v8408 = vpack.c.b16 %v6520, %v6512
    %v8409 = vpack.c.b16 %v6521, %v6513
    %v8410 = vpack.c.b16 %v6530, %v6522
    %v8411 = vpack.c.b16 %v6531, %v6523
    %v8412 = vpack.c.b16 %v6532, %v6524
    %v8413 = vpack.c.b16 %v6533, %v6525
    %v8414 = vpack.c.b16 %v6534, %v6526
    %v8415 = vpack.c.b16 %v6535, %v6527
    %v8416 = vpack.c.b16 %v6536, %v6528
    %v8417 = vpack.c.b16 %v6537, %v6529
    %v8418 = vpack.c.b16 %v6546, %v6538
    %v8419 = vpack.c.b16 %v6547, %v6539
    %v8420 = vpack.c.b16 %v6548, %v6540
    %v8421 = vpack.c.b16 %v6549, %v6541
    %v8422 = vpack.c.b16 %v6550, %v6542
    %v8423 = vpack.c.b16 %v6551, %v6543
    %v8424 = vpack.c.b16 %v6552, %v6544
    %v8425 = vpack.c.b16 %v6553, %v6545
    %v8426 = vpack.c.b16 %v6562, %v6554
    %v8427 = vpack.c.b16 %v6563, %v6555
    %v8428 = vpack.c.b16 %v6564, %v6556
    %v8429 = vpack.c.b16 %v6565, %v6557
    %v8430 = vpack.c.b16 %v6566, %v6558
    %v8431 = vpack.c.b16 %v6567, %v6559
    %v8432 = vpack.c.b16 %v6568, %v6560
    %v8433 = vpack.c.b16 %v6569, %v6561
    %v8434 = vpack.c.b16 %v6578, %v6570
    %v8435 = vpack.c.b16 %v6579, %v6571
    %v8436 = vpack.c.b16 %v6580, %v6572
    %v8437 = vpack.c.b16 %v6581, %v6573
    %v8438 = vpack.c.b16 %v6582, %v6574
    %v8439 = vpack.c.b16 %v6583, %v6575
    %v8440 = vpack.c.b16 %v6584, %v6576
    %v8441 = vpack.c.b16 %v6585, %v6577
    %v8442 = vpack.c.b16 %v6594, %v6586
    %v8443 = vpack.c.b16 %v6595, %v6587
    %v8444 = vpack.c.b16 %v6596, %v6588
    %v8445 = vpack.c.b16 %v6597, %v6589
    %v8446 = vpack.c.b16 %v6598, %v6590
    %v8447 = vpack.c.b16 %v6599, %v6591
    %v8448 = vpack.c.b16 %v6600, %v6592
    %v8449 = vpack.c.b16 %v6601, %v6593
    %v8450 = vpack.c.b16 %v6610, %v6602
    %v8451 = vpack.c.b16 %v6611, %v6603
    %v8452 = vpack.c.b16 %v6612, %v6604
    %v8453 = vpack.c.b16 %v6613, %v6605
    %v8454 = vpack.c.b16 %v6614, %v6606
    %v8455 = vpack.c.b16 %v6615, %v6607
    %v8456 = vpack.c.b16 %v6616, %v6608
    %v8457 = vpack.c.b16 %v6617, %v6609
    %v8458 = vpack.c.b16 %v6626, %v6618
    %v8459 = vpack.c.b16 %v6627, %v6619
    %v8460 = vpack.c.b16 %v6628, %v6620
    %v8461 = vpack.c.b16 %v6629, %v6621
    %v8462 = vpack.c.b16 %v6630, %v6622
    %v8463 = vpack.c.b16 %v6631, %v6623
    %v8464 = vpack.c.b16 %v6632, %v6624
    %v8465 = vpack.c.b16 %v6633, %v6625
    %v8466 = vpack.c.b16 %v6642, %v6634
    %v8467 = vpack.c.b16 %v6643, %v6635
    %v8468 = vpack.c.b16 %v6644, %v6636
    %v8469 = vpack.c.b16 %v6645, %v6637
    %v8470 = vpack.c.b16 %v6646, %v6638
    %v8471 = vpack.c.b16 %v6647, %v6639
    %v8472 = vpack.c.b16 %v6648, %v6640
    %v8473 = vpack.c.b16 %v6649, %v6641
    %v8474 = vpack.c.b16 %v6658, %v6650
    %v8475 = vpack.c.b16 %v6659, %v6651
    %v8476 = vpack.c.b16 %v6660, %v6652
    %v8477 = vpack.c.b16 %v6661, %v6653
    %v8478 = vpack.c.b16 %v6662, %v6654
    %v8479 = vpack.c.b16 %v6663, %v6655
    %v8480 = vpack.c.b16 %v6664, %v6656
    %v8481 = vpack.c.b16 %v6665, %v6657
    %v8482 = vpack.c.b16 %v6674, %v6666
    %v8483 = vpack.c.b16 %v6675, %v6667
    %v8484 = vpack.c.b16 %v6676, %v6668
    %v8485 = vpack.c.b16 %v6677, %v6669
    %v8486 = vpack.c.b16 %v6678, %v6670
    %v8487 = vpack.c.b16 %v6679, %v6671
    %v8488 = vpack.c.b16 %v6680, %v6672
    %v8489 = vpack.c.b16 %v6681, %v6673
    %v8490 = vpack.c.b16 %v6690, %v6682
    %v8491 = vpack.c.b16 %v6691, %v6683
    %v8492 = vpack.c.b16 %v6692, %v6684
    %v8493 = vpack.c.b16 %v6693, %v6685
    %v8494 = vpack.c.b16 %v6694, %v6686
    %v8495 = vpack.c.b16 %v6695, %v6687
    %v8496 = vpack.c.b16 %v6696, %v6688
    %v8497 = vpack.c.b16 %v6697, %v6689
    %v8498 = vpack.c.b16 %v6706, %v6698
    %v8499 = vpack.c.b16 %v6707, %v6699
    %v8500 = vpack.c.b16 %v6708, %v6700
    %v8501 = vpack.c.b16 %v6709, %v6701
    %v8502 = vpack.c.b16 %v6710, %v6702
    %v8503 = vpack.c.b16 %v6711, %v6703
    %v8504 = vpack.c.b16 %v6712, %v6704
    %v8505 = vpack.c.b16 %v6713, %v6705
    %v8506 = vpack.c.b16 %v6722, %v6714
    %v8507 = vpack.c.b16 %v6723, %v6715
    %v8508 = vpack.c.b16 %v6724, %v6716
    %v8509 = vpack.c.b16 %v6725, %v6717
    %v8510 = vpack.c.b16 %v6726, %v6718
    %v8511 = vpack.c.b16 %v6727, %v6719
    %v8512 = vpack.c.b16 %v6728, %v6720
    %v8513 = vpack.c.b16 %v6729, %v6721
    %v8514 = vpack.c.b16 %v6738, %v6730
    %v8515 = vpack.c.b16 %v6739, %v6731
    %v8516 = vpack.c.b16 %v6740, %v6732
    %v8517 = vpack.c.b16 %v6741, %v6733
    %v8518 = vpack.c.b16 %v6742, %v6734
    %v8519 = vpack.c.b16 %v6743, %v6735
    %v8520 = vpack.c.b16 %v6744, %v6736
    %v8521 = vpack.c.b16 %v6745, %v6737
    %v8522 = vpack.c.b16 %v6754, %v6746
    %v8523 = vpack.c.b16 %v6755, %v6747
    %v8524 = vpack.c.b16 %v6756, %v6748
    %v8525 = vpack.c.b16 %v6757, %v6749
    %v8526 = vpack.c.b16 %v6758, %v6750
    %v8527 = vpack.c.b16 %v6759, %v6751
    %v8528 = vpack.c.b16 %v6760, %v6752
    %v8529 = vpack.c.b16 %v6761, %v6753
    %v8530 = vpack.c.b16 %v6770, %v6762
    %v8531 = vpack.c.b16 %v6771, %v6763
    %v8532 = vpack.c.b16 %v6772, %v6764
    %v8533 = vpack.c.b16 %v6773, %v6765
    %v8534 = vpack.c.b16 %v6774, %v6766
    %v8535 = vpack.c.b16 %v6775, %v6767
    %v8536 = vpack.c.b16 %v6776, %v6768
    %v8537 = vpack.c.b16 %v6777, %v6769
    %v8538 = vpack.c.b16 %v6786, %v6778
    %v8539 = vpack.c.b16 %v6787, %v6779
    %v8540 = vpack.c.b16 %v6788, %v6780
    %v8541 = vpack.c.b16 %v6789, %v6781
    %v8542 = vpack.c.b16 %v6790, %v6782
    %v8543 = vpack.c.b16 %v6791, %v6783
    %v8544 = vpack.c.b16 %v6792, %v6784
    %v8545 = vpack.c.b16 %v6793, %v6785
    %v8546 = vpack.c.b16 %v6802, %v6794
    %v8547 = vpack.c.b16 %v6803, %v6795
    %v8548 = vpack.c.b16 %v6804, %v6796
    %v8549 = vpack.c.b16 %v6805, %v6797
    %v8550 = vpack.c.b16 %v6806, %v6798
    %v8551 = vpack.c.b16 %v6807, %v6799
    %v8552 = vpack.c.b16 %v6808, %v6800
    %v8553 = vpack.c.b16 %v6809, %v6801
    %v8554 = vpack.c.b16 %v6818, %v6810
    %v8555 = vpack.c.b16 %v6819, %v6811
    %v8556 = vpack.c.b16 %v6820, %v6812
    %v8557 = vpack.c.b16 %v6821, %v6813
    %v8558 = vpack.c.b16 %v6822, %v6814
    %v8559 = vpack.c.b16 %v6823, %v6815
    %v8560 = vpack.c.b16 %v6824, %v6816
    %v8561 = vpack.c.b16 %v6825, %v6817
    %v8562 = vpack.c.b16 %v6834, %v6826
    %v8563 = vpack.c.b16 %v6835, %v6827
    %v8564 = vpack.c.b16 %v6836, %v6828
    %v8565 = vpack.c.b16 %v6837, %v6829
    %v8566 = vpack.c.b16 %v6838, %v6830
    %v8567 = vpack.c.b16 %v6839, %v6831
    %v8568 = vpack.c.b16 %v6840, %v6832
    %v8569 = vpack.c.b16 %v6841, %v6833
    %v8570 = vpack.c.b16 %v6850, %v6842
    %v8571 = vpack.c.b16 %v6851, %v6843
    %v8572 = vpack.c.b16 %v6852, %v6844
    %v8573 = vpack.c.b16 %v6853, %v6845
    %v8574 = vpack.c.b16 %v6854, %v6846
    %v8575 = vpack.c.b16 %v6855, %v6847
    %v8576 = vpack.c.b16 %v6856, %v6848
    %v8577 = vpack.c.b16 %v6857, %v6849
    %v8578 = vpack.c.b16 %v6866, %v6858
    %v8579 = vpack.c.b16 %v6867, %v6859
    %v8580 = vpack.c.b16 %v6868, %v6860
    %v8581 = vpack.c.b16 %v6869, %v6861
    %v8582 = vpack.c.b16 %v6870, %v6862
    %v8583 = vpack.c.b16 %v6871, %v6863
    %v8584 = vpack.c.b16 %v6872, %v6864
    %v8585 = vpack.c.b16 %v6873, %v6865
    %v8586 = vpack.c.b16 %v6882, %v6874
    %v8587 = vpack.c.b16 %v6883, %v6875
    %v8588 = vpack.c.b16 %v6884, %v6876
    %v8589 = vpack.c.b16 %v6885, %v6877
    %v8590 = vpack.c.b16 %v6886, %v6878
    %v8591 = vpack.c.b16 %v6887, %v6879
    %v8592 = vpack.c.b16 %v6888, %v6880
    %v8593 = vpack.c.b16 %v6889, %v6881
    %v8594 = vpack.c.b16 %v6898, %v6890
    %v8595 = vpack.c.b16 %v6899, %v6891
    %v8596 = vpack.c.b16 %v6900, %v6892
    %v8597 = vpack.c.b16 %v6901, %v6893
    %v8598 = vpack.c.b16 %v6902, %v6894
    %v8599 = vpack.c.b16 %v6903, %v6895
    %v8600 = vpack.c.b16 %v6904, %v6896
    %v8601 = vpack.c.b16 %v6905, %v6897
    %v8602 = vpack.c.b16 %v6914, %v6906
    %v8603 = vpack.c.b16 %v6915, %v6907
    %v8604 = vpack.c.b16 %v6916, %v6908
    %v8605 = vpack.c.b16 %v6917, %v6909
    %v8606 = vpack.c.b16 %v6918, %v6910
    %v8607 = vpack.c.b16 %v6919, %v6911
    %v8608 = vpack.c.b16 %v6920, %v6912
    %v8609 = vpack.c.b16 %v6921, %v6913
    %v8610 = vpack.c.b16 %v6930, %v6922
    %v8611 = vpack.c.b16 %v6931, %v6923
    %v8612 = vpack.c.b16 %v6932, %v6924
    %v8613 = vpack.c.b16 %v6933, %v6925
    %v8614 = vpack.c.b16 %v6934, %v6926
    %v8615 = vpack.c.b16 %v6935, %v6927
    %v8616 = vpack.c.b16 %v6936, %v6928
    %v8617 = vpack.c.b16 %v6937, %v6929
    %v8618 = vpack.c.b16 %v6946, %v6938
    %v8619 = vpack.c.b16 %v6947, %v6939
    %v8620 = vpack.c.b16 %v6948, %v6940
    %v8621 = vpack.c.b16 %v6949, %v6941
    %v8622 = vpack.c.b16 %v6950, %v6942
    %v8623 = vpack.c.b16 %v6951, %v6943
    %v8624 = vpack.c.b16 %v6952, %v6944
    %v8625 = vpack.c.b16 %v6953, %v6945
    %v8626 = vpack.c.b16 %v6962, %v6954
    %v8627 = vpack.c.b16 %v6963, %v6955
    %v8628 = vpack.c.b16 %v6964, %v6956
    %v8629 = vpack.c.b16 %v6965, %v6957
    %v8630 = vpack.c.b16 %v6966, %v6958
    %v8631 = vpack.c.b16 %v6967, %v6959
    %v8632 = vpack.c.b16 %v6968, %v6960
    %v8633 = vpack.c.b16 %v6969, %v6961
    %v8634 = vpack.c.b16 %v6978, %v6970
    %v8635 = vpack.c.b16 %v6979, %v6971
    %v8636 = vpack.c.b16 %v6980, %v6972
    %v8637 = vpack.c.b16 %v6981, %v6973
    %v8638 = vpack.c.b16 %v6982, %v6974
    %v8639 = vpack.c.b16 %v6983, %v6975
    %v8640 = vpack.c.b16 %v6984, %v6976
    %v8641 = vpack.c.b16 %v6985, %v6977
    %v8642 = vpack.c.b16 %v6994, %v6986
    %v8643 = vpack.c.b16 %v6995, %v6987
    %v8644 = vpack.c.b16 %v6996, %v6988
    %v8645 = vpack.c.b16 %v6997, %v6989
    %v8646 = vpack.c.b16 %v6998, %v6990
    %v8647 = vpack.c.b16 %v6999, %v6991
    %v8648 = vpack.c.b16 %v7000, %v6992
    %v8649 = vpack.c.b16 %v7001, %v6993
    %v8650 = vpack.c.b16 %v7010, %v7002
    %v8651 = vpack.c.b16 %v7011, %v7003
    %v8652 = vpack.c.b16 %v7012, %v7004
    %v8653 = vpack.c.b16 %v7013, %v7005
    %v8654 = vpack.c.b16 %v7014, %v7006
    %v8655 = vpack.c.b16 %v7015, %v7007
    %v8656 = vpack.c.b16 %v7016, %v7008
    %v8657 = vpack.c.b16 %v7017, %v7009
    %v8658 = vpack.c.b16 %v7026, %v7018
    %v8659 = vpack.c.b16 %v7027, %v7019
    %v8660 = vpack.c.b16 %v7028, %v7020
    %v8661 = vpack.c.b16 %v7029, %v7021
    %v8662 = vpack.c.b16 %v7030, %v7022
    %v8663 = vpack.c.b16 %v7031, %v7023
    %v8664 = vpack.c.b16 %v7032, %v7024
    %v8665 = vpack.c.b16 %v7033, %v7025
    %v8666 = vpack.c.b16 %v7042, %v7034
    %v8667 = vpack.c.b16 %v7043, %v7035
    %v8668 = vpack.c.b16 %v7044, %v7036
    %v8669 = vpack.c.b16 %v7045, %v7037
    %v8670 = vpack.c.b16 %v7046, %v7038
    %v8671 = vpack.c.b16 %v7047, %v7039
    %v8672 = vpack.c.b16 %v7048, %v7040
    %v8673 = vpack.c.b16 %v7049, %v7041
    %v8674 = vpack.c.b16 %v7058, %v7050
    %v8675 = vpack.c.b16 %v7059, %v7051
    %v8676 = vpack.c.b16 %v7060, %v7052
    %v8677 = vpack.c.b16 %v7061, %v7053
    %v8678 = vpack.c.b16 %v7062, %v7054
    %v8679 = vpack.c.b16 %v7063, %v7055
    %v8680 = vpack.c.b16 %v7064, %v7056
    %v8681 = vpack.c.b16 %v7065, %v7057
    %v8682 = vpack.c.b16 %v7074, %v7066
    %v8683 = vpack.c.b16 %v7075, %v7067
    %v8684 = vpack.c.b16 %v7076, %v7068
    %v8685 = vpack.c.b16 %v7077, %v7069
    %v8686 = vpack.c.b16 %v7078, %v7070
    %v8687 = vpack.c.b16 %v7079, %v7071
    %v8688 = vpack.c.b16 %v7080, %v7072
    %v8689 = vpack.c.b16 %v7081, %v7073
    %v8690 = vpack.c.b16 %v7090, %v7082
    %v8691 = vpack.c.b16 %v7091, %v7083
    %v8692 = vpack.c.b16 %v7092, %v7084
    %v8693 = vpack.c.b16 %v7093, %v7085
    %v8694 = vpack.c.b16 %v7094, %v7086
    %v8695 = vpack.c.b16 %v7095, %v7087
    %v8696 = vpack.c.b16 %v7096, %v7088
    %v8697 = vpack.c.b16 %v7097, %v7089
    %v8698 = vpack.c.b16 %v7106, %v7098
    %v8699 = vpack.c.b16 %v7107, %v7099
    %v8700 = vpack.c.b16 %v7108, %v7100
    %v8701 = vpack.c.b16 %v7109, %v7101
    %v8702 = vpack.c.b16 %v7110, %v7102
    %v8703 = vpack.c.b16 %v7111, %v7103
    %v8704 = vpack.c.b16 %v7112, %v7104
    %v8705 = vpack.c.b16 %v7113, %v7105
    %v8706 = vpack.c.b16 %v7122, %v7114
    %v8707 = vpack.c.b16 %v7123, %v7115
    %v8708 = vpack.c.b16 %v7124, %v7116
    %v8709 = vpack.c.b16 %v7125, %v7117
    %v8710 = vpack.c.b16 %v7126, %v7118
    %v8711 = vpack.c.b16 %v7127, %v7119
    %v8712 = vpack.c.b16 %v7128, %v7120
    %v8713 = vpack.c.b16 %v7129, %v7121
    %v8714 = vpack.c.b16 %v7138, %v7130
    %v8715 = vpack.c.b16 %v7139, %v7131
    %v8716 = vpack.c.b16 %v7140, %v7132
    %v8717 = vpack.c.b16 %v7141, %v7133
    %v8718 = vpack.c.b16 %v7142, %v7134
    %v8719 = vpack.c.b16 %v7143, %v7135
    %v8720 = vpack.c.b16 %v7144, %v7136
    %v8721 = vpack.c.b16 %v7145, %v7137
    %v8722 = vpack.c.b16 %v7154, %v7146
    %v8723 = vpack.c.b16 %v7155, %v7147
    %v8724 = vpack.c.b16 %v7156, %v7148
    %v8725 = vpack.c.b16 %v7157, %v7149
    %v8726 = vpack.c.b16 %v7158, %v7150
    %v8727 = vpack.c.b16 %v7159, %v7151
    %v8728 = vpack.c.b16 %v7160, %v7152
    %v8729 = vpack.c.b16 %v7161, %v7153
    %v8730 = vpack.c.b16 %v7170, %v7162
    %v8731 = vpack.c.b16 %v7171, %v7163
    %v8732 = vpack.c.b16 %v7172, %v7164
    %v8733 = vpack.c.b16 %v7173, %v7165
    %v8734 = vpack.c.b16 %v7174, %v7166
    %v8735 = vpack.c.b16 %v7175, %v7167
    %v8736 = vpack.c.b16 %v7176, %v7168
    %v8737 = vpack.c.b16 %v7177, %v7169
    %v8738 = vpack.c.b16 %v7186, %v7178
    %v8739 = vpack.c.b16 %v7187, %v7179
    %v8740 = vpack.c.b16 %v7188, %v7180
    %v8741 = vpack.c.b16 %v7189, %v7181
    %v8742 = vpack.c.b16 %v7190, %v7182
    %v8743 = vpack.c.b16 %v7191, %v7183
    %v8744 = vpack.c.b16 %v7192, %v7184
    %v8745 = vpack.c.b16 %v7193, %v7185
    %v8746 = vpack.c.b16 %v7202, %v7194
    %v8747 = vpack.c.b16 %v7203, %v7195
    %v8748 = vpack.c.b16 %v7204, %v7196
    %v8749 = vpack.c.b16 %v7205, %v7197
    %v8750 = vpack.c.b16 %v7206, %v7198
    %v8751 = vpack.c.b16 %v7207, %v7199
    %v8752 = vpack.c.b16 %v7208, %v7200
    %v8753 = vpack.c.b16 %v7209, %v7201
    %v8754 = vpack.c.b16 %v7218, %v7210
    %v8755 = vpack.c.b16 %v7219, %v7211
    %v8756 = vpack.c.b16 %v7220, %v7212
    %v8757 = vpack.c.b16 %v7221, %v7213
    %v8758 = vpack.c.b16 %v7222, %v7214
    %v8759 = vpack.c.b16 %v7223, %v7215
    %v8760 = vpack.c.b16 %v7224, %v7216
    %v8761 = vpack.c.b16 %v7225, %v7217
    %v8762 = vpack.c.b16 %v7234, %v7226
    %v8763 = vpack.c.b16 %v7235, %v7227
    %v8764 = vpack.c.b16 %v7236, %v7228
    %v8765 = vpack.c.b16 %v7237, %v7229
    %v8766 = vpack.c.b16 %v7238, %v7230
    %v8767 = vpack.c.b16 %v7239, %v7231
    %v8768 = vpack.c.b16 %v7240, %v7232
    %v8769 = vpack.c.b16 %v7241, %v7233
    %v8770 = vpack.c.b16 %v7250, %v7242
    %v8771 = vpack.c.b16 %v7251, %v7243
    %v8772 = vpack.c.b16 %v7252, %v7244
    %v8773 = vpack.c.b16 %v7253, %v7245
    %v8774 = vpack.c.b16 %v7254, %v7246
    %v8775 = vpack.c.b16 %v7255, %v7247
    %v8776 = vpack.c.b16 %v7256, %v7248
    %v8777 = vpack.c.b16 %v7257, %v7249
    %v8778 = vpack.c.b16 %v7266, %v7258
    %v8779 = vpack.c.b16 %v7267, %v7259
    %v8780 = vpack.c.b16 %v7268, %v7260
    %v8781 = vpack.c.b16 %v7269, %v7261
    %v8782 = vpack.c.b16 %v7270, %v7262
    %v8783 = vpack.c.b16 %v7271, %v7263
    %v8784 = vpack.c.b16 %v7272, %v7264
    %v8785 = vpack.c.b16 %v7273, %v7265
    %v8786 = vpack.c.b16 %v7282, %v7274
    %v8787 = vpack.c.b16 %v7283, %v7275
    %v8788 = vpack.c.b16 %v7284, %v7276
    %v8789 = vpack.c.b16 %v7285, %v7277
    %v8790 = vpack.c.b16 %v7286, %v7278
    %v8791 = vpack.c.b16 %v7287, %v7279
    %v8792 = vpack.c.b16 %v7288, %v7280
    %v8793 = vpack.c.b16 %v7289, %v7281
    %v8794 = vpack.c.b16 %v7298, %v7290
    %v8795 = vpack.c.b16 %v7299, %v7291
    %v8796 = vpack.c.b16 %v7300, %v7292
    %v8797 = vpack.c.b16 %v7301, %v7293
    %v8798 = vpack.c.b16 %v7302, %v7294
    %v8799 = vpack.c.b16 %v7303, %v7295
    %v8800 = vpack.c.b16 %v7304, %v7296
    %v8801 = vpack.c.b16 %v7305, %v7297
    %v8802 = vpack.c.b16 %v7314, %v7306
    %v8803 = vpack.c.b16 %v7315, %v7307
    %v8804 = vpack.c.b16 %v7316, %v7308
    %v8805 = vpack.c.b16 %v7317, %v7309
    %v8806 = vpack.c.b16 %v7318, %v7310
    %v8807 = vpack.c.b16 %v7319, %v7311
    %v8808 = vpack.c.b16 %v7320, %v7312
    %v8809 = vpack.c.b16 %v7321, %v7313
    %v8810 = vpack.c.b16 %v7330, %v7322
    %v8811 = vpack.c.b16 %v7331, %v7323
    %v8812 = vpack.c.b16 %v7332, %v7324
    %v8813 = vpack.c.b16 %v7333, %v7325
    %v8814 = vpack.c.b16 %v7334, %v7326
    %v8815 = vpack.c.b16 %v7335, %v7327
    %v8816 = vpack.c.b16 %v7336, %v7328
    %v8817 = vpack.c.b16 %v7337, %v7329
    %v8818 = vpack.c.b16 %v7346, %v7338
    %v8819 = vpack.c.b16 %v7347, %v7339
    %v8820 = vpack.c.b16 %v7348, %v7340
    %v8821 = vpack.c.b16 %v7349, %v7341
    %v8822 = vpack.c.b16 %v7350, %v7342
    %v8823 = vpack.c.b16 %v7351, %v7343
    %v8824 = vpack.c.b16 %v7352, %v7344
    %v8825 = vpack.c.b16 %v7353, %v7345
    %v8826 = vpack.c.b16 %v7362, %v7354
    %v8827 = vpack.c.b16 %v7363, %v7355
    %v8828 = vpack.c.b16 %v7364, %v7356
    %v8829 = vpack.c.b16 %v7365, %v7357
    %v8830 = vpack.c.b16 %v7366, %v7358
    %v8831 = vpack.c.b16 %v7367, %v7359
    %v8832 = vpack.c.b16 %v7368, %v7360
    %v8833 = vpack.c.b16 %v7369, %v7361
    %v8834 = vpack.c.b16 %v7378, %v7370
    %v8835 = vpack.c.b16 %v7379, %v7371
    %v8836 = vpack.c.b16 %v7380, %v7372
    %v8837 = vpack.c.b16 %v7381, %v7373
    %v8838 = vpack.c.b16 %v7382, %v7374
    %v8839 = vpack.c.b16 %v7383, %v7375
    %v8840 = vpack.c.b16 %v7384, %v7376
    %v8841 = vpack.c.b16 %v7385, %v7377
    %v8842 = vpack.c.b16 %v7394, %v7386
    %v8843 = vpack.c.b16 %v7395, %v7387
    %v8844 = vpack.c.b16 %v7396, %v7388
    %v8845 = vpack.c.b16 %v7397, %v7389
    %v8846 = vpack.c.b16 %v7398, %v7390
    %v8847 = vpack.c.b16 %v7399, %v7391
    %v8848 = vpack.c.b16 %v7400, %v7392
    %v8849 = vpack.c.b16 %v7401, %v7393
    %v8850 = vpack.c.b16 %v7410, %v7402
    %v8851 = vpack.c.b16 %v7411, %v7403
    %v8852 = vpack.c.b16 %v7412, %v7404
    %v8853 = vpack.c.b16 %v7413, %v7405
    %v8854 = vpack.c.b16 %v7414, %v7406
    %v8855 = vpack.c.b16 %v7415, %v7407
    %v8856 = vpack.c.b16 %v7416, %v7408
    %v8857 = vpack.c.b16 %v7417, %v7409
    %v8858 = vpack.c.b16 %v7426, %v7418
    %v8859 = vpack.c.b16 %v7427, %v7419
    %v8860 = vpack.c.b16 %v7428, %v7420
    %v8861 = vpack.c.b16 %v7429, %v7421
    %v8862 = vpack.c.b16 %v7430, %v7422
    %v8863 = vpack.c.b16 %v7431, %v7423
    %v8864 = vpack.c.b16 %v7432, %v7424
    %v8865 = vpack.c.b16 %v7433, %v7425
    %v8866 = vpack.c.b16 %v7442, %v7434
    %v8867 = vpack.c.b16 %v7443, %v7435
    %v8868 = vpack.c.b16 %v7444, %v7436
    %v8869 = vpack.c.b16 %v7445, %v7437
    %v8870 = vpack.c.b16 %v7446, %v7438
    %v8871 = vpack.c.b16 %v7447, %v7439
    %v8872 = vpack.c.b16 %v7448, %v7440
    %v8873 = vpack.c.b16 %v7449, %v7441
    %v8874 = vpack.c.b16 %v7458, %v7450
    %v8875 = vpack.c.b16 %v7459, %v7451
    %v8876 = vpack.c.b16 %v7460, %v7452
    %v8877 = vpack.c.b16 %v7461, %v7453
    %v8878 = vpack.c.b16 %v7462, %v7454
    %v8879 = vpack.c.b16 %v7463, %v7455
    %v8880 = vpack.c.b16 %v7464, %v7456
    %v8881 = vpack.c.b16 %v7465, %v7457
    %v8882 = vpack.c.b16 %v7474, %v7466
    %v8883 = vpack.c.b16 %v7475, %v7467
    %v8884 = vpack.c.b16 %v7476, %v7468
    %v8885 = vpack.c.b16 %v7477, %v7469
    %v8886 = vpack.c.b16 %v7478, %v7470
    %v8887 = vpack.c.b16 %v7479, %v7471
    %v8888 = vpack.c.b16 %v7480, %v7472
    %v8889 = vpack.c.b16 %v7481, %v7473
    %v8890 = vpack.c.b16 %v7490, %v7482
    %v8891 = vpack.c.b16 %v7491, %v7483
    %v8892 = vpack.c.b16 %v7492, %v7484
    %v8893 = vpack.c.b16 %v7493, %v7485
    %v8894 = vpack.c.b16 %v7494, %v7486
    %v8895 = vpack.c.b16 %v7495, %v7487
    %v8896 = vpack.c.b16 %v7496, %v7488
    %v8897 = vpack.c.b16 %v7497, %v7489
    %v8898 = vpack.c.b16 %v7506, %v7498
    %v8899 = vpack.c.b16 %v7507, %v7499
    %v8900 = vpack.c.b16 %v7508, %v7500
    %v8901 = vpack.c.b16 %v7509, %v7501
    %v8902 = vpack.c.b16 %v7510, %v7502
    %v8903 = vpack.c.b16 %v7511, %v7503
    %v8904 = vpack.c.b16 %v7512, %v7504
    %v8905 = vpack.c.b16 %v7513, %v7505
    %v8906 = vpack.c.b16 %v7522, %v7514
    %v8907 = vpack.c.b16 %v7523, %v7515
    %v8908 = vpack.c.b16 %v7524, %v7516
    %v8909 = vpack.c.b16 %v7525, %v7517
    %v8910 = vpack.c.b16 %v7526, %v7518
    %v8911 = vpack.c.b16 %v7527, %v7519
    %v8912 = vpack.c.b16 %v7528, %v7520
    %v8913 = vpack.c.b16 %v7529, %v7521
    %v8914 = vpack.c.b16 %v7538, %v7530
    %v8915 = vpack.c.b16 %v7539, %v7531
    %v8916 = vpack.c.b16 %v7540, %v7532
    %v8917 = vpack.c.b16 %v7541, %v7533
    %v8918 = vpack.c.b16 %v7542, %v7534
    %v8919 = vpack.c.b16 %v7543, %v7535
    %v8920 = vpack.c.b16 %v7544, %v7536
    %v8921 = vpack.c.b16 %v7545, %v7537
    %v8922 = vpack.c.b16 %v7554, %v7546
    %v8923 = vpack.c.b16 %v7555, %v7547
    %v8924 = vpack.c.b16 %v7556, %v7548
    %v8925 = vpack.c.b16 %v7557, %v7549
    %v8926 = vpack.c.b16 %v7558, %v7550
    %v8927 = vpack.c.b16 %v7559, %v7551
    %v8928 = vpack.c.b16 %v7560, %v7552
    %v8929 = vpack.c.b16 %v7561, %v7553
    %v8930 = vpack.c.b16 %v7570, %v7562
    %v8931 = vpack.c.b16 %v7571, %v7563
    %v8932 = vpack.c.b16 %v7572, %v7564
    %v8933 = vpack.c.b16 %v7573, %v7565
    %v8934 = vpack.c.b16 %v7574, %v7566
    %v8935 = vpack.c.b16 %v7575, %v7567
    %v8936 = vpack.c.b16 %v7576, %v7568
    %v8937 = vpack.c.b16 %v7577, %v7569
    %v8938 = vpack.c.b16 %v7586, %v7578
    %v8939 = vpack.c.b16 %v7587, %v7579
    %v8940 = vpack.c.b16 %v7588, %v7580
    %v8941 = vpack.c.b16 %v7589, %v7581
    %v8942 = vpack.c.b16 %v7590, %v7582
    %v8943 = vpack.c.b16 %v7591, %v7583
    %v8944 = vpack.c.b16 %v7592, %v7584
    %v8945 = vpack.c.b16 %v7593, %v7585
    %v8946 = vpack.c.b16 %v7602, %v7594
    %v8947 = vpack.c.b16 %v7603, %v7595
    %v8948 = vpack.c.b16 %v7604, %v7596
    %v8949 = vpack.c.b16 %v7605, %v7597
    %v8950 = vpack.c.b16 %v7606, %v7598
    %v8951 = vpack.c.b16 %v7607, %v7599
    %v8952 = vpack.c.b16 %v7608, %v7600
    %v8953 = vpack.c.b16 %v7609, %v7601
    %v8954 = vpack.c.b16 %v7618, %v7610
    %v8955 = vpack.c.b16 %v7619, %v7611
    %v8956 = vpack.c.b16 %v7620, %v7612
    %v8957 = vpack.c.b16 %v7621, %v7613
    %v8958 = vpack.c.b16 %v7622, %v7614
    %v8959 = vpack.c.b16 %v7623, %v7615
    %v8960 = vpack.c.b16 %v7624, %v7616
    %v8961 = vpack.c.b16 %v7625, %v7617
    %v8962 = vpack.c.b16 %v7634, %v7626
    %v8963 = vpack.c.b16 %v7635, %v7627
    %v8964 = vpack.c.b16 %v7636, %v7628
    %v8965 = vpack.c.b16 %v7637, %v7629
    %v8966 = vpack.c.b16 %v7638, %v7630
    %v8967 = vpack.c.b16 %v7639, %v7631
    %v8968 = vpack.c.b16 %v7640, %v7632
    %v8969 = vpack.c.b16 %v7641, %v7633
    %v8970 = vpack.c.b16 %v7650, %v7642
    %v8971 = vpack.c.b16 %v7651, %v7643
    %v8972 = vpack.c.b16 %v7652, %v7644
    %v8973 = vpack.c.b16 %v7653, %v7645
    %v8974 = vpack.c.b16 %v7654, %v7646
    %v8975 = vpack.c.b16 %v7655, %v7647
    %v8976 = vpack.c.b16 %v7656, %v7648
    %v8977 = vpack.c.b16 %v7657, %v7649
    %v8978 = vpack.c.b16 %v7666, %v7658
    %v8979 = vpack.c.b16 %v7667, %v7659
    %v8980 = vpack.c.b16 %v7668, %v7660
    %v8981 = vpack.c.b16 %v7669, %v7661
    %v8982 = vpack.c.b16 %v7670, %v7662
    %v8983 = vpack.c.b16 %v7671, %v7663
    %v8984 = vpack.c.b16 %v7672, %v7664
    %v8985 = vpack.c.b16 %v7673, %v7665
    %v8986 = vpack.c.b16 %v7682, %v7674
    %v8987 = vpack.c.b16 %v7683, %v7675
    %v8988 = vpack.c.b16 %v7684, %v7676
    %v8989 = vpack.c.b16 %v7685, %v7677
    %v8990 = vpack.c.b16 %v7686, %v7678
    %v8991 = vpack.c.b16 %v7687, %v7679
    %v8992 = vpack.c.b16 %v7688, %v7680
    %v8993 = vpack.c.b16 %v7689, %v7681
    %v8994 = vpack.c.b16 %v7698, %v7690
    %v8995 = vpack.c.b16 %v7699, %v7691
    %v8996 = vpack.c.b16 %v7700, %v7692
    %v8997 = vpack.c.b16 %v7701, %v7693
    %v8998 = vpack.c.b16 %v7702, %v7694
    %v8999 = vpack.c.b16 %v7703, %v7695
    %v9000 = vpack.c.b16 %v7704, %v7696
    %v9001 = vpack.c.b16 %v7705, %v7697
    %v9002 = vpack.c.b16 %v7714, %v7706
    %v9003 = vpack.c.b16 %v7715, %v7707
    %v9004 = vpack.c.b16 %v7716, %v7708
    %v9005 = vpack.c.b16 %v7717, %v7709
    %v9006 = vpack.c.b16 %v7718, %v7710
    %v9007 = vpack.c.b16 %v7719, %v7711
    %v9008 = vpack.c.b16 %v7720, %v7712
    %v9009 = vpack.c.b16 %v7721, %v7713
    %v9010 = vpack.c.b16 %v7730, %v7722
    %v9011 = vpack.c.b16 %v7731, %v7723
    %v9012 = vpack.c.b16 %v7732, %v7724
    %v9013 = vpack.c.b16 %v7733, %v7725
    %v9014 = vpack.c.b16 %v7734, %v7726
    %v9015 = vpack.c.b16 %v7735, %v7727
    %v9016 = vpack.c.b16 %v7736, %v7728
    %v9017 = vpack.c.b16 %v7737, %v7729
    %v9018 = vpack.c.b16 %v7746, %v7738
    %v9019 = vpack.c.b16 %v7747, %v7739
    %v9020 = vpack.c.b16 %v7748, %v7740
    %v9021 = vpack.c.b16 %v7749, %v7741
    %v9022 = vpack.c.b16 %v7750, %v7742
    %v9023 = vpack.c.b16 %v7751, %v7743
    %v9024 = vpack.c.b16 %v7752, %v7744
    %v9025 = vpack.c.b16 %v7753, %v7745
    %v9026 = vpack.c.b16 %v7762, %v7754
    %v9027 = vpack.c.b16 %v7763, %v7755
    %v9028 = vpack.c.b16 %v7764, %v7756
    %v9029 = vpack.c.b16 %v7765, %v7757
    %v9030 = vpack.c.b16 %v7766, %v7758
    %v9031 = vpack.c.b16 %v7767, %v7759
    %v9032 = vpack.c.b16 %v7768, %v7760
    %v9033 = vpack.c.b16 %v7769, %v7761
    %v9034 = vpack.c.b16 %v7778, %v7770
    %v9035 = vpack.c.b16 %v7779, %v7771
    %v9036 = vpack.c.b16 %v7780, %v7772
    %v9037 = vpack.c.b16 %v7781, %v7773
    %v9038 = vpack.c.b16 %v7782, %v7774
    %v9039 = vpack.c.b16 %v7783, %v7775
    %v9040 = vpack.c.b16 %v7784, %v7776
    %v9041 = vpack.c.b16 %v7785, %v7777
    %v9042 = vpack.c.b16 %v7794, %v7786
    %v9043 = vpack.c.b16 %v7795, %v7787
    %v9044 = vpack.c.b16 %v7796, %v7788
    %v9045 = vpack.c.b16 %v7797, %v7789
    %v9046 = vpack.c.b16 %v7798, %v7790
    %v9047 = vpack.c.b16 %v7799, %v7791
    %v9048 = vpack.c.b16 %v7800, %v7792
    %v9049 = vpack.c.b16 %v7801, %v7793
    %v9050 = vpack.c.b16 %v7810, %v7802
    %v9051 = vpack.c.b16 %v7811, %v7803
    %v9052 = vpack.c.b16 %v7812, %v7804
    %v9053 = vpack.c.b16 %v7813, %v7805
    %v9054 = vpack.c.b16 %v7814, %v7806
    %v9055 = vpack.c.b16 %v7815, %v7807
    %v9056 = vpack.c.b16 %v7816, %v7808
    %v9057 = vpack.c.b16 %v7817, %v7809
    %v9058 = vpack.c.b16 %v7826, %v7818
    %v9059 = vpack.c.b16 %v7827, %v7819
    %v9060 = vpack.c.b16 %v7828, %v7820
    %v9061 = vpack.c.b16 %v7829, %v7821
    %v9062 = vpack.c.b16 %v7830, %v7822
    %v9063 = vpack.c.b16 %v7831, %v7823
    %v9064 = vpack.c.b16 %v7832, %v7824
    %v9065 = vpack.c.b16 %v7833, %v7825
    %v9066 = vpack.c.b16 %v7842, %v7834
    %v9067 = vpack.c.b16 %v7843, %v7835
    %v9068 = vpack.c.b16 %v7844, %v7836
    %v9069 = vpack.c.b16 %v7845, %v7837
    %v9070 = vpack.c.b16 %v7846, %v7838
    %v9071 = vpack.c.b16 %v7847, %v7839
    %v9072 = vpack.c.b16 %v7848, %v7840
    %v9073 = vpack.c.b16 %v7849, %v7841
    %v9074 = vpack.c.b16 %v7858, %v7850
    %v9075 = vpack.c.b16 %v7859, %v7851
    %v9076 = vpack.c.b16 %v7860, %v7852
    %v9077 = vpack.c.b16 %v7861, %v7853
    %v9078 = vpack.c.b16 %v7862, %v7854
    %v9079 = vpack.c.b16 %v7863, %v7855
    %v9080 = vpack.c.b16 %v7864, %v7856
    %v9081 = vpack.c.b16 %v7865, %v7857
    %v9082 = vpack.c.b16 %v7874, %v7866
    %v9083 = vpack.c.b16 %v7875, %v7867
    %v9084 = vpack.c.b16 %v7876, %v7868
    %v9085 = vpack.c.b16 %v7877, %v7869
    %v9086 = vpack.c.b16 %v7878, %v7870
    %v9087 = vpack.c.b16 %v7879, %v7871
    %v9088 = vpack.c.b16 %v7880, %v7872
    %v9089 = vpack.c.b16 %v7881, %v7873
    %v9090 = vpack.c.b16 %v7890, %v7882
    %v9091 = vpack.c.b16 %v7891, %v7883
    %v9092 = vpack.c.b16 %v7892, %v7884
    %v9093 = vpack.c.b16 %v7893, %v7885
    %v9094 = vpack.c.b16 %v7894, %v7886
    %v9095 = vpack.c.b16 %v7895, %v7887
    %v9096 = vpack.c.b16 %v7896, %v7888
    %v9097 = vpack.c.b16 %v7897, %v7889
    %v9098 = vpack.c.b16 %v7906, %v7898
    %v9099 = vpack.c.b16 %v7907, %v7899
    %v9100 = vpack.c.b16 %v7908, %v7900
    %v9101 = vpack.c.b16 %v7909, %v7901
    %v9102 = vpack.c.b16 %v7910, %v7902
    %v9103 = vpack.c.b16 %v7911, %v7903
    %v9104 = vpack.c.b16 %v7912, %v7904
    %v9105 = vpack.c.b16 %v7913, %v7905
    %v9106 = vpack.c.b16 %v7922, %v7914
    %v9107 = vpack.c.b16 %v7923, %v7915
    %v9108 = vpack.c.b16 %v7924, %v7916
    %v9109 = vpack.c.b16 %v7925, %v7917
    %v9110 = vpack.c.b16 %v7926, %v7918
    %v9111 = vpack.c.b16 %v7927, %v7919
    %v9112 = vpack.c.b16 %v7928, %v7920
    %v9113 = vpack.c.b16 %v7929, %v7921
    %v9114 = vpack.c.b16 %v7938, %v7930
    %v9115 = vpack.c.b16 %v7939, %v7931
    %v9116 = vpack.c.b16 %v7940, %v7932
    %v9117 = vpack.c.b16 %v7941, %v7933
    %v9118 = vpack.c.b16 %v7942, %v7934
    %v9119 = vpack.c.b16 %v7943, %v7935
    %v9120 = vpack.c.b16 %v7944, %v7936
    %v9121 = vpack.c.b16 %v7945, %v7937
    %v9122 = vpack.c.b16 %v7954, %v7946
    %v9123 = vpack.c.b16 %v7955, %v7947
    %v9124 = vpack.c.b16 %v7956, %v7948
    %v9125 = vpack.c.b16 %v7957, %v7949
    %v9126 = vpack.c.b16 %v7958, %v7950
    %v9127 = vpack.c.b16 %v7959, %v7951
    %v9128 = vpack.c.b16 %v7960, %v7952
    %v9129 = vpack.c.b16 %v7961, %v7953
    %v9130 = vpack.c.b16 %v7970, %v7962
    %v9131 = vpack.c.b16 %v7971, %v7963
    %v9132 = vpack.c.b16 %v7972, %v7964
    %v9133 = vpack.c.b16 %v7973, %v7965
    %v9134 = vpack.c.b16 %v7974, %v7966
    %v9135 = vpack.c.b16 %v7975, %v7967
    %v9136 = vpack.c.b16 %v7976, %v7968
    %v9137 = vpack.c.b16 %v7977, %v7969
    %v9138 = vpack.c.b16 %v7986, %v7978
    %v9139 = vpack.c.b16 %v7987, %v7979
    %v9140 = vpack.c.b16 %v7988, %v7980
    %v9141 = vpack.c.b16 %v7989, %v7981
    %v9142 = vpack.c.b16 %v7990, %v7982
    %v9143 = vpack.c.b16 %v7991, %v7983
    %v9144 = vpack.c.b16 %v7992, %v7984
    %v9145 = vpack.c.b16 %v7993, %v7985
    %v9146 = vpack.c.b16 %v8002, %v7994
    %v9147 = vpack.c.b16 %v8003, %v7995
    %v9148 = vpack.c.b16 %v8004, %v7996
    %v9149 = vpack.c.b16 %v8005, %v7997
    %v9150 = vpack.c.b16 %v8006, %v7998
    %v9151 = vpack.c.b16 %v8007, %v7999
    %v9152 = vpack.c.b16 %v8008, %v8000
    %v9153 = vpack.c.b16 %v8009, %v8001
    %v9154 = vpack.c.b16 %v8018, %v8010
    %v9155 = vpack.c.b16 %v8019, %v8011
    %v9156 = vpack.c.b16 %v8020, %v8012
    %v9157 = vpack.c.b16 %v8021, %v8013
    %v9158 = vpack.c.b16 %v8022, %v8014
    %v9159 = vpack.c.b16 %v8023, %v8015
    %v9160 = vpack.c.b16 %v8024, %v8016
    %v9161 = vpack.c.b16 %v8025, %v8017
    %v9162 = vpack.c.b16 %v8034, %v8026
    %v9163 = vpack.c.b16 %v8035, %v8027
    %v9164 = vpack.c.b16 %v8036, %v8028
    %v9165 = vpack.c.b16 %v8037, %v8029
    %v9166 = vpack.c.b16 %v8038, %v8030
    %v9167 = vpack.c.b16 %v8039, %v8031
    %v9168 = vpack.c.b16 %v8040, %v8032
    %v9169 = vpack.c.b16 %v8041, %v8033
    %v9170 = vpack.c.b16 %v8050, %v8042
    %v9171 = vpack.c.b16 %v8051, %v8043
    %v9172 = vpack.c.b16 %v8052, %v8044
    %v9173 = vpack.c.b16 %v8053, %v8045
    %v9174 = vpack.c.b16 %v8054, %v8046
    %v9175 = vpack.c.b16 %v8055, %v8047
    %v9176 = vpack.c.b16 %v8056, %v8048
    %v9177 = vpack.c.b16 %v8057, %v8049
    %v9178 = vpack.c.b16 %v8066, %v8058
    %v9179 = vpack.c.b16 %v8067, %v8059
    %v9180 = vpack.c.b16 %v8068, %v8060
    %v9181 = vpack.c.b16 %v8069, %v8061
    %v9182 = vpack.c.b16 %v8070, %v8062
    %v9183 = vpack.c.b16 %v8071, %v8063
    %v9184 = vpack.c.b16 %v8072, %v8064
    %v9185 = vpack.c.b16 %v8073, %v8065
    %v9186 = vpack.c.b16 %v8082, %v8074
    %v9187 = vpack.c.b16 %v8083, %v8075
    %v9188 = vpack.c.b16 %v8084, %v8076
    %v9189 = vpack.c.b16 %v8085, %v8077
    %v9190 = vpack.c.b16 %v8086, %v8078
    %v9191 = vpack.c.b16 %v8087, %v8079
    %v9192 = vpack.c.b16 %v8088, %v8080
    %v9193 = vpack.c.b16 %v8089, %v8081
    %v9194 = vpack.c.b16 %v8098, %v8090
    %v9195 = vpack.c.b16 %v8099, %v8091
    %v9196 = vpack.c.b16 %v8100, %v8092
    %v9197 = vpack.c.b16 %v8101, %v8093
    %v9198 = vpack.c.b16 %v8102, %v8094
    %v9199 = vpack.c.b16 %v8103, %v8095
    %v9200 = vpack.c.b16 %v8104, %v8096
    %v9201 = vpack.c.b16 %v8105, %v8097
    %v9202 = vpack.c.b16 %v8114, %v8106
    %v9203 = vpack.c.b16 %v8115, %v8107
    %v9204 = vpack.c.b16 %v8116, %v8108
    %v9205 = vpack.c.b16 %v8117, %v8109
    %v9206 = vpack.c.b16 %v8118, %v8110
    %v9207 = vpack.c.b16 %v8119, %v8111
    %v9208 = vpack.c.b16 %v8120, %v8112
    %v9209 = vpack.c.b16 %v8121, %v8113
    %v9210 = vpack.c.b16 %v8130, %v8122
    %v9211 = vpack.c.b16 %v8131, %v8123
    %v9212 = vpack.c.b16 %v8132, %v8124
    %v9213 = vpack.c.b16 %v8133, %v8125
    %v9214 = vpack.c.b16 %v8134, %v8126
    %v9215 = vpack.c.b16 %v8135, %v8127
    %v9216 = vpack.c.b16 %v8136, %v8128
    %v9217 = vpack.c.b16 %v8137, %v8129
    %v9218 = vpack.c.b16 %v8146, %v8138
    %v9219 = vpack.c.b16 %v8147, %v8139
    %v9220 = vpack.c.b16 %v8148, %v8140
    %v9221 = vpack.c.b16 %v8149, %v8141
    %v9222 = vpack.c.b16 %v8150, %v8142
    %v9223 = vpack.c.b16 %v8151, %v8143
    %v9224 = vpack.c.b16 %v8152, %v8144
    %v9225 = vpack.c.b16 %v8153, %v8145
    %v9226 = vpack.c.b16 %v8162, %v8154
    %v9227 = vpack.c.b16 %v8163, %v8155
    %v9228 = vpack.c.b16 %v8164, %v8156
    %v9229 = vpack.c.b16 %v8165, %v8157
    %v9230 = vpack.c.b16 %v8166, %v8158
    %v9231 = vpack.c.b16 %v8167, %v8159
    %v9232 = vpack.c.b16 %v8168, %v8160
    %v9233 = vpack.c.b16 %v8169, %v8161
    %v9234 = vpack.c.b16 %v8178, %v8170
    %v9235 = vpack.c.b16 %v8179, %v8171
    %v9236 = vpack.c.b16 %v8180, %v8172
    %v9237 = vpack.c.b16 %v8181, %v8173
    %v9238 = vpack.c.b16 %v8182, %v8174
    %v9239 = vpack.c.b16 %v8183, %v8175
    %v9240 = vpack.c.b16 %v8184, %v8176
    %v9241 = vpack.c.b16 %v8185, %v8177
    %v9242 = vpack.c.b16 %v8194, %v8186
    %v9243 = vpack.c.b16 %v8195, %v8187
    %v9244 = vpack.c.b16 %v8196, %v8188
    %v9245 = vpack.c.b16 %v8197, %v8189
    %v9246 = vpack.c.b16 %v8198, %v8190
    %v9247 = vpack.c.b16 %v8199, %v8191
    %v9248 = vpack.c.b16 %v8200, %v8192
    %v9249 = vpack.c.b16 %v8201, %v8193
    %v9250 = vpack.c.b16 %v8210, %v8202
    %v9251 = vpack.c.b16 %v8211, %v8203
    %v9252 = vpack.c.b16 %v8212, %v8204
    %v9253 = vpack.c.b16 %v8213, %v8205
    %v9254 = vpack.c.b16 %v8214, %v8206
    %v9255 = vpack.c.b16 %v8215, %v8207
    %v9256 = vpack.c.b16 %v8216, %v8208
    %v9257 = vpack.c.b16 %v8217, %v8209
    %v9258 = vpack.c.b16 %v8226, %v8218
    %v9259 = vpack.c.b16 %v8227, %v8219
    %v9260 = vpack.c.b16 %v8228, %v8220
    %v9261 = vpack.c.b16 %v8229, %v8221
    %v9262 = vpack.c.b16 %v8230, %v8222
    %v9263 = vpack.c.b16 %v8231, %v8223
    %v9264 = vpack.c.b16 %v8232, %v8224
    %v9265 = vpack.c.b16 %v8233, %v8225
    %v9266 = vpack.c.b16 %v8242, %v8234
    %v9267 = vpack.c.b16 %v8243, %v8235
    %v9268 = vpack.c.b16 %v8244, %v8236
    %v9269 = vpack.c.b16 %v8245, %v8237
    %v9270 = vpack.c.b16 %v8246, %v8238
    %v9271 = vpack.c.b16 %v8247, %v8239
    %v9272 = vpack.c.b16 %v8248, %v8240
    %v9273 = vpack.c.b16 %v8249, %v8241
    %10298 = vmatprep.subr.bf16.mxu0 %v8251
    %10299 = vmatpush1.bf16.msra.mxu0 %v8250
    %10300 = vmatprep.subr.bf16.mxu0 %v8259
    %10301 = vmatpush1.bf16.msra.mxu0 %v8258
    %10302 = vmatprep.subr.bf16.mxu0 %v8267
    %10303 = vmatpush1.bf16.msra.mxu0 %v8266
    %10304 = vmatprep.subr.bf16.mxu0 %v8275
    %10305 = vmatpush1.bf16.msra.mxu0 %v8274
    %10306 = vmatprep.subr.bf16.mxu0 %v8283
    %10307 = vmatpush1.bf16.msra.mxu0 %v8282
    %10308 = vmatprep.subr.bf16.mxu0 %v8291
    %10309 = vmatpush1.bf16.msra.mxu0 %v8290
    %10310 = vmatprep.subr.bf16.mxu0 %v8299
    %10311 = vmatpush1.bf16.msra.mxu0 %v8298
    %10312 = vmatprep.subr.bf16.mxu0 %v8307
    %10313 = vmatpush1.bf16.msra.mxu0 %v8306
    %10314 = vmatprep.subr.bf16.mxu0 %v8315
    %10315 = vmatpush1.bf16.msra.mxu0 %v8314
    %10316 = vmatprep.subr.bf16.mxu0 %v8323
    %10317 = vmatpush1.bf16.msra.mxu0 %v8322
    %10318 = vmatprep.subr.bf16.mxu0 %v8331
    %10319 = vmatpush1.bf16.msra.mxu0 %v8330
    %10320 = vmatprep.subr.bf16.mxu0 %v8339
    %10321 = vmatpush1.bf16.msra.mxu0 %v8338
    %10322 = vmatprep.subr.bf16.mxu0 %v8347
    %10323 = vmatpush1.bf16.msra.mxu0 %v8346
    %10324 = vmatprep.subr.bf16.mxu0 %v8355
    %10325 = vmatpush1.bf16.msra.mxu0 %v8354
    %10326 = vmatprep.subr.bf16.mxu0 %v8363
    %10327 = vmatpush1.bf16.msra.mxu0 %v8362
    %10328 = vmatprep.subr.bf16.mxu0 %v8371
    %10329 = vmatpush1.bf16.msra.mxu0 %v8370
    %10330 = vmatprep.mubr.bf16.mxu0 %v4097
    %10331 = vmatmul.mubr.bf16.gmra.mrb[0].mxu0 %v4096
    %v10332 = vpop.f32.mrb[0].mxu0
    %v10333 = vadd.f32 %v5141, %v10332
    %v10334 = vpop.f32.mrb[0].mxu0
    %v10335 = vadd.f32 %v5145, %v10334
    %v10336 = vpop.f32.mrb[0].mxu0
    %v10337 = vadd.f32 %v5141, %v10336
    %v10338 = vpop.f32.mrb[0].mxu0
    %v10339 = vadd.f32 %v5145, %v10338
    %10340 = vdwg.mxu0
    %10341 = vmatprep.subr.bf16.mxu0 %v8379
    %10342 = vmatpush1.bf16.msra.mxu0 %v8378
    %10343 = vmatprep.subr.bf16.mxu0 %v8387
    %10344 = vmatpush1.bf16.msra.mxu0 %v8386
    %10345 = vmatprep.subr.bf16.mxu0 %v8395
    %10346 = vmatpush1.bf16.msra.mxu0 %v8394
    %10347 = vmatprep.subr.bf16.mxu0 %v8403
    %10348 = vmatpush1.bf16.msra.mxu0 %v8402
    %10349 = vmatprep.subr.bf16.mxu0 %v8411
    %10350 = vmatpush1.bf16.msra.mxu0 %v8410
    %10351 = vmatprep.subr.bf16.mxu0 %v8419
    %10352 = vmatpush1.bf16.msra.mxu0 %v8418
    %10353 = vmatprep.subr.bf16.mxu0 %v8427
    %10354 = vmatpush1.bf16.msra.mxu0 %v8426
    %10355 = vmatprep.subr.bf16.mxu0 %v8435
    %10356 = vmatpush1.bf16.msra.mxu0 %v8434
    %10357 = vmatprep.subr.bf16.mxu0 %v8443
    %10358 = vmatpush1.bf16.msra.mxu0 %v8442
    %10359 = vmatprep.subr.bf16.mxu0 %v8451
    %10360 = vmatpush1.bf16.msra.mxu0 %v8450
    %10361 = vmatprep.subr.bf16.mxu0 %v8459
    %10362 = vmatpush1.bf16.msra.mxu0 %v8458
    %10363 = vmatprep.subr.bf16.mxu0 %v8467
    %10364 = vmatpush1.bf16.msra.mxu0 %v8466
    %10365 = vmatprep.subr.bf16.mxu0 %v8475
    %10366 = vmatpush1.bf16.msra.mxu0 %v8474
    %10367 = vmatprep.subr.bf16.mxu0 %v8483
    %10368 = vmatpush1.bf16.msra.mxu0 %v8482
    %10369 = vmatprep.subr.bf16.mxu0 %v8491
    %10370 = vmatpush1.bf16.msra.mxu0 %v8490
    %10371 = vmatprep.subr.bf16.mxu0 %v8499
    %10372 = vmatpush1.bf16.msra.mxu0 %v8498
    %10373 = vmatprep.mubr.bf16.mxu0 %v4099
    %10374 = vmatmul.mubr.bf16.gmra.mrb[0].mxu0 %v4098
    %v10375 = vpop.f32.mrb[0].mxu0
    %v10376 = vadd.f32 %v10333, %v10375
    %v10377 = vpop.f32.mrb[0].mxu0
    %v10378 = vadd.f32 %v10335, %v10377
    %v10379 = vpop.f32.mrb[0].mxu0
    %v10380 = vadd.f32 %v10337, %v10379
    %v10381 = vpop.f32.mrb[0].mxu0
    %v10382 = vadd.f32 %v10339, %v10381
    %10383 = vdwg.mxu0
    %10384 = vmatprep.subr.bf16.mxu0 %v8507
    %10385 = vmatpush1.bf16.msra.mxu0 %v8506
    %10386 = vmatprep.subr.bf16.mxu0 %v8515
    %10387 = vmatpush1.bf16.msra.mxu0 %v8514
    %10388 = vmatprep.subr.bf16.mxu0 %v8523
    %10389 = vmatpush1.bf16.msra.mxu0 %v8522
    %10390 = vmatprep.subr.bf16.mxu0 %v8531
    %10391 = vmatpush1.bf16.msra.mxu0 %v8530
    %10392 = vmatprep.subr.bf16.mxu0 %v8539
    %10393 = vmatpush1.bf16.msra.mxu0 %v8538
    %10394 = vmatprep.subr.bf16.mxu0 %v8547
    %10395 = vmatpush1.bf16.msra.mxu0 %v8546
    %10396 = vmatprep.subr.bf16.mxu0 %v8555
    %10397 = vmatpush1.bf16.msra.mxu0 %v8554
    %10398 = vmatprep.subr.bf16.mxu0 %v8563
    %10399 = vmatpush1.bf16.msra.mxu0 %v8562
    %10400 = vmatprep.subr.bf16.mxu0 %v8571
    %10401 = vmatpush1.bf16.msra.mxu0 %v8570
    %10402 = vmatprep.subr.bf16.mxu0 %v8579
    %10403 = vmatpush1.bf16.msra.mxu0 %v8578
    %10404 = vmatprep.subr.bf16.mxu0 %v8587
    %10405 = vmatpush1.bf16.msra.mxu0 %v8586
    %10406 = vmatprep.subr.bf16.mxu0 %v8595
    %10407 = vmatpush1.bf16.msra.mxu0 %v8594
    %10408 = vmatprep.subr.bf16.mxu0 %v8603
    %10409 = vmatpush1.bf16.msra.mxu0 %v8602
    %10410 = vmatprep.subr.bf16.mxu0 %v8611
    %10411 = vmatpush1.bf16.msra.mxu0 %v8610
    %10412 = vmatprep.subr.bf16.mxu0 %v8619
    %10413 = vmatpush1.bf16.msra.mxu0 %v8618
    %10414 = vmatprep.subr.bf16.mxu0 %v8627
    %10415 = vmatpush1.bf16.msra.mxu0 %v8626
    %10416 = vmatprep.mubr.bf16.mxu0 %v4101
    %10417 = vmatmul.mubr.bf16.gmra.mrb[0].mxu0 %v4100
    %v10418 = vpop.f32.mrb[0].mxu0
    %v10419 = vadd.f32 %v10376, %v10418
    %v10420 = vpop.f32.mrb[0].mxu0
    %v10421 = vadd.f32 %v10378, %v10420
    %v10422 = vpop.f32.mrb[0].mxu0
    %v10423 = vadd.f32 %v10380, %v10422
    %v10424 = vpop.f32.mrb[0].mxu0
    %v10425 = vadd.f32 %v10382, %v10424
    %10426 = vdwg.mxu0
    %10427 = vmatprep.subr.bf16.mxu0 %v8635
    %10428 = vmatpush1.bf16.msra.mxu0 %v8634
    %10429 = vmatprep.subr.bf16.mxu0 %v8643
    %10430 = vmatpush1.bf16.msra.mxu0 %v8642
    %10431 = vmatprep.subr.bf16.mxu0 %v8651
    %10432 = vmatpush1.bf16.msra.mxu0 %v8650
    %10433 = vmatprep.subr.bf16.mxu0 %v8659
    %10434 = vmatpush1.bf16.msra.mxu0 %v8658
    %10435 = vmatprep.subr.bf16.mxu0 %v8667
    %10436 = vmatpush1.bf16.msra.mxu0 %v8666
    %10437 = vmatprep.subr.bf16.mxu0 %v8675
    %10438 = vmatpush1.bf16.msra.mxu0 %v8674
    %10439 = vmatprep.subr.bf16.mxu0 %v8683
    %10440 = vmatpush1.bf16.msra.mxu0 %v8682
    %10441 = vmatprep.subr.bf16.mxu0 %v8691
    %10442 = vmatpush1.bf16.msra.mxu0 %v8690
    %10443 = vmatprep.subr.bf16.mxu0 %v8699
    %10444 = vmatpush1.bf16.msra.mxu0 %v8698
    %10445 = vmatprep.subr.bf16.mxu0 %v8707
    %10446 = vmatpush1.bf16.msra.mxu0 %v8706
    %10447 = vmatprep.subr.bf16.mxu0 %v8715
    %10448 = vmatpush1.bf16.msra.mxu0 %v8714
    %10449 = vmatprep.subr.bf16.mxu0 %v8723
    %10450 = vmatpush1.bf16.msra.mxu0 %v8722
    %10451 = vmatprep.subr.bf16.mxu0 %v8731
    %10452 = vmatpush1.bf16.msra.mxu0 %v8730
    %10453 = vmatprep.subr.bf16.mxu0 %v8739
    %10454 = vmatpush1.bf16.msra.mxu0 %v8738
    %10455 = vmatprep.subr.bf16.mxu0 %v8747
    %10456 = vmatpush1.bf16.msra.mxu0 %v8746
    %10457 = vmatprep.subr.bf16.mxu0 %v8755
    %10458 = vmatpush1.bf16.msra.mxu0 %v8754
    %10459 = vmatprep.mubr.bf16.mxu0 %v4103
    %10460 = vmatmul.mubr.bf16.gmra.mrb[0].mxu0 %v4102
    %v10461 = vpop.f32.mrb[0].mxu0
    %v10462 = vadd.f32 %v10419, %v10461
    %v10463 = vpop.f32.mrb[0].mxu0
    %v10464 = vadd.f32 %v10421, %v10463
    %v10465 = vpop.f32.mrb[0].mxu0
    %v10466 = vadd.f32 %v10423, %v10465
    %v10467 = vpop.f32.mrb[0].mxu0
    %v10468 = vadd.f32 %v10425, %v10467
    %10469 = vdwg.mxu0
    %10470 = vmatprep.subr.bf16.mxu0 %v8763
    %10471 = vmatpush1.bf16.msra.mxu0 %v8762
    %10472 = vmatprep.subr.bf16.mxu0 %v8771
    %10473 = vmatpush1.bf16.msra.mxu0 %v8770
    %10474 = vmatprep.subr.bf16.mxu0 %v8779
    %10475 = vmatpush1.bf16.msra.mxu0 %v8778
    %10476 = vmatprep.subr.bf16.mxu0 %v8787
    %10477 = vmatpush1.bf16.msra.mxu0 %v8786
    %10478 = vmatprep.subr.bf16.mxu0 %v8795
    %10479 = vmatpush1.bf16.msra.mxu0 %v8794
    %10480 = vmatprep.subr.bf16.mxu0 %v8803
    %10481 = vmatpush1.bf16.msra.mxu0 %v8802
    %10482 = vmatprep.subr.bf16.mxu0 %v8811
    %10483 = vmatpush1.bf16.msra.mxu0 %v8810
    %10484 = vmatprep.subr.bf16.mxu0 %v8819
    %10485 = vmatpush1.bf16.msra.mxu0 %v8818
    %10486 = vmatprep.subr.bf16.mxu0 %v8827
    %10487 = vmatpush1.bf16.msra.mxu0 %v8826
    %10488 = vmatprep.subr.bf16.mxu0 %v8835
    %10489 = vmatpush1.bf16.msra.mxu0 %v8834
    %10490 = vmatprep.subr.bf16.mxu0 %v8843
    %10491 = vmatpush1.bf16.msra.mxu0 %v8842
    %10492 = vmatprep.subr.bf16.mxu0 %v8851
    %10493 = vmatpush1.bf16.msra.mxu0 %v8850
    %10494 = vmatprep.subr.bf16.mxu0 %v8859
    %10495 = vmatpush1.bf16.msra.mxu0 %v8858
    %10496 = vmatprep.subr.bf16.mxu0 %v8867
    %10497 = vmatpush1.bf16.msra.mxu0 %v8866
    %10498 = vmatprep.subr.bf16.mxu0 %v8875
    %10499 = vmatpush1.bf16.msra.mxu0 %v8874
    %10500 = vmatprep.subr.bf16.mxu0 %v8883
    %10501 = vmatpush1.bf16.msra.mxu0 %v8882
    %10502 = vmatprep.mubr.bf16.mxu0 %v4105
    %10503 = vmatmul.mubr.bf16.gmra.mrb[0].mxu0 %v4104
    %v10504 = vpop.f32.mrb[0].mxu0
    %v10505 = vadd.f32 %v10462, %v10504
    %v10506 = vpop.f32.mrb[0].mxu0
    %v10507 = vadd.f32 %v10464, %v10506
    %v10508 = vpop.f32.mrb[0].mxu0
    %v10509 = vadd.f32 %v10466, %v10508
    %v10510 = vpop.f32.mrb[0].mxu0
    %v10511 = vadd.f32 %v10468, %v10510
    %10512 = vdwg.mxu0
    %10513 = vmatprep.subr.bf16.mxu0 %v8891
    %10514 = vmatpush1.bf16.msra.mxu0 %v8890
    %10515 = vmatprep.subr.bf16.mxu0 %v8899
    %10516 = vmatpush1.bf16.msra.mxu0 %v8898
    %10517 = vmatprep.subr.bf16.mxu0 %v8907
    %10518 = vmatpush1.bf16.msra.mxu0 %v8906
    %10519 = vmatprep.subr.bf16.mxu0 %v8915
    %10520 = vmatpush1.bf16.msra.mxu0 %v8914
    %10521 = vmatprep.subr.bf16.mxu0 %v8923
    %10522 = vmatpush1.bf16.msra.mxu0 %v8922
    %10523 = vmatprep.subr.bf16.mxu0 %v8931
    %10524 = vmatpush1.bf16.msra.mxu0 %v8930
    %10525 = vmatprep.subr.bf16.mxu0 %v8939
    %10526 = vmatpush1.bf16.msra.mxu0 %v8938
    %10527 = vmatprep.subr.bf16.mxu0 %v8947
    %10528 = vmatpush1.bf16.msra.mxu0 %v8946
    %10529 = vmatprep.subr.bf16.mxu0 %v8955
    %10530 = vmatpush1.bf16.msra.mxu0 %v8954
    %10531 = vmatprep.subr.bf16.mxu0 %v8963
    %10532 = vmatpush1.bf16.msra.mxu0 %v8962
    %10533 = vmatprep.subr.bf16.mxu0 %v8971
    %10534 = vmatpush1.bf16.msra.mxu0 %v8970
    %10535 = vmatprep.subr.bf16.mxu0 %v8979
    %10536 = vmatpush1.bf16.msra.mxu0 %v8978
    %10537 = vmatprep.subr.bf16.mxu0 %v8987
    %10538 = vmatpush1.bf16.msra.mxu0 %v8986
    %10539 = vmatprep.subr.bf16.mxu0 %v8995
    %10540 = vmatpush1.bf16.msra.mxu0 %v8994
    %10541 = vmatprep.subr.bf16.mxu0 %v9003
    %10542 = vmatpush1.bf16.msra.mxu0 %v9002
    %10543 = vmatprep.subr.bf16.mxu0 %v9011
    %10544 = vmatpush1.bf16.msra.mxu0 %v9010
    %10545 = vmatprep.mubr.bf16.mxu0 %v4107
    %10546 = vmatmul.mubr.bf16.gmra.mrb[0].mxu0 %v4106
    %v10547 = vpop.f32.mrb[0].mxu0
    %v10548 = vadd.f32 %v10505, %v10547
    %v10549 = vpop.f32.mrb[0].mxu0
    %v10550 = vadd.f32 %v10507, %v10549
    %v10551 = vpop.f32.mrb[0].mxu0
    %v10552 = vadd.f32 %v10509, %v10551
    %v10553 = vpop.f32.mrb[0].mxu0
    %v10554 = vadd.f32 %v10511, %v10553
    %10555 = vdwg.mxu0
    %10556 = vmatprep.subr.bf16.mxu0 %v9019
    %10557 = vmatpush1.bf16.msra.mxu0 %v9018
    %10558 = vmatprep.subr.bf16.mxu0 %v9027
    %10559 = vmatpush1.bf16.msra.mxu0 %v9026
    %10560 = vmatprep.subr.bf16.mxu0 %v9035
    %10561 = vmatpush1.bf16.msra.mxu0 %v9034
    %10562 = vmatprep.subr.bf16.mxu0 %v9043
    %10563 = vmatpush1.bf16.msra.mxu0 %v9042
    %10564 = vmatprep.subr.bf16.mxu0 %v9051
    %10565 = vmatpush1.bf16.msra.mxu0 %v9050
    %10566 = vmatprep.subr.bf16.mxu0 %v9059
    %10567 = vmatpush1.bf16.msra.mxu0 %v9058
    %10568 = vmatprep.subr.bf16.mxu0 %v9067
    %10569 = vmatpush1.bf16.msra.mxu0 %v9066
    %10570 = vmatprep.subr.bf16.mxu0 %v9075
    %10571 = vmatpush1.bf16.msra.mxu0 %v9074
    %10572 = vmatprep.subr.bf16.mxu0 %v9083
    %10573 = vmatpush1.bf16.msra.mxu0 %v9082
    %10574 = vmatprep.subr.bf16.mxu0 %v9091
    %10575 = vmatpush1.bf16.msra.mxu0 %v9090
    %10576 = vmatprep.subr.bf16.mxu0 %v9099
    %10577 = vmatpush1.bf16.msra.mxu0 %v9098
    %10578 = vmatprep.subr.bf16.mxu0 %v9107
    %10579 = vmatpush1.bf16.msra.mxu0 %v9106
    %10580 = vmatprep.subr.bf16.mxu0 %v9115
    %10581 = vmatpush1.bf16.msra.mxu0 %v9114
    %10582 = vmatprep.subr.bf16.mxu0 %v9123
    %10583 = vmatpush1.bf16.msra.mxu0 %v9122
    %10584 = vmatprep.subr.bf16.mxu0 %v9131
    %10585 = vmatpush1.bf16.msra.mxu0 %v9130
    %10586 = vmatprep.subr.bf16.mxu0 %v9139
    %10587 = vmatpush1.bf16.msra.mxu0 %v9138
    %10588 = vmatprep.mubr.bf16.mxu0 %v4109
    %10589 = vmatmul.mubr.bf16.gmra.mrb[0].mxu0 %v4108
    %v10590 = vpop.f32.mrb[0].mxu0
    %v10591 = vadd.f32 %v10548, %v10590
    %v10592 = vpop.f32.mrb[0].mxu0
    %v10593 = vadd.f32 %v10550, %v10592
    %v10594 = vpop.f32.mrb[0].mxu0
    %v10595 = vadd.f32 %v10552, %v10594
    %v10596 = vpop.f32.mrb[0].mxu0
    %v10597 = vadd.f32 %v10554, %v10596
    %10598 = vdwg.mxu0
    %10599 = vmatprep.subr.bf16.mxu0 %v9147
    %10600 = vmatpush1.bf16.msra.mxu0 %v9146
    %10601 = vmatprep.subr.bf16.mxu0 %v9155
    %10602 = vmatpush1.bf16.msra.mxu0 %v9154
    %10603 = vmatprep.subr.bf16.mxu0 %v9163
    %10604 = vmatpush1.bf16.msra.mxu0 %v9162
    %10605 = vmatprep.subr.bf16.mxu0 %v9171
    %10606 = vmatpush1.bf16.msra.mxu0 %v9170
    %10607 = vmatprep.subr.bf16.mxu0 %v9179
    %10608 = vmatpush1.bf16.msra.mxu0 %v9178
    %10609 = vmatprep.subr.bf16.mxu0 %v9187
    %10610 = vmatpush1.bf16.msra.mxu0 %v9186
    %10611 = vmatprep.subr.bf16.mxu0 %v9195
    %10612 = vmatpush1.bf16.msra.mxu0 %v9194
    %10613 = vmatprep.subr.bf16.mxu0 %v9203
    %10614 = vmatpush1.bf16.msra.mxu0 %v9202
    %10615 = vmatprep.subr.bf16.mxu0 %v9211
    %10616 = vmatpush1.bf16.msra.mxu0 %v9210
    %10617 = vmatprep.subr.bf16.mxu0 %v9219
    %10618 = vmatpush1.bf16.msra.mxu0 %v9218
    %10619 = vmatprep.subr.bf16.mxu0 %v9227
    %10620 = vmatpush1.bf16.msra.mxu0 %v9226
    %10621 = vmatprep.subr.bf16.mxu0 %v9235
    %10622 = vmatpush1.bf16.msra.mxu0 %v9234
    %10623 = vmatprep.subr.bf16.mxu0 %v9243
    %10624 = vmatpush1.bf16.msra.mxu0 %v9242
    %10625 = vmatprep.subr.bf16.mxu0 %v9251
    %10626 = vmatpush1.bf16.msra.mxu0 %v9250
    %10627 = vmatprep.subr.bf16.mxu0 %v9259
    %10628 = vmatpush1.bf16.msra.mxu0 %v9258
    %10629 = vmatprep.subr.bf16.mxu0 %v9267
    %10630 = vmatpush1.bf16.msra.mxu0 %v9266
    %10631 = vmatprep.mubr.bf16.mxu0 %v4111
    %10632 = vmatmul.mubr.bf16.gmra.mrb[0].mxu0 %v4110
    %v10633 = vpop.f32.mrb[0].mxu0
    %v10634 = vadd.f32 %v10591, %v10633
    %v10635 = vpop.f32.mrb[0].mxu0
    %v10636 = vadd.f32 %v10593, %v10635
    %v10637 = vpop.f32.mrb[0].mxu0
    %v10638 = vadd.f32 %v10595, %v10637
    %v10639 = vpop.f32.mrb[0].mxu0
    %v10640 = vadd.f32 %v10597, %v10639
    %10641 = vdwg.mxu0
    %10642 = vmatprep.subr.bf16.mxu0 %v8253
    %10643 = vmatpush1.bf16.msra.mxu0 %v8252
    %10644 = vmatprep.subr.bf16.mxu0 %v8261
    %10645 = vmatpush1.bf16.msra.mxu0 %v8260
    %10646 = vmatprep.subr.bf16.mxu0 %v8269
    %10647 = vmatpush1.bf16.msra.mxu0 %v8268
    %10648 = vmatprep.subr.bf16.mxu0 %v8277
    %10649 = vmatpush1.bf16.msra.mxu0 %v8276
    %10650 = vmatprep.subr.bf16.mxu0 %v8285
    %10651 = vmatpush1.bf16.msra.mxu0 %v8284
    %10652 = vmatprep.subr.bf16.mxu0 %v8293
    %10653 = vmatpush1.bf16.msra.mxu0 %v8292
    %10654 = vmatprep.subr.bf16.mxu0 %v8301
    %10655 = vmatpush1.bf16.msra.mxu0 %v8300
    %10656 = vmatprep.subr.bf16.mxu0 %v8309
    %10657 = vmatpush1.bf16.msra.mxu0 %v8308
    %10658 = vmatprep.subr.bf16.mxu0 %v8317
    %10659 = vmatpush1.bf16.msra.mxu0 %v8316
    %10660 = vmatprep.subr.bf16.mxu0 %v8325
    %10661 = vmatpush1.bf16.msra.mxu0 %v8324
    %10662 = vmatprep.subr.bf16.mxu0 %v8333
    %10663 = vmatpush1.bf16.msra.mxu0 %v8332
    %10664 = vmatprep.subr.bf16.mxu0 %v8341
    %10665 = vmatpush1.bf16.msra.mxu0 %v8340
    %10666 = vmatprep.subr.bf16.mxu0 %v8349
    %10667 = vmatpush1.bf16.msra.mxu0 %v8348
    %10668 = vmatprep.subr.bf16.mxu0 %v8357
    %10669 = vmatpush1.bf16.msra.mxu0 %v8356
    %10670 = vmatprep.subr.bf16.mxu0 %v8365
    %10671 = vmatpush1.bf16.msra.mxu0 %v8364
    %10672 = vmatprep.subr.bf16.mxu0 %v8373
    %10673 = vmatpush1.bf16.msra.mxu0 %v8372
    %10674 = vmatprep.mubr.bf16.mxu0 %v4097
    %10675 = vmatmul.mubr.bf16.gmra.mrb[0].mxu0 %v4096
    %v10676 = vpop.f32.mrb[0].mxu0
    %v10677 = vadd.f32 %v5149, %v10676
    %v10678 = vpop.f32.mrb[0].mxu0
    %v10679 = vadd.f32 %v5153, %v10678
    %v10680 = vpop.f32.mrb[0].mxu0
    %v10681 = vadd.f32 %v5149, %v10680
    %v10682 = vpop.f32.mrb[0].mxu0
    %v10683 = vadd.f32 %v5153, %v10682
    %10684 = vdwg.mxu0
    %10685 = vmatprep.subr.bf16.mxu0 %v8381
    %10686 = vmatpush1.bf16.msra.mxu0 %v8380
    %10687 = vmatprep.subr.bf16.mxu0 %v8389
    %10688 = vmatpush1.bf16.msra.mxu0 %v8388
    %10689 = vmatprep.subr.bf16.mxu0 %v8397
    %10690 = vmatpush1.bf16.msra.mxu0 %v8396
    %10691 = vmatprep.subr.bf16.mxu0 %v8405
    %10692 = vmatpush1.bf16.msra.mxu0 %v8404
    %10693 = vmatprep.subr.bf16.mxu0 %v8413
    %10694 = vmatpush1.bf16.msra.mxu0 %v8412
    %10695 = vmatprep.subr.bf16.mxu0 %v8421
    %10696 = vmatpush1.bf16.msra.mxu0 %v8420
    %10697 = vmatprep.subr.bf16.mxu0 %v8429
    %10698 = vmatpush1.bf16.msra.mxu0 %v8428
    %10699 = vmatprep.subr.bf16.mxu0 %v8437
    %10700 = vmatpush1.bf16.msra.mxu0 %v8436
    %10701 = vmatprep.subr.bf16.mxu0 %v8445
    %10702 = vmatpush1.bf16.msra.mxu0 %v8444
    %10703 = vmatprep.subr.bf16.mxu0 %v8453
    %10704 = vmatpush1.bf16.msra.mxu0 %v8452
    %10705 = vmatprep.subr.bf16.mxu0 %v8461
    %10706 = vmatpush1.bf16.msra.mxu0 %v8460
    %10707 = vmatprep.subr.bf16.mxu0 %v8469
    %10708 = vmatpush1.bf16.msra.mxu0 %v8468
    %10709 = vmatprep.subr.bf16.mxu0 %v8477
    %10710 = vmatpush1.bf16.msra.mxu0 %v8476
    %10711 = vmatprep.subr.bf16.mxu0 %v8485
    %10712 = vmatpush1.bf16.msra.mxu0 %v8484
    %10713 = vmatprep.subr.bf16.mxu0 %v8493
    %10714 = vmatpush1.bf16.msra.mxu0 %v8492
    %10715 = vmatprep.subr.bf16.mxu0 %v8501
    %10716 = vmatpush1.bf16.msra.mxu0 %v8500
    %10717 = vmatprep.mubr.bf16.mxu0 %v4099
    %10718 = vmatmul.mubr.bf16.gmra.mrb[0].mxu0 %v4098
    %v10719 = vpop.f32.mrb[0].mxu0
    %v10720 = vadd.f32 %v10677, %v10719
    %v10721 = vpop.f32.mrb[0].mxu0
    %v10722 = vadd.f32 %v10679, %v10721
    %v10723 = vpop.f32.mrb[0].mxu0
    %v10724 = vadd.f32 %v10681, %v10723
    %v10725 = vpop.f32.mrb[0].mxu0
    %v10726 = vadd.f32 %v10683, %v10725
    %10727 = vdwg.mxu0
    %10728 = vmatprep.subr.bf16.mxu0 %v8509
    %10729 = vmatpush1.bf16.msra.mxu0 %v8508
    %10730 = vmatprep.subr.bf16.mxu0 %v8517
    %10731 = vmatpush1.bf16.msra.mxu0 %v8516
    %10732 = vmatprep.subr.bf16.mxu0 %v8525
    %10733 = vmatpush1.bf16.msra.mxu0 %v8524
    %10734 = vmatprep.subr.bf16.mxu0 %v8533
    %10735 = vmatpush1.bf16.msra.mxu0 %v8532
    %10736 = vmatprep.subr.bf16.mxu0 %v8541
    %10737 = vmatpush1.bf16.msra.mxu0 %v8540
    %10738 = vmatprep.subr.bf16.mxu0 %v8549
    %10739 = vmatpush1.bf16.msra.mxu0 %v8548
    %10740 = vmatprep.subr.bf16.mxu0 %v8557
    %10741 = vmatpush1.bf16.msra.mxu0 %v8556
    %10742 = vmatprep.subr.bf16.mxu0 %v8565
    %10743 = vmatpush1.bf16.msra.mxu0 %v8564
    %10744 = vmatprep.subr.bf16.mxu0 %v8573
    %10745 = vmatpush1.bf16.msra.mxu0 %v8572
    %10746 = vmatprep.subr.bf16.mxu0 %v8581
    %10747 = vmatpush1.bf16.msra.mxu0 %v8580
    %10748 = vmatprep.subr.bf16.mxu0 %v8589
    %10749 = vmatpush1.bf16.msra.mxu0 %v8588
    %10750 = vmatprep.subr.bf16.mxu0 %v8597
    %10751 = vmatpush1.bf16.msra.mxu0 %v8596
    %10752 = vmatprep.subr.bf16.mxu0 %v8605
    %10753 = vmatpush1.bf16.msra.mxu0 %v8604
    %10754 = vmatprep.subr.bf16.mxu0 %v8613
    %10755 = vmatpush1.bf16.msra.mxu0 %v8612
    %10756 = vmatprep.subr.bf16.mxu0 %v8621
    %10757 = vmatpush1.bf16.msra.mxu0 %v8620
    %10758 = vmatprep.subr.bf16.mxu0 %v8629
    %10759 = vmatpush1.bf16.msra.mxu0 %v8628
    %10760 = vmatprep.mubr.bf16.mxu0 %v4101
    %10761 = vmatmul.mubr.bf16.gmra.mrb[0].mxu0 %v4100
    %v10762 = vpop.f32.mrb[0].mxu0
    %v10763 = vadd.f32 %v10720, %v10762
    %v10764 = vpop.f32.mrb[0].mxu0
    %v10765 = vadd.f32 %v10722, %v10764
    %v10766 = vpop.f32.mrb[0].mxu0
    %v10767 = vadd.f32 %v10724, %v10766
    %v10768 = vpop.f32.mrb[0].mxu0
    %v10769 = vadd.f32 %v10726, %v10768
    %10770 = vdwg.mxu0
    %10771 = vmatprep.subr.bf16.mxu0 %v8637
    %10772 = vmatpush1.bf16.msra.mxu0 %v8636
    %10773 = vmatprep.subr.bf16.mxu0 %v8645
    %10774 = vmatpush1.bf16.msra.mxu0 %v8644
    %10775 = vmatprep.subr.bf16.mxu0 %v8653
    %10776 = vmatpush1.bf16.msra.mxu0 %v8652
    %10777 = vmatprep.subr.bf16.mxu0 %v8661
    %10778 = vmatpush1.bf16.msra.mxu0 %v8660
    %10779 = vmatprep.subr.bf16.mxu0 %v8669
    %10780 = vmatpush1.bf16.msra.mxu0 %v8668
    %10781 = vmatprep.subr.bf16.mxu0 %v8677
    %10782 = vmatpush1.bf16.msra.mxu0 %v8676
    %10783 = vmatprep.subr.bf16.mxu0 %v8685
    %10784 = vmatpush1.bf16.msra.mxu0 %v8684
    %10785 = vmatprep.subr.bf16.mxu0 %v8693
    %10786 = vmatpush1.bf16.msra.mxu0 %v8692
    %10787 = vmatprep.subr.bf16.mxu0 %v8701
    %10788 = vmatpush1.bf16.msra.mxu0 %v8700
    %10789 = vmatprep.subr.bf16.mxu0 %v8709
    %10790 = vmatpush1.bf16.msra.mxu0 %v8708
    %10791 = vmatprep.subr.bf16.mxu0 %v8717
    %10792 = vmatpush1.bf16.msra.mxu0 %v8716
    %10793 = vmatprep.subr.bf16.mxu0 %v8725
    %10794 = vmatpush1.bf16.msra.mxu0 %v8724
    %10795 = vmatprep.subr.bf16.mxu0 %v8733
    %10796 = vmatpush1.bf16.msra.mxu0 %v8732
    %10797 = vmatprep.subr.bf16.mxu0 %v8741
    %10798 = vmatpush1.bf16.msra.mxu0 %v8740
    %10799 = vmatprep.subr.bf16.mxu0 %v8749
    %10800 = vmatpush1.bf16.msra.mxu0 %v8748
    %10801 = vmatprep.subr.bf16.mxu0 %v8757
    %10802 = vmatpush1.bf16.msra.mxu0 %v8756
    %10803 = vmatprep.mubr.bf16.mxu0 %v4103
    %10804 = vmatmul.mubr.bf16.gmra.mrb[0].mxu0 %v4102
    %v10805 = vpop.f32.mrb[0].mxu0
    %v10806 = vadd.f32 %v10763, %v10805
    %v10807 = vpop.f32.mrb[0].mxu0
    %v10808 = vadd.f32 %v10765, %v10807
    %v10809 = vpop.f32.mrb[0].mxu0
    %v10810 = vadd.f32 %v10767, %v10809
    %v10811 = vpop.f32.mrb[0].mxu0
    %v10812 = vadd.f32 %v10769, %v10811
    %10813 = vdwg.mxu0
    %10814 = vmatprep.subr.bf16.mxu0 %v8765
    %10815 = vmatpush1.bf16.msra.mxu0 %v8764
    %10816 = vmatprep.subr.bf16.mxu0 %v8773
    %10817 = vmatpush1.bf16.msra.mxu0 %v8772
    %10818 = vmatprep.subr.bf16.mxu0 %v8781
    %10819 = vmatpush1.bf16.msra.mxu0 %v8780
    %10820 = vmatprep.subr.bf16.mxu0 %v8789
    %10821 = vmatpush1.bf16.msra.mxu0 %v8788
    %10822 = vmatprep.subr.bf16.mxu0 %v8797
    %10823 = vmatpush1.bf16.msra.mxu0 %v8796
    %10824 = vmatprep.subr.bf16.mxu0 %v8805
    %10825 = vmatpush1.bf16.msra.mxu0 %v8804
    %10826 = vmatprep.subr.bf16.mxu0 %v8813
    %10827 = vmatpush1.bf16.msra.mxu0 %v8812
    %10828 = vmatprep.subr.bf16.mxu0 %v8821
    %10829 = vmatpush1.bf16.msra.mxu0 %v8820
    %10830 = vmatprep.subr.bf16.mxu0 %v8829
    %10831 = vmatpush1.bf16.msra.mxu0 %v8828
    %10832 = vmatprep.subr.bf16.mxu0 %v8837
    %10833 = vmatpush1.bf16.msra.mxu0 %v8836
    %10834 = vmatprep.subr.bf16.mxu0 %v8845
    %10835 = vmatpush1.bf16.msra.mxu0 %v8844
    %10836 = vmatprep.subr.bf16.mxu0 %v8853
    %10837 = vmatpush1.bf16.msra.mxu0 %v8852
    %10838 = vmatprep.subr.bf16.mxu0 %v8861
    %10839 = vmatpush1.bf16.msra.mxu0 %v8860
    %10840 = vmatprep.subr.bf16.mxu0 %v8869
    %10841 = vmatpush1.bf16.msra.mxu0 %v8868
    %10842 = vmatprep.subr.bf16.mxu0 %v8877
    %10843 = vmatpush1.bf16.msra.mxu0 %v8876
    %10844 = vmatprep.subr.bf16.mxu0 %v8885
    %10845 = vmatpush1.bf16.msra.mxu0 %v8884
    %10846 = vmatprep.mubr.bf16.mxu0 %v4105
    %10847 = vmatmul.mubr.bf16.gmra.mrb[0].mxu0 %v4104
    %v10848 = vpop.f32.mrb[0].mxu0
    %v10849 = vadd.f32 %v10806, %v10848
    %v10850 = vpop.f32.mrb[0].mxu0
    %v10851 = vadd.f32 %v10808, %v10850
    %v10852 = vpop.f32.mrb[0].mxu0
    %v10853 = vadd.f32 %v10810, %v10852
    %v10854 = vpop.f32.mrb[0].mxu0
    %v10855 = vadd.f32 %v10812, %v10854
    %10856 = vdwg.mxu0
    %10857 = vmatprep.subr.bf16.mxu0 %v8893
    %10858 = vmatpush1.bf16.msra.mxu0 %v8892
    %10859 = vmatprep.subr.bf16.mxu0 %v8901
    %10860 = vmatpush1.bf16.msra.mxu0 %v8900
    %10861 = vmatprep.subr.bf16.mxu0 %v8909
    %10862 = vmatpush1.bf16.msra.mxu0 %v8908
    %10863 = vmatprep.subr.bf16.mxu0 %v8917
    %10864 = vmatpush1.bf16.msra.mxu0 %v8916
    %10865 = vmatprep.subr.bf16.mxu0 %v8925
    %10866 = vmatpush1.bf16.msra.mxu0 %v8924
    %10867 = vmatprep.subr.bf16.mxu0 %v8933
    %10868 = vmatpush1.bf16.msra.mxu0 %v8932
    %10869 = vmatprep.subr.bf16.mxu0 %v8941
    %10870 = vmatpush1.bf16.msra.mxu0 %v8940
    %10871 = vmatprep.subr.bf16.mxu0 %v8949
    %10872 = vmatpush1.bf16.msra.mxu0 %v8948
    %10873 = vmatprep.subr.bf16.mxu0 %v8957
    %10874 = vmatpush1.bf16.msra.mxu0 %v8956
    %10875 = vmatprep.subr.bf16.mxu0 %v8965
    %10876 = vmatpush1.bf16.msra.mxu0 %v8964
    %10877 = vmatprep.subr.bf16.mxu0 %v8973
    %10878 = vmatpush1.bf16.msra.mxu0 %v8972
    %10879 = vmatprep.subr.bf16.mxu0 %v8981
    %10880 = vmatpush1.bf16.msra.mxu0 %v8980
    %10881 = vmatprep.subr.bf16.mxu0 %v8989
    %10882 = vmatpush1.bf16.msra.mxu0 %v8988
    %10883 = vmatprep.subr.bf16.mxu0 %v8997
    %10884 = vmatpush1.bf16.msra.mxu0 %v8996
    %10885 = vmatprep.subr.bf16.mxu0 %v9005
    %10886 = vmatpush1.bf16.msra.mxu0 %v9004
    %10887 = vmatprep.subr.bf16.mxu0 %v9013
    %10888 = vmatpush1.bf16.msra.mxu0 %v9012
    %10889 = vmatprep.mubr.bf16.mxu0 %v4107
    %10890 = vmatmul.mubr.bf16.gmra.mrb[0].mxu0 %v4106
    %v10891 = vpop.f32.mrb[0].mxu0
    %v10892 = vadd.f32 %v10849, %v10891
    %v10893 = vpop.f32.mrb[0].mxu0
    %v10894 = vadd.f32 %v10851, %v10893
    %v10895 = vpop.f32.mrb[0].mxu0
    %v10896 = vadd.f32 %v10853, %v10895
    %v10897 = vpop.f32.mrb[0].mxu0
    %v10898 = vadd.f32 %v10855, %v10897
    %10899 = vdwg.mxu0
    %10900 = vmatprep.subr.bf16.mxu0 %v9021
    %10901 = vmatpush1.bf16.msra.mxu0 %v9020
    %10902 = vmatprep.subr.bf16.mxu0 %v9029
    %10903 = vmatpush1.bf16.msra.mxu0 %v9028
    %10904 = vmatprep.subr.bf16.mxu0 %v9037
    %10905 = vmatpush1.bf16.msra.mxu0 %v9036
    %10906 = vmatprep.subr.bf16.mxu0 %v9045
    %10907 = vmatpush1.bf16.msra.mxu0 %v9044
    %10908 = vmatprep.subr.bf16.mxu0 %v9053
    %10909 = vmatpush1.bf16.msra.mxu0 %v9052
    %10910 = vmatprep.subr.bf16.mxu0 %v9061
    %10911 = vmatpush1.bf16.msra.mxu0 %v9060
    %10912 = vmatprep.subr.bf16.mxu0 %v9069
    %10913 = vmatpush1.bf16.msra.mxu0 %v9068
    %10914 = vmatprep.subr.bf16.mxu0 %v9077
    %10915 = vmatpush1.bf16.msra.mxu0 %v9076
    %10916 = vmatprep.subr.bf16.mxu0 %v9085
    %10917 = vmatpush1.bf16.msra.mxu0 %v9084
    %10918 = vmatprep.subr.bf16.mxu0 %v9093
    %10919 = vmatpush1.bf16.msra.mxu0 %v9092
    %10920 = vmatprep.subr.bf16.mxu0 %v9101
    %10921 = vmatpush1.bf16.msra.mxu0 %v9100
    %10922 = vmatprep.subr.bf16.mxu0 %v9109
    %10923 = vmatpush1.bf16.msra.mxu0 %v9108
    %10924 = vmatprep.subr.bf16.mxu0 %v9117
    %10925 = vmatpush1.bf16.msra.mxu0 %v9116
    %10926 = vmatprep.subr.bf16.mxu0 %v9125
    %10927 = vmatpush1.bf16.msra.mxu0 %v9124
    %10928 = vmatprep.subr.bf16.mxu0 %v9133
    %10929 = vmatpush1.bf16.msra.mxu0 %v9132
    %10930 = vmatprep.subr.bf16.mxu0 %v9141
    %10931 = vmatpush1.bf16.msra.mxu0 %v9140
    %10932 = vmatprep.mubr.bf16.mxu0 %v4109
    %10933 = vmatmul.mubr.bf16.gmra.mrb[0].mxu0 %v4108
    %v10934 = vpop.f32.mrb[0].mxu0
    %v10935 = vadd.f32 %v10892, %v10934
    %v10936 = vpop.f32.mrb[0].mxu0
    %v10937 = vadd.f32 %v10894, %v10936
    %v10938 = vpop.f32.mrb[0].mxu0
    %v10939 = vadd.f32 %v10896, %v10938
    %v10940 = vpop.f32.mrb[0].mxu0
    %v10941 = vadd.f32 %v10898, %v10940
    %10942 = vdwg.mxu0
    %10943 = vmatprep.subr.bf16.mxu0 %v9149
    %10944 = vmatpush1.bf16.msra.mxu0 %v9148
    %10945 = vmatprep.subr.bf16.mxu0 %v9157
    %10946 = vmatpush1.bf16.msra.mxu0 %v9156
    %10947 = vmatprep.subr.bf16.mxu0 %v9165
    %10948 = vmatpush1.bf16.msra.mxu0 %v9164
    %10949 = vmatprep.subr.bf16.mxu0 %v9173
    %10950 = vmatpush1.bf16.msra.mxu0 %v9172
    %10951 = vmatprep.subr.bf16.mxu0 %v9181
    %10952 = vmatpush1.bf16.msra.mxu0 %v9180
    %10953 = vmatprep.subr.bf16.mxu0 %v9189
    %10954 = vmatpush1.bf16.msra.mxu0 %v9188
    %10955 = vmatprep.subr.bf16.mxu0 %v9197
    %10956 = vmatpush1.bf16.msra.mxu0 %v9196
    %10957 = vmatprep.subr.bf16.mxu0 %v9205
    %10958 = vmatpush1.bf16.msra.mxu0 %v9204
    %10959 = vmatprep.subr.bf16.mxu0 %v9213
    %10960 = vmatpush1.bf16.msra.mxu0 %v9212
    %10961 = vmatprep.subr.bf16.mxu0 %v9221
    %10962 = vmatpush1.bf16.msra.mxu0 %v9220
    %10963 = vmatprep.subr.bf16.mxu0 %v9229
    %10964 = vmatpush1.bf16.msra.mxu0 %v9228
    %10965 = vmatprep.subr.bf16.mxu0 %v9237
    %10966 = vmatpush1.bf16.msra.mxu0 %v9236
    %10967 = vmatprep.subr.bf16.mxu0 %v9245
    %10968 = vmatpush1.bf16.msra.mxu0 %v9244
    %10969 = vmatprep.subr.bf16.mxu0 %v9253
    %10970 = vmatpush1.bf16.msra.mxu0 %v9252
    %10971 = vmatprep.subr.bf16.mxu0 %v9261
    %10972 = vmatpush1.bf16.msra.mxu0 %v9260
    %10973 = vmatprep.subr.bf16.mxu0 %v9269
    %10974 = vmatpush1.bf16.msra.mxu0 %v9268
    %10975 = vmatprep.mubr.bf16.mxu0 %v4111
    %10976 = vmatmul.mubr.bf16.gmra.mrb[0].mxu0 %v4110
    %v10977 = vpop.f32.mrb[0].mxu0
    %v10978 = vadd.f32 %v10935, %v10977
    %v10979 = vpop.f32.mrb[0].mxu0
    %v10980 = vadd.f32 %v10937, %v10979
    %v10981 = vpop.f32.mrb[0].mxu0
    %v10982 = vadd.f32 %v10939, %v10981
    %v10983 = vpop.f32.mrb[0].mxu0
    %v10984 = vadd.f32 %v10941, %v10983
    %10985 = vdwg.mxu0
    %10986 = vmatprep.subr.bf16.mxu0 %v8255
    %10987 = vmatpush1.bf16.msra.mxu0 %v8254
    %10988 = vmatprep.subr.bf16.mxu0 %v8263
    %10989 = vmatpush1.bf16.msra.mxu0 %v8262
    %10990 = vmatprep.subr.bf16.mxu0 %v8271
    %10991 = vmatpush1.bf16.msra.mxu0 %v8270
    %10992 = vmatprep.subr.bf16.mxu0 %v8279
    %10993 = vmatpush1.bf16.msra.mxu0 %v8278
    %10994 = vmatprep.subr.bf16.mxu0 %v8287
    %10995 = vmatpush1.bf16.msra.mxu0 %v8286
    %10996 = vmatprep.subr.bf16.mxu0 %v8295
    %10997 = vmatpush1.bf16.msra.mxu0 %v8294
    %10998 = vmatprep.subr.bf16.mxu0 %v8303
    %10999 = vmatpush1.bf16.msra.mxu0 %v8302
    %11000 = vmatprep.subr.bf16.mxu0 %v8311
    %11001 = vmatpush1.bf16.msra.mxu0 %v8310
    %11002 = vmatprep.subr.bf16.mxu0 %v8319
    %11003 = vmatpush1.bf16.msra.mxu0 %v8318
    %11004 = vmatprep.subr.bf16.mxu0 %v8327
    %11005 = vmatpush1.bf16.msra.mxu0 %v8326
    %11006 = vmatprep.subr.bf16.mxu0 %v8335
    %11007 = vmatpush1.bf16.msra.mxu0 %v8334
    %11008 = vmatprep.subr.bf16.mxu0 %v8343
    %11009 = vmatpush1.bf16.msra.mxu0 %v8342
    %11010 = vmatprep.subr.bf16.mxu0 %v8351
    %11011 = vmatpush1.bf16.msra.mxu0 %v8350
    %11012 = vmatprep.subr.bf16.mxu0 %v8359
    %11013 = vmatpush1.bf16.msra.mxu0 %v8358
    %11014 = vmatprep.subr.bf16.mxu0 %v8367
    %11015 = vmatpush1.bf16.msra.mxu0 %v8366
    %11016 = vmatprep.subr.bf16.mxu0 %v8375
    %11017 = vmatpush1.bf16.msra.mxu0 %v8374
    %11018 = vmatprep.mubr.bf16.mxu0 %v4097
    %11019 = vmatmul.mubr.bf16.gmra.mrb[0].mxu0 %v4096
    %v11020 = vpop.f32.mrb[0].mxu0
    %v11021 = vadd.f32 %v5157, %v11020
    %v11022 = vpop.f32.mrb[0].mxu0
    %v11023 = vadd.f32 %v5161, %v11022
    %v11024 = vpop.f32.mrb[0].mxu0
    %v11025 = vadd.f32 %v5157, %v11024
    %v11026 = vpop.f32.mrb[0].mxu0
    %v11027 = vadd.f32 %v5161, %v11026
    %11028 = vdwg.mxu0
    %11029 = vmatprep.subr.bf16.mxu0 %v8383
    %11030 = vmatpush1.bf16.msra.mxu0 %v8382
    %11031 = vmatprep.subr.bf16.mxu0 %v8391
    %11032 = vmatpush1.bf16.msra.mxu0 %v8390
    %11033 = vmatprep.subr.bf16.mxu0 %v8399
    %11034 = vmatpush1.bf16.msra.mxu0 %v8398
    %11035 = vmatprep.subr.bf16.mxu0 %v8407
    %11036 = vmatpush1.bf16.msra.mxu0 %v8406
    %11037 = vmatprep.subr.bf16.mxu0 %v8415
    %11038 = vmatpush1.bf16.msra.mxu0 %v8414
    %11039 = vmatprep.subr.bf16.mxu0 %v8423
    %11040 = vmatpush1.bf16.msra.mxu0 %v8422
    %11041 = vmatprep.subr.bf16.mxu0 %v8431
    %11042 = vmatpush1.bf16.msra.mxu0 %v8430
    %11043 = vmatprep.subr.bf16.mxu0 %v8439
    %11044 = vmatpush1.bf16.msra.mxu0 %v8438
    %11045 = vmatprep.subr.bf16.mxu0 %v8447
    %11046 = vmatpush1.bf16.msra.mxu0 %v8446
    %11047 = vmatprep.subr.bf16.mxu0 %v8455
    %11048 = vmatpush1.bf16.msra.mxu0 %v8454
    %11049 = vmatprep.subr.bf16.mxu0 %v8463
    %11050 = vmatpush1.bf16.msra.mxu0 %v8462
    %11051 = vmatprep.subr.bf16.mxu0 %v8471
    %11052 = vmatpush1.bf16.msra.mxu0 %v8470
    %11053 = vmatprep.subr.bf16.mxu0 %v8479
    %11054 = vmatpush1.bf16.msra.mxu0 %v8478
    %11055 = vmatprep.subr.bf16.mxu0 %v8487
    %11056 = vmatpush1.bf16.msra.mxu0 %v8486
    %11057 = vmatprep.subr.bf16.mxu0 %v8495
    %11058 = vmatpush1.bf16.msra.mxu0 %v8494
    %11059 = vmatprep.subr.bf16.mxu0 %v8503
    %11060 = vmatpush1.bf16.msra.mxu0 %v8502
    %11061 = vmatprep.mubr.bf16.mxu0 %v4099
    %11062 = vmatmul.mubr.bf16.gmra.mrb[0].mxu0 %v4098
    %v11063 = vpop.f32.mrb[0].mxu0
    %v11064 = vadd.f32 %v11021, %v11063
    %v11065 = vpop.f32.mrb[0].mxu0
    %v11066 = vadd.f32 %v11023, %v11065
    %v11067 = vpop.f32.mrb[0].mxu0
    %v11068 = vadd.f32 %v11025, %v11067
    %v11069 = vpop.f32.mrb[0].mxu0
    %v11070 = vadd.f32 %v11027, %v11069
    %11071 = vdwg.mxu0
    %11072 = vmatprep.subr.bf16.mxu0 %v8511
    %11073 = vmatpush1.bf16.msra.mxu0 %v8510
    %11074 = vmatprep.subr.bf16.mxu0 %v8519
    %11075 = vmatpush1.bf16.msra.mxu0 %v8518
    %11076 = vmatprep.subr.bf16.mxu0 %v8527
    %11077 = vmatpush1.bf16.msra.mxu0 %v8526
    %11078 = vmatprep.subr.bf16.mxu0 %v8535
    %11079 = vmatpush1.bf16.msra.mxu0 %v8534
    %11080 = vmatprep.subr.bf16.mxu0 %v8543
    %11081 = vmatpush1.bf16.msra.mxu0 %v8542
    %11082 = vmatprep.subr.bf16.mxu0 %v8551
    %11083 = vmatpush1.bf16.msra.mxu0 %v8550
    %11084 = vmatprep.subr.bf16.mxu0 %v8559
    %11085 = vmatpush1.bf16.msra.mxu0 %v8558
    %11086 = vmatprep.subr.bf16.mxu0 %v8567
    %11087 = vmatpush1.bf16.msra.mxu0 %v8566
    %11088 = vmatprep.subr.bf16.mxu0 %v8575
    %11089 = vmatpush1.bf16.msra.mxu0 %v8574
    %11090 = vmatprep.subr.bf16.mxu0 %v8583
    %11091 = vmatpush1.bf16.msra.mxu0 %v8582
    %11092 = vmatprep.subr.bf16.mxu0 %v8591
    %11093 = vmatpush1.bf16.msra.mxu0 %v8590
    %11094 = vmatprep.subr.bf16.mxu0 %v8599
    %11095 = vmatpush1.bf16.msra.mxu0 %v8598
    %11096 = vmatprep.subr.bf16.mxu0 %v8607
    %11097 = vmatpush1.bf16.msra.mxu0 %v8606
    %11098 = vmatprep.subr.bf16.mxu0 %v8615
    %11099 = vmatpush1.bf16.msra.mxu0 %v8614
    %11100 = vmatprep.subr.bf16.mxu0 %v8623
    %11101 = vmatpush1.bf16.msra.mxu0 %v8622
    %11102 = vmatprep.subr.bf16.mxu0 %v8631
    %11103 = vmatpush1.bf16.msra.mxu0 %v8630
    %11104 = vmatprep.mubr.bf16.mxu0 %v4101
    %11105 = vmatmul.mubr.bf16.gmra.mrb[0].mxu0 %v4100
    %v11106 = vpop.f32.mrb[0].mxu0
    %v11107 = vadd.f32 %v11064, %v11106
    %v11108 = vpop.f32.mrb[0].mxu0
    %v11109 = vadd.f32 %v11066, %v11108
    %v11110 = vpop.f32.mrb[0].mxu0
    %v11111 = vadd.f32 %v11068, %v11110
    %v11112 = vpop.f32.mrb[0].mxu0
    %v11113 = vadd.f32 %v11070, %v11112
    %11114 = vdwg.mxu0
    %11115 = vmatprep.subr.bf16.mxu0 %v8639
    %11116 = vmatpush1.bf16.msra.mxu0 %v8638
    %11117 = vmatprep.subr.bf16.mxu0 %v8647
    %11118 = vmatpush1.bf16.msra.mxu0 %v8646
    %11119 = vmatprep.subr.bf16.mxu0 %v8655
    %11120 = vmatpush1.bf16.msra.mxu0 %v8654
    %11121 = vmatprep.subr.bf16.mxu0 %v8663
    %11122 = vmatpush1.bf16.msra.mxu0 %v8662
    %11123 = vmatprep.subr.bf16.mxu0 %v8671
    %11124 = vmatpush1.bf16.msra.mxu0 %v8670
    %11125 = vmatprep.subr.bf16.mxu0 %v8679
    %11126 = vmatpush1.bf16.msra.mxu0 %v8678
    %11127 = vmatprep.subr.bf16.mxu0 %v8687
    %11128 = vmatpush1.bf16.msra.mxu0 %v8686
    %11129 = vmatprep.subr.bf16.mxu0 %v8695
    %11130 = vmatpush1.bf16.msra.mxu0 %v8694
    %11131 = vmatprep.subr.bf16.mxu0 %v8703
    %11132 = vmatpush1.bf16.msra.mxu0 %v8702
    %11133 = vmatprep.subr.bf16.mxu0 %v8711
    %11134 = vmatpush1.bf16.msra.mxu0 %v8710
    %11135 = vmatprep.subr.bf16.mxu0 %v8719
    %11136 = vmatpush1.bf16.msra.mxu0 %v8718
    %11137 = vmatprep.subr.bf16.mxu0 %v8727
    %11138 = vmatpush1.bf16.msra.mxu0 %v8726
    %11139 = vmatprep.subr.bf16.mxu0 %v8735
    %11140 = vmatpush1.bf16.msra.mxu0 %v8734
    %11141 = vmatprep.subr.bf16.mxu0 %v8743
    %11142 = vmatpush1.bf16.msra.mxu0 %v8742
    %11143 = vmatprep.subr.bf16.mxu0 %v8751
    %11144 = vmatpush1.bf16.msra.mxu0 %v8750
    %11145 = vmatprep.subr.bf16.mxu0 %v8759
    %11146 = vmatpush1.bf16.msra.mxu0 %v8758
    %11147 = vmatprep.mubr.bf16.mxu0 %v4103
    %11148 = vmatmul.mubr.bf16.gmra.mrb[0].mxu0 %v4102
    %v11149 = vpop.f32.mrb[0].mxu0
    %v11150 = vadd.f32 %v11107, %v11149
    %v11151 = vpop.f32.mrb[0].mxu0
    %v11152 = vadd.f32 %v11109, %v11151
    %v11153 = vpop.f32.mrb[0].mxu0
    %v11154 = vadd.f32 %v11111, %v11153
    %v11155 = vpop.f32.mrb[0].mxu0
    %v11156 = vadd.f32 %v11113, %v11155
    %11157 = vdwg.mxu0
    %11158 = vmatprep.subr.bf16.mxu0 %v8767
    %11159 = vmatpush1.bf16.msra.mxu0 %v8766
    %11160 = vmatprep.subr.bf16.mxu0 %v8775
    %11161 = vmatpush1.bf16.msra.mxu0 %v8774
    %11162 = vmatprep.subr.bf16.mxu0 %v8783
    %11163 = vmatpush1.bf16.msra.mxu0 %v8782
    %11164 = vmatprep.subr.bf16.mxu0 %v8791
    %11165 = vmatpush1.bf16.msra.mxu0 %v8790
    %11166 = vmatprep.subr.bf16.mxu0 %v8799
    %11167 = vmatpush1.bf16.msra.mxu0 %v8798
    %11168 = vmatprep.subr.bf16.mxu0 %v8807
    %11169 = vmatpush1.bf16.msra.mxu0 %v8806
    %11170 = vmatprep.subr.bf16.mxu0 %v8815
    %11171 = vmatpush1.bf16.msra.mxu0 %v8814
    %11172 = vmatprep.subr.bf16.mxu0 %v8823
    %11173 = vmatpush1.bf16.msra.mxu0 %v8822
    %11174 = vmatprep.subr.bf16.mxu0 %v8831
    %11175 = vmatpush1.bf16.msra.mxu0 %v8830
    %11176 = vmatprep.subr.bf16.mxu0 %v8839
    %11177 = vmatpush1.bf16.msra.mxu0 %v8838
    %11178 = vmatprep.subr.bf16.mxu0 %v8847
    %11179 = vmatpush1.bf16.msra.mxu0 %v8846
    %11180 = vmatprep.subr.bf16.mxu0 %v8855
    %11181 = vmatpush1.bf16.msra.mxu0 %v8854
    %11182 = vmatprep.subr.bf16.mxu0 %v8863
    %11183 = vmatpush1.bf16.msra.mxu0 %v8862
    %11184 = vmatprep.subr.bf16.mxu0 %v8871
    %11185 = vmatpush1.bf16.msra.mxu0 %v8870
    %11186 = vmatprep.subr.bf16.mxu0 %v8879
    %11187 = vmatpush1.bf16.msra.mxu0 %v8878
    %11188 = vmatprep.subr.bf16.mxu0 %v8887
    %11189 = vmatpush1.bf16.msra.mxu0 %v8886
    %11190 = vmatprep.mubr.bf16.mxu0 %v4105
    %11191 = vmatmul.mubr.bf16.gmra.mrb[0].mxu0 %v4104
    %v11192 = vpop.f32.mrb[0].mxu0
    %v11193 = vadd.f32 %v11150, %v11192
    %v11194 = vpop.f32.mrb[0].mxu0
    %v11195 = vadd.f32 %v11152, %v11194
    %v11196 = vpop.f32.mrb[0].mxu0
    %v11197 = vadd.f32 %v11154, %v11196
    %v11198 = vpop.f32.mrb[0].mxu0
    %v11199 = vadd.f32 %v11156, %v11198
    %11200 = vdwg.mxu0
    %11201 = vmatprep.subr.bf16.mxu0 %v8895
    %11202 = vmatpush1.bf16.msra.mxu0 %v8894
    %11203 = vmatprep.subr.bf16.mxu0 %v8903
    %11204 = vmatpush1.bf16.msra.mxu0 %v8902
    %11205 = vmatprep.subr.bf16.mxu0 %v8911
    %11206 = vmatpush1.bf16.msra.mxu0 %v8910
    %11207 = vmatprep.subr.bf16.mxu0 %v8919
    %11208 = vmatpush1.bf16.msra.mxu0 %v8918
    %11209 = vmatprep.subr.bf16.mxu0 %v8927
    %11210 = vmatpush1.bf16.msra.mxu0 %v8926
    %11211 = vmatprep.subr.bf16.mxu0 %v8935
    %11212 = vmatpush1.bf16.msra.mxu0 %v8934
    %11213 = vmatprep.subr.bf16.mxu0 %v8943
    %11214 = vmatpush1.bf16.msra.mxu0 %v8942
    %11215 = vmatprep.subr.bf16.mxu0 %v8951
    %11216 = vmatpush1.bf16.msra.mxu0 %v8950
    %11217 = vmatprep.subr.bf16.mxu0 %v8959
    %11218 = vmatpush1.bf16.msra.mxu0 %v8958
    %11219 = vmatprep.subr.bf16.mxu0 %v8967
    %11220 = vmatpush1.bf16.msra.mxu0 %v8966
    %11221 = vmatprep.subr.bf16.mxu0 %v8975
    %11222 = vmatpush1.bf16.msra.mxu0 %v8974
    %11223 = vmatprep.subr.bf16.mxu0 %v8983
    %11224 = vmatpush1.bf16.msra.mxu0 %v8982
    %11225 = vmatprep.subr.bf16.mxu0 %v8991
    %11226 = vmatpush1.bf16.msra.mxu0 %v8990
    %11227 = vmatprep.subr.bf16.mxu0 %v8999
    %11228 = vmatpush1.bf16.msra.mxu0 %v8998
    %11229 = vmatprep.subr.bf16.mxu0 %v9007
    %11230 = vmatpush1.bf16.msra.mxu0 %v9006
    %11231 = vmatprep.subr.bf16.mxu0 %v9015
    %11232 = vmatpush1.bf16.msra.mxu0 %v9014
    %11233 = vmatprep.mubr.bf16.mxu0 %v4107
    %11234 = vmatmul.mubr.bf16.gmra.mrb[0].mxu0 %v4106
    %v11235 = vpop.f32.mrb[0].mxu0
    %v11236 = vadd.f32 %v11193, %v11235
    %v11237 = vpop.f32.mrb[0].mxu0
    %v11238 = vadd.f32 %v11195, %v11237
    %v11239 = vpop.f32.mrb[0].mxu0
    %v11240 = vadd.f32 %v11197, %v11239
    %v11241 = vpop.f32.mrb[0].mxu0
    %v11242 = vadd.f32 %v11199, %v11241
    %11243 = vdwg.mxu0
    %11244 = vmatprep.subr.bf16.mxu0 %v9023
    %11245 = vmatpush1.bf16.msra.mxu0 %v9022
    %11246 = vmatprep.subr.bf16.mxu0 %v9031
    %11247 = vmatpush1.bf16.msra.mxu0 %v9030
    %11248 = vmatprep.subr.bf16.mxu0 %v9039
    %11249 = vmatpush1.bf16.msra.mxu0 %v9038
    %11250 = vmatprep.subr.bf16.mxu0 %v9047
    %11251 = vmatpush1.bf16.msra.mxu0 %v9046
    %11252 = vmatprep.subr.bf16.mxu0 %v9055
    %11253 = vmatpush1.bf16.msra.mxu0 %v9054
    %11254 = vmatprep.subr.bf16.mxu0 %v9063
    %11255 = vmatpush1.bf16.msra.mxu0 %v9062
    %11256 = vmatprep.subr.bf16.mxu0 %v9071
    %11257 = vmatpush1.bf16.msra.mxu0 %v9070
    %11258 = vmatprep.subr.bf16.mxu0 %v9079
    %11259 = vmatpush1.bf16.msra.mxu0 %v9078
    %11260 = vmatprep.subr.bf16.mxu0 %v9087
    %11261 = vmatpush1.bf16.msra.mxu0 %v9086
    %11262 = vmatprep.subr.bf16.mxu0 %v9095
    %11263 = vmatpush1.bf16.msra.mxu0 %v9094
    %11264 = vmatprep.subr.bf16.mxu0 %v9103
    %11265 = vmatpush1.bf16.msra.mxu0 %v9102
    %11266 = vmatprep.subr.bf16.mxu0 %v9111
    %11267 = vmatpush1.bf16.msra.mxu0 %v9110
    %11268 = vmatprep.subr.bf16.mxu0 %v9119
    %11269 = vmatpush1.bf16.msra.mxu0 %v9118
    %11270 = vmatprep.subr.bf16.mxu0 %v9127
    %11271 = vmatpush1.bf16.msra.mxu0 %v9126
    %11272 = vmatprep.subr.bf16.mxu0 %v9135
    %11273 = vmatpush1.bf16.msra.mxu0 %v9134
    %11274 = vmatprep.subr.bf16.mxu0 %v9143
    %11275 = vmatpush1.bf16.msra.mxu0 %v9142
    %11276 = vmatprep.mubr.bf16.mxu0 %v4109
    %11277 = vmatmul.mubr.bf16.gmra.mrb[0].mxu0 %v4108
    %v11278 = vpop.f32.mrb[0].mxu0
    %v11279 = vadd.f32 %v11236, %v11278
    %v11280 = vpop.f32.mrb[0].mxu0
    %v11281 = vadd.f32 %v11238, %v11280
    %v11282 = vpop.f32.mrb[0].mxu0
    %v11283 = vadd.f32 %v11240, %v11282
    %v11284 = vpop.f32.mrb[0].mxu0
    %v11285 = vadd.f32 %v11242, %v11284
    %11286 = vdwg.mxu0
    %11287 = vmatprep.subr.bf16.mxu0 %v9151
    %11288 = vmatpush1.bf16.msra.mxu0 %v9150
    %11289 = vmatprep.subr.bf16.mxu0 %v9159
    %11290 = vmatpush1.bf16.msra.mxu0 %v9158
    %11291 = vmatprep.subr.bf16.mxu0 %v9167
    %11292 = vmatpush1.bf16.msra.mxu0 %v9166
    %11293 = vmatprep.subr.bf16.mxu0 %v9175
    %11294 = vmatpush1.bf16.msra.mxu0 %v9174
    %11295 = vmatprep.subr.bf16.mxu0 %v9183
    %11296 = vmatpush1.bf16.msra.mxu0 %v9182
    %11297 = vmatprep.subr.bf16.mxu0 %v9191
    %11298 = vmatpush1.bf16.msra.mxu0 %v9190
    %11299 = vmatprep.subr.bf16.mxu0 %v9199
    %11300 = vmatpush1.bf16.msra.mxu0 %v9198
    %11301 = vmatprep.subr.bf16.mxu0 %v9207
    %11302 = vmatpush1.bf16.msra.mxu0 %v9206
    %11303 = vmatprep.subr.bf16.mxu0 %v9215
    %11304 = vmatpush1.bf16.msra.mxu0 %v9214
    %11305 = vmatprep.subr.bf16.mxu0 %v9223
    %11306 = vmatpush1.bf16.msra.mxu0 %v9222
    %11307 = vmatprep.subr.bf16.mxu0 %v9231
    %11308 = vmatpush1.bf16.msra.mxu0 %v9230
    %11309 = vmatprep.subr.bf16.mxu0 %v9239
    %11310 = vmatpush1.bf16.msra.mxu0 %v9238
    %11311 = vmatprep.subr.bf16.mxu0 %v9247
    %11312 = vmatpush1.bf16.msra.mxu0 %v9246
    %11313 = vmatprep.subr.bf16.mxu0 %v9255
    %11314 = vmatpush1.bf16.msra.mxu0 %v9254
    %11315 = vmatprep.subr.bf16.mxu0 %v9263
    %11316 = vmatpush1.bf16.msra.mxu0 %v9262
    %11317 = vmatprep.subr.bf16.mxu0 %v9271
    %11318 = vmatpush1.bf16.msra.mxu0 %v9270
    %11319 = vmatprep.mubr.bf16.mxu0 %v4111
    %11320 = vmatmul.mubr.bf16.gmra.mrb[0].mxu0 %v4110
    %v11321 = vpop.f32.mrb[0].mxu0
    %v11322 = vadd.f32 %v11279, %v11321
    %v11323 = vpop.f32.mrb[0].mxu0
    %v11324 = vadd.f32 %v11281, %v11323
    %v11325 = vpop.f32.mrb[0].mxu0
    %v11326 = vadd.f32 %v11283, %v11325
    %v11327 = vpop.f32.mrb[0].mxu0
    %v11328 = vadd.f32 %v11285, %v11327
    %11329 = vdwg.mxu0
    %11330 = vmatprep.subr.bf16.mxu0 %v8257
    %11331 = vmatpush1.bf16.msra.mxu0 %v8256
    %11332 = vmatprep.subr.bf16.mxu0 %v8265
    %11333 = vmatpush1.bf16.msra.mxu0 %v8264
    %11334 = vmatprep.subr.bf16.mxu0 %v8273
    %11335 = vmatpush1.bf16.msra.mxu0 %v8272
    %11336 = vmatprep.subr.bf16.mxu0 %v8281
    %11337 = vmatpush1.bf16.msra.mxu0 %v8280
    %11338 = vmatprep.subr.bf16.mxu0 %v8289
    %11339 = vmatpush1.bf16.msra.mxu0 %v8288
    %11340 = vmatprep.subr.bf16.mxu0 %v8297
    %11341 = vmatpush1.bf16.msra.mxu0 %v8296
    %11342 = vmatprep.subr.bf16.mxu0 %v8305
    %11343 = vmatpush1.bf16.msra.mxu0 %v8304
    %11344 = vmatprep.subr.bf16.mxu0 %v8313
    %11345 = vmatpush1.bf16.msra.mxu0 %v8312
    %11346 = vmatprep.subr.bf16.mxu0 %v8321
    %11347 = vmatpush1.bf16.msra.mxu0 %v8320
    %11348 = vmatprep.subr.bf16.mxu0 %v8329
    %11349 = vmatpush1.bf16.msra.mxu0 %v8328
    %11350 = vmatprep.subr.bf16.mxu0 %v8337
    %11351 = vmatpush1.bf16.msra.mxu0 %v8336
    %11352 = vmatprep.subr.bf16.mxu0 %v8345
    %11353 = vmatpush1.bf16.msra.mxu0 %v8344
    %11354 = vmatprep.subr.bf16.mxu0 %v8353
    %11355 = vmatpush1.bf16.msra.mxu0 %v8352
    %11356 = vmatprep.subr.bf16.mxu0 %v8361
    %11357 = vmatpush1.bf16.msra.mxu0 %v8360
    %11358 = vmatprep.subr.bf16.mxu0 %v8369
    %11359 = vmatpush1.bf16.msra.mxu0 %v8368
    %11360 = vmatprep.subr.bf16.mxu0 %v8377
    %11361 = vmatpush1.bf16.msra.mxu0 %v8376
    %11362 = vmatprep.mubr.bf16.mxu0 %v4097
    %11363 = vmatmul.mubr.bf16.gmra.mrb[0].mxu0 %v4096
    %v11364 = vpop.f32.mrb[0].mxu0
    %v11365 = vadd.f32 %v5165, %v11364
    %v11366 = vpop.f32.mrb[0].mxu0
    %v11367 = vadd.f32 %v5169, %v11366
    %v11368 = vpop.f32.mrb[0].mxu0
    %v11369 = vadd.f32 %v5165, %v11368
    %v11370 = vpop.f32.mrb[0].mxu0
    %v11371 = vadd.f32 %v5169, %v11370
    %11372 = vdwg.mxu0
    %11373 = vmatprep.subr.bf16.mxu0 %v8385
    %11374 = vmatpush1.bf16.msra.mxu0 %v8384
    %11375 = vmatprep.subr.bf16.mxu0 %v8393
    %11376 = vmatpush1.bf16.msra.mxu0 %v8392
    %11377 = vmatprep.subr.bf16.mxu0 %v8401
    %11378 = vmatpush1.bf16.msra.mxu0 %v8400
    %11379 = vmatprep.subr.bf16.mxu0 %v8409
    %11380 = vmatpush1.bf16.msra.mxu0 %v8408
    %11381 = vmatprep.subr.bf16.mxu0 %v8417
    %11382 = vmatpush1.bf16.msra.mxu0 %v8416
    %11383 = vmatprep.subr.bf16.mxu0 %v8425
    %11384 = vmatpush1.bf16.msra.mxu0 %v8424
    %11385 = vmatprep.subr.bf16.mxu0 %v8433
    %11386 = vmatpush1.bf16.msra.mxu0 %v8432
    %11387 = vmatprep.subr.bf16.mxu0 %v8441
    %11388 = vmatpush1.bf16.msra.mxu0 %v8440
    %11389 = vmatprep.subr.bf16.mxu0 %v8449
    %11390 = vmatpush1.bf16.msra.mxu0 %v8448
    %11391 = vmatprep.subr.bf16.mxu0 %v8457
    %11392 = vmatpush1.bf16.msra.mxu0 %v8456
    %11393 = vmatprep.subr.bf16.mxu0 %v8465
    %11394 = vmatpush1.bf16.msra.mxu0 %v8464
    %11395 = vmatprep.subr.bf16.mxu0 %v8473
    %11396 = vmatpush1.bf16.msra.mxu0 %v8472
    %11397 = vmatprep.subr.bf16.mxu0 %v8481
    %11398 = vmatpush1.bf16.msra.mxu0 %v8480
    %11399 = vmatprep.subr.bf16.mxu0 %v8489
    %11400 = vmatpush1.bf16.msra.mxu0 %v8488
    %11401 = vmatprep.subr.bf16.mxu0 %v8497
    %11402 = vmatpush1.bf16.msra.mxu0 %v8496
    %11403 = vmatprep.subr.bf16.mxu0 %v8505
    %11404 = vmatpush1.bf16.msra.mxu0 %v8504
    %11405 = vmatprep.mubr.bf16.mxu0 %v4099
    %11406 = vmatmul.mubr.bf16.gmra.mrb[0].mxu0 %v4098
    %v11407 = vpop.f32.mrb[0].mxu0
    %v11408 = vadd.f32 %v11365, %v11407
    %v11409 = vpop.f32.mrb[0].mxu0
    %v11410 = vadd.f32 %v11367, %v11409
    %v11411 = vpop.f32.mrb[0].mxu0
    %v11412 = vadd.f32 %v11369, %v11411
    %v11413 = vpop.f32.mrb[0].mxu0
    %v11414 = vadd.f32 %v11371, %v11413
    %11415 = vdwg.mxu0
    %11416 = vmatprep.subr.bf16.mxu0 %v8513
    %11417 = vmatpush1.bf16.msra.mxu0 %v8512
    %11418 = vmatprep.subr.bf16.mxu0 %v8521
    %11419 = vmatpush1.bf16.msra.mxu0 %v8520
    %11420 = vmatprep.subr.bf16.mxu0 %v8529
    %11421 = vmatpush1.bf16.msra.mxu0 %v8528
    %11422 = vmatprep.subr.bf16.mxu0 %v8537
    %11423 = vmatpush1.bf16.msra.mxu0 %v8536
    %11424 = vmatprep.subr.bf16.mxu0 %v8545
    %11425 = vmatpush1.bf16.msra.mxu0 %v8544
    %11426 = vmatprep.subr.bf16.mxu0 %v8553
    %11427 = vmatpush1.bf16.msra.mxu0 %v8552
    %11428 = vmatprep.subr.bf16.mxu0 %v8561
    %11429 = vmatpush1.bf16.msra.mxu0 %v8560
    %11430 = vmatprep.subr.bf16.mxu0 %v8569
    %11431 = vmatpush1.bf16.msra.mxu0 %v8568
    %11432 = vmatprep.subr.bf16.mxu0 %v8577
    %11433 = vmatpush1.bf16.msra.mxu0 %v8576
    %11434 = vmatprep.subr.bf16.mxu0 %v8585
    %11435 = vmatpush1.bf16.msra.mxu0 %v8584
    %11436 = vmatprep.subr.bf16.mxu0 %v8593
    %11437 = vmatpush1.bf16.msra.mxu0 %v8592
    %11438 = vmatprep.subr.bf16.mxu0 %v8601
    %11439 = vmatpush1.bf16.msra.mxu0 %v8600
    %11440 = vmatprep.subr.bf16.mxu0 %v8609
    %11441 = vmatpush1.bf16.msra.mxu0 %v8608
    %11442 = vmatprep.subr.bf16.mxu0 %v8617
    %11443 = vmatpush1.bf16.msra.mxu0 %v8616
    %11444 = vmatprep.subr.bf16.mxu0 %v8625
    %11445 = vmatpush1.bf16.msra.mxu0 %v8624
    %11446 = vmatprep.subr.bf16.mxu0 %v8633
    %11447 = vmatpush1.bf16.msra.mxu0 %v8632
    %11448 = vmatprep.mubr.bf16.mxu0 %v4101
    %11449 = vmatmul.mubr.bf16.gmra.mrb[0].mxu0 %v4100
    %v11450 = vpop.f32.mrb[0].mxu0
    %v11451 = vadd.f32 %v11408, %v11450
    %v11452 = vpop.f32.mrb[0].mxu0
    %v11453 = vadd.f32 %v11410, %v11452
    %v11454 = vpop.f32.mrb[0].mxu0
    %v11455 = vadd.f32 %v11412, %v11454
    %v11456 = vpop.f32.mrb[0].mxu0
    %v11457 = vadd.f32 %v11414, %v11456
    %11458 = vdwg.mxu0
    %11459 = vmatprep.subr.bf16.mxu0 %v8641
    %11460 = vmatpush1.bf16.msra.mxu0 %v8640
    %11461 = vmatprep.subr.bf16.mxu0 %v8649
    %11462 = vmatpush1.bf16.msra.mxu0 %v8648
    %11463 = vmatprep.subr.bf16.mxu0 %v8657
    %11464 = vmatpush1.bf16.msra.mxu0 %v8656
    %11465 = vmatprep.subr.bf16.mxu0 %v8665
    %11466 = vmatpush1.bf16.msra.mxu0 %v8664
    %11467 = vmatprep.subr.bf16.mxu0 %v8673
    %11468 = vmatpush1.bf16.msra.mxu0 %v8672
    %11469 = vmatprep.subr.bf16.mxu0 %v8681
    %11470 = vmatpush1.bf16.msra.mxu0 %v8680
    %11471 = vmatprep.subr.bf16.mxu0 %v8689
    %11472 = vmatpush1.bf16.msra.mxu0 %v8688
    %11473 = vmatprep.subr.bf16.mxu0 %v8697
    %11474 = vmatpush1.bf16.msra.mxu0 %v8696
    %11475 = vmatprep.subr.bf16.mxu0 %v8705
    %11476 = vmatpush1.bf16.msra.mxu0 %v8704
    %11477 = vmatprep.subr.bf16.mxu0 %v8713
    %11478 = vmatpush1.bf16.msra.mxu0 %v8712
    %11479 = vmatprep.subr.bf16.mxu0 %v8721
    %11480 = vmatpush1.bf16.msra.mxu0 %v8720
    %11481 = vmatprep.subr.bf16.mxu0 %v8729
    %11482 = vmatpush1.bf16.msra.mxu0 %v8728
    %11483 = vmatprep.subr.bf16.mxu0 %v8737
    %11484 = vmatpush1.bf16.msra.mxu0 %v8736
    %11485 = vmatprep.subr.bf16.mxu0 %v8745
    %11486 = vmatpush1.bf16.msra.mxu0 %v8744
    %11487 = vmatprep.subr.bf16.mxu0 %v8753
    %11488 = vmatpush1.bf16.msra.mxu0 %v8752
    %11489 = vmatprep.subr.bf16.mxu0 %v8761
    %11490 = vmatpush1.bf16.msra.mxu0 %v8760
    %11491 = vmatprep.mubr.bf16.mxu0 %v4103
    %11492 = vmatmul.mubr.bf16.gmra.mrb[0].mxu0 %v4102
    %v11493 = vpop.f32.mrb[0].mxu0
    %v11494 = vadd.f32 %v11451, %v11493
    %v11495 = vpop.f32.mrb[0].mxu0
    %v11496 = vadd.f32 %v11453, %v11495
    %v11497 = vpop.f32.mrb[0].mxu0
    %v11498 = vadd.f32 %v11455, %v11497
    %v11499 = vpop.f32.mrb[0].mxu0
    %v11500 = vadd.f32 %v11457, %v11499
    %11501 = vdwg.mxu0
    %11502 = vmatprep.subr.bf16.mxu0 %v8769
    %11503 = vmatpush1.bf16.msra.mxu0 %v8768
    %11504 = vmatprep.subr.bf16.mxu0 %v8777
    %11505 = vmatpush1.bf16.msra.mxu0 %v8776
    %11506 = vmatprep.subr.bf16.mxu0 %v8785
    %11507 = vmatpush1.bf16.msra.mxu0 %v8784
    %11508 = vmatprep.subr.bf16.mxu0 %v8793
    %11509 = vmatpush1.bf16.msra.mxu0 %v8792
    %11510 = vmatprep.subr.bf16.mxu0 %v8801
    %11511 = vmatpush1.bf16.msra.mxu0 %v8800
    %11512 = vmatprep.subr.bf16.mxu0 %v8809
    %11513 = vmatpush1.bf16.msra.mxu0 %v8808
    %11514 = vmatprep.subr.bf16.mxu0 %v8817
    %11515 = vmatpush1.bf16.msra.mxu0 %v8816
    %11516 = vmatprep.subr.bf16.mxu0 %v8825
    %11517 = vmatpush1.bf16.msra.mxu0 %v8824
    %11518 = vmatprep.subr.bf16.mxu0 %v8833
    %11519 = vmatpush1.bf16.msra.mxu0 %v8832
    %11520 = vmatprep.subr.bf16.mxu0 %v8841
    %11521 = vmatpush1.bf16.msra.mxu0 %v8840
    %11522 = vmatprep.subr.bf16.mxu0 %v8849
    %11523 = vmatpush1.bf16.msra.mxu0 %v8848
    %11524 = vmatprep.subr.bf16.mxu0 %v8857
    %11525 = vmatpush1.bf16.msra.mxu0 %v8856
    %11526 = vmatprep.subr.bf16.mxu0 %v8865
    %11527 = vmatpush1.bf16.msra.mxu0 %v8864
    %11528 = vmatprep.subr.bf16.mxu0 %v8873
    %11529 = vmatpush1.bf16.msra.mxu0 %v8872
    %11530 = vmatprep.subr.bf16.mxu0 %v8881
    %11531 = vmatpush1.bf16.msra.mxu0 %v8880
    %11532 = vmatprep.subr.bf16.mxu0 %v8889
    %11533 = vmatpush1.bf16.msra.mxu0 %v8888
    %11534 = vmatprep.mubr.bf16.mxu0 %v4105
    %11535 = vmatmul.mubr.bf16.gmra.mrb[0].mxu0 %v4104
    %v11536 = vpop.f32.mrb[0].mxu0
    %v11537 = vadd.f32 %v11494, %v11536
    %v11538 = vpop.f32.mrb[0].mxu0
    %v11539 = vadd.f32 %v11496, %v11538
    %v11540 = vpop.f32.mrb[0].mxu0
    %v11541 = vadd.f32 %v11498, %v11540
    %v11542 = vpop.f32.mrb[0].mxu0
    %v11543 = vadd.f32 %v11500, %v11542
    %11544 = vdwg.mxu0
    %11545 = vmatprep.subr.bf16.mxu0 %v8897
    %11546 = vmatpush1.bf16.msra.mxu0 %v8896
    %11547 = vmatprep.subr.bf16.mxu0 %v8905
    %11548 = vmatpush1.bf16.msra.mxu0 %v8904
    %11549 = vmatprep.subr.bf16.mxu0 %v8913
    %11550 = vmatpush1.bf16.msra.mxu0 %v8912
    %11551 = vmatprep.subr.bf16.mxu0 %v8921
    %11552 = vmatpush1.bf16.msra.mxu0 %v8920
    %11553 = vmatprep.subr.bf16.mxu0 %v8929
    %11554 = vmatpush1.bf16.msra.mxu0 %v8928
    %11555 = vmatprep.subr.bf16.mxu0 %v8937
    %11556 = vmatpush1.bf16.msra.mxu0 %v8936
    %11557 = vmatprep.subr.bf16.mxu0 %v8945
    %11558 = vmatpush1.bf16.msra.mxu0 %v8944
    %11559 = vmatprep.subr.bf16.mxu0 %v8953
    %11560 = vmatpush1.bf16.msra.mxu0 %v8952
    %11561 = vmatprep.subr.bf16.mxu0 %v8961
    %11562 = vmatpush1.bf16.msra.mxu0 %v8960
    %11563 = vmatprep.subr.bf16.mxu0 %v8969
    %11564 = vmatpush1.bf16.msra.mxu0 %v8968
    %11565 = vmatprep.subr.bf16.mxu0 %v8977
    %11566 = vmatpush1.bf16.msra.mxu0 %v8976
    %11567 = vmatprep.subr.bf16.mxu0 %v8985
    %11568 = vmatpush1.bf16.msra.mxu0 %v8984
    %11569 = vmatprep.subr.bf16.mxu0 %v8993
    %11570 = vmatpush1.bf16.msra.mxu0 %v8992
    %11571 = vmatprep.subr.bf16.mxu0 %v9001
    %11572 = vmatpush1.bf16.msra.mxu0 %v9000
    %11573 = vmatprep.subr.bf16.mxu0 %v9009
    %11574 = vmatpush1.bf16.msra.mxu0 %v9008
    %11575 = vmatprep.subr.bf16.mxu0 %v9017
    %11576 = vmatpush1.bf16.msra.mxu0 %v9016
    %11577 = vmatprep.mubr.bf16.mxu0 %v4107
    %11578 = vmatmul.mubr.bf16.gmra.mrb[0].mxu0 %v4106
    %v11579 = vpop.f32.mrb[0].mxu0
    %v11580 = vadd.f32 %v11537, %v11579
    %v11581 = vpop.f32.mrb[0].mxu0
    %v11582 = vadd.f32 %v11539, %v11581
    %v11583 = vpop.f32.mrb[0].mxu0
    %v11584 = vadd.f32 %v11541, %v11583
    %v11585 = vpop.f32.mrb[0].mxu0
    %v11586 = vadd.f32 %v11543, %v11585
    %11587 = vdwg.mxu0
    %11588 = vmatprep.subr.bf16.mxu0 %v9025
    %11589 = vmatpush1.bf16.msra.mxu0 %v9024
    %11590 = vmatprep.subr.bf16.mxu0 %v9033
    %11591 = vmatpush1.bf16.msra.mxu0 %v9032
    %11592 = vmatprep.subr.bf16.mxu0 %v9041
    %11593 = vmatpush1.bf16.msra.mxu0 %v9040
    %11594 = vmatprep.subr.bf16.mxu0 %v9049
    %11595 = vmatpush1.bf16.msra.mxu0 %v9048
    %11596 = vmatprep.subr.bf16.mxu0 %v9057
    %11597 = vmatpush1.bf16.msra.mxu0 %v9056
    %11598 = vmatprep.subr.bf16.mxu0 %v9065
    %11599 = vmatpush1.bf16.msra.mxu0 %v9064
    %11600 = vmatprep.subr.bf16.mxu0 %v9073
    %11601 = vmatpush1.bf16.msra.mxu0 %v9072
    %11602 = vmatprep.subr.bf16.mxu0 %v9081
    %11603 = vmatpush1.bf16.msra.mxu0 %v9080
    %11604 = vmatprep.subr.bf16.mxu0 %v9089
    %11605 = vmatpush1.bf16.msra.mxu0 %v9088
    %11606 = vmatprep.subr.bf16.mxu0 %v9097
    %11607 = vmatpush1.bf16.msra.mxu0 %v9096
    %11608 = vmatprep.subr.bf16.mxu0 %v9105
    %11609 = vmatpush1.bf16.msra.mxu0 %v9104
    %11610 = vmatprep.subr.bf16.mxu0 %v9113
    %11611 = vmatpush1.bf16.msra.mxu0 %v9112
    %11612 = vmatprep.subr.bf16.mxu0 %v9121
    %11613 = vmatpush1.bf16.msra.mxu0 %v9120
    %11614 = vmatprep.subr.bf16.mxu0 %v9129
    %11615 = vmatpush1.bf16.msra.mxu0 %v9128
    %11616 = vmatprep.subr.bf16.mxu0 %v9137
    %11617 = vmatpush1.bf16.msra.mxu0 %v9136
    %11618 = vmatprep.subr.bf16.mxu0 %v9145
    %11619 = vmatpush1.bf16.msra.mxu0 %v9144
    %11620 = vmatprep.mubr.bf16.mxu0 %v4109
    %11621 = vmatmul.mubr.bf16.gmra.mrb[0].mxu0 %v4108
    %v11622 = vpop.f32.mrb[0].mxu0
    %v11623 = vadd.f32 %v11580, %v11622
    %v11624 = vpop.f32.mrb[0].mxu0
    %v11625 = vadd.f32 %v11582, %v11624
    %v11626 = vpop.f32.mrb[0].mxu0
    %v11627 = vadd.f32 %v11584, %v11626
    %v11628 = vpop.f32.mrb[0].mxu0
    %v11629 = vadd.f32 %v11586, %v11628
    %11630 = vdwg.mxu0
    %11631 = vmatprep.subr.bf16.mxu0 %v9153
    %11632 = vmatpush1.bf16.msra.mxu0 %v9152
    %11633 = vmatprep.subr.bf16.mxu0 %v9161
    %11634 = vmatpush1.bf16.msra.mxu0 %v9160
    %11635 = vmatprep.subr.bf16.mxu0 %v9169
    %11636 = vmatpush1.bf16.msra.mxu0 %v9168
    %11637 = vmatprep.subr.bf16.mxu0 %v9177
    %11638 = vmatpush1.bf16.msra.mxu0 %v9176
    %11639 = vmatprep.subr.bf16.mxu0 %v9185
    %11640 = vmatpush1.bf16.msra.mxu0 %v9184
    %11641 = vmatprep.subr.bf16.mxu0 %v9193
    %11642 = vmatpush1.bf16.msra.mxu0 %v9192
    %11643 = vmatprep.subr.bf16.mxu0 %v9201
    %11644 = vmatpush1.bf16.msra.mxu0 %v9200
    %11645 = vmatprep.subr.bf16.mxu0 %v9209
    %11646 = vmatpush1.bf16.msra.mxu0 %v9208
    %11647 = vmatprep.subr.bf16.mxu0 %v9217
    %11648 = vmatpush1.bf16.msra.mxu0 %v9216
    %11649 = vmatprep.subr.bf16.mxu0 %v9225
    %11650 = vmatpush1.bf16.msra.mxu0 %v9224
    %11651 = vmatprep.subr.bf16.mxu0 %v9233
    %11652 = vmatpush1.bf16.msra.mxu0 %v9232
    %11653 = vmatprep.subr.bf16.mxu0 %v9241
    %11654 = vmatpush1.bf16.msra.mxu0 %v9240
    %11655 = vmatprep.subr.bf16.mxu0 %v9249
    %11656 = vmatpush1.bf16.msra.mxu0 %v9248
    %11657 = vmatprep.subr.bf16.mxu0 %v9257
    %11658 = vmatpush1.bf16.msra.mxu0 %v9256
    %11659 = vmatprep.subr.bf16.mxu0 %v9265
    %11660 = vmatpush1.bf16.msra.mxu0 %v9264
    %11661 = vmatprep.subr.bf16.mxu0 %v9273
    %11662 = vmatpush1.bf16.msra.mxu0 %v9272
    %11663 = vmatprep.mubr.bf16.mxu0 %v4111
    %11664 = vmatmul.mubr.bf16.gmra.mrb[0].mxu0 %v4110
    %v11665 = vpop.f32.mrb[0].mxu0
    %v11666 = vadd.f32 %v11623, %v11665
    %v11667 = vpop.f32.mrb[0].mxu0
    %v11668 = vadd.f32 %v11625, %v11667
    %v11669 = vpop.f32.mrb[0].mxu0
    %v11670 = vadd.f32 %v11627, %v11669
    %v11671 = vpop.f32.mrb[0].mxu0
    %v11672 = vadd.f32 %v11629, %v11671
    %11673 = vdwg.mxu0
    %v11674 = vmax.f32 %v10634, 0.0
    %v11675 = vmax.f32 %v10636, 0.0
    %v11676 = vmax.f32 %v10978, 0.0
    %v11677 = vmax.f32 %v10980, 0.0
    %v11678 = vmax.f32 %v11322, 0.0
    %v11679 = vmax.f32 %v11324, 0.0
    %v11680 = vmax.f32 %v11666, 0.0
    %v11681 = vmax.f32 %v11668, 0.0
    %v11682 = vmax.f32 %v10638, 0.0
    %v11683 = vmax.f32 %v10640, 0.0
    %v11684 = vmax.f32 %v10982, 0.0
    %v11685 = vmax.f32 %v10984, 0.0
    %v11686 = vmax.f32 %v11326, 0.0
    %v11687 = vmax.f32 %v11328, 0.0
    %v11688 = vmax.f32 %v11670, 0.0
    %v11689 = vmax.f32 %v11672, 0.0
    %v11690 = vpack.c.bf16 %v11682, %v11674
    %v11691 = vpack.c.bf16 %v11683, %v11675
    %v11692 = vpack.c.bf16 %v11684, %v11676
    %v11693 = vpack.c.bf16 %v11685, %v11677
    %v11694 = vpack.c.bf16 %v11686, %v11678
    %v11695 = vpack.c.bf16 %v11687, %v11679
    %v11696 = vpack.c.bf16 %v11688, %v11680
    %v11697 = vpack.c.bf16 %v11689, %v11681
    %v11698 = vld [vmem:[#allocation9] sm:$0xff]
    %v11699 = vld [vmem:[#allocation9 + $0x8] sm:$0xff]
    %v11700 = vld [vmem:[#allocation9 + $0x10] sm:$0xff]
    %v11701 = vld [vmem:[#allocation9 + $0x18] sm:$0xff]
    %v11702 = vld [vmem:[#allocation9 + $0x20] sm:$0xff]
    %v11703 = vld [vmem:[#allocation9 + $0x28] sm:$0xff]
    %v11704 = vld [vmem:[#allocation9 + $0x30] sm:$0xff]
    %v11705 = vld [vmem:[#allocation9 + $0x38] sm:$0xff]
    %v11706 = vld [vmem:[#allocation9 + $0x40] sm:$0xff]
    %v11707 = vld [vmem:[#allocation9 + $0x48] sm:$0xff]
    %v11708 = vld [vmem:[#allocation9 + $0x50] sm:$0xff]
    %v11709 = vld [vmem:[#allocation9 + $0x58] sm:$0xff]
    %v11710 = vld [vmem:[#allocation9 + $0x60] sm:$0xff]
    %v11711 = vld [vmem:[#allocation9 + $0x68] sm:$0xff]
    %v11712 = vld [vmem:[#allocation9 + $0x70] sm:$0xff]
    %v11713 = vld [vmem:[#allocation9 + $0x78] sm:$0xff]
    %v11714 = vld [vmem:[#allocation9 + $0x80] sm:$0xff]
    %v11715 = vld [vmem:[#allocation9 + $0x88] sm:$0xff]
    %v11716 = vld [vmem:[#allocation9 + $0x90] sm:$0xff]
    %v11717 = vld [vmem:[#allocation9 + $0x98] sm:$0xff]
    %v11718 = vld [vmem:[#allocation9 + $0xa0] sm:$0xff]
    %v11719 = vld [vmem:[#allocation9 + $0xa8] sm:$0xff]
    %v11720 = vld [vmem:[#allocation9 + $0xb0] sm:$0xff]
    %v11721 = vld [vmem:[#allocation9 + $0xb8] sm:$0xff]
    %v11722 = vld [vmem:[#allocation9 + $0xc0] sm:$0xff]
    %v11723 = vld [vmem:[#allocation9 + $0xc8] sm:$0xff]
    %v11724 = vld [vmem:[#allocation9 + $0xd0] sm:$0xff]
    %v11725 = vld [vmem:[#allocation9 + $0xd8] sm:$0xff]
    %v11726 = vld [vmem:[#allocation9 + $0xe0] sm:$0xff]
    %v11727 = vld [vmem:[#allocation9 + $0xe8] sm:$0xff]
    %v11728 = vld [vmem:[#allocation9 + $0xf0] sm:$0xff]
    %v11729 = vld [vmem:[#allocation9 + $0xf8] sm:$0xff]
    %v11730 = vld [vmem:[#allocation9 + $0x100] sm:$0xff]
    %v11731 = vld [vmem:[#allocation9 + $0x108] sm:$0xff]
    %v11732 = vld [vmem:[#allocation9 + $0x110] sm:$0xff]
    %v11733 = vld [vmem:[#allocation9 + $0x118] sm:$0xff]
    %v11734 = vld [vmem:[#allocation9 + $0x120] sm:$0xff]
    %v11735 = vld [vmem:[#allocation9 + $0x128] sm:$0xff]
    %v11736 = vld [vmem:[#allocation9 + $0x130] sm:$0xff]
    %v11737 = vld [vmem:[#allocation9 + $0x138] sm:$0xff]
    %v11738 = vld [vmem:[#allocation9 + $0x140] sm:$0xff]
    %v11739 = vld [vmem:[#allocation9 + $0x148] sm:$0xff]
    %v11740 = vld [vmem:[#allocation9 + $0x150] sm:$0xff]
    %v11741 = vld [vmem:[#allocation9 + $0x158] sm:$0xff]
    %v11742 = vld [vmem:[#allocation9 + $0x160] sm:$0xff]
    %v11743 = vld [vmem:[#allocation9 + $0x168] sm:$0xff]
    %v11744 = vld [vmem:[#allocation9 + $0x170] sm:$0xff]
    %v11745 = vld [vmem:[#allocation9 + $0x178] sm:$0xff]
    %v11746 = vld [vmem:[#allocation9 + $0x180] sm:$0xff]
    %v11747 = vld [vmem:[#allocation9 + $0x188] sm:$0xff]
    %v11748 = vld [vmem:[#allocation9 + $0x190] sm:$0xff]
    %v11749 = vld [vmem:[#allocation9 + $0x198] sm:$0xff]
    %v11750 = vld [vmem:[#allocation9 + $0x1a0] sm:$0xff]
    %v11751 = vld [vmem:[#allocation9 + $0x1a8] sm:$0xff]
    %v11752 = vld [vmem:[#allocation9 + $0x1b0] sm:$0xff]
    %v11753 = vld [vmem:[#allocation9 + $0x1b8] sm:$0xff]
    %v11754 = vld [vmem:[#allocation9 + $0x1c0] sm:$0xff]
    %v11755 = vld [vmem:[#allocation9 + $0x1c8] sm:$0xff]
    %v11756 = vld [vmem:[#allocation9 + $0x1d0] sm:$0xff]
    %v11757 = vld [vmem:[#allocation9 + $0x1d8] sm:$0xff]
    %v11758 = vld [vmem:[#allocation9 + $0x1e0] sm:$0xff]
    %v11759 = vld [vmem:[#allocation9 + $0x1e8] sm:$0xff]
    %v11760 = vld [vmem:[#allocation9 + $0x1f0] sm:$0xff]
    %v11761 = vld [vmem:[#allocation9 + $0x1f8] sm:$0xff]
    %v11762 = vld [vmem:[#allocation9 + $0x200] sm:$0xff]
    %v11763 = vld [vmem:[#allocation9 + $0x208] sm:$0xff]
    %v11764 = vld [vmem:[#allocation9 + $0x210] sm:$0xff]
    %v11765 = vld [vmem:[#allocation9 + $0x218] sm:$0xff]
    %v11766 = vld [vmem:[#allocation9 + $0x220] sm:$0xff]
    %v11767 = vld [vmem:[#allocation9 + $0x228] sm:$0xff]
    %v11768 = vld [vmem:[#allocation9 + $0x230] sm:$0xff]
    %v11769 = vld [vmem:[#allocation9 + $0x238] sm:$0xff]
    %v11770 = vld [vmem:[#allocation9 + $0x240] sm:$0xff]
    %v11771 = vld [vmem:[#allocation9 + $0x248] sm:$0xff]
    %v11772 = vld [vmem:[#allocation9 + $0x250] sm:$0xff]
    %v11773 = vld [vmem:[#allocation9 + $0x258] sm:$0xff]
    %v11774 = vld [vmem:[#allocation9 + $0x260] sm:$0xff]
    %v11775 = vld [vmem:[#allocation9 + $0x268] sm:$0xff]
    %v11776 = vld [vmem:[#allocation9 + $0x270] sm:$0xff]
    %v11777 = vld [vmem:[#allocation9 + $0x278] sm:$0xff]
    %v11778 = vld [vmem:[#allocation9 + $0x280] sm:$0xff]
    %v11779 = vld [vmem:[#allocation9 + $0x288] sm:$0xff]
    %v11780 = vld [vmem:[#allocation9 + $0x290] sm:$0xff]
    %v11781 = vld [vmem:[#allocation9 + $0x298] sm:$0xff]
    %v11782 = vld [vmem:[#allocation9 + $0x2a0] sm:$0xff]
    %v11783 = vld [vmem:[#allocation9 + $0x2a8] sm:$0xff]
    %v11784 = vld [vmem:[#allocation9 + $0x2b0] sm:$0xff]
    %v11785 = vld [vmem:[#allocation9 + $0x2b8] sm:$0xff]
    %v11786 = vld [vmem:[#allocation9 + $0x2c0] sm:$0xff]
    %v11787 = vld [vmem:[#allocation9 + $0x2c8] sm:$0xff]
    %v11788 = vld [vmem:[#allocation9 + $0x2d0] sm:$0xff]
    %v11789 = vld [vmem:[#allocation9 + $0x2d8] sm:$0xff]
    %v11790 = vld [vmem:[#allocation9 + $0x2e0] sm:$0xff]
    %v11791 = vld [vmem:[#allocation9 + $0x2e8] sm:$0xff]
    %v11792 = vld [vmem:[#allocation9 + $0x2f0] sm:$0xff]
    %v11793 = vld [vmem:[#allocation9 + $0x2f8] sm:$0xff]
    %v11794 = vld [vmem:[#allocation9 + $0x300] sm:$0xff]
    %v11795 = vld [vmem:[#allocation9 + $0x308] sm:$0xff]
    %v11796 = vld [vmem:[#allocation9 + $0x310] sm:$0xff]
    %v11797 = vld [vmem:[#allocation9 + $0x318] sm:$0xff]
    %v11798 = vld [vmem:[#allocation9 + $0x320] sm:$0xff]
    %v11799 = vld [vmem:[#allocation9 + $0x328] sm:$0xff]
    %v11800 = vld [vmem:[#allocation9 + $0x330] sm:$0xff]
    %v11801 = vld [vmem:[#allocation9 + $0x338] sm:$0xff]
    %v11802 = vld [vmem:[#allocation9 + $0x340] sm:$0xff]
    %v11803 = vld [vmem:[#allocation9 + $0x348] sm:$0xff]
    %v11804 = vld [vmem:[#allocation9 + $0x350] sm:$0xff]
    %v11805 = vld [vmem:[#allocation9 + $0x358] sm:$0xff]
    %v11806 = vld [vmem:[#allocation9 + $0x360] sm:$0xff]
    %v11807 = vld [vmem:[#allocation9 + $0x368] sm:$0xff]
    %v11808 = vld [vmem:[#allocation9 + $0x370] sm:$0xff]
    %v11809 = vld [vmem:[#allocation9 + $0x378] sm:$0xff]
    %v11810 = vld [vmem:[#allocation9 + $0x380] sm:$0xff]
    %v11811 = vld [vmem:[#allocation9 + $0x388] sm:$0xff]
    %v11812 = vld [vmem:[#allocation9 + $0x390] sm:$0xff]
    %v11813 = vld [vmem:[#allocation9 + $0x398] sm:$0xff]
    %v11814 = vld [vmem:[#allocation9 + $0x3a0] sm:$0xff]
    %v11815 = vld [vmem:[#allocation9 + $0x3a8] sm:$0xff]
    %v11816 = vld [vmem:[#allocation9 + $0x3b0] sm:$0xff]
    %v11817 = vld [vmem:[#allocation9 + $0x3b8] sm:$0xff]
    %v11818 = vld [vmem:[#allocation9 + $0x3c0] sm:$0xff]
    %v11819 = vld [vmem:[#allocation9 + $0x3c8] sm:$0xff]
    %v11820 = vld [vmem:[#allocation9 + $0x3d0] sm:$0xff]
    %v11821 = vld [vmem:[#allocation9 + $0x3d8] sm:$0xff]
    %v11822 = vld [vmem:[#allocation9 + $0x3e0] sm:$0xff]
    %v11823 = vld [vmem:[#allocation9 + $0x3e8] sm:$0xff]
    %v11824 = vld [vmem:[#allocation9 + $0x3f0] sm:$0xff]
    %v11825 = vld [vmem:[#allocation9 + $0x3f8] sm:$0xff]
    %v11826 = vld [vmem:[#allocation9 + $0x400] sm:$0xff]
    %v11827 = vld [vmem:[#allocation9 + $0x408] sm:$0xff]
    %v11828 = vld [vmem:[#allocation9 + $0x410] sm:$0xff]
    %v11829 = vld [vmem:[#allocation9 + $0x418] sm:$0xff]
    %v11830 = vld [vmem:[#allocation9 + $0x420] sm:$0xff]
    %v11831 = vld [vmem:[#allocation9 + $0x428] sm:$0xff]
    %v11832 = vld [vmem:[#allocation9 + $0x430] sm:$0xff]
    %v11833 = vld [vmem:[#allocation9 + $0x438] sm:$0xff]
    %v11834 = vld [vmem:[#allocation9 + $0x440] sm:$0xff]
    %v11835 = vld [vmem:[#allocation9 + $0x448] sm:$0xff]
    %v11836 = vld [vmem:[#allocation9 + $0x450] sm:$0xff]
    %v11837 = vld [vmem:[#allocation9 + $0x458] sm:$0xff]
    %v11838 = vld [vmem:[#allocation9 + $0x460] sm:$0xff]
    %v11839 = vld [vmem:[#allocation9 + $0x468] sm:$0xff]
    %v11840 = vld [vmem:[#allocation9 + $0x470] sm:$0xff]
    %v11841 = vld [vmem:[#allocation9 + $0x478] sm:$0xff]
    %v11842 = vld [vmem:[#allocation9 + $0x480] sm:$0xff]
    %v11843 = vld [vmem:[#allocation9 + $0x488] sm:$0xff]
    %v11844 = vld [vmem:[#allocation9 + $0x490] sm:$0xff]
    %v11845 = vld [vmem:[#allocation9 + $0x498] sm:$0xff]
    %v11846 = vld [vmem:[#allocation9 + $0x4a0] sm:$0xff]
    %v11847 = vld [vmem:[#allocation9 + $0x4a8] sm:$0xff]
    %v11848 = vld [vmem:[#allocation9 + $0x4b0] sm:$0xff]
    %v11849 = vld [vmem:[#allocation9 + $0x4b8] sm:$0xff]
    %v11850 = vld [vmem:[#allocation9 + $0x4c0] sm:$0xff]
    %v11851 = vld [vmem:[#allocation9 + $0x4c8] sm:$0xff]
    %v11852 = vld [vmem:[#allocation9 + $0x4d0] sm:$0xff]
    %v11853 = vld [vmem:[#allocation9 + $0x4d8] sm:$0xff]
    %v11854 = vld [vmem:[#allocation9 + $0x4e0] sm:$0xff]
    %v11855 = vld [vmem:[#allocation9 + $0x4e8] sm:$0xff]
    %v11856 = vld [vmem:[#allocation9 + $0x4f0] sm:$0xff]
    %v11857 = vld [vmem:[#allocation9 + $0x4f8] sm:$0xff]
    %v11858 = vld [vmem:[#allocation9 + $0x500] sm:$0xff]
    %v11859 = vld [vmem:[#allocation9 + $0x508] sm:$0xff]
    %v11860 = vld [vmem:[#allocation9 + $0x510] sm:$0xff]
    %v11861 = vld [vmem:[#allocation9 + $0x518] sm:$0xff]
    %v11862 = vld [vmem:[#allocation9 + $0x520] sm:$0xff]
    %v11863 = vld [vmem:[#allocation9 + $0x528] sm:$0xff]
    %v11864 = vld [vmem:[#allocation9 + $0x530] sm:$0xff]
    %v11865 = vld [vmem:[#allocation9 + $0x538] sm:$0xff]
    %v11866 = vld [vmem:[#allocation9 + $0x540] sm:$0xff]
    %v11867 = vld [vmem:[#allocation9 + $0x548] sm:$0xff]
    %v11868 = vld [vmem:[#allocation9 + $0x550] sm:$0xff]
    %v11869 = vld [vmem:[#allocation9 + $0x558] sm:$0xff]
    %v11870 = vld [vmem:[#allocation9 + $0x560] sm:$0xff]
    %v11871 = vld [vmem:[#allocation9 + $0x568] sm:$0xff]
    %v11872 = vld [vmem:[#allocation9 + $0x570] sm:$0xff]
    %v11873 = vld [vmem:[#allocation9 + $0x578] sm:$0xff]
    %v11874 = vld [vmem:[#allocation9 + $0x580] sm:$0xff]
    %v11875 = vld [vmem:[#allocation9 + $0x588] sm:$0xff]
    %v11876 = vld [vmem:[#allocation9 + $0x590] sm:$0xff]
    %v11877 = vld [vmem:[#allocation9 + $0x598] sm:$0xff]
    %v11878 = vld [vmem:[#allocation9 + $0x5a0] sm:$0xff]
    %v11879 = vld [vmem:[#allocation9 + $0x5a8] sm:$0xff]
    %v11880 = vld [vmem:[#allocation9 + $0x5b0] sm:$0xff]
    %v11881 = vld [vmem:[#allocation9 + $0x5b8] sm:$0xff]
    %v11882 = vld [vmem:[#allocation9 + $0x5c0] sm:$0xff]
    %v11883 = vld [vmem:[#allocation9 + $0x5c8] sm:$0xff]
    %v11884 = vld [vmem:[#allocation9 + $0x5d0] sm:$0xff]
    %v11885 = vld [vmem:[#allocation9 + $0x5d8] sm:$0xff]
    %v11886 = vld [vmem:[#allocation9 + $0x5e0] sm:$0xff]
    %v11887 = vld [vmem:[#allocation9 + $0x5e8] sm:$0xff]
    %v11888 = vld [vmem:[#allocation9 + $0x5f0] sm:$0xff]
    %v11889 = vld [vmem:[#allocation9 + $0x5f8] sm:$0xff]
    %v11890 = vld [vmem:[#allocation9 + $0x600] sm:$0xff]
    %v11891 = vld [vmem:[#allocation9 + $0x608] sm:$0xff]
    %v11892 = vld [vmem:[#allocation9 + $0x610] sm:$0xff]
    %v11893 = vld [vmem:[#allocation9 + $0x618] sm:$0xff]
    %v11894 = vld [vmem:[#allocation9 + $0x620] sm:$0xff]
    %v11895 = vld [vmem:[#allocation9 + $0x628] sm:$0xff]
    %v11896 = vld [vmem:[#allocation9 + $0x630] sm:$0xff]
    %v11897 = vld [vmem:[#allocation9 + $0x638] sm:$0xff]
    %v11898 = vld [vmem:[#allocation9 + $0x640] sm:$0xff]
    %v11899 = vld [vmem:[#allocation9 + $0x648] sm:$0xff]
    %v11900 = vld [vmem:[#allocation9 + $0x650] sm:$0xff]
    %v11901 = vld [vmem:[#allocation9 + $0x658] sm:$0xff]
    %v11902 = vld [vmem:[#allocation9 + $0x660] sm:$0xff]
    %v11903 = vld [vmem:[#allocation9 + $0x668] sm:$0xff]
    %v11904 = vld [vmem:[#allocation9 + $0x670] sm:$0xff]
    %v11905 = vld [vmem:[#allocation9 + $0x678] sm:$0xff]
    %v11906 = vld [vmem:[#allocation9 + $0x680] sm:$0xff]
    %v11907 = vld [vmem:[#allocation9 + $0x688] sm:$0xff]
    %v11908 = vld [vmem:[#allocation9 + $0x690] sm:$0xff]
    %v11909 = vld [vmem:[#allocation9 + $0x698] sm:$0xff]
    %v11910 = vld [vmem:[#allocation9 + $0x6a0] sm:$0xff]
    %v11911 = vld [vmem:[#allocation9 + $0x6a8] sm:$0xff]
    %v11912 = vld [vmem:[#allocation9 + $0x6b0] sm:$0xff]
    %v11913 = vld [vmem:[#allocation9 + $0x6b8] sm:$0xff]
    %v11914 = vld [vmem:[#allocation9 + $0x6c0] sm:$0xff]
    %v11915 = vld [vmem:[#allocation9 + $0x6c8] sm:$0xff]
    %v11916 = vld [vmem:[#allocation9 + $0x6d0] sm:$0xff]
    %v11917 = vld [vmem:[#allocation9 + $0x6d8] sm:$0xff]
    %v11918 = vld [vmem:[#allocation9 + $0x6e0] sm:$0xff]
    %v11919 = vld [vmem:[#allocation9 + $0x6e8] sm:$0xff]
    %v11920 = vld [vmem:[#allocation9 + $0x6f0] sm:$0xff]
    %v11921 = vld [vmem:[#allocation9 + $0x6f8] sm:$0xff]
    %v11922 = vld [vmem:[#allocation9 + $0x700] sm:$0xff]
    %v11923 = vld [vmem:[#allocation9 + $0x708] sm:$0xff]
    %v11924 = vld [vmem:[#allocation9 + $0x710] sm:$0xff]
    %v11925 = vld [vmem:[#allocation9 + $0x718] sm:$0xff]
    %v11926 = vld [vmem:[#allocation9 + $0x720] sm:$0xff]
    %v11927 = vld [vmem:[#allocation9 + $0x728] sm:$0xff]
    %v11928 = vld [vmem:[#allocation9 + $0x730] sm:$0xff]
    %v11929 = vld [vmem:[#allocation9 + $0x738] sm:$0xff]
    %v11930 = vld [vmem:[#allocation9 + $0x740] sm:$0xff]
    %v11931 = vld [vmem:[#allocation9 + $0x748] sm:$0xff]
    %v11932 = vld [vmem:[#allocation9 + $0x750] sm:$0xff]
    %v11933 = vld [vmem:[#allocation9 + $0x758] sm:$0xff]
    %v11934 = vld [vmem:[#allocation9 + $0x760] sm:$0xff]
    %v11935 = vld [vmem:[#allocation9 + $0x768] sm:$0xff]
    %v11936 = vld [vmem:[#allocation9 + $0x770] sm:$0xff]
    %v11937 = vld [vmem:[#allocation9 + $0x778] sm:$0xff]
    %v11938 = vld [vmem:[#allocation9 + $0x780] sm:$0xff]
    %v11939 = vld [vmem:[#allocation9 + $0x788] sm:$0xff]
    %v11940 = vld [vmem:[#allocation9 + $0x790] sm:$0xff]
    %v11941 = vld [vmem:[#allocation9 + $0x798] sm:$0xff]
    %v11942 = vld [vmem:[#allocation9 + $0x7a0] sm:$0xff]
    %v11943 = vld [vmem:[#allocation9 + $0x7a8] sm:$0xff]
    %v11944 = vld [vmem:[#allocation9 + $0x7b0] sm:$0xff]
    %v11945 = vld [vmem:[#allocation9 + $0x7b8] sm:$0xff]
    %v11946 = vld [vmem:[#allocation9 + $0x7c0] sm:$0xff]
    %v11947 = vld [vmem:[#allocation9 + $0x7c8] sm:$0xff]
    %v11948 = vld [vmem:[#allocation9 + $0x7d0] sm:$0xff]
    %v11949 = vld [vmem:[#allocation9 + $0x7d8] sm:$0xff]
    %v11950 = vld [vmem:[#allocation9 + $0x7e0] sm:$0xff]
    %v11951 = vld [vmem:[#allocation9 + $0x7e8] sm:$0xff]
    %v11952 = vld [vmem:[#allocation9 + $0x7f0] sm:$0xff]
    %v11953 = vld [vmem:[#allocation9 + $0x7f8] sm:$0xff]
    %v11954 = vld [vmem:[#allocation10] sm:$0xf]
    %v11956 = vlaneseq
    %v11957 = vshrl.u32 %v11956, 7
    %v11958 = vsub.s32 0, %v11957
    %v11959 = vrot.slane %v11954, %v11958
    %v11960 = vlaneseq
    %v11961 = vshrl.u32 %v11960, 7
    %v11962 = vsub.s32 1, %v11961
    %v11963 = vrot.slane %v11954, %v11962
    %v11964 = vlaneseq
    %v11965 = vshrl.u32 %v11964, 7
    %v11966 = vsub.s32 2, %v11965
    %v11967 = vrot.slane %v11954, %v11966
    %v11968 = vlaneseq
    %v11969 = vshrl.u32 %v11968, 7
    %v11970 = vsub.s32 3, %v11969
    %v11971 = vrot.slane %v11954, %v11970
    %v12232 = vunpack.c.l.b16 %v11698
    %v12233 = vunpack.c.h.b16 %v11698
    %v12234 = vunpack.c.l.b16 %v11699
    %v12235 = vunpack.c.h.b16 %v11699
    %v12236 = vunpack.c.l.b16 %v11700
    %v12237 = vunpack.c.h.b16 %v11700
    %v12238 = vunpack.c.l.b16 %v11701
    %v12239 = vunpack.c.h.b16 %v11701
    %v12240 = vunpack.c.l.b16 %v11702
    %v12241 = vunpack.c.h.b16 %v11702
    %v12242 = vunpack.c.l.b16 %v11703
    %v12243 = vunpack.c.h.b16 %v11703
    %v12244 = vunpack.c.l.b16 %v11704
    %v12245 = vunpack.c.h.b16 %v11704
    %v12246 = vunpack.c.l.b16 %v11705
    %v12247 = vunpack.c.h.b16 %v11705
    %v12248 = vunpack.c.l.b16 %v11706
    %v12249 = vunpack.c.h.b16 %v11706
    %v12250 = vunpack.c.l.b16 %v11707
    %v12251 = vunpack.c.h.b16 %v11707
    %v12252 = vunpack.c.l.b16 %v11708
    %v12253 = vunpack.c.h.b16 %v11708
    %v12254 = vunpack.c.l.b16 %v11709
    %v12255 = vunpack.c.h.b16 %v11709
    %v12256 = vunpack.c.l.b16 %v11710
    %v12257 = vunpack.c.h.b16 %v11710
    %v12258 = vunpack.c.l.b16 %v11711
    %v12259 = vunpack.c.h.b16 %v11711
    %v12260 = vunpack.c.l.b16 %v11712
    %v12261 = vunpack.c.h.b16 %v11712
    %v12262 = vunpack.c.l.b16 %v11713
    %v12263 = vunpack.c.h.b16 %v11713
    %v12264 = vunpack.c.l.b16 %v11714
    %v12265 = vunpack.c.h.b16 %v11714
    %v12266 = vunpack.c.l.b16 %v11715
    %v12267 = vunpack.c.h.b16 %v11715
    %v12268 = vunpack.c.l.b16 %v11716
    %v12269 = vunpack.c.h.b16 %v11716
    %v12270 = vunpack.c.l.b16 %v11717
    %v12271 = vunpack.c.h.b16 %v11717
    %v12272 = vunpack.c.l.b16 %v11718
    %v12273 = vunpack.c.h.b16 %v11718
    %v12274 = vunpack.c.l.b16 %v11719
    %v12275 = vunpack.c.h.b16 %v11719
    %v12276 = vunpack.c.l.b16 %v11720
    %v12277 = vunpack.c.h.b16 %v11720
    %v12278 = vunpack.c.l.b16 %v11721
    %v12279 = vunpack.c.h.b16 %v11721
    %v12280 = vunpack.c.l.b16 %v11722
    %v12281 = vunpack.c.h.b16 %v11722
    %v12282 = vunpack.c.l.b16 %v11723
    %v12283 = vunpack.c.h.b16 %v11723
    %v12284 = vunpack.c.l.b16 %v11724
    %v12285 = vunpack.c.h.b16 %v11724
    %v12286 = vunpack.c.l.b16 %v11725
    %v12287 = vunpack.c.h.b16 %v11725
    %v12288 = vunpack.c.l.b16 %v11726
    %v12289 = vunpack.c.h.b16 %v11726
    %v12290 = vunpack.c.l.b16 %v11727
    %v12291 = vunpack.c.h.b16 %v11727
    %v12292 = vunpack.c.l.b16 %v11728
    %v12293 = vunpack.c.h.b16 %v11728
    %v12294 = vunpack.c.l.b16 %v11729
    %v12295 = vunpack.c.h.b16 %v11729
    %v12296 = vunpack.c.l.b16 %v11730
    %v12297 = vunpack.c.h.b16 %v11730
    %v12298 = vunpack.c.l.b16 %v11731
    %v12299 = vunpack.c.h.b16 %v11731
    %v12300 = vunpack.c.l.b16 %v11732
    %v12301 = vunpack.c.h.b16 %v11732
    %v12302 = vunpack.c.l.b16 %v11733
    %v12303 = vunpack.c.h.b16 %v11733
    %v12304 = vunpack.c.l.b16 %v11734
    %v12305 = vunpack.c.h.b16 %v11734
    %v12306 = vunpack.c.l.b16 %v11735
    %v12307 = vunpack.c.h.b16 %v11735
    %v12308 = vunpack.c.l.b16 %v11736
    %v12309 = vunpack.c.h.b16 %v11736
    %v12310 = vunpack.c.l.b16 %v11737
    %v12311 = vunpack.c.h.b16 %v11737
    %v12312 = vunpack.c.l.b16 %v11738
    %v12313 = vunpack.c.h.b16 %v11738
    %v12314 = vunpack.c.l.b16 %v11739
    %v12315 = vunpack.c.h.b16 %v11739
    %v12316 = vunpack.c.l.b16 %v11740
    %v12317 = vunpack.c.h.b16 %v11740
    %v12318 = vunpack.c.l.b16 %v11741
    %v12319 = vunpack.c.h.b16 %v11741
    %v12320 = vunpack.c.l.b16 %v11742
    %v12321 = vunpack.c.h.b16 %v11742
    %v12322 = vunpack.c.l.b16 %v11743
    %v12323 = vunpack.c.h.b16 %v11743
    %v12324 = vunpack.c.l.b16 %v11744
    %v12325 = vunpack.c.h.b16 %v11744
    %v12326 = vunpack.c.l.b16 %v11745
    %v12327 = vunpack.c.h.b16 %v11745
    %v12328 = vunpack.c.l.b16 %v11746
    %v12329 = vunpack.c.h.b16 %v11746
    %v12330 = vunpack.c.l.b16 %v11747
    %v12331 = vunpack.c.h.b16 %v11747
    %v12332 = vunpack.c.l.b16 %v11748
    %v12333 = vunpack.c.h.b16 %v11748
    %v12334 = vunpack.c.l.b16 %v11749
    %v12335 = vunpack.c.h.b16 %v11749
    %v12336 = vunpack.c.l.b16 %v11750
    %v12337 = vunpack.c.h.b16 %v11750
    %v12338 = vunpack.c.l.b16 %v11751
    %v12339 = vunpack.c.h.b16 %v11751
    %v12340 = vunpack.c.l.b16 %v11752
    %v12341 = vunpack.c.h.b16 %v11752
    %v12342 = vunpack.c.l.b16 %v11753
    %v12343 = vunpack.c.h.b16 %v11753
    %v12344 = vunpack.c.l.b16 %v11754
    %v12345 = vunpack.c.h.b16 %v11754
    %v12346 = vunpack.c.l.b16 %v11755
    %v12347 = vunpack.c.h.b16 %v11755
    %v12348 = vunpack.c.l.b16 %v11756
    %v12349 = vunpack.c.h.b16 %v11756
    %v12350 = vunpack.c.l.b16 %v11757
    %v12351 = vunpack.c.h.b16 %v11757
    %v12352 = vunpack.c.l.b16 %v11758
    %v12353 = vunpack.c.h.b16 %v11758
    %v12354 = vunpack.c.l.b16 %v11759
    %v12355 = vunpack.c.h.b16 %v11759
    %v12356 = vunpack.c.l.b16 %v11760
    %v12357 = vunpack.c.h.b16 %v11760
    %v12358 = vunpack.c.l.b16 %v11761
    %v12359 = vunpack.c.h.b16 %v11761
    %v12360 = vunpack.c.l.b16 %v11762
    %v12361 = vunpack.c.h.b16 %v11762
    %v12362 = vunpack.c.l.b16 %v11763
    %v12363 = vunpack.c.h.b16 %v11763
    %v12364 = vunpack.c.l.b16 %v11764
    %v12365 = vunpack.c.h.b16 %v11764
    %v12366 = vunpack.c.l.b16 %v11765
    %v12367 = vunpack.c.h.b16 %v11765
    %v12368 = vunpack.c.l.b16 %v11766
    %v12369 = vunpack.c.h.b16 %v11766
    %v12370 = vunpack.c.l.b16 %v11767
    %v12371 = vunpack.c.h.b16 %v11767
    %v12372 = vunpack.c.l.b16 %v11768
    %v12373 = vunpack.c.h.b16 %v11768
    %v12374 = vunpack.c.l.b16 %v11769
    %v12375 = vunpack.c.h.b16 %v11769
    %v12376 = vunpack.c.l.b16 %v11770
    %v12377 = vunpack.c.h.b16 %v11770
    %v12378 = vunpack.c.l.b16 %v11771
    %v12379 = vunpack.c.h.b16 %v11771
    %v12380 = vunpack.c.l.b16 %v11772
    %v12381 = vunpack.c.h.b16 %v11772
    %v12382 = vunpack.c.l.b16 %v11773
    %v12383 = vunpack.c.h.b16 %v11773
    %v12384 = vunpack.c.l.b16 %v11774
    %v12385 = vunpack.c.h.b16 %v11774
    %v12386 = vunpack.c.l.b16 %v11775
    %v12387 = vunpack.c.h.b16 %v11775
    %v12388 = vunpack.c.l.b16 %v11776
    %v12389 = vunpack.c.h.b16 %v11776
    %v12390 = vunpack.c.l.b16 %v11777
    %v12391 = vunpack.c.h.b16 %v11777
    %v12392 = vunpack.c.l.b16 %v11778
    %v12393 = vunpack.c.h.b16 %v11778
    %v12394 = vunpack.c.l.b16 %v11779
    %v12395 = vunpack.c.h.b16 %v11779
    %v12396 = vunpack.c.l.b16 %v11780
    %v12397 = vunpack.c.h.b16 %v11780
    %v12398 = vunpack.c.l.b16 %v11781
    %v12399 = vunpack.c.h.b16 %v11781
    %v12400 = vunpack.c.l.b16 %v11782
    %v12401 = vunpack.c.h.b16 %v11782
    %v12402 = vunpack.c.l.b16 %v11783
    %v12403 = vunpack.c.h.b16 %v11783
    %v12404 = vunpack.c.l.b16 %v11784
    %v12405 = vunpack.c.h.b16 %v11784
    %v12406 = vunpack.c.l.b16 %v11785
    %v12407 = vunpack.c.h.b16 %v11785
    %v12408 = vunpack.c.l.b16 %v11786
    %v12409 = vunpack.c.h.b16 %v11786
    %v12410 = vunpack.c.l.b16 %v11787
    %v12411 = vunpack.c.h.b16 %v11787
    %v12412 = vunpack.c.l.b16 %v11788
    %v12413 = vunpack.c.h.b16 %v11788
    %v12414 = vunpack.c.l.b16 %v11789
    %v12415 = vunpack.c.h.b16 %v11789
    %v12416 = vunpack.c.l.b16 %v11790
    %v12417 = vunpack.c.h.b16 %v11790
    %v12418 = vunpack.c.l.b16 %v11791
    %v12419 = vunpack.c.h.b16 %v11791
    %v12420 = vunpack.c.l.b16 %v11792
    %v12421 = vunpack.c.h.b16 %v11792
    %v12422 = vunpack.c.l.b16 %v11793
    %v12423 = vunpack.c.h.b16 %v11793
    %v12424 = vunpack.c.l.b16 %v11794
    %v12425 = vunpack.c.h.b16 %v11794
    %v12426 = vunpack.c.l.b16 %v11795
    %v12427 = vunpack.c.h.b16 %v11795
    %v12428 = vunpack.c.l.b16 %v11796
    %v12429 = vunpack.c.h.b16 %v11796
    %v12430 = vunpack.c.l.b16 %v11797
    %v12431 = vunpack.c.h.b16 %v11797
    %v12432 = vunpack.c.l.b16 %v11798
    %v12433 = vunpack.c.h.b16 %v11798
    %v12434 = vunpack.c.l.b16 %v11799
    %v12435 = vunpack.c.h.b16 %v11799
    %v12436 = vunpack.c.l.b16 %v11800
    %v12437 = vunpack.c.h.b16 %v11800
    %v12438 = vunpack.c.l.b16 %v11801
    %v12439 = vunpack.c.h.b16 %v11801
    %v12440 = vunpack.c.l.b16 %v11802
    %v12441 = vunpack.c.h.b16 %v11802
    %v12442 = vunpack.c.l.b16 %v11803
    %v12443 = vunpack.c.h.b16 %v11803
    %v12444 = vunpack.c.l.b16 %v11804
    %v12445 = vunpack.c.h.b16 %v11804
    %v12446 = vunpack.c.l.b16 %v11805
    %v12447 = vunpack.c.h.b16 %v11805
    %v12448 = vunpack.c.l.b16 %v11806
    %v12449 = vunpack.c.h.b16 %v11806
    %v12450 = vunpack.c.l.b16 %v11807
    %v12451 = vunpack.c.h.b16 %v11807
    %v12452 = vunpack.c.l.b16 %v11808
    %v12453 = vunpack.c.h.b16 %v11808
    %v12454 = vunpack.c.l.b16 %v11809
    %v12455 = vunpack.c.h.b16 %v11809
    %v12456 = vunpack.c.l.b16 %v11810
    %v12457 = vunpack.c.h.b16 %v11810
    %v12458 = vunpack.c.l.b16 %v11811
    %v12459 = vunpack.c.h.b16 %v11811
    %v12460 = vunpack.c.l.b16 %v11812
    %v12461 = vunpack.c.h.b16 %v11812
    %v12462 = vunpack.c.l.b16 %v11813
    %v12463 = vunpack.c.h.b16 %v11813
    %v12464 = vunpack.c.l.b16 %v11814
    %v12465 = vunpack.c.h.b16 %v11814
    %v12466 = vunpack.c.l.b16 %v11815
    %v12467 = vunpack.c.h.b16 %v11815
    %v12468 = vunpack.c.l.b16 %v11816
    %v12469 = vunpack.c.h.b16 %v11816
    %v12470 = vunpack.c.l.b16 %v11817
    %v12471 = vunpack.c.h.b16 %v11817
    %v12472 = vunpack.c.l.b16 %v11818
    %v12473 = vunpack.c.h.b16 %v11818
    %v12474 = vunpack.c.l.b16 %v11819
    %v12475 = vunpack.c.h.b16 %v11819
    %v12476 = vunpack.c.l.b16 %v11820
    %v12477 = vunpack.c.h.b16 %v11820
    %v12478 = vunpack.c.l.b16 %v11821
    %v12479 = vunpack.c.h.b16 %v11821
    %v12480 = vunpack.c.l.b16 %v11822
    %v12481 = vunpack.c.h.b16 %v11822
    %v12482 = vunpack.c.l.b16 %v11823
    %v12483 = vunpack.c.h.b16 %v11823
    %v12484 = vunpack.c.l.b16 %v11824
    %v12485 = vunpack.c.h.b16 %v11824
    %v12486 = vunpack.c.l.b16 %v11825
    %v12487 = vunpack.c.h.b16 %v11825
    %v12488 = vunpack.c.l.b16 %v11826
    %v12489 = vunpack.c.h.b16 %v11826
    %v12490 = vunpack.c.l.b16 %v11827
    %v12491 = vunpack.c.h.b16 %v11827
    %v12492 = vunpack.c.l.b16 %v11828
    %v12493 = vunpack.c.h.b16 %v11828
    %v12494 = vunpack.c.l.b16 %v11829
    %v12495 = vunpack.c.h.b16 %v11829
    %v12496 = vunpack.c.l.b16 %v11830
    %v12497 = vunpack.c.h.b16 %v11830
    %v12498 = vunpack.c.l.b16 %v11831
    %v12499 = vunpack.c.h.b16 %v11831
    %v12500 = vunpack.c.l.b16 %v11832
    %v12501 = vunpack.c.h.b16 %v11832
    %v12502 = vunpack.c.l.b16 %v11833
    %v12503 = vunpack.c.h.b16 %v11833
    %v12504 = vunpack.c.l.b16 %v11834
    %v12505 = vunpack.c.h.b16 %v11834
    %v12506 = vunpack.c.l.b16 %v11835
    %v12507 = vunpack.c.h.b16 %v11835
    %v12508 = vunpack.c.l.b16 %v11836
    %v12509 = vunpack.c.h.b16 %v11836
    %v12510 = vunpack.c.l.b16 %v11837
    %v12511 = vunpack.c.h.b16 %v11837
    %v12512 = vunpack.c.l.b16 %v11838
    %v12513 = vunpack.c.h.b16 %v11838
    %v12514 = vunpack.c.l.b16 %v11839
    %v12515 = vunpack.c.h.b16 %v11839
    %v12516 = vunpack.c.l.b16 %v11840
    %v12517 = vunpack.c.h.b16 %v11840
    %v12518 = vunpack.c.l.b16 %v11841
    %v12519 = vunpack.c.h.b16 %v11841
    %v12520 = vunpack.c.l.b16 %v11842
    %v12521 = vunpack.c.h.b16 %v11842
    %v12522 = vunpack.c.l.b16 %v11843
    %v12523 = vunpack.c.h.b16 %v11843
    %v12524 = vunpack.c.l.b16 %v11844
    %v12525 = vunpack.c.h.b16 %v11844
    %v12526 = vunpack.c.l.b16 %v11845
    %v12527 = vunpack.c.h.b16 %v11845
    %v12528 = vunpack.c.l.b16 %v11846
    %v12529 = vunpack.c.h.b16 %v11846
    %v12530 = vunpack.c.l.b16 %v11847
    %v12531 = vunpack.c.h.b16 %v11847
    %v12532 = vunpack.c.l.b16 %v11848
    %v12533 = vunpack.c.h.b16 %v11848
    %v12534 = vunpack.c.l.b16 %v11849
    %v12535 = vunpack.c.h.b16 %v11849
    %v12536 = vunpack.c.l.b16 %v11850
    %v12537 = vunpack.c.h.b16 %v11850
    %v12538 = vunpack.c.l.b16 %v11851
    %v12539 = vunpack.c.h.b16 %v11851
    %v12540 = vunpack.c.l.b16 %v11852
    %v12541 = vunpack.c.h.b16 %v11852
    %v12542 = vunpack.c.l.b16 %v11853
    %v12543 = vunpack.c.h.b16 %v11853
    %v12544 = vunpack.c.l.b16 %v11854
    %v12545 = vunpack.c.h.b16 %v11854
    %v12546 = vunpack.c.l.b16 %v11855
    %v12547 = vunpack.c.h.b16 %v11855
    %v12548 = vunpack.c.l.b16 %v11856
    %v12549 = vunpack.c.h.b16 %v11856
    %v12550 = vunpack.c.l.b16 %v11857
    %v12551 = vunpack.c.h.b16 %v11857
    %v12552 = vunpack.c.l.b16 %v11858
    %v12553 = vunpack.c.h.b16 %v11858
    %v12554 = vunpack.c.l.b16 %v11859
    %v12555 = vunpack.c.h.b16 %v11859
    %v12556 = vunpack.c.l.b16 %v11860
    %v12557 = vunpack.c.h.b16 %v11860
    %v12558 = vunpack.c.l.b16 %v11861
    %v12559 = vunpack.c.h.b16 %v11861
    %v12560 = vunpack.c.l.b16 %v11862
    %v12561 = vunpack.c.h.b16 %v11862
    %v12562 = vunpack.c.l.b16 %v11863
    %v12563 = vunpack.c.h.b16 %v11863
    %v12564 = vunpack.c.l.b16 %v11864
    %v12565 = vunpack.c.h.b16 %v11864
    %v12566 = vunpack.c.l.b16 %v11865
    %v12567 = vunpack.c.h.b16 %v11865
    %v12568 = vunpack.c.l.b16 %v11866
    %v12569 = vunpack.c.h.b16 %v11866
    %v12570 = vunpack.c.l.b16 %v11867
    %v12571 = vunpack.c.h.b16 %v11867
    %v12572 = vunpack.c.l.b16 %v11868
    %v12573 = vunpack.c.h.b16 %v11868
    %v12574 = vunpack.c.l.b16 %v11869
    %v12575 = vunpack.c.h.b16 %v11869
    %v12576 = vunpack.c.l.b16 %v11870
    %v12577 = vunpack.c.h.b16 %v11870
    %v12578 = vunpack.c.l.b16 %v11871
    %v12579 = vunpack.c.h.b16 %v11871
    %v12580 = vunpack.c.l.b16 %v11872
    %v12581 = vunpack.c.h.b16 %v11872
    %v12582 = vunpack.c.l.b16 %v11873
    %v12583 = vunpack.c.h.b16 %v11873
    %v12584 = vunpack.c.l.b16 %v11874
    %v12585 = vunpack.c.h.b16 %v11874
    %v12586 = vunpack.c.l.b16 %v11875
    %v12587 = vunpack.c.h.b16 %v11875
    %v12588 = vunpack.c.l.b16 %v11876
    %v12589 = vunpack.c.h.b16 %v11876
    %v12590 = vunpack.c.l.b16 %v11877
    %v12591 = vunpack.c.h.b16 %v11877
    %v12592 = vunpack.c.l.b16 %v11878
    %v12593 = vunpack.c.h.b16 %v11878
    %v12594 = vunpack.c.l.b16 %v11879
    %v12595 = vunpack.c.h.b16 %v11879
    %v12596 = vunpack.c.l.b16 %v11880
    %v12597 = vunpack.c.h.b16 %v11880
    %v12598 = vunpack.c.l.b16 %v11881
    %v12599 = vunpack.c.h.b16 %v11881
    %v12600 = vunpack.c.l.b16 %v11882
    %v12601 = vunpack.c.h.b16 %v11882
    %v12602 = vunpack.c.l.b16 %v11883
    %v12603 = vunpack.c.h.b16 %v11883
    %v12604 = vunpack.c.l.b16 %v11884
    %v12605 = vunpack.c.h.b16 %v11884
    %v12606 = vunpack.c.l.b16 %v11885
    %v12607 = vunpack.c.h.b16 %v11885
    %v12608 = vunpack.c.l.b16 %v11886
    %v12609 = vunpack.c.h.b16 %v11886
    %v12610 = vunpack.c.l.b16 %v11887
    %v12611 = vunpack.c.h.b16 %v11887
    %v12612 = vunpack.c.l.b16 %v11888
    %v12613 = vunpack.c.h.b16 %v11888
    %v12614 = vunpack.c.l.b16 %v11889
    %v12615 = vunpack.c.h.b16 %v11889
    %v12616 = vunpack.c.l.b16 %v11890
    %v12617 = vunpack.c.h.b16 %v11890
    %v12618 = vunpack.c.l.b16 %v11891
    %v12619 = vunpack.c.h.b16 %v11891
    %v12620 = vunpack.c.l.b16 %v11892
    %v12621 = vunpack.c.h.b16 %v11892
    %v12622 = vunpack.c.l.b16 %v11893
    %v12623 = vunpack.c.h.b16 %v11893
    %v12624 = vunpack.c.l.b16 %v11894
    %v12625 = vunpack.c.h.b16 %v11894
    %v12626 = vunpack.c.l.b16 %v11895
    %v12627 = vunpack.c.h.b16 %v11895
    %v12628 = vunpack.c.l.b16 %v11896
    %v12629 = vunpack.c.h.b16 %v11896
    %v12630 = vunpack.c.l.b16 %v11897
    %v12631 = vunpack.c.h.b16 %v11897
    %v12632 = vunpack.c.l.b16 %v11898
    %v12633 = vunpack.c.h.b16 %v11898
    %v12634 = vunpack.c.l.b16 %v11899
    %v12635 = vunpack.c.h.b16 %v11899
    %v12636 = vunpack.c.l.b16 %v11900
    %v12637 = vunpack.c.h.b16 %v11900
    %v12638 = vunpack.c.l.b16 %v11901
    %v12639 = vunpack.c.h.b16 %v11901
    %v12640 = vunpack.c.l.b16 %v11902
    %v12641 = vunpack.c.h.b16 %v11902
    %v12642 = vunpack.c.l.b16 %v11903
    %v12643 = vunpack.c.h.b16 %v11903
    %v12644 = vunpack.c.l.b16 %v11904
    %v12645 = vunpack.c.h.b16 %v11904
    %v12646 = vunpack.c.l.b16 %v11905
    %v12647 = vunpack.c.h.b16 %v11905
    %v12648 = vunpack.c.l.b16 %v11906
    %v12649 = vunpack.c.h.b16 %v11906
    %v12650 = vunpack.c.l.b16 %v11907
    %v12651 = vunpack.c.h.b16 %v11907
    %v12652 = vunpack.c.l.b16 %v11908
    %v12653 = vunpack.c.h.b16 %v11908
    %v12654 = vunpack.c.l.b16 %v11909
    %v12655 = vunpack.c.h.b16 %v11909
    %v12656 = vunpack.c.l.b16 %v11910
    %v12657 = vunpack.c.h.b16 %v11910
    %v12658 = vunpack.c.l.b16 %v11911
    %v12659 = vunpack.c.h.b16 %v11911
    %v12660 = vunpack.c.l.b16 %v11912
    %v12661 = vunpack.c.h.b16 %v11912
    %v12662 = vunpack.c.l.b16 %v11913
    %v12663 = vunpack.c.h.b16 %v11913
    %v12664 = vunpack.c.l.b16 %v11914
    %v12665 = vunpack.c.h.b16 %v11914
    %v12666 = vunpack.c.l.b16 %v11915
    %v12667 = vunpack.c.h.b16 %v11915
    %v12668 = vunpack.c.l.b16 %v11916
    %v12669 = vunpack.c.h.b16 %v11916
    %v12670 = vunpack.c.l.b16 %v11917
    %v12671 = vunpack.c.h.b16 %v11917
    %v12672 = vunpack.c.l.b16 %v11918
    %v12673 = vunpack.c.h.b16 %v11918
    %v12674 = vunpack.c.l.b16 %v11919
    %v12675 = vunpack.c.h.b16 %v11919
    %v12676 = vunpack.c.l.b16 %v11920
    %v12677 = vunpack.c.h.b16 %v11920
    %v12678 = vunpack.c.l.b16 %v11921
    %v12679 = vunpack.c.h.b16 %v11921
    %v12680 = vunpack.c.l.b16 %v11922
    %v12681 = vunpack.c.h.b16 %v11922
    %v12682 = vunpack.c.l.b16 %v11923
    %v12683 = vunpack.c.h.b16 %v11923
    %v12684 = vunpack.c.l.b16 %v11924
    %v12685 = vunpack.c.h.b16 %v11924
    %v12686 = vunpack.c.l.b16 %v11925
    %v12687 = vunpack.c.h.b16 %v11925
    %v12688 = vunpack.c.l.b16 %v11926
    %v12689 = vunpack.c.h.b16 %v11926
    %v12690 = vunpack.c.l.b16 %v11927
    %v12691 = vunpack.c.h.b16 %v11927
    %v12692 = vunpack.c.l.b16 %v11928
    %v12693 = vunpack.c.h.b16 %v11928
    %v12694 = vunpack.c.l.b16 %v11929
    %v12695 = vunpack.c.h.b16 %v11929
    %v12696 = vunpack.c.l.b16 %v11930
    %v12697 = vunpack.c.h.b16 %v11930
    %v12698 = vunpack.c.l.b16 %v11931
    %v12699 = vunpack.c.h.b16 %v11931
    %v12700 = vunpack.c.l.b16 %v11932
    %v12701 = vunpack.c.h.b16 %v11932
    %v12702 = vunpack.c.l.b16 %v11933
    %v12703 = vunpack.c.h.b16 %v11933
    %v12704 = vunpack.c.l.b16 %v11934
    %v12705 = vunpack.c.h.b16 %v11934
    %v12706 = vunpack.c.l.b16 %v11935
    %v12707 = vunpack.c.h.b16 %v11935
    %v12708 = vunpack.c.l.b16 %v11936
    %v12709 = vunpack.c.h.b16 %v11936
    %v12710 = vunpack.c.l.b16 %v11937
    %v12711 = vunpack.c.h.b16 %v11937
    %v12712 = vunpack.c.l.b16 %v11938
    %v12713 = vunpack.c.h.b16 %v11938
    %v12714 = vunpack.c.l.b16 %v11939
    %v12715 = vunpack.c.h.b16 %v11939
    %v12716 = vunpack.c.l.b16 %v11940
    %v12717 = vunpack.c.h.b16 %v11940
    %v12718 = vunpack.c.l.b16 %v11941
    %v12719 = vunpack.c.h.b16 %v11941
    %v12720 = vunpack.c.l.b16 %v11942
    %v12721 = vunpack.c.h.b16 %v11942
    %v12722 = vunpack.c.l.b16 %v11943
    %v12723 = vunpack.c.h.b16 %v11943
    %v12724 = vunpack.c.l.b16 %v11944
    %v12725 = vunpack.c.h.b16 %v11944
    %v12726 = vunpack.c.l.b16 %v11945
    %v12727 = vunpack.c.h.b16 %v11945
    %v12728 = vunpack.c.l.b16 %v11946
    %v12729 = vunpack.c.h.b16 %v11946
    %v12730 = vunpack.c.l.b16 %v11947
    %v12731 = vunpack.c.h.b16 %v11947
    %v12732 = vunpack.c.l.b16 %v11948
    %v12733 = vunpack.c.h.b16 %v11948
    %v12734 = vunpack.c.l.b16 %v11949
    %v12735 = vunpack.c.h.b16 %v11949
    %v12736 = vunpack.c.l.b16 %v11950
    %v12737 = vunpack.c.h.b16 %v11950
    %v12738 = vunpack.c.l.b16 %v11951
    %v12739 = vunpack.c.h.b16 %v11951
    %v12740 = vunpack.c.l.b16 %v11952
    %v12741 = vunpack.c.h.b16 %v11952
    %v12742 = vunpack.c.l.b16 %v11953
    %v12743 = vunpack.c.h.b16 %v11953
    %v12744 = vpack.c.b16 %v12236, %v12232
    %v12745 = vpack.c.b16 %v12237, %v12233
    %v12746 = vpack.c.b16 %v12238, %v12234
    %v12747 = vpack.c.b16 %v12239, %v12235
    %v12748 = vpack.c.b16 %v12244, %v12240
    %v12749 = vpack.c.b16 %v12245, %v12241
    %v12750 = vpack.c.b16 %v12246, %v12242
    %v12751 = vpack.c.b16 %v12247, %v12243
    %v12752 = vpack.c.b16 %v12252, %v12248
    %v12753 = vpack.c.b16 %v12253, %v12249
    %v12754 = vpack.c.b16 %v12254, %v12250
    %v12755 = vpack.c.b16 %v12255, %v12251
    %v12756 = vpack.c.b16 %v12260, %v12256
    %v12757 = vpack.c.b16 %v12261, %v12257
    %v12758 = vpack.c.b16 %v12262, %v12258
    %v12759 = vpack.c.b16 %v12263, %v12259
    %v12760 = vpack.c.b16 %v12268, %v12264
    %v12761 = vpack.c.b16 %v12269, %v12265
    %v12762 = vpack.c.b16 %v12270, %v12266
    %v12763 = vpack.c.b16 %v12271, %v12267
    %v12764 = vpack.c.b16 %v12276, %v12272
    %v12765 = vpack.c.b16 %v12277, %v12273
    %v12766 = vpack.c.b16 %v12278, %v12274
    %v12767 = vpack.c.b16 %v12279, %v12275
    %v12768 = vpack.c.b16 %v12284, %v12280
    %v12769 = vpack.c.b16 %v12285, %v12281
    %v12770 = vpack.c.b16 %v12286, %v12282
    %v12771 = vpack.c.b16 %v12287, %v12283
    %v12772 = vpack.c.b16 %v12292, %v12288
    %v12773 = vpack.c.b16 %v12293, %v12289
    %v12774 = vpack.c.b16 %v12294, %v12290
    %v12775 = vpack.c.b16 %v12295, %v12291
    %v12776 = vpack.c.b16 %v12300, %v12296
    %v12777 = vpack.c.b16 %v12301, %v12297
    %v12778 = vpack.c.b16 %v12302, %v12298
    %v12779 = vpack.c.b16 %v12303, %v12299
    %v12780 = vpack.c.b16 %v12308, %v12304
    %v12781 = vpack.c.b16 %v12309, %v12305
    %v12782 = vpack.c.b16 %v12310, %v12306
    %v12783 = vpack.c.b16 %v12311, %v12307
    %v12784 = vpack.c.b16 %v12316, %v12312
    %v12785 = vpack.c.b16 %v12317, %v12313
    %v12786 = vpack.c.b16 %v12318, %v12314
    %v12787 = vpack.c.b16 %v12319, %v12315
    %v12788 = vpack.c.b16 %v12324, %v12320
    %v12789 = vpack.c.b16 %v12325, %v12321
    %v12790 = vpack.c.b16 %v12326, %v12322
    %v12791 = vpack.c.b16 %v12327, %v12323
    %v12792 = vpack.c.b16 %v12332, %v12328
    %v12793 = vpack.c.b16 %v12333, %v12329
    %v12794 = vpack.c.b16 %v12334, %v12330
    %v12795 = vpack.c.b16 %v12335, %v12331
    %v12796 = vpack.c.b16 %v12340, %v12336
    %v12797 = vpack.c.b16 %v12341, %v12337
    %v12798 = vpack.c.b16 %v12342, %v12338
    %v12799 = vpack.c.b16 %v12343, %v12339
    %v12800 = vpack.c.b16 %v12348, %v12344
    %v12801 = vpack.c.b16 %v12349, %v12345
    %v12802 = vpack.c.b16 %v12350, %v12346
    %v12803 = vpack.c.b16 %v12351, %v12347
    %v12804 = vpack.c.b16 %v12356, %v12352
    %v12805 = vpack.c.b16 %v12357, %v12353
    %v12806 = vpack.c.b16 %v12358, %v12354
    %v12807 = vpack.c.b16 %v12359, %v12355
    %v12808 = vpack.c.b16 %v12364, %v12360
    %v12809 = vpack.c.b16 %v12365, %v12361
    %v12810 = vpack.c.b16 %v12366, %v12362
    %v12811 = vpack.c.b16 %v12367, %v12363
    %v12812 = vpack.c.b16 %v12372, %v12368
    %v12813 = vpack.c.b16 %v12373, %v12369
    %v12814 = vpack.c.b16 %v12374, %v12370
    %v12815 = vpack.c.b16 %v12375, %v12371
    %v12816 = vpack.c.b16 %v12380, %v12376
    %v12817 = vpack.c.b16 %v12381, %v12377
    %v12818 = vpack.c.b16 %v12382, %v12378
    %v12819 = vpack.c.b16 %v12383, %v12379
    %v12820 = vpack.c.b16 %v12388, %v12384
    %v12821 = vpack.c.b16 %v12389, %v12385
    %v12822 = vpack.c.b16 %v12390, %v12386
    %v12823 = vpack.c.b16 %v12391, %v12387
    %v12824 = vpack.c.b16 %v12396, %v12392
    %v12825 = vpack.c.b16 %v12397, %v12393
    %v12826 = vpack.c.b16 %v12398, %v12394
    %v12827 = vpack.c.b16 %v12399, %v12395
    %v12828 = vpack.c.b16 %v12404, %v12400
    %v12829 = vpack.c.b16 %v12405, %v12401
    %v12830 = vpack.c.b16 %v12406, %v12402
    %v12831 = vpack.c.b16 %v12407, %v12403
    %v12832 = vpack.c.b16 %v12412, %v12408
    %v12833 = vpack.c.b16 %v12413, %v12409
    %v12834 = vpack.c.b16 %v12414, %v12410
    %v12835 = vpack.c.b16 %v12415, %v12411
    %v12836 = vpack.c.b16 %v12420, %v12416
    %v12837 = vpack.c.b16 %v12421, %v12417
    %v12838 = vpack.c.b16 %v12422, %v12418
    %v12839 = vpack.c.b16 %v12423, %v12419
    %v12840 = vpack.c.b16 %v12428, %v12424
    %v12841 = vpack.c.b16 %v12429, %v12425
    %v12842 = vpack.c.b16 %v12430, %v12426
    %v12843 = vpack.c.b16 %v12431, %v12427
    %v12844 = vpack.c.b16 %v12436, %v12432
    %v12845 = vpack.c.b16 %v12437, %v12433
    %v12846 = vpack.c.b16 %v12438, %v12434
    %v12847 = vpack.c.b16 %v12439, %v12435
    %v12848 = vpack.c.b16 %v12444, %v12440
    %v12849 = vpack.c.b16 %v12445, %v12441
    %v12850 = vpack.c.b16 %v12446, %v12442
    %v12851 = vpack.c.b16 %v12447, %v12443
    %v12852 = vpack.c.b16 %v12452, %v12448
    %v12853 = vpack.c.b16 %v12453, %v12449
    %v12854 = vpack.c.b16 %v12454, %v12450
    %v12855 = vpack.c.b16 %v12455, %v12451
    %v12856 = vpack.c.b16 %v12460, %v12456
    %v12857 = vpack.c.b16 %v12461, %v12457
    %v12858 = vpack.c.b16 %v12462, %v12458
    %v12859 = vpack.c.b16 %v12463, %v12459
    %v12860 = vpack.c.b16 %v12468, %v12464
    %v12861 = vpack.c.b16 %v12469, %v12465
    %v12862 = vpack.c.b16 %v12470, %v12466
    %v12863 = vpack.c.b16 %v12471, %v12467
    %v12864 = vpack.c.b16 %v12476, %v12472
    %v12865 = vpack.c.b16 %v12477, %v12473
    %v12866 = vpack.c.b16 %v12478, %v12474
    %v12867 = vpack.c.b16 %v12479, %v12475
    %v12868 = vpack.c.b16 %v12484, %v12480
    %v12869 = vpack.c.b16 %v12485, %v12481
    %v12870 = vpack.c.b16 %v12486, %v12482
    %v12871 = vpack.c.b16 %v12487, %v12483
    %v12872 = vpack.c.b16 %v12492, %v12488
    %v12873 = vpack.c.b16 %v12493, %v12489
    %v12874 = vpack.c.b16 %v12494, %v12490
    %v12875 = vpack.c.b16 %v12495, %v12491
    %v12876 = vpack.c.b16 %v12500, %v12496
    %v12877 = vpack.c.b16 %v12501, %v12497
    %v12878 = vpack.c.b16 %v12502, %v12498
    %v12879 = vpack.c.b16 %v12503, %v12499
    %v12880 = vpack.c.b16 %v12508, %v12504
    %v12881 = vpack.c.b16 %v12509, %v12505
    %v12882 = vpack.c.b16 %v12510, %v12506
    %v12883 = vpack.c.b16 %v12511, %v12507
    %v12884 = vpack.c.b16 %v12516, %v12512
    %v12885 = vpack.c.b16 %v12517, %v12513
    %v12886 = vpack.c.b16 %v12518, %v12514
    %v12887 = vpack.c.b16 %v12519, %v12515
    %v12888 = vpack.c.b16 %v12524, %v12520
    %v12889 = vpack.c.b16 %v12525, %v12521
    %v12890 = vpack.c.b16 %v12526, %v12522
    %v12891 = vpack.c.b16 %v12527, %v12523
    %v12892 = vpack.c.b16 %v12532, %v12528
    %v12893 = vpack.c.b16 %v12533, %v12529
    %v12894 = vpack.c.b16 %v12534, %v12530
    %v12895 = vpack.c.b16 %v12535, %v12531
    %v12896 = vpack.c.b16 %v12540, %v12536
    %v12897 = vpack.c.b16 %v12541, %v12537
    %v12898 = vpack.c.b16 %v12542, %v12538
    %v12899 = vpack.c.b16 %v12543, %v12539
    %v12900 = vpack.c.b16 %v12548, %v12544
    %v12901 = vpack.c.b16 %v12549, %v12545
    %v12902 = vpack.c.b16 %v12550, %v12546
    %v12903 = vpack.c.b16 %v12551, %v12547
    %v12904 = vpack.c.b16 %v12556, %v12552
    %v12905 = vpack.c.b16 %v12557, %v12553
    %v12906 = vpack.c.b16 %v12558, %v12554
    %v12907 = vpack.c.b16 %v12559, %v12555
    %v12908 = vpack.c.b16 %v12564, %v12560
    %v12909 = vpack.c.b16 %v12565, %v12561
    %v12910 = vpack.c.b16 %v12566, %v12562
    %v12911 = vpack.c.b16 %v12567, %v12563
    %v12912 = vpack.c.b16 %v12572, %v12568
    %v12913 = vpack.c.b16 %v12573, %v12569
    %v12914 = vpack.c.b16 %v12574, %v12570
    %v12915 = vpack.c.b16 %v12575, %v12571
    %v12916 = vpack.c.b16 %v12580, %v12576
    %v12917 = vpack.c.b16 %v12581, %v12577
    %v12918 = vpack.c.b16 %v12582, %v12578
    %v12919 = vpack.c.b16 %v12583, %v12579
    %v12920 = vpack.c.b16 %v12588, %v12584
    %v12921 = vpack.c.b16 %v12589, %v12585
    %v12922 = vpack.c.b16 %v12590, %v12586
    %v12923 = vpack.c.b16 %v12591, %v12587
    %v12924 = vpack.c.b16 %v12596, %v12592
    %v12925 = vpack.c.b16 %v12597, %v12593
    %v12926 = vpack.c.b16 %v12598, %v12594
    %v12927 = vpack.c.b16 %v12599, %v12595
    %v12928 = vpack.c.b16 %v12604, %v12600
    %v12929 = vpack.c.b16 %v12605, %v12601
    %v12930 = vpack.c.b16 %v12606, %v12602
    %v12931 = vpack.c.b16 %v12607, %v12603
    %v12932 = vpack.c.b16 %v12612, %v12608
    %v12933 = vpack.c.b16 %v12613, %v12609
    %v12934 = vpack.c.b16 %v12614, %v12610
    %v12935 = vpack.c.b16 %v12615, %v12611
    %v12936 = vpack.c.b16 %v12620, %v12616
    %v12937 = vpack.c.b16 %v12621, %v12617
    %v12938 = vpack.c.b16 %v12622, %v12618
    %v12939 = vpack.c.b16 %v12623, %v12619
    %v12940 = vpack.c.b16 %v12628, %v12624
    %v12941 = vpack.c.b16 %v12629, %v12625
    %v12942 = vpack.c.b16 %v12630, %v12626
    %v12943 = vpack.c.b16 %v12631, %v12627
    %v12944 = vpack.c.b16 %v12636, %v12632
    %v12945 = vpack.c.b16 %v12637, %v12633
    %v12946 = vpack.c.b16 %v12638, %v12634
    %v12947 = vpack.c.b16 %v12639, %v12635
    %v12948 = vpack.c.b16 %v12644, %v12640
    %v12949 = vpack.c.b16 %v12645, %v12641
    %v12950 = vpack.c.b16 %v12646, %v12642
    %v12951 = vpack.c.b16 %v12647, %v12643
    %v12952 = vpack.c.b16 %v12652, %v12648
    %v12953 = vpack.c.b16 %v12653, %v12649
    %v12954 = vpack.c.b16 %v12654, %v12650
    %v12955 = vpack.c.b16 %v12655, %v12651
    %v12956 = vpack.c.b16 %v12660, %v12656
    %v12957 = vpack.c.b16 %v12661, %v12657
    %v12958 = vpack.c.b16 %v12662, %v12658
    %v12959 = vpack.c.b16 %v12663, %v12659
    %v12960 = vpack.c.b16 %v12668, %v12664
    %v12961 = vpack.c.b16 %v12669, %v12665
    %v12962 = vpack.c.b16 %v12670, %v12666
    %v12963 = vpack.c.b16 %v12671, %v12667
    %v12964 = vpack.c.b16 %v12676, %v12672
    %v12965 = vpack.c.b16 %v12677, %v12673
    %v12966 = vpack.c.b16 %v12678, %v12674
    %v12967 = vpack.c.b16 %v12679, %v12675
    %v12968 = vpack.c.b16 %v12684, %v12680
    %v12969 = vpack.c.b16 %v12685, %v12681
    %v12970 = vpack.c.b16 %v12686, %v12682
    %v12971 = vpack.c.b16 %v12687, %v12683
    %v12972 = vpack.c.b16 %v12692, %v12688
    %v12973 = vpack.c.b16 %v12693, %v12689
    %v12974 = vpack.c.b16 %v12694, %v12690
    %v12975 = vpack.c.b16 %v12695, %v12691
    %v12976 = vpack.c.b16 %v12700, %v12696
    %v12977 = vpack.c.b16 %v12701, %v12697
    %v12978 = vpack.c.b16 %v12702, %v12698
    %v12979 = vpack.c.b16 %v12703, %v12699
    %v12980 = vpack.c.b16 %v12708, %v12704
    %v12981 = vpack.c.b16 %v12709, %v12705
    %v12982 = vpack.c.b16 %v12710, %v12706
    %v12983 = vpack.c.b16 %v12711, %v12707
    %v12984 = vpack.c.b16 %v12716, %v12712
    %v12985 = vpack.c.b16 %v12717, %v12713
    %v12986 = vpack.c.b16 %v12718, %v12714
    %v12987 = vpack.c.b16 %v12719, %v12715
    %v12988 = vpack.c.b16 %v12724, %v12720
    %v12989 = vpack.c.b16 %v12725, %v12721
    %v12990 = vpack.c.b16 %v12726, %v12722
    %v12991 = vpack.c.b16 %v12727, %v12723
    %v12992 = vpack.c.b16 %v12732, %v12728
    %v12993 = vpack.c.b16 %v12733, %v12729
    %v12994 = vpack.c.b16 %v12734, %v12730
    %v12995 = vpack.c.b16 %v12735, %v12731
    %v12996 = vpack.c.b16 %v12740, %v12736
    %v12997 = vpack.c.b16 %v12741, %v12737
    %v12998 = vpack.c.b16 %v12742, %v12738
    %v12999 = vpack.c.b16 %v12743, %v12739
    %13256 = vmatprep.subr.bf16.mxu0 %v12745
    %13257 = vmatpush1.bf16.msra.mxu0 %v12744
    %13258 = vmatprep.subr.bf16.mxu0 %v12749
    %13259 = vmatpush1.bf16.msra.mxu0 %v12748
    %13260 = vmatprep.subr.bf16.mxu0 %v12753
    %13261 = vmatpush1.bf16.msra.mxu0 %v12752
    %13262 = vmatprep.subr.bf16.mxu0 %v12757
    %13263 = vmatpush1.bf16.msra.mxu0 %v12756
    %13264 = vmatprep.subr.bf16.mxu0 %v12761
    %13265 = vmatpush1.bf16.msra.mxu0 %v12760
    %13266 = vmatprep.subr.bf16.mxu0 %v12765
    %13267 = vmatpush1.bf16.msra.mxu0 %v12764
    %13268 = vmatprep.subr.bf16.mxu0 %v12769
    %13269 = vmatpush1.bf16.msra.mxu0 %v12768
    %13270 = vmatprep.subr.bf16.mxu0 %v12773
    %13271 = vmatpush1.bf16.msra.mxu0 %v12772
    %13272 = vmatprep.subr.bf16.mxu0 %v12777
    %13273 = vmatpush1.bf16.msra.mxu0 %v12776
    %13274 = vmatprep.subr.bf16.mxu0 %v12781
    %13275 = vmatpush1.bf16.msra.mxu0 %v12780
    %13276 = vmatprep.subr.bf16.mxu0 %v12785
    %13277 = vmatpush1.bf16.msra.mxu0 %v12784
    %13278 = vmatprep.subr.bf16.mxu0 %v12789
    %13279 = vmatpush1.bf16.msra.mxu0 %v12788
    %13280 = vmatprep.subr.bf16.mxu0 %v12793
    %13281 = vmatpush1.bf16.msra.mxu0 %v12792
    %13282 = vmatprep.subr.bf16.mxu0 %v12797
    %13283 = vmatpush1.bf16.msra.mxu0 %v12796
    %13284 = vmatprep.subr.bf16.mxu0 %v12801
    %13285 = vmatpush1.bf16.msra.mxu0 %v12800
    %13286 = vmatprep.subr.bf16.mxu0 %v12805
    %13287 = vmatpush1.bf16.msra.mxu0 %v12804
    %13288 = vmatprep.mubr.bf16.mxu0 %v11691
    %13289 = vmatmul.mubr.bf16.gmra.mrb[0].mxu0 %v11690
    %v13290 = vpop.f32.mrb[0].mxu0
    %v13291 = vadd.f32 %v11959, %v13290
    %v13292 = vpop.f32.mrb[0].mxu0
    %v13293 = vadd.f32 %v11963, %v13292
    %v13294 = vpop.f32.mrb[0].mxu0
    %v13295 = vadd.f32 %v11959, %v13294
    %v13296 = vpop.f32.mrb[0].mxu0
    %v13297 = vadd.f32 %v11963, %v13296
    %13298 = vdwg.mxu0
    %13299 = vmatprep.subr.bf16.mxu0 %v12809
    %13300 = vmatpush1.bf16.msra.mxu0 %v12808
    %13301 = vmatprep.subr.bf16.mxu0 %v12813
    %13302 = vmatpush1.bf16.msra.mxu0 %v12812
    %13303 = vmatprep.subr.bf16.mxu0 %v12817
    %13304 = vmatpush1.bf16.msra.mxu0 %v12816
    %13305 = vmatprep.subr.bf16.mxu0 %v12821
    %13306 = vmatpush1.bf16.msra.mxu0 %v12820
    %13307 = vmatprep.subr.bf16.mxu0 %v12825
    %13308 = vmatpush1.bf16.msra.mxu0 %v12824
    %13309 = vmatprep.subr.bf16.mxu0 %v12829
    %13310 = vmatpush1.bf16.msra.mxu0 %v12828
    %13311 = vmatprep.subr.bf16.mxu0 %v12833
    %13312 = vmatpush1.bf16.msra.mxu0 %v12832
    %13313 = vmatprep.subr.bf16.mxu0 %v12837
    %13314 = vmatpush1.bf16.msra.mxu0 %v12836
    %13315 = vmatprep.subr.bf16.mxu0 %v12841
    %13316 = vmatpush1.bf16.msra.mxu0 %v12840
    %13317 = vmatprep.subr.bf16.mxu0 %v12845
    %13318 = vmatpush1.bf16.msra.mxu0 %v12844
    %13319 = vmatprep.subr.bf16.mxu0 %v12849
    %13320 = vmatpush1.bf16.msra.mxu0 %v12848
    %13321 = vmatprep.subr.bf16.mxu0 %v12853
    %13322 = vmatpush1.bf16.msra.mxu0 %v12852
    %13323 = vmatprep.subr.bf16.mxu0 %v12857
    %13324 = vmatpush1.bf16.msra.mxu0 %v12856
    %13325 = vmatprep.subr.bf16.mxu0 %v12861
    %13326 = vmatpush1.bf16.msra.mxu0 %v12860
    %13327 = vmatprep.subr.bf16.mxu0 %v12865
    %13328 = vmatpush1.bf16.msra.mxu0 %v12864
    %13329 = vmatprep.subr.bf16.mxu0 %v12869
    %13330 = vmatpush1.bf16.msra.mxu0 %v12868
    %13331 = vmatprep.mubr.bf16.mxu0 %v11693
    %13332 = vmatmul.mubr.bf16.gmra.mrb[0].mxu0 %v11692
    %v13333 = vpop.f32.mrb[0].mxu0
    %v13334 = vadd.f32 %v13291, %v13333
    %v13335 = vpop.f32.mrb[0].mxu0
    %v13336 = vadd.f32 %v13293, %v13335
    %v13337 = vpop.f32.mrb[0].mxu0
    %v13338 = vadd.f32 %v13295, %v13337
    %v13339 = vpop.f32.mrb[0].mxu0
    %v13340 = vadd.f32 %v13297, %v13339
    %13341 = vdwg.mxu0
    %13342 = vmatprep.subr.bf16.mxu0 %v12873
    %13343 = vmatpush1.bf16.msra.mxu0 %v12872
    %13344 = vmatprep.subr.bf16.mxu0 %v12877
    %13345 = vmatpush1.bf16.msra.mxu0 %v12876
    %13346 = vmatprep.subr.bf16.mxu0 %v12881
    %13347 = vmatpush1.bf16.msra.mxu0 %v12880
    %13348 = vmatprep.subr.bf16.mxu0 %v12885
    %13349 = vmatpush1.bf16.msra.mxu0 %v12884
    %13350 = vmatprep.subr.bf16.mxu0 %v12889
    %13351 = vmatpush1.bf16.msra.mxu0 %v12888
    %13352 = vmatprep.subr.bf16.mxu0 %v12893
    %13353 = vmatpush1.bf16.msra.mxu0 %v12892
    %13354 = vmatprep.subr.bf16.mxu0 %v12897
    %13355 = vmatpush1.bf16.msra.mxu0 %v12896
    %13356 = vmatprep.subr.bf16.mxu0 %v12901
    %13357 = vmatpush1.bf16.msra.mxu0 %v12900
    %13358 = vmatprep.subr.bf16.mxu0 %v12905
    %13359 = vmatpush1.bf16.msra.mxu0 %v12904
    %13360 = vmatprep.subr.bf16.mxu0 %v12909
    %13361 = vmatpush1.bf16.msra.mxu0 %v12908
    %13362 = vmatprep.subr.bf16.mxu0 %v12913
    %13363 = vmatpush1.bf16.msra.mxu0 %v12912
    %13364 = vmatprep.subr.bf16.mxu0 %v12917
    %13365 = vmatpush1.bf16.msra.mxu0 %v12916
    %13366 = vmatprep.subr.bf16.mxu0 %v12921
    %13367 = vmatpush1.bf16.msra.mxu0 %v12920
    %13368 = vmatprep.subr.bf16.mxu0 %v12925
    %13369 = vmatpush1.bf16.msra.mxu0 %v12924
    %13370 = vmatprep.subr.bf16.mxu0 %v12929
    %13371 = vmatpush1.bf16.msra.mxu0 %v12928
    %13372 = vmatprep.subr.bf16.mxu0 %v12933
    %13373 = vmatpush1.bf16.msra.mxu0 %v12932
    %13374 = vmatprep.mubr.bf16.mxu0 %v11695
    %13375 = vmatmul.mubr.bf16.gmra.mrb[0].mxu0 %v11694
    %v13376 = vpop.f32.mrb[0].mxu0
    %v13377 = vadd.f32 %v13334, %v13376
    %v13378 = vpop.f32.mrb[0].mxu0
    %v13379 = vadd.f32 %v13336, %v13378
    %v13380 = vpop.f32.mrb[0].mxu0
    %v13381 = vadd.f32 %v13338, %v13380
    %v13382 = vpop.f32.mrb[0].mxu0
    %v13383 = vadd.f32 %v13340, %v13382
    %13384 = vdwg.mxu0
    %13385 = vmatprep.subr.bf16.mxu0 %v12937
    %13386 = vmatpush1.bf16.msra.mxu0 %v12936
    %13387 = vmatprep.subr.bf16.mxu0 %v12941
    %13388 = vmatpush1.bf16.msra.mxu0 %v12940
    %13389 = vmatprep.subr.bf16.mxu0 %v12945
    %13390 = vmatpush1.bf16.msra.mxu0 %v12944
    %13391 = vmatprep.subr.bf16.mxu0 %v12949
    %13392 = vmatpush1.bf16.msra.mxu0 %v12948
    %13393 = vmatprep.subr.bf16.mxu0 %v12953
    %13394 = vmatpush1.bf16.msra.mxu0 %v12952
    %13395 = vmatprep.subr.bf16.mxu0 %v12957
    %13396 = vmatpush1.bf16.msra.mxu0 %v12956
    %13397 = vmatprep.subr.bf16.mxu0 %v12961
    %13398 = vmatpush1.bf16.msra.mxu0 %v12960
    %13399 = vmatprep.subr.bf16.mxu0 %v12965
    %13400 = vmatpush1.bf16.msra.mxu0 %v12964
    %13401 = vmatprep.subr.bf16.mxu0 %v12969
    %13402 = vmatpush1.bf16.msra.mxu0 %v12968
    %13403 = vmatprep.subr.bf16.mxu0 %v12973
    %13404 = vmatpush1.bf16.msra.mxu0 %v12972
    %13405 = vmatprep.subr.bf16.mxu0 %v12977
    %13406 = vmatpush1.bf16.msra.mxu0 %v12976
    %13407 = vmatprep.subr.bf16.mxu0 %v12981
    %13408 = vmatpush1.bf16.msra.mxu0 %v12980
    %13409 = vmatprep.subr.bf16.mxu0 %v12985
    %13410 = vmatpush1.bf16.msra.mxu0 %v12984
    %13411 = vmatprep.subr.bf16.mxu0 %v12989
    %13412 = vmatpush1.bf16.msra.mxu0 %v12988
    %13413 = vmatprep.subr.bf16.mxu0 %v12993
    %13414 = vmatpush1.bf16.msra.mxu0 %v12992
    %13415 = vmatprep.subr.bf16.mxu0 %v12997
    %13416 = vmatpush1.bf16.msra.mxu0 %v12996
    %13417 = vmatprep.mubr.bf16.mxu0 %v11697
    %13418 = vmatmul.mubr.bf16.gmra.mrb[0].mxu0 %v11696
    %v13419 = vpop.f32.mrb[0].mxu0
    %v13420 = vadd.f32 %v13377, %v13419
    %v13421 = vpop.f32.mrb[0].mxu0
    %v13422 = vadd.f32 %v13379, %v13421
    %v13423 = vpop.f32.mrb[0].mxu0
    %v13424 = vadd.f32 %v13381, %v13423
    %v13425 = vpop.f32.mrb[0].mxu0
    %v13426 = vadd.f32 %v13383, %v13425
    %13427 = vdwg.mxu0
    %13428 = vmatprep.subr.bf16.mxu0 %v12747
    %13429 = vmatpush1.bf16.msra.mxu0 %v12746
    %13430 = vmatprep.subr.bf16.mxu0 %v12751
    %13431 = vmatpush1.bf16.msra.mxu0 %v12750
    %13432 = vmatprep.subr.bf16.mxu0 %v12755
    %13433 = vmatpush1.bf16.msra.mxu0 %v12754
    %13434 = vmatprep.subr.bf16.mxu0 %v12759
    %13435 = vmatpush1.bf16.msra.mxu0 %v12758
    %13436 = vmatprep.subr.bf16.mxu0 %v12763
    %13437 = vmatpush1.bf16.msra.mxu0 %v12762
    %13438 = vmatprep.subr.bf16.mxu0 %v12767
    %13439 = vmatpush1.bf16.msra.mxu0 %v12766
    %13440 = vmatprep.subr.bf16.mxu0 %v12771
    %13441 = vmatpush1.bf16.msra.mxu0 %v12770
    %13442 = vmatprep.subr.bf16.mxu0 %v12775
    %13443 = vmatpush1.bf16.msra.mxu0 %v12774
    %13444 = vmatprep.subr.bf16.mxu0 %v12779
    %13445 = vmatpush1.bf16.msra.mxu0 %v12778
    %13446 = vmatprep.subr.bf16.mxu0 %v12783
    %13447 = vmatpush1.bf16.msra.mxu0 %v12782
    %13448 = vmatprep.subr.bf16.mxu0 %v12787
    %13449 = vmatpush1.bf16.msra.mxu0 %v12786
    %13450 = vmatprep.subr.bf16.mxu0 %v12791
    %13451 = vmatpush1.bf16.msra.mxu0 %v12790
    %13452 = vmatprep.subr.bf16.mxu0 %v12795
    %13453 = vmatpush1.bf16.msra.mxu0 %v12794
    %13454 = vmatprep.subr.bf16.mxu0 %v12799
    %13455 = vmatpush1.bf16.msra.mxu0 %v12798
    %13456 = vmatprep.subr.bf16.mxu0 %v12803
    %13457 = vmatpush1.bf16.msra.mxu0 %v12802
    %13458 = vmatprep.subr.bf16.mxu0 %v12807
    %13459 = vmatpush1.bf16.msra.mxu0 %v12806
    %13460 = vmatprep.mubr.bf16.mxu0 %v11691
    %13461 = vmatmul.mubr.bf16.gmra.mrb[0].mxu0 %v11690
    %v13462 = vpop.f32.mrb[0].mxu0
    %v13463 = vadd.f32 %v11967, %v13462
    %v13464 = vpop.f32.mrb[0].mxu0
    %v13465 = vadd.f32 %v11971, %v13464
    %v13466 = vpop.f32.mrb[0].mxu0
    %v13467 = vadd.f32 %v11967, %v13466
    %v13468 = vpop.f32.mrb[0].mxu0
    %v13469 = vadd.f32 %v11971, %v13468
    %13470 = vdwg.mxu0
    %13471 = vmatprep.subr.bf16.mxu0 %v12811
    %13472 = vmatpush1.bf16.msra.mxu0 %v12810
    %13473 = vmatprep.subr.bf16.mxu0 %v12815
    %13474 = vmatpush1.bf16.msra.mxu0 %v12814
    %13475 = vmatprep.subr.bf16.mxu0 %v12819
    %13476 = vmatpush1.bf16.msra.mxu0 %v12818
    %13477 = vmatprep.subr.bf16.mxu0 %v12823
    %13478 = vmatpush1.bf16.msra.mxu0 %v12822
    %13479 = vmatprep.subr.bf16.mxu0 %v12827
    %13480 = vmatpush1.bf16.msra.mxu0 %v12826
    %13481 = vmatprep.subr.bf16.mxu0 %v12831
    %13482 = vmatpush1.bf16.msra.mxu0 %v12830
    %13483 = vmatprep.subr.bf16.mxu0 %v12835
    %13484 = vmatpush1.bf16.msra.mxu0 %v12834
    %13485 = vmatprep.subr.bf16.mxu0 %v12839
    %13486 = vmatpush1.bf16.msra.mxu0 %v12838
    %13487 = vmatprep.subr.bf16.mxu0 %v12843
    %13488 = vmatpush1.bf16.msra.mxu0 %v12842
    %13489 = vmatprep.subr.bf16.mxu0 %v12847
    %13490 = vmatpush1.bf16.msra.mxu0 %v12846
    %13491 = vmatprep.subr.bf16.mxu0 %v12851
    %13492 = vmatpush1.bf16.msra.mxu0 %v12850
    %13493 = vmatprep.subr.bf16.mxu0 %v12855
    %13494 = vmatpush1.bf16.msra.mxu0 %v12854
    %13495 = vmatprep.subr.bf16.mxu0 %v12859
    %13496 = vmatpush1.bf16.msra.mxu0 %v12858
    %13497 = vmatprep.subr.bf16.mxu0 %v12863
    %13498 = vmatpush1.bf16.msra.mxu0 %v12862
    %13499 = vmatprep.subr.bf16.mxu0 %v12867
    %13500 = vmatpush1.bf16.msra.mxu0 %v12866
    %13501 = vmatprep.subr.bf16.mxu0 %v12871
    %13502 = vmatpush1.bf16.msra.mxu0 %v12870
    %13503 = vmatprep.mubr.bf16.mxu0 %v11693
    %13504 = vmatmul.mubr.bf16.gmra.mrb[0].mxu0 %v11692
    %v13505 = vpop.f32.mrb[0].mxu0
    %v13506 = vadd.f32 %v13463, %v13505
    %v13507 = vpop.f32.mrb[0].mxu0
    %v13508 = vadd.f32 %v13465, %v13507
    %v13509 = vpop.f32.mrb[0].mxu0
    %v13510 = vadd.f32 %v13467, %v13509
    %v13511 = vpop.f32.mrb[0].mxu0
    %v13512 = vadd.f32 %v13469, %v13511
    %13513 = vdwg.mxu0
    %13514 = vmatprep.subr.bf16.mxu0 %v12875
    %13515 = vmatpush1.bf16.msra.mxu0 %v12874
    %13516 = vmatprep.subr.bf16.mxu0 %v12879
    %13517 = vmatpush1.bf16.msra.mxu0 %v12878
    %13518 = vmatprep.subr.bf16.mxu0 %v12883
    %13519 = vmatpush1.bf16.msra.mxu0 %v12882
    %13520 = vmatprep.subr.bf16.mxu0 %v12887
    %13521 = vmatpush1.bf16.msra.mxu0 %v12886
    %13522 = vmatprep.subr.bf16.mxu0 %v12891
    %13523 = vmatpush1.bf16.msra.mxu0 %v12890
    %13524 = vmatprep.subr.bf16.mxu0 %v12895
    %13525 = vmatpush1.bf16.msra.mxu0 %v12894
    %13526 = vmatprep.subr.bf16.mxu0 %v12899
    %13527 = vmatpush1.bf16.msra.mxu0 %v12898
    %13528 = vmatprep.subr.bf16.mxu0 %v12903
    %13529 = vmatpush1.bf16.msra.mxu0 %v12902
    %13530 = vmatprep.subr.bf16.mxu0 %v12907
    %13531 = vmatpush1.bf16.msra.mxu0 %v12906
    %13532 = vmatprep.subr.bf16.mxu0 %v12911
    %13533 = vmatpush1.bf16.msra.mxu0 %v12910
    %13534 = vmatprep.subr.bf16.mxu0 %v12915
    %13535 = vmatpush1.bf16.msra.mxu0 %v12914
    %13536 = vmatprep.subr.bf16.mxu0 %v12919
    %13537 = vmatpush1.bf16.msra.mxu0 %v12918
    %13538 = vmatprep.subr.bf16.mxu0 %v12923
    %13539 = vmatpush1.bf16.msra.mxu0 %v12922
    %13540 = vmatprep.subr.bf16.mxu0 %v12927
    %13541 = vmatpush1.bf16.msra.mxu0 %v12926
    %13542 = vmatprep.subr.bf16.mxu0 %v12931
    %13543 = vmatpush1.bf16.msra.mxu0 %v12930
    %13544 = vmatprep.subr.bf16.mxu0 %v12935
    %13545 = vmatpush1.bf16.msra.mxu0 %v12934
    %13546 = vmatprep.mubr.bf16.mxu0 %v11695
    %13547 = vmatmul.mubr.bf16.gmra.mrb[0].mxu0 %v11694
    %v13548 = vpop.f32.mrb[0].mxu0
    %v13549 = vadd.f32 %v13506, %v13548
    %v13550 = vpop.f32.mrb[0].mxu0
    %v13551 = vadd.f32 %v13508, %v13550
    %v13552 = vpop.f32.mrb[0].mxu0
    %v13553 = vadd.f32 %v13510, %v13552
    %v13554 = vpop.f32.mrb[0].mxu0
    %v13555 = vadd.f32 %v13512, %v13554
    %13556 = vdwg.mxu0
    %13557 = vmatprep.subr.bf16.mxu0 %v12939
    %13558 = vmatpush1.bf16.msra.mxu0 %v12938
    %13559 = vmatprep.subr.bf16.mxu0 %v12943
    %13560 = vmatpush1.bf16.msra.mxu0 %v12942
    %13561 = vmatprep.subr.bf16.mxu0 %v12947
    %13562 = vmatpush1.bf16.msra.mxu0 %v12946
    %13563 = vmatprep.subr.bf16.mxu0 %v12951
    %13564 = vmatpush1.bf16.msra.mxu0 %v12950
    %13565 = vmatprep.subr.bf16.mxu0 %v12955
    %13566 = vmatpush1.bf16.msra.mxu0 %v12954
    %13567 = vmatprep.subr.bf16.mxu0 %v12959
    %13568 = vmatpush1.bf16.msra.mxu0 %v12958
    %13569 = vmatprep.subr.bf16.mxu0 %v12963
    %13570 = vmatpush1.bf16.msra.mxu0 %v12962
    %13571 = vmatprep.subr.bf16.mxu0 %v12967
    %13572 = vmatpush1.bf16.msra.mxu0 %v12966
    %13573 = vmatprep.subr.bf16.mxu0 %v12971
    %13574 = vmatpush1.bf16.msra.mxu0 %v12970
    %13575 = vmatprep.subr.bf16.mxu0 %v12975
    %13576 = vmatpush1.bf16.msra.mxu0 %v12974
    %13577 = vmatprep.subr.bf16.mxu0 %v12979
    %13578 = vmatpush1.bf16.msra.mxu0 %v12978
    %13579 = vmatprep.subr.bf16.mxu0 %v12983
    %13580 = vmatpush1.bf16.msra.mxu0 %v12982
    %13581 = vmatprep.subr.bf16.mxu0 %v12987
    %13582 = vmatpush1.bf16.msra.mxu0 %v12986
    %13583 = vmatprep.subr.bf16.mxu0 %v12991
    %13584 = vmatpush1.bf16.msra.mxu0 %v12990
    %13585 = vmatprep.subr.bf16.mxu0 %v12995
    %13586 = vmatpush1.bf16.msra.mxu0 %v12994
    %13587 = vmatprep.subr.bf16.mxu0 %v12999
    %13588 = vmatpush1.bf16.msra.mxu0 %v12998
    %13589 = vmatprep.mubr.bf16.mxu0 %v11697
    %13590 = vmatmul.mubr.bf16.gmra.mrb[0].mxu0 %v11696
    %v13591 = vpop.f32.mrb[0].mxu0
    %v13592 = vadd.f32 %v13549, %v13591
    %v13593 = vpop.f32.mrb[0].mxu0
    %v13594 = vadd.f32 %v13551, %v13593
    %v13595 = vpop.f32.mrb[0].mxu0
    %v13596 = vadd.f32 %v13553, %v13595
    %v13597 = vpop.f32.mrb[0].mxu0
    %v13598 = vadd.f32 %v13555, %v13597
    %13599 = vdwg.mxu0
    %v13600 = vmax.f32 %v13420, 0.0
    %v13601 = vmax.f32 %v13422, 0.0
    %v13602 = vmax.f32 %v13592, 0.0
    %v13603 = vmax.f32 %v13594, 0.0
    %v13604 = vmax.f32 %v13424, 0.0
    %v13605 = vmax.f32 %v13426, 0.0
    %v13606 = vmax.f32 %v13596, 0.0
    %v13607 = vmax.f32 %v13598, 0.0
    %v13608 = vpack.c.bf16 %v13604, %v13600
    %v13609 = vpack.c.bf16 %v13605, %v13601
    %v13610 = vpack.c.bf16 %v13606, %v13602
    %v13611 = vpack.c.bf16 %v13607, %v13603
    %v13612 = vld [vmem:[#allocation12] sm:$0xff]
    %v13613 = vld [vmem:[#allocation12 + $0x8] sm:$0xff]
    %v13614 = vld [vmem:[#allocation12 + $0x10] sm:$0xff]
    %v13615 = vld [vmem:[#allocation12 + $0x18] sm:$0xff]
    %v13616 = vld [vmem:[#allocation12 + $0x20] sm:$0xff]
    %v13617 = vld [vmem:[#allocation12 + $0x28] sm:$0xff]
    %v13618 = vld [vmem:[#allocation12 + $0x30] sm:$0xff]
    %v13619 = vld [vmem:[#allocation12 + $0x38] sm:$0xff]
    %v13620 = vld [vmem:[#allocation12 + $0x40] sm:$0xff]
    %v13621 = vld [vmem:[#allocation12 + $0x48] sm:$0xff]
    %v13622 = vld [vmem:[#allocation12 + $0x50] sm:$0xff]
    %v13623 = vld [vmem:[#allocation12 + $0x58] sm:$0xff]
    %v13624 = vld [vmem:[#allocation12 + $0x60] sm:$0xff]
    %v13625 = vld [vmem:[#allocation12 + $0x68] sm:$0xff]
    %v13626 = vld [vmem:[#allocation12 + $0x70] sm:$0xff]
    %v13627 = vld [vmem:[#allocation12 + $0x78] sm:$0xff]
    %v13628 = vld [vmem:[#allocation12 + $0x80] sm:$0xff]
    %v13629 = vld [vmem:[#allocation12 + $0x88] sm:$0xff]
    %v13630 = vld [vmem:[#allocation12 + $0x90] sm:$0xff]
    %v13631 = vld [vmem:[#allocation12 + $0x98] sm:$0xff]
    %v13632 = vld [vmem:[#allocation12 + $0xa0] sm:$0xff]
    %v13633 = vld [vmem:[#allocation12 + $0xa8] sm:$0xff]
    %v13634 = vld [vmem:[#allocation12 + $0xb0] sm:$0xff]
    %v13635 = vld [vmem:[#allocation12 + $0xb8] sm:$0xff]
    %v13636 = vld [vmem:[#allocation12 + $0xc0] sm:$0xff]
    %v13637 = vld [vmem:[#allocation12 + $0xc8] sm:$0xff]
    %v13638 = vld [vmem:[#allocation12 + $0xd0] sm:$0xff]
    %v13639 = vld [vmem:[#allocation12 + $0xd8] sm:$0xff]
    %v13640 = vld [vmem:[#allocation12 + $0xe0] sm:$0xff]
    %v13641 = vld [vmem:[#allocation12 + $0xe8] sm:$0xff]
    %v13642 = vld [vmem:[#allocation12 + $0xf0] sm:$0xff]
    %v13643 = vld [vmem:[#allocation12 + $0xf8] sm:$0xff]
    %v13644 = vld [vmem:[#allocation12 + $0x100] sm:$0xff]
    %v13645 = vld [vmem:[#allocation12 + $0x108] sm:$0xff]
    %v13646 = vld [vmem:[#allocation12 + $0x110] sm:$0xff]
    %v13647 = vld [vmem:[#allocation12 + $0x118] sm:$0xff]
    %v13648 = vld [vmem:[#allocation12 + $0x120] sm:$0xff]
    %v13649 = vld [vmem:[#allocation12 + $0x128] sm:$0xff]
    %v13650 = vld [vmem:[#allocation12 + $0x130] sm:$0xff]
    %v13651 = vld [vmem:[#allocation12 + $0x138] sm:$0xff]
    %v13652 = vld [vmem:[#allocation12 + $0x140] sm:$0xff]
    %v13653 = vld [vmem:[#allocation12 + $0x148] sm:$0xff]
    %v13654 = vld [vmem:[#allocation12 + $0x150] sm:$0xff]
    %v13655 = vld [vmem:[#allocation12 + $0x158] sm:$0xff]
    %v13656 = vld [vmem:[#allocation12 + $0x160] sm:$0xff]
    %v13657 = vld [vmem:[#allocation12 + $0x168] sm:$0xff]
    %v13658 = vld [vmem:[#allocation12 + $0x170] sm:$0xff]
    %v13659 = vld [vmem:[#allocation12 + $0x178] sm:$0xff]
    %v13660 = vld [vmem:[#allocation12 + $0x180] sm:$0xff]
    %v13661 = vld [vmem:[#allocation12 + $0x188] sm:$0xff]
    %v13662 = vld [vmem:[#allocation12 + $0x190] sm:$0xff]
    %v13663 = vld [vmem:[#allocation12 + $0x198] sm:$0xff]
    %v13664 = vld [vmem:[#allocation12 + $0x1a0] sm:$0xff]
    %v13665 = vld [vmem:[#allocation12 + $0x1a8] sm:$0xff]
    %v13666 = vld [vmem:[#allocation12 + $0x1b0] sm:$0xff]
    %v13667 = vld [vmem:[#allocation12 + $0x1b8] sm:$0xff]
    %v13668 = vld [vmem:[#allocation12 + $0x1c0] sm:$0xff]
    %v13669 = vld [vmem:[#allocation12 + $0x1c8] sm:$0xff]
    %v13670 = vld [vmem:[#allocation12 + $0x1d0] sm:$0xff]
    %v13671 = vld [vmem:[#allocation12 + $0x1d8] sm:$0xff]
    %v13672 = vld [vmem:[#allocation12 + $0x1e0] sm:$0xff]
    %v13673 = vld [vmem:[#allocation12 + $0x1e8] sm:$0xff]
    %v13674 = vld [vmem:[#allocation12 + $0x1f0] sm:$0xff]
    %v13675 = vld [vmem:[#allocation12 + $0x1f8] sm:$0xff]
    %v13676 = vld [vmem:[#allocation13] sm:$0x3]
    %v13678 = vlaneseq
    %v13679 = vshrl.u32 %v13678, 7
    %v13680 = vsub.s32 0, %v13679
    %v13681 = vrot.slane %v13676, %v13680
    %v13682 = vlaneseq
    %v13683 = vshrl.u32 %v13682, 7
    %v13684 = vsub.s32 1, %v13683
    %v13685 = vrot.slane %v13676, %v13684
    %v13752 = vunpack.c.l.b16 %v13612
    %v13753 = vunpack.c.h.b16 %v13612
    %v13754 = vunpack.c.l.b16 %v13613
    %v13755 = vunpack.c.h.b16 %v13613
    %v13756 = vunpack.c.l.b16 %v13614
    %v13757 = vunpack.c.h.b16 %v13614
    %v13758 = vunpack.c.l.b16 %v13615
    %v13759 = vunpack.c.h.b16 %v13615
    %v13760 = vunpack.c.l.b16 %v13616
    %v13761 = vunpack.c.h.b16 %v13616
    %v13762 = vunpack.c.l.b16 %v13617
    %v13763 = vunpack.c.h.b16 %v13617
    %v13764 = vunpack.c.l.b16 %v13618
    %v13765 = vunpack.c.h.b16 %v13618
    %v13766 = vunpack.c.l.b16 %v13619
    %v13767 = vunpack.c.h.b16 %v13619
    %v13768 = vunpack.c.l.b16 %v13620
    %v13769 = vunpack.c.h.b16 %v13620
    %v13770 = vunpack.c.l.b16 %v13621
    %v13771 = vunpack.c.h.b16 %v13621
    %v13772 = vunpack.c.l.b16 %v13622
    %v13773 = vunpack.c.h.b16 %v13622
    %v13774 = vunpack.c.l.b16 %v13623
    %v13775 = vunpack.c.h.b16 %v13623
    %v13776 = vunpack.c.l.b16 %v13624
    %v13777 = vunpack.c.h.b16 %v13624
    %v13778 = vunpack.c.l.b16 %v13625
    %v13779 = vunpack.c.h.b16 %v13625
    %v13780 = vunpack.c.l.b16 %v13626
    %v13781 = vunpack.c.h.b16 %v13626
    %v13782 = vunpack.c.l.b16 %v13627
    %v13783 = vunpack.c.h.b16 %v13627
    %v13784 = vunpack.c.l.b16 %v13628
    %v13785 = vunpack.c.h.b16 %v13628
    %v13786 = vunpack.c.l.b16 %v13629
    %v13787 = vunpack.c.h.b16 %v13629
    %v13788 = vunpack.c.l.b16 %v13630
    %v13789 = vunpack.c.h.b16 %v13630
    %v13790 = vunpack.c.l.b16 %v13631
    %v13791 = vunpack.c.h.b16 %v13631
    %v13792 = vunpack.c.l.b16 %v13632
    %v13793 = vunpack.c.h.b16 %v13632
    %v13794 = vunpack.c.l.b16 %v13633
    %v13795 = vunpack.c.h.b16 %v13633
    %v13796 = vunpack.c.l.b16 %v13634
    %v13797 = vunpack.c.h.b16 %v13634
    %v13798 = vunpack.c.l.b16 %v13635
    %v13799 = vunpack.c.h.b16 %v13635
    %v13800 = vunpack.c.l.b16 %v13636
    %v13801 = vunpack.c.h.b16 %v13636
    %v13802 = vunpack.c.l.b16 %v13637
    %v13803 = vunpack.c.h.b16 %v13637
    %v13804 = vunpack.c.l.b16 %v13638
    %v13805 = vunpack.c.h.b16 %v13638
    %v13806 = vunpack.c.l.b16 %v13639
    %v13807 = vunpack.c.h.b16 %v13639
    %v13808 = vunpack.c.l.b16 %v13640
    %v13809 = vunpack.c.h.b16 %v13640
    %v13810 = vunpack.c.l.b16 %v13641
    %v13811 = vunpack.c.h.b16 %v13641
    %v13812 = vunpack.c.l.b16 %v13642
    %v13813 = vunpack.c.h.b16 %v13642
    %v13814 = vunpack.c.l.b16 %v13643
    %v13815 = vunpack.c.h.b16 %v13643
    %v13816 = vunpack.c.l.b16 %v13644
    %v13817 = vunpack.c.h.b16 %v13644
    %v13818 = vunpack.c.l.b16 %v13645
    %v13819 = vunpack.c.h.b16 %v13645
    %v13820 = vunpack.c.l.b16 %v13646
    %v13821 = vunpack.c.h.b16 %v13646
    %v13822 = vunpack.c.l.b16 %v13647
    %v13823 = vunpack.c.h.b16 %v13647
    %v13824 = vunpack.c.l.b16 %v13648
    %v13825 = vunpack.c.h.b16 %v13648
    %v13826 = vunpack.c.l.b16 %v13649
    %v13827 = vunpack.c.h.b16 %v13649
    %v13828 = vunpack.c.l.b16 %v13650
    %v13829 = vunpack.c.h.b16 %v13650
    %v13830 = vunpack.c.l.b16 %v13651
    %v13831 = vunpack.c.h.b16 %v13651
    %v13832 = vunpack.c.l.b16 %v13652
    %v13833 = vunpack.c.h.b16 %v13652
    %v13834 = vunpack.c.l.b16 %v13653
    %v13835 = vunpack.c.h.b16 %v13653
    %v13836 = vunpack.c.l.b16 %v13654
    %v13837 = vunpack.c.h.b16 %v13654
    %v13838 = vunpack.c.l.b16 %v13655
    %v13839 = vunpack.c.h.b16 %v13655
    %v13840 = vunpack.c.l.b16 %v13656
    %v13841 = vunpack.c.h.b16 %v13656
    %v13842 = vunpack.c.l.b16 %v13657
    %v13843 = vunpack.c.h.b16 %v13657
    %v13844 = vunpack.c.l.b16 %v13658
    %v13845 = vunpack.c.h.b16 %v13658
    %v13846 = vunpack.c.l.b16 %v13659
    %v13847 = vunpack.c.h.b16 %v13659
    %v13848 = vunpack.c.l.b16 %v13660
    %v13849 = vunpack.c.h.b16 %v13660
    %v13850 = vunpack.c.l.b16 %v13661
    %v13851 = vunpack.c.h.b16 %v13661
    %v13852 = vunpack.c.l.b16 %v13662
    %v13853 = vunpack.c.h.b16 %v13662
    %v13854 = vunpack.c.l.b16 %v13663
    %v13855 = vunpack.c.h.b16 %v13663
    %v13856 = vunpack.c.l.b16 %v13664
    %v13857 = vunpack.c.h.b16 %v13664
    %v13858 = vunpack.c.l.b16 %v13665
    %v13859 = vunpack.c.h.b16 %v13665
    %v13860 = vunpack.c.l.b16 %v13666
    %v13861 = vunpack.c.h.b16 %v13666
    %v13862 = vunpack.c.l.b16 %v13667
    %v13863 = vunpack.c.h.b16 %v13667
    %v13864 = vunpack.c.l.b16 %v13668
    %v13865 = vunpack.c.h.b16 %v13668
    %v13866 = vunpack.c.l.b16 %v13669
    %v13867 = vunpack.c.h.b16 %v13669
    %v13868 = vunpack.c.l.b16 %v13670
    %v13869 = vunpack.c.h.b16 %v13670
    %v13870 = vunpack.c.l.b16 %v13671
    %v13871 = vunpack.c.h.b16 %v13671
    %v13872 = vunpack.c.l.b16 %v13672
    %v13873 = vunpack.c.h.b16 %v13672
    %v13874 = vunpack.c.l.b16 %v13673
    %v13875 = vunpack.c.h.b16 %v13673
    %v13876 = vunpack.c.l.b16 %v13674
    %v13877 = vunpack.c.h.b16 %v13674
    %v13878 = vunpack.c.l.b16 %v13675
    %v13879 = vunpack.c.h.b16 %v13675
    %v13880 = vpack.c.b16 %v13754, %v13752
    %v13881 = vpack.c.b16 %v13755, %v13753
    %v13882 = vpack.c.b16 %v13758, %v13756
    %v13883 = vpack.c.b16 %v13759, %v13757
    %v13884 = vpack.c.b16 %v13762, %v13760
    %v13885 = vpack.c.b16 %v13763, %v13761
    %v13886 = vpack.c.b16 %v13766, %v13764
    %v13887 = vpack.c.b16 %v13767, %v13765
    %v13888 = vpack.c.b16 %v13770, %v13768
    %v13889 = vpack.c.b16 %v13771, %v13769
    %v13890 = vpack.c.b16 %v13774, %v13772
    %v13891 = vpack.c.b16 %v13775, %v13773
    %v13892 = vpack.c.b16 %v13778, %v13776
    %v13893 = vpack.c.b16 %v13779, %v13777
    %v13894 = vpack.c.b16 %v13782, %v13780
    %v13895 = vpack.c.b16 %v13783, %v13781
    %v13896 = vpack.c.b16 %v13786, %v13784
    %v13897 = vpack.c.b16 %v13787, %v13785
    %v13898 = vpack.c.b16 %v13790, %v13788
    %v13899 = vpack.c.b16 %v13791, %v13789
    %v13900 = vpack.c.b16 %v13794, %v13792
    %v13901 = vpack.c.b16 %v13795, %v13793
    %v13902 = vpack.c.b16 %v13798, %v13796
    %v13903 = vpack.c.b16 %v13799, %v13797
    %v13904 = vpack.c.b16 %v13802, %v13800
    %v13905 = vpack.c.b16 %v13803, %v13801
    %v13906 = vpack.c.b16 %v13806, %v13804
    %v13907 = vpack.c.b16 %v13807, %v13805
    %v13908 = vpack.c.b16 %v13810, %v13808
    %v13909 = vpack.c.b16 %v13811, %v13809
    %v13910 = vpack.c.b16 %v13814, %v13812
    %v13911 = vpack.c.b16 %v13815, %v13813
    %v13912 = vpack.c.b16 %v13818, %v13816
    %v13913 = vpack.c.b16 %v13819, %v13817
    %v13914 = vpack.c.b16 %v13822, %v13820
    %v13915 = vpack.c.b16 %v13823, %v13821
    %v13916 = vpack.c.b16 %v13826, %v13824
    %v13917 = vpack.c.b16 %v13827, %v13825
    %v13918 = vpack.c.b16 %v13830, %v13828
    %v13919 = vpack.c.b16 %v13831, %v13829
    %v13920 = vpack.c.b16 %v13834, %v13832
    %v13921 = vpack.c.b16 %v13835, %v13833
    %v13922 = vpack.c.b16 %v13838, %v13836
    %v13923 = vpack.c.b16 %v13839, %v13837
    %v13924 = vpack.c.b16 %v13842, %v13840
    %v13925 = vpack.c.b16 %v13843, %v13841
    %v13926 = vpack.c.b16 %v13846, %v13844
    %v13927 = vpack.c.b16 %v13847, %v13845
    %v13928 = vpack.c.b16 %v13850, %v13848
    %v13929 = vpack.c.b16 %v13851, %v13849
    %v13930 = vpack.c.b16 %v13854, %v13852
    %v13931 = vpack.c.b16 %v13855, %v13853
    %v13932 = vpack.c.b16 %v13858, %v13856
    %v13933 = vpack.c.b16 %v13859, %v13857
    %v13934 = vpack.c.b16 %v13862, %v13860
    %v13935 = vpack.c.b16 %v13863, %v13861
    %v13936 = vpack.c.b16 %v13866, %v13864
    %v13937 = vpack.c.b16 %v13867, %v13865
    %v13938 = vpack.c.b16 %v13870, %v13868
    %v13939 = vpack.c.b16 %v13871, %v13869
    %v13940 = vpack.c.b16 %v13874, %v13872
    %v13941 = vpack.c.b16 %v13875, %v13873
    %v13942 = vpack.c.b16 %v13878, %v13876
    %v13943 = vpack.c.b16 %v13879, %v13877
    %14008 = vmatprep.subr.bf16.mxu0 %v13881
    %14009 = vmatpush1.bf16.msra.mxu0 %v13880
    %14010 = vmatprep.subr.bf16.mxu0 %v13883
    %14011 = vmatpush1.bf16.msra.mxu0 %v13882
    %14012 = vmatprep.subr.bf16.mxu0 %v13885
    %14013 = vmatpush1.bf16.msra.mxu0 %v13884
    %14014 = vmatprep.subr.bf16.mxu0 %v13887
    %14015 = vmatpush1.bf16.msra.mxu0 %v13886
    %14016 = vmatprep.subr.bf16.mxu0 %v13889
    %14017 = vmatpush1.bf16.msra.mxu0 %v13888
    %14018 = vmatprep.subr.bf16.mxu0 %v13891
    %14019 = vmatpush1.bf16.msra.mxu0 %v13890
    %14020 = vmatprep.subr.bf16.mxu0 %v13893
    %14021 = vmatpush1.bf16.msra.mxu0 %v13892
    %14022 = vmatprep.subr.bf16.mxu0 %v13895
    %14023 = vmatpush1.bf16.msra.mxu0 %v13894
    %14024 = vmatprep.subr.bf16.mxu0 %v13897
    %14025 = vmatpush1.bf16.msra.mxu0 %v13896
    %14026 = vmatprep.subr.bf16.mxu0 %v13899
    %14027 = vmatpush1.bf16.msra.mxu0 %v13898
    %14028 = vmatprep.subr.bf16.mxu0 %v13901
    %14029 = vmatpush1.bf16.msra.mxu0 %v13900
    %14030 = vmatprep.subr.bf16.mxu0 %v13903
    %14031 = vmatpush1.bf16.msra.mxu0 %v13902
    %14032 = vmatprep.subr.bf16.mxu0 %v13905
    %14033 = vmatpush1.bf16.msra.mxu0 %v13904
    %14034 = vmatprep.subr.bf16.mxu0 %v13907
    %14035 = vmatpush1.bf16.msra.mxu0 %v13906
    %14036 = vmatprep.subr.bf16.mxu0 %v13909
    %14037 = vmatpush1.bf16.msra.mxu0 %v13908
    %14038 = vmatprep.subr.bf16.mxu0 %v13911
    %14039 = vmatpush1.bf16.msra.mxu0 %v13910
    %14040 = vmatprep.mubr.bf16.mxu0 %v13609
    %14041 = vmatmul.mubr.bf16.gmra.mrb[0].mxu0 %v13608
    %v14042 = vpop.f32.mrb[0].mxu0
    %v14043 = vadd.f32 %v13681, %v14042
    %v14044 = vpop.f32.mrb[0].mxu0
    %v14045 = vadd.f32 %v13685, %v14044
    %v14046 = vpop.f32.mrb[0].mxu0
    %v14047 = vadd.f32 %v13681, %v14046
    %v14048 = vpop.f32.mrb[0].mxu0
    %v14049 = vadd.f32 %v13685, %v14048
    %14050 = vdwg.mxu0
    %14051 = vmatprep.subr.bf16.mxu0 %v13913
    %14052 = vmatpush1.bf16.msra.mxu0 %v13912
    %14053 = vmatprep.subr.bf16.mxu0 %v13915
    %14054 = vmatpush1.bf16.msra.mxu0 %v13914
    %14055 = vmatprep.subr.bf16.mxu0 %v13917
    %14056 = vmatpush1.bf16.msra.mxu0 %v13916
    %14057 = vmatprep.subr.bf16.mxu0 %v13919
    %14058 = vmatpush1.bf16.msra.mxu0 %v13918
    %14059 = vmatprep.subr.bf16.mxu0 %v13921
    %14060 = vmatpush1.bf16.msra.mxu0 %v13920
    %14061 = vmatprep.subr.bf16.mxu0 %v13923
    %14062 = vmatpush1.bf16.msra.mxu0 %v13922
    %14063 = vmatprep.subr.bf16.mxu0 %v13925
    %14064 = vmatpush1.bf16.msra.mxu0 %v13924
    %14065 = vmatprep.subr.bf16.mxu0 %v13927
    %14066 = vmatpush1.bf16.msra.mxu0 %v13926
    %14067 = vmatprep.subr.bf16.mxu0 %v13929
    %14068 = vmatpush1.bf16.msra.mxu0 %v13928
    %14069 = vmatprep.subr.bf16.mxu0 %v13931
    %14070 = vmatpush1.bf16.msra.mxu0 %v13930
    %14071 = vmatprep.subr.bf16.mxu0 %v13933
    %14072 = vmatpush1.bf16.msra.mxu0 %v13932
    %14073 = vmatprep.subr.bf16.mxu0 %v13935
    %14074 = vmatpush1.bf16.msra.mxu0 %v13934
    %14075 = vmatprep.subr.bf16.mxu0 %v13937
    %14076 = vmatpush1.bf16.msra.mxu0 %v13936
    %14077 = vmatprep.subr.bf16.mxu0 %v13939
    %14078 = vmatpush1.bf16.msra.mxu0 %v13938
    %14079 = vmatprep.subr.bf16.mxu0 %v13941
    %14080 = vmatpush1.bf16.msra.mxu0 %v13940
    %14081 = vmatprep.subr.bf16.mxu0 %v13943
    %14082 = vmatpush1.bf16.msra.mxu0 %v13942
    %14083 = vmatprep.mubr.bf16.mxu0 %v13611
    %14084 = vmatmul.mubr.bf16.gmra.mrb[0].mxu0 %v13610
    %v14085 = vpop.f32.mrb[0].mxu0
    %v14086 = vadd.f32 %v14043, %v14085
    %v14087 = vpop.f32.mrb[0].mxu0
    %v14088 = vadd.f32 %v14045, %v14087
    %v14089 = vpop.f32.mrb[0].mxu0
    %v14090 = vadd.f32 %v14047, %v14089
    %v14091 = vpop.f32.mrb[0].mxu0
    %v14092 = vadd.f32 %v14049, %v14091
    %14093 = vdwg.mxu0
    %v14094 = vmax.f32 %v14086, 0.0
    %v14095 = vmax.f32 %v14088, 0.0
    %v14096 = vmax.f32 %v14090, 0.0
    %v14097 = vmax.f32 %v14092, 0.0
    %v14098 = vpack.c.bf16 %v14096, %v14094
    %v14099 = vpack.c.bf16 %v14097, %v14095
    %v14100 = vld [vmem:[#allocation15] sm:$0xf]
    %v14101 = vld [vmem:[#allocation15 + $0x4] sm:$0xf]
    %v14102 = vld [vmem:[#allocation15 + $0x8] sm:$0xf]
    %v14103 = vld [vmem:[#allocation15 + $0xc] sm:$0xf]
    %v14104 = vld [vmem:[#allocation15 + $0x10] sm:$0xf]
    %v14105 = vld [vmem:[#allocation15 + $0x14] sm:$0xf]
    %v14106 = vld [vmem:[#allocation15 + $0x18] sm:$0xf]
    %v14107 = vld [vmem:[#allocation15 + $0x1c] sm:$0xf]
    %v14108 = vld [vmem:[#allocation15 + $0x20] sm:$0xf]
    %v14109 = vld [vmem:[#allocation15 + $0x24] sm:$0xf]
    %v14110 = vld [vmem:[#allocation15 + $0x28] sm:$0xf]
    %v14111 = vld [vmem:[#allocation15 + $0x2c] sm:$0xf]
    %v14112 = vld [vmem:[#allocation15 + $0x30] sm:$0xf]
    %v14113 = vld [vmem:[#allocation15 + $0x34] sm:$0xf]
    %v14114 = vld [vmem:[#allocation15 + $0x38] sm:$0xf]
    %v14115 = vld [vmem:[#allocation15 + $0x3c] sm:$0xf]
    %v14116 = vld [vmem:[#allocation15 + $0x40] sm:$0xf]
    %v14117 = vld [vmem:[#allocation15 + $0x44] sm:$0xf]
    %v14118 = vld [vmem:[#allocation15 + $0x48] sm:$0xf]
    %v14119 = vld [vmem:[#allocation15 + $0x4c] sm:$0xf]
    %v14120 = vld [vmem:[#allocation15 + $0x50] sm:$0xf]
    %v14121 = vld [vmem:[#allocation15 + $0x54] sm:$0xf]
    %v14122 = vld [vmem:[#allocation15 + $0x58] sm:$0xf]
    %v14123 = vld [vmem:[#allocation15 + $0x5c] sm:$0xf]
    %v14124 = vld [vmem:[#allocation15 + $0x60] sm:$0xf]
    %v14125 = vld [vmem:[#allocation15 + $0x64] sm:$0xf]
    %v14126 = vld [vmem:[#allocation15 + $0x68] sm:$0xf]
    %v14127 = vld [vmem:[#allocation15 + $0x6c] sm:$0xf]
    %v14128 = vld [vmem:[#allocation15 + $0x70] sm:$0xf]
    %v14129 = vld [vmem:[#allocation15 + $0x74] sm:$0xf]
    %v14130 = vld [vmem:[#allocation15 + $0x78] sm:$0xf]
    %v14131 = vld [vmem:[#allocation15 + $0x7c] sm:$0xf]
    %v14132 = vld [vmem:[#allocation16] sm:$0x1]
    %v14134 = vlaneseq
    %v14135 = vshrl.u32 %v14134, 7
    %v14136 = vsub.s32 0, %v14135
    %v14137 = vrot.slane %v14132, %v14136
    %v14171 = vunpack.c.l.b16 %v14100
    %v14172 = vunpack.c.l.b16 %v14101
    %v14173 = vunpack.c.l.b16 %v14102
    %v14174 = vunpack.c.l.b16 %v14103
    %v14175 = vunpack.c.l.b16 %v14104
    %v14176 = vunpack.c.l.b16 %v14105
    %v14177 = vunpack.c.l.b16 %v14106
    %v14178 = vunpack.c.l.b16 %v14107
    %v14179 = vunpack.c.l.b16 %v14108
    %v14180 = vunpack.c.l.b16 %v14109
    %v14181 = vunpack.c.l.b16 %v14110
    %v14182 = vunpack.c.l.b16 %v14111
    %v14183 = vunpack.c.l.b16 %v14112
    %v14184 = vunpack.c.l.b16 %v14113
    %v14185 = vunpack.c.l.b16 %v14114
    %v14186 = vunpack.c.l.b16 %v14115
    %v14187 = vunpack.c.l.b16 %v14116
    %v14188 = vunpack.c.l.b16 %v14117
    %v14189 = vunpack.c.l.b16 %v14118
    %v14190 = vunpack.c.l.b16 %v14119
    %v14191 = vunpack.c.l.b16 %v14120
    %v14192 = vunpack.c.l.b16 %v14121
    %v14193 = vunpack.c.l.b16 %v14122
    %v14194 = vunpack.c.l.b16 %v14123
    %v14195 = vunpack.c.l.b16 %v14124
    %v14196 = vunpack.c.l.b16 %v14125
    %v14197 = vunpack.c.l.b16 %v14126
    %v14198 = vunpack.c.l.b16 %v14127
    %v14199 = vunpack.c.l.b16 %v14128
    %v14200 = vunpack.c.l.b16 %v14129
    %v14201 = vunpack.c.l.b16 %v14130
    %v14202 = vunpack.c.l.b16 %v14131
    %v14203 = vpack.c.b16 %v14172, %v14171
    %v14204 = vpack.c.b16 %v14174, %v14173
    %v14205 = vpack.c.b16 %v14176, %v14175
    %v14206 = vpack.c.b16 %v14178, %v14177
    %v14207 = vpack.c.b16 %v14180, %v14179
    %v14208 = vpack.c.b16 %v14182, %v14181
    %v14209 = vpack.c.b16 %v14184, %v14183
    %v14210 = vpack.c.b16 %v14186, %v14185
    %v14211 = vpack.c.b16 %v14188, %v14187
    %v14212 = vpack.c.b16 %v14190, %v14189
    %v14213 = vpack.c.b16 %v14192, %v14191
    %v14214 = vpack.c.b16 %v14194, %v14193
    %v14215 = vpack.c.b16 %v14196, %v14195
    %v14216 = vpack.c.b16 %v14198, %v14197
    %v14217 = vpack.c.b16 %v14200, %v14199
    %v14218 = vpack.c.b16 %v14202, %v14201
    %14235 = vmatprep.subr.bf16.mxu0 0
    %14236 = vmatpush1.bf16.msra.mxu0 %v14203
    %14237 = vmatprep.subr.bf16.mxu0 0
    %14238 = vmatpush1.bf16.msra.mxu0 %v14204
    %14239 = vmatprep.subr.bf16.mxu0 0
    %14240 = vmatpush1.bf16.msra.mxu0 %v14205
    %14241 = vmatprep.subr.bf16.mxu0 0
    %14242 = vmatpush1.bf16.msra.mxu0 %v14206
    %14243 = vmatprep.subr.bf16.mxu0 0
    %14244 = vmatpush1.bf16.msra.mxu0 %v14207
    %14245 = vmatprep.subr.bf16.mxu0 0
    %14246 = vmatpush1.bf16.msra.mxu0 %v14208
    %14247 = vmatprep.subr.bf16.mxu0 0
    %14248 = vmatpush1.bf16.msra.mxu0 %v14209
    %14249 = vmatprep.subr.bf16.mxu0 0
    %14250 = vmatpush1.bf16.msra.mxu0 %v14210
    %14251 = vmatprep.subr.bf16.mxu0 0
    %14252 = vmatpush1.bf16.msra.mxu0 %v14211
    %14253 = vmatprep.subr.bf16.mxu0 0
    %14254 = vmatpush1.bf16.msra.mxu0 %v14212
    %14255 = vmatprep.subr.bf16.mxu0 0
    %14256 = vmatpush1.bf16.msra.mxu0 %v14213
    %14257 = vmatprep.subr.bf16.mxu0 0
    %14258 = vmatpush1.bf16.msra.mxu0 %v14214
    %14259 = vmatprep.subr.bf16.mxu0 0
    %14260 = vmatpush1.bf16.msra.mxu0 %v14215
    %14261 = vmatprep.subr.bf16.mxu0 0
    %14262 = vmatpush1.bf16.msra.mxu0 %v14216
    %14263 = vmatprep.subr.bf16.mxu0 0
    %14264 = vmatpush1.bf16.msra.mxu0 %v14217
    %14265 = vmatprep.subr.bf16.mxu0 0
    %14266 = vmatpush1.bf16.msra.mxu0 %v14218
    %14267 = vmatprep.mubr.bf16.mxu0 %v14099
    %14268 = vmatmul.mubr.bf16.gmra.mrb[0].mxu0 %v14098
    %v14269 = vpop.f32.mrb[0].mxu0
    %v14270 = vadd.f32 %v14137, %v14269
    %v14271 = vpop.f32.mrb[0].mxu0
    %v14272 = vpop.f32.mrb[0].mxu0
    %v14273 = vadd.f32 %v14137, %v14272
    %v14274 = vpop.f32.mrb[0].mxu0
    %14275 = vdwg.mxu0
    %v14276 = vmax.f32 %v14270, 0.0
    %v14277 = vmax.f32 %v14273, 0.0
    %v14278 = vpack.c.bf16 %v14277, %v14276
    %v14279 = vld [vmem:[#allocation18] sm:$0xf]
    %v14280 = vld [vmem:[#allocation18 + $0x4] sm:$0xf]
    %v14281 = vld [vmem:[#allocation18 + $0x8] sm:$0xf]
    %v14282 = vld [vmem:[#allocation18 + $0xc] sm:$0xf]
    %v14283 = vld [vmem:[#allocation18 + $0x10] sm:$0xf]
    %v14284 = vld [vmem:[#allocation18 + $0x14] sm:$0xf]
    %v14285 = vld [vmem:[#allocation18 + $0x18] sm:$0xf]
    %v14286 = vld [vmem:[#allocation18 + $0x1c] sm:$0xf]
    %v14287 = vld [vmem:[#allocation18 + $0x20] sm:$0xf]
    %v14288 = vld [vmem:[#allocation18 + $0x24] sm:$0xf]
    %v14289 = vld [vmem:[#allocation18 + $0x28] sm:$0xf]
    %v14290 = vld [vmem:[#allocation18 + $0x2c] sm:$0xf]
    %v14291 = vld [vmem:[#allocation18 + $0x30] sm:$0xf]
    %v14292 = vld [vmem:[#allocation18 + $0x34] sm:$0xf]
    %v14293 = vld [vmem:[#allocation18 + $0x38] sm:$0xf]
    %v14294 = vld [vmem:[#allocation18 + $0x3c] sm:$0xf]
    %v14295 = vld [vmem:[#allocation19] sm:$0x1]
    %v14297 = vlaneseq
    %v14298 = vshrl.u32 %v14297, 7
    %v14299 = vsub.s32 0, %v14298
    %v14300 = vrot.slane %v14295, %v14299
    %v14318 = vunpack.c.l.b16 %v14279
    %v14319 = vunpack.c.l.b16 %v14280
    %v14320 = vunpack.c.l.b16 %v14281
    %v14321 = vunpack.c.l.b16 %v14282
    %v14322 = vunpack.c.l.b16 %v14283
    %v14323 = vunpack.c.l.b16 %v14284
    %v14324 = vunpack.c.l.b16 %v14285
    %v14325 = vunpack.c.l.b16 %v14286
    %v14326 = vunpack.c.l.b16 %v14287
    %v14327 = vunpack.c.l.b16 %v14288
    %v14328 = vunpack.c.l.b16 %v14289
    %v14329 = vunpack.c.l.b16 %v14290
    %v14330 = vunpack.c.l.b16 %v14291
    %v14331 = vunpack.c.l.b16 %v14292
    %v14332 = vunpack.c.l.b16 %v14293
    %v14333 = vunpack.c.l.b16 %v14294
    %v14334 = vpack.c.b16 %v14319, %v14318
    %v14335 = vpack.c.b16 %v14321, %v14320
    %v14336 = vpack.c.b16 %v14323, %v14322
    %v14337 = vpack.c.b16 %v14325, %v14324
    %v14338 = vpack.c.b16 %v14327, %v14326
    %v14339 = vpack.c.b16 %v14329, %v14328
    %v14340 = vpack.c.b16 %v14331, %v14330
    %v14341 = vpack.c.b16 %v14333, %v14332
    %14350 = vmatprep.subr.bf16.mxu0 0
    %14351 = vmatpush1.bf16.msra.mxu0 %v14334
    %14352 = vmatprep.subr.bf16.mxu0 0
    %14353 = vmatpush1.bf16.msra.mxu0 %v14335
    %14354 = vmatprep.subr.bf16.mxu0 0
    %14355 = vmatpush1.bf16.msra.mxu0 %v14336
    %14356 = vmatprep.subr.bf16.mxu0 0
    %14357 = vmatpush1.bf16.msra.mxu0 %v14337
    %14358 = vmatprep.subr.bf16.mxu0 0
    %14359 = vmatpush1.bf16.msra.mxu0 %v14338
    %14360 = vmatprep.subr.bf16.mxu0 0
    %14361 = vmatpush1.bf16.msra.mxu0 %v14339
    %14362 = vmatprep.subr.bf16.mxu0 0
    %14363 = vmatpush1.bf16.msra.mxu0 %v14340
    %14364 = vmatprep.subr.bf16.mxu0 0
    %14365 = vmatpush1.bf16.msra.mxu0 %v14341
    %14366 = vmatprep.subr.bf16.mxu0 0
    %14367 = vmatpush1.bf16.msra.mxu0 0
    %14368 = vmatprep.subr.bf16.mxu0 0
    %14369 = vmatpush1.bf16.msra.mxu0 0
    %14370 = vmatprep.subr.bf16.mxu0 0
    %14371 = vmatpush1.bf16.msra.mxu0 0
    %14372 = vmatprep.subr.bf16.mxu0 0
    %14373 = vmatpush1.bf16.msra.mxu0 0
    %14374 = vmatprep.subr.bf16.mxu0 0
    %14375 = vmatpush1.bf16.msra.mxu0 0
    %14376 = vmatprep.subr.bf16.mxu0 0
    %14377 = vmatpush1.bf16.msra.mxu0 0
    %14378 = vmatprep.subr.bf16.mxu0 0
    %14379 = vmatpush1.bf16.msra.mxu0 0
    %14380 = vmatprep.subr.bf16.mxu0 0
    %14381 = vmatpush1.bf16.msra.mxu0 0
    %14382 = vmatprep.mubr.bf16.mxu0 0
    %14383 = vmatmul.mubr.bf16.gmra.mrb[0].mxu0 %v14278
    %v14384 = vpop.f32.mrb[0].mxu0
    %v14385 = vadd.f32 %v14300, %v14384
    %v14386 = vpop.f32.mrb[0].mxu0
    %v14387 = vpop.f32.mrb[0].mxu0
    %v14388 = vadd.f32 %v14300, %v14387
    %v14389 = vpop.f32.mrb[0].mxu0
    %14390 = vdwg.mxu0
    %14391 = vmax.xlane.f32.xlu0 %v14385
    %v14392 = vpop.xlane.xlu0 %14391
    %14393 = vmax.xlane.f32.xlu0 %v14388
    %v14394 = vpop.xlane.xlu0 %14393
    %v14395 = vsub.f32 %v14385, %v14392
    %v14396 = vsub.f32 %v14388, %v14394
    %v14397 = vmul.f32 %v14395, 1.442695
    %v14398 = vpow.pop %v14397
    %v14399 = vmul.f32 %v14396, 1.442695
    %v14400 = vpow.pop %v14399
    %14401 = vadd.xlane.f32.xlu0 %v14398
    %v14402 = vpop.xlane.xlu0 %14401
    %14403 = vadd.xlane.f32.xlu0 %v14400
    %v14404 = vpop.xlane.xlu0 %14403
    %v14405 = vrcp.pop %v14402
    %v14406 = vmul.f32 %v14398, %v14405
    %v14407 = vrcp.pop %v14404
    %v14408 = vmul.f32 %v14400, %v14407
    %14409 = vst [vmem:[%s13] sm:$0xff] %v14406
    %14410 = vst [vmem:[%s13 + $0x8] sm:$0xff] %v14408
    // Predicated region
    $region102: #{feedforward_nn.1} parent=1 // pred_check
      _
    $region103: #{feedforward_nn.1} parent=1 // pred_check_branch
      %14412 = sbr.rel (0) target = $region105
    $region104: #{feedforward_nn.1} parent=1 // pred_region
      _
    $region105: #{feedforward_nn.1} parent=1 // pred_fallthru
      _
    // Predicated region
    $region106: #{feedforward_nn.1} parent=1 // pred_check
      _
    $region107: #{feedforward_nn.1} parent=1 // pred_check_branch
      %14414 = sbr.rel (0) target = $region109
    $region108: #{feedforward_nn.1} parent=1 // pred_region
      _
    $region109: #{feedforward_nn.1} parent=1 // pred_fallthru
      _
    %14415 = vsyncpa [#allocation3], 1
    %14416 = vsyncpa [#allocation5], 1
    %14417 = vsyncpa [#allocation8], 1
    %14418 = vsyncpa [#allocation11], 1
    %14419 = vsyncpa [#allocation14], 1
    %14420 = vsyncpa [#allocation17], 1
    %14421 = vsyncpa [#allocation20], 1

</llo_original>
